<compile_context>
chip_gen: v7x
topology: tpu7x:2x2x1
jax: 0.10.0
libtpu: 0.0.40
codegen_flags: <defaults>
</compile_context>

<pallas_src>
import functools

import jax
import jax.numpy as jnp
from jax.experimental import pallas as pl
from jax.experimental.pallas import tpu as pltpu

IN_FEATURES = 196608   # fixed by the module
OUT_FEATURES = 10


def linear_kernel(x_ref, w_ref, o_ref, acc_ref):
    """grid = (split p [parallel across TCs], K-tile k [reduction])."""
    k = pl.program_id(1)

    @pl.when(k == 0)
    def _():
        acc_ref[...] = jnp.zeros_like(acc_ref)

    # x_ref: (B, tk), w_ref: (N, tk) — contract both on their last (lane) dim.
    acc_ref[...] += jax.lax.dot_general(
        x_ref[...], w_ref[...],
        dimension_numbers=(((1,), (1,)), ((), ())),
        preferred_element_type=jnp.float32,
    )

    @pl.when(k == pl.num_programs(1) - 1)
    def _():
        o_ref[...] = acc_ref[...].astype(o_ref.dtype)


@functools.partial(jax.jit, static_argnames=("tk", "num_splits"))
def pallas_linear(x, weight, bias, *, tk=32768, num_splits=2):
    """x: (B, K) f32; weight: (N, K) f32 (PyTorch layout); bias: (N,) f32."""
    B, K = x.shape
    N = weight.shape[0]
    assert K % (num_splits * tk) == 0, "K must divide evenly into num_splits*tk"
    kpp = K // (num_splits * tk)      # K tiles per split

    partials = pl.pallas_call(
        linear_kernel,
        out_shape=jax.ShapeDtypeStruct((num_splits, B, N), jnp.float32),
        grid_spec=pltpu.PrefetchScalarGridSpec(
            num_scalar_prefetch=0,
            grid=(num_splits, kpp),
            in_specs=[
                pl.BlockSpec((B, tk), lambda p, k: (0, p * kpp + k)),  # x tile
                pl.BlockSpec((N, tk), lambda p, k: (0, p * kpp + k)),  # W tile
            ],
            # One partial (B, N) accumulation result per split; leading dim squeezed.
            out_specs=pl.BlockSpec((None, B, N), lambda p, k: (p, 0, 0)),
            scratch_shapes=[pltpu.VMEM((B, N), jnp.float32)],
        ),
        compiler_params=pltpu.CompilerParams(
            dimension_semantics=("parallel", "arbitrary"),
        ),
        cost_estimate=pl.CostEstimate(
            flops=2 * B * K * N,
            transcendentals=0,
            bytes_accessed=4 * (B * K + N * K + num_splits * B * N),
        ),
    )(x, weight)

    # Tiny fused epilogue on (num_splits, B, 10): combine partial sums + bias.
    return (partials.sum(axis=0) + bias[None, :]).astype(x.dtype)


if __name__ == "__main__":
    key = jax.random.PRNGKey(0)
    kx, kw, kb = jax.random.split(key, 3)

    batch = 2
    # Deterministic parameter init mimicking PyTorch Linear default:
    # U(-1/sqrt(in_features), 1/sqrt(in_features))
    bound = 1.0 / (IN_FEATURES ** 0.5)
    weight = jax.random.uniform(
        kw, (OUT_FEATURES, IN_FEATURES), jnp.float32, -bound, bound
    )
    bias = jax.random.uniform(kb, (OUT_FEATURES,), jnp.float32, -bound, bound)
    x = jax.random.normal(kx, (batch, IN_FEATURES), jnp.float32)

    out = pallas_linear(x, weight, bias)
    out = jax.block_until_ready(out)

    # Reference check in plain JAX
    ref = x @ weight.T + bias
    assert out.shape == (batch, OUT_FEATURES)
    assert jnp.allclose(out, ref, atol=1e-3, rtol=1e-3), "mismatch vs reference"

    print("KERNEL_OK")
</pallas_src>

<mosaic_0001>
module attributes {stable_mosaic.version = 11 : i64} {
  func.func @linear_kernel(%arg0: i32, %arg1: i32, %arg2: memref<2x32768xf32, #tpu.memory_space<vmem>>, %arg3: memref<10x32768xf32, #tpu.memory_space<vmem>>, %arg4: memref<1x2x10xf32, #tpu.memory_space<vmem>>, %arg5: memref<2x10xf32, #tpu.memory_space<vmem>>) attributes {dimension_semantics = [#tpu.dimension_semantics<parallel>, #tpu.dimension_semantics<arbitrary>], iteration_bounds = array<i64: 2, 3>, scalar_prefetch = 0 : i64, scratch_operands = 1 : i64, tpu.core_type = #tpu.core_type<tc>, window_params = [{transform_indices = @transform_0, window_bounds = array<i64: 2, 32768>}, {transform_indices = @transform_1, window_bounds = array<i64: 10, 32768>}, {transform_indices = @transform_2, window_bounds = array<i64: 1, 2, 10>}]} {
    %c0_i32 = arith.constant 0 : i32
    %0 = arith.cmpi eq, %arg1, %c0_i32 : i32
    %1 = arith.extui %0 : i1 to i32
    %c0_i32_0 = arith.constant 0 : i32
    %2 = arith.cmpi ne, %1, %c0_i32_0 : i32
    scf.if %2 {
      %cst_9 = arith.constant 0.000000e+00 : f32
      %12 = vector.broadcast %cst_9 : f32 to vector<2x10xf32>
      %c0_10 = arith.constant 0 : index
      %c0_11 = arith.constant 0 : index
      %13 = vector.load %arg5[%c0_10, %c0_11] : memref<2x10xf32, #tpu.memory_space<vmem>>, vector<2x10xf32>
      tpu.vector_store %arg5[%c0_10, %c0_11], %12 {strides = array<i32>} : memref<2x10xf32, #tpu.memory_space<vmem>>, vector<2x10xf32>,
    } else {
    }
    %c0 = arith.constant 0 : index
    %c0_1 = arith.constant 0 : index
    %3 = vector.load %arg5[%c0, %c0_1] : memref<2x10xf32, #tpu.memory_space<vmem>>, vector<2x10xf32>
    %c0_2 = arith.constant 0 : index
    %c0_3 = arith.constant 0 : index
    %4 = vector.load %arg2[%c0_2, %c0_3] : memref<2x32768xf32, #tpu.memory_space<vmem>>, vector<2x32768xf32>
    %c0_4 = arith.constant 0 : index
    %c0_5 = arith.constant 0 : index
    %5 = vector.load %arg3[%c0_4, %c0_5] : memref<10x32768xf32, #tpu.memory_space<vmem>>, vector<10x32768xf32>
    %cst = arith.constant dense<0.000000e+00> : vector<2x10xf32>
    %6 = tpu.matmul %4, %5, %cst {dimension_numbers = #tpu.dot_dimension_numbers<[1], [1], [0], [0], [0, 0, 1, 0], [], []>} : vector<2x32768xf32>, vector<10x32768xf32>, vector<2x10xf32> -> vector<2x10xf32>
    %7 = arith.addf %3, %6 : vector<2x10xf32>
    %c0_6 = arith.constant 0 : index
    %c0_7 = arith.constant 0 : index
    %8 = vector.load %arg5[%c0_6, %c0_7] : memref<2x10xf32, #tpu.memory_space<vmem>>, vector<2x10xf32>
    tpu.vector_store %arg5[%c0_6, %c0_7], %7 {strides = array<i32>} : memref<2x10xf32, #tpu.memory_space<vmem>>, vector<2x10xf32>,
    %c2_i32 = arith.constant 2 : i32
    %9 = arith.cmpi eq, %arg1, %c2_i32 : i32
    %10 = arith.extui %9 : i1 to i32
    %c0_i32_8 = arith.constant 0 : i32
    %11 = arith.cmpi ne, %10, %c0_i32_8 : i32
    scf.if %11 {
      %c0_9 = arith.constant 0 : index
      %c0_10 = arith.constant 0 : index
      %12 = vector.load %arg5[%c0_9, %c0_10] : memref<2x10xf32, #tpu.memory_space<vmem>>, vector<2x10xf32>
      %c0_11 = arith.constant 0 : index
      %c0_12 = arith.constant 0 : index
      %c0_13 = arith.constant 0 : index
      %13 = vector.load %arg4[%c0_11, %c0_12, %c0_13] : memref<1x2x10xf32, #tpu.memory_space<vmem>>, vector<1x2x10xf32>
      %14 = vector.shape_cast %13 : vector<1x2x10xf32> to vector<2x10xf32>
      %15 = vector.shape_cast %12 : vector<2x10xf32> to vector<1x2x10xf32>
      tpu.vector_store %arg4[%c0_11, %c0_12, %c0_13], %15 {strides = array<i32>} : memref<1x2x10xf32, #tpu.memory_space<vmem>>, vector<1x2x10xf32>,
    } else {
    }
    return
  }
  func.func @transform_0(%arg0: i32, %arg1: i32) -> (i32, i32) {
    %c3_i32 = arith.constant 3 : i32
    %0 = arith.muli %arg0, %c3_i32 : i32
    %1 = arith.addi %0, %arg1 : i32
    %c0_i32 = arith.constant 0 : i32
    %c0_i32_0 = arith.constant 0 : i32
    return %c0_i32, %1 : i32, i32
  }
  func.func @transform_1(%arg0: i32, %arg1: i32) -> (i32, i32) {
    %c3_i32 = arith.constant 3 : i32
    %0 = arith.muli %arg0, %c3_i32 : i32
    %1 = arith.addi %0, %arg1 : i32
    %c0_i32 = arith.constant 0 : i32
    %c0_i32_0 = arith.constant 0 : i32
    return %c0_i32, %1 : i32, i32
  }
  func.func @transform_2(%arg0: i32, %arg1: i32) -> (i32, i32, i32) {
    %c0_i32 = arith.constant 0 : i32
    %c0_i32_0 = arith.constant 0 : i32
    %c0_i32_1 = arith.constant 0 : i32
    return %arg0, %c0_i32, %c0_i32_0 : i32, i32, i32
  }
}

</mosaic_0001>

<llo_original>
// kernel: pallas_linear.1
$region0: #{pallas_linear.1}
  #allocation0 [shape = 'u32[]', space=smem, size = 0x4, offset = 0x4, fixed_abs, tag = 'smem constant byte address 0x4 - core index']
  #allocation1 [shape = 'u32[144,128]{1,0:T(1,128)}', space=vmem, size = 0x12000, scoped, tag = 'internal scratch']
  #allocation2 [shape = 'f32[2,10]{1,0:T(2,128)}', space=vmem, size = 0x400, scoped, tag = 'scratch operand']
  %s0 = inlined_call_operand.hbm [shape: f32[2,196608], index: 0, kind: input, shape index: {}]
  %s1 = inlined_call_operand.hbm [shape: f32[10,196608], index: 1, kind: input, shape index: {}]
  %s2 = inlined_call_operand.vmem [shape: f32[2,2,10], index: 2, kind: output, shape index: {}]
  %s3 = sld [smem:[#allocation0]]
  $region57: #{pallas_linear.1} parent=0
    _
  %s5 = ssub.s32 1, %s3
  %s6 = scalar_select 0, %s5, %s3
  $region1: #{pallas_linear.1} parent=0
    #allocation3 [shape = 'u8[524288]{0}', space=vmem, size = 0x80000, scoped, tag = 'input window, operand 0']
    #allocation4 [shape = 's32[2]{0}', space=sflag, size = 0x8, scoped, tag = 'scoped memory for pallas_linear.1']
    #allocation5 [shape = 'u8[4194304]{0}', space=vmem, size = 0x400000, scoped, tag = 'input window, operand 1']
    #allocation6 [shape = 's32[2]{0}', space=sflag, size = 0x8, scoped, tag = 'scoped memory for pallas_linear.1']
    %7 = vsyncpa [#allocation4], 0
    %s8 = scalar_lea.sflag [#allocation4], 1
    %9 = vsyncpa %s8, 0
    %10 = vsyncpa [#allocation6], 0
    %s11 = scalar_lea.sflag [#allocation6], 1
    %12 = vsyncpa %s11, 0
    loop: start=0, step=1, limit=8
    $region2: #{pallas_linear.1} parent=1 // loop_pre_header
      _
    $region3: #{pallas_linear.1} parent=1 // loop_header
      %s14 = sphi 0, %s18
      %p15 = scmp.ge.s32.totalorder %s14, 8
      %s21 = sphi 0, %s33
      %s22 = sphi 0, %s29
      %s23 = sphi 0, %s21
      %s24 = sphi 0, %s22
      %s25 = sphi 0, %s23
      %s26 = sphi 0, %s24
      %s40 = sphi 0, %s42
      %s43 = sphi 0, %s40
      %s44 = sphi 0, %s43
      %s60 = sphi 0, %s44
      %s70 = sphi 0, %s72
      %s73 = sphi 0, %s70
      %s74 = sphi 0, %s73
      %s90 = sphi 0, %s74
      %s96 = sphi 0, %s98
      %s99 = sphi 0, %s96
      %s100 = sphi 0, %s99
      %s116 = sphi 0, %s100
    $region4: #{pallas_linear.1} parent=1 // loop_header_branch
      %17 = sbr.rel (%p15) target = $region8
    $region5: #{pallas_linear.1} parent=1 // loop_body
      %s19 = ssub.s32 %s14, 1
      %s20 = ssub.s32 %s14, 2
      %s27 = sadd.s32 1, %s22
      %p28 = scmp.ge.s32.totalorder %s27, 3
      %s29 = scalar_select %p28, 0, %s27
      %s30 = sadd.s32 1, %s21
      %s31 = scalar_select %p28, %s30, %s21
      %p32 = scmp.ge.s32.totalorder %s31, 2
      %s33 = scalar_select %p32, 0, %s31
      %s34 = smul.u32 %s21, 3
      %s35 = sadd.s32 %s34, %s22
      %s36 = smul.u32 %s33, 3
      %s37 = sadd.s32 %s36, %s29
      %s38 = ssub.s32 %s35, %s37
      %p39 = scmp.eq.s32.totalorder %s38, 0
      %s41 = sadd.s32 %s40, 1
      %s42 = scalar_select %p39, %s40, %s41
      %p45 = pneg %p39
      %p46 = scmp.eq.s32.totalorder %s14, 5
      %p47 = por %p45, %p46
      %p48 = scmp.ne.s32.totalorder %s40, %s43
      %p49 = scmp.eq.s32.totalorder %s14, 0
      %p50 = por %p48, %p49
      %p51 = scmp.ne.s32.totalorder %s40, %s43
      %p52 = scmp.eq.s32.totalorder %s19, 5
      %p53 = por %p51, %p52
      %p54 = scmp.ne.s32.totalorder %s43, %s44
      %p55 = scmp.eq.s32.totalorder %s19, 0
      %p56 = por %p54, %p55
      %p57 = scmp.ne.s32.totalorder %s43, %s44
      %p58 = scmp.eq.s32.totalorder %s20, 5
      %p59 = por %p57, %p58
      %p61 = scmp.ne.s32.totalorder %s44, %s60
      %p62 = scmp.eq.s32.totalorder %s20, 0
      %p63 = por %p61, %p62
      %s64 = smul.u32 %s21, 3
      %s65 = sadd.s32 %s64, %s22
      %s66 = smul.u32 %s33, 3
      %s67 = sadd.s32 %s66, %s29
      %s68 = ssub.s32 %s65, %s67
      %p69 = scmp.eq.s32.totalorder %s68, 0
      %s71 = sadd.s32 %s70, 1
      %s72 = scalar_select %p69, %s70, %s71
      %p75 = pneg %p69
      %p76 = scmp.eq.s32.totalorder %s14, 5
      %p77 = por %p75, %p76
      %p78 = scmp.ne.s32.totalorder %s70, %s73
      %p79 = scmp.eq.s32.totalorder %s14, 0
      %p80 = por %p78, %p79
      %p81 = scmp.ne.s32.totalorder %s70, %s73
      %p82 = scmp.eq.s32.totalorder %s19, 5
      %p83 = por %p81, %p82
      %p84 = scmp.ne.s32.totalorder %s73, %s74
      %p85 = scmp.eq.s32.totalorder %s19, 0
      %p86 = por %p84, %p85
      %p87 = scmp.ne.s32.totalorder %s73, %s74
      %p88 = scmp.eq.s32.totalorder %s20, 5
      %p89 = por %p87, %p88
      %p91 = scmp.ne.s32.totalorder %s74, %s90
      %p92 = scmp.eq.s32.totalorder %s20, 0
      %p93 = por %p91, %p92
      %s94 = ssub.s32 %s21, %s33
      %p95 = scmp.eq.s32.totalorder %s94, 0
      %s97 = sadd.s32 %s96, 1
      %s98 = scalar_select %p95, %s96, %s97
      %p101 = pneg %p95
      %p102 = scmp.eq.s32.totalorder %s14, 5
      %p103 = por %p101, %p102
      %p104 = scmp.ne.s32.totalorder %s96, %s99
      %p105 = scmp.eq.s32.totalorder %s14, 0
      %p106 = por %p104, %p105
      %p107 = scmp.ne.s32.totalorder %s96, %s99
      %p108 = scmp.eq.s32.totalorder %s19, 5
      %p109 = por %p107, %p108
      %p110 = scmp.ne.s32.totalorder %s99, %s100
      %p111 = scmp.eq.s32.totalorder %s19, 0
      %p112 = por %p110, %p111
      %p113 = scmp.ne.s32.totalorder %s99, %s100
      %p114 = scmp.eq.s32.totalorder %s20, 5
      %p115 = por %p113, %p114
      %p117 = scmp.ne.s32.totalorder %s100, %s116
      %p118 = scmp.eq.s32.totalorder %s20, 0
      %p119 = por %p117, %p118
      %p120 = scmp.le.s32.totalorder 1, %s14
      %p121 = scmp.lt.s32.totalorder %s14, 7
      %p122 = pnand %p120, %p121
      %p123 = pneg %p122
      // Predicated region
      $region9: #{pallas_linear.1} parent=5 // pred_check
        _
      $region10: #{pallas_linear.1} parent=5 // pred_check_branch
        %125 = sbr.rel (%p122) target = $region12
      $region11: #{pallas_linear.1} parent=5 // pred_region
        %s126 = ssub.s32 %s14, 1
      $region12: #{pallas_linear.1} parent=5 // pred_fallthru
        _
      %p127 = scmp.lt.s32.totalorder %s14, 6
      // Predicated region
      $region13: #{pallas_linear.1} parent=5 // pred_check
        %p128 = pneg %p127
      $region14: #{pallas_linear.1} parent=5 // pred_check_branch
        %130 = sbr.rel (%p128) target = $region16
      $region15: #{pallas_linear.1} parent=5 // pred_region
        // Predicated region
        $region17: #{pallas_linear.1} parent=15 // pred_check
          %p131 = pneg %p50
        $region18: #{pallas_linear.1} parent=15 // pred_check_branch
          %133 = sbr.rel (%p131) target = $region20
        $region19: #{pallas_linear.1} parent=15 // pred_region
          %s134 = sand.u32 %s40, 1
          %s135 = scalar_lea.sflag [#allocation4], %s134
          %s136 = sand.u32 %s40, 1
          %s137 = smul.addr %s136, 512
          %s138 = scalar_lea.vmem [#allocation3], %s137
          %s139 = smul.u32 %s21, 3
          %s140 = sadd.s32 %s139, %s22
          %s141 = smul.u32 256, %s140
          %s143 = ssub.s32 8192, 8192
          %144 = vsyncadd %s135, %s143
          %s145 = smul.addr %s141, 32
          %s146 = scalar_lea.hbm %s0, %s145
          %s148 = sshll.u32 %s138, 4
          %s149 = int_to_ptr.vmem [resolvable:$true] %s148
          %151 = dma.hbm_to_vmem [thread:$0]  %s146, 8192, %s149, %s135
        $region20: #{pallas_linear.1} parent=15 // pred_fallthru
          _
        // Predicated region
        $region21: #{pallas_linear.1} parent=15 // pred_check
          %p152 = pneg %p80
        $region22: #{pallas_linear.1} parent=15 // pred_check_branch
          %154 = sbr.rel (%p152) target = $region24
        $region23: #{pallas_linear.1} parent=15 // pred_region
          %s155 = sand.u32 %s70, 1
          %s156 = scalar_lea.sflag [#allocation6], %s155
          %s157 = sand.u32 %s70, 1
          %s158 = smul.addr %s157, 4096
          %s159 = scalar_lea.vmem [#allocation5], %s158
          %s160 = smul.u32 %s21, 3
          %s161 = sadd.s32 %s160, %s22
          %s162 = smul.u32 256, %s161
          %s164 = ssub.s32 65536, 65536
          %165 = vsyncadd %s156, %s164
          %s166 = smul.addr %s162, 128
          %s167 = scalar_lea.hbm %s1, %s166
          %s168 = sshll.u32 %s159, 4
          %s169 = int_to_ptr.vmem [resolvable:$true] %s168
          %174 = dma.hbm_to_vmem [thread:$0]  %s167, 65536, %s169, %s156, 196608, 32768, 2048
        $region24: #{pallas_linear.1} parent=15 // pred_fallthru
          _
      $region16: #{pallas_linear.1} parent=5 // pred_fallthru
        _
      %p175 = scmp.le.s32.totalorder 1, %s14
      %p176 = scmp.lt.s32.totalorder %s14, 7
      %p177 = pnand %p175, %p176
      %p178 = pneg %p177
      // Predicated region
      $region25: #{pallas_linear.1} parent=5 // pred_check
        _
      $region26: #{pallas_linear.1} parent=5 // pred_check_branch
        %180 = sbr.rel (%p177) target = $region28
      $region27: #{pallas_linear.1} parent=5 // pred_region
        %s181 = ssub.s32 %s14, 1
        %s182 = sand.u32 %s43, 1
        %s183 = scalar_lea.sflag [#allocation4], %s182
        %s184 = sand.u32 %s43, 1
        %s185 = smul.addr %s184, 512
        %s186 = scalar_lea.vmem [#allocation3], %s185
        // Predicated region
        $region29: #{pallas_linear.1} parent=27 // pred_check
          %p187 = pneg %p56
        $region30: #{pallas_linear.1} parent=27 // pred_check_branch
          %189 = sbr.rel (%p187) target = $region32
        $region31: #{pallas_linear.1} parent=27 // pred_region
          %190 = dma.done %s183, 8192
        $region32: #{pallas_linear.1} parent=27 // pred_fallthru
          _
        %s191 = sand.u32 %s73, 1
        %s192 = scalar_lea.sflag [#allocation6], %s191
        %s193 = sand.u32 %s73, 1
        %s194 = smul.addr %s193, 4096
        %s195 = scalar_lea.vmem [#allocation5], %s194
        // Predicated region
        $region33: #{pallas_linear.1} parent=27 // pred_check
          %p196 = pneg %p86
        $region34: #{pallas_linear.1} parent=27 // pred_check_branch
          %198 = sbr.rel (%p196) target = $region36
        $region35: #{pallas_linear.1} parent=27 // pred_region
          %199 = dma.done %s192, 65536
        $region36: #{pallas_linear.1} parent=27 // pred_fallthru
          _
        %s200 = sand.u32 %s43, 1
        %s201 = scalar_lea.sflag [#allocation4], %s200
        %s202 = sand.u32 %s43, 1
        %s203 = smul.addr %s202, 512
        %s204 = scalar_lea.vmem [#allocation3], %s203
        %p205 = pneg %p56
        %p206 = pneg %p53
        %s207 = sand.u32 %s73, 1
        %s208 = scalar_lea.sflag [#allocation6], %s207
        %s209 = sand.u32 %s73, 1
        %s210 = smul.addr %s209, 4096
        %s211 = scalar_lea.vmem [#allocation5], %s210
        %p212 = pneg %p86
        %p213 = pneg %p83
        %p214 = pneg %p112
        %p215 = pneg %p109
        %p216 = scmp.lt.s32.totalorder %s23, 1
        %s217 = scalar_select %p216, %s23, 1
        %s218 = smul.addr %s217, 2
        %s219 = scalar_lea.vmem %s2, %s218
        %s220 = smul.u32 %s23, 3
        %s221 = sadd.s32 %s220, %s24
        %s222 = smul.u32 256, %s221
        %s223 = smul.u32 %s23, 3
        %s224 = sadd.s32 %s223, %s24
        %s225 = smul.u32 256, %s224
        %p226 = scmp.lt.s32.totalorder %s23, 1
        %s227 = scalar_select %p226, %s23, 1
        %s228 = smul.addr %s227, 2
        %s229 = scalar_lea.vmem %s2, %s228
        %p230 = scmp.eq.s32.totalorder %s24, 0
        // Predicated region
        $region37: #{pallas_linear.1} parent=27 // pred_check
          %p231 = pneg %p230
        $region38: #{pallas_linear.1} parent=27 // pred_check_branch
          %233 = sbr.rel (%p231) target = $region40
        $region39: #{pallas_linear.1} parent=27 // pred_region
          %vm234 = vcmask 74752
          %235 = vst.msk [vmem:[#allocation2] sm:$0x3] %vm234, 0.0
        $region40: #{pallas_linear.1} parent=27 // pred_fallthru
          _
        %v236 = vld [vmem:[#allocation2] sm:$0x3]
        %v237 = vld [vmem:[%s186] sm:$0xff]
        %v238 = vld [vmem:[%s186 + $0x8] sm:$0xff]
        %v239 = vld [vmem:[%s186 + $0x10] sm:$0xff]
        %v240 = vld [vmem:[%s186 + $0x18] sm:$0xff]
        %v241 = vld [vmem:[%s186 + $0x20] sm:$0xff]
        %v242 = vld [vmem:[%s186 + $0x28] sm:$0xff]
        %v243 = vld [vmem:[%s186 + $0x30] sm:$0xff]
        %v244 = vld [vmem:[%s186 + $0x38] sm:$0xff]
        %v245 = vld [vmem:[%s186 + $0x40] sm:$0xff]
        %v246 = vld [vmem:[%s186 + $0x48] sm:$0xff]
        %v247 = vld [vmem:[%s186 + $0x50] sm:$0xff]
        %v248 = vld [vmem:[%s186 + $0x58] sm:$0xff]
        %v249 = vld [vmem:[%s186 + $0x60] sm:$0xff]
        %v250 = vld [vmem:[%s186 + $0x68] sm:$0xff]
        %v251 = vld [vmem:[%s186 + $0x70] sm:$0xff]
        %v252 = vld [vmem:[%s186 + $0x78] sm:$0xff]
        %v253 = vld [vmem:[%s186 + $0x80] sm:$0xff]
        %v254 = vld [vmem:[%s186 + $0x88] sm:$0xff]
        %v255 = vld [vmem:[%s186 + $0x90] sm:$0xff]
        %v256 = vld [vmem:[%s186 + $0x98] sm:$0xff]
        %v257 = vld [vmem:[%s186 + $0xa0] sm:$0xff]
        %v258 = vld [vmem:[%s186 + $0xa8] sm:$0xff]
        %v259 = vld [vmem:[%s186 + $0xb0] sm:$0xff]
        %v260 = vld [vmem:[%s186 + $0xb8] sm:$0xff]
        %v261 = vld [vmem:[%s186 + $0xc0] sm:$0xff]
        %v262 = vld [vmem:[%s186 + $0xc8] sm:$0xff]
        %v263 = vld [vmem:[%s186 + $0xd0] sm:$0xff]
        %v264 = vld [vmem:[%s186 + $0xd8] sm:$0xff]
        %v265 = vld [vmem:[%s186 + $0xe0] sm:$0xff]
        %v266 = vld [vmem:[%s186 + $0xe8] sm:$0xff]
        %v267 = vld [vmem:[%s186 + $0xf0] sm:$0xff]
        %v268 = vld [vmem:[%s186 + $0xf8] sm:$0xff]
        %v269 = vld [vmem:[%s186 + $0x100] sm:$0xff]
        %v270 = vld [vmem:[%s186 + $0x108] sm:$0xff]
        %v271 = vld [vmem:[%s186 + $0x110] sm:$0xff]
        %v272 = vld [vmem:[%s186 + $0x118] sm:$0xff]
        %v273 = vld [vmem:[%s186 + $0x120] sm:$0xff]
        %v274 = vld [vmem:[%s186 + $0x128] sm:$0xff]
        %v275 = vld [vmem:[%s186 + $0x130] sm:$0xff]
        %v276 = vld [vmem:[%s186 + $0x138] sm:$0xff]
        %v277 = vld [vmem:[%s186 + $0x140] sm:$0xff]
        %v278 = vld [vmem:[%s186 + $0x148] sm:$0xff]
        %v279 = vld [vmem:[%s186 + $0x150] sm:$0xff]
        %v280 = vld [vmem:[%s186 + $0x158] sm:$0xff]
        %v281 = vld [vmem:[%s186 + $0x160] sm:$0xff]
        %v282 = vld [vmem:[%s186 + $0x168] sm:$0xff]
        %v283 = vld [vmem:[%s186 + $0x170] sm:$0xff]
        %v284 = vld [vmem:[%s186 + $0x178] sm:$0xff]
        %v285 = vld [vmem:[%s186 + $0x180] sm:$0xff]
        %v286 = vld [vmem:[%s186 + $0x188] sm:$0xff]
        %v287 = vld [vmem:[%s186 + $0x190] sm:$0xff]
        %v288 = vld [vmem:[%s186 + $0x198] sm:$0xff]
        %v289 = vld [vmem:[%s186 + $0x1a0] sm:$0xff]
        %v290 = vld [vmem:[%s186 + $0x1a8] sm:$0xff]
        %v291 = vld [vmem:[%s186 + $0x1b0] sm:$0xff]
        %v292 = vld [vmem:[%s186 + $0x1b8] sm:$0xff]
        %v293 = vld [vmem:[%s186 + $0x1c0] sm:$0xff]
        %v294 = vld [vmem:[%s186 + $0x1c8] sm:$0xff]
        %v295 = vld [vmem:[%s186 + $0x1d0] sm:$0xff]
        %v296 = vld [vmem:[%s186 + $0x1d8] sm:$0xff]
        %v297 = vld [vmem:[%s186 + $0x1e0] sm:$0xff]
        %v298 = vld [vmem:[%s186 + $0x1e8] sm:$0xff]
        %v299 = vld [vmem:[%s186 + $0x1f0] sm:$0xff]
        %v300 = vld [vmem:[%s186 + $0x1f8] sm:$0xff]
        %v301 = vld [vmem:[%s195] sm:$0xff]
        %v302 = vld [vmem:[%s195 + $0x8] sm:$0xff]
        %v303 = vld [vmem:[%s195 + $0x10] sm:$0xff]
        %v304 = vld [vmem:[%s195 + $0x18] sm:$0xff]
        %v305 = vld [vmem:[%s195 + $0x20] sm:$0xff]
        %v306 = vld [vmem:[%s195 + $0x28] sm:$0xff]
        %v307 = vld [vmem:[%s195 + $0x30] sm:$0xff]
        %v308 = vld [vmem:[%s195 + $0x38] sm:$0xff]
        %v309 = vld [vmem:[%s195 + $0x40] sm:$0xff]
        %v310 = vld [vmem:[%s195 + $0x48] sm:$0xff]
        %v311 = vld [vmem:[%s195 + $0x50] sm:$0xff]
        %v312 = vld [vmem:[%s195 + $0x58] sm:$0xff]
        %v313 = vld [vmem:[%s195 + $0x60] sm:$0xff]
        %v314 = vld [vmem:[%s195 + $0x68] sm:$0xff]
        %v315 = vld [vmem:[%s195 + $0x70] sm:$0xff]
        %v316 = vld [vmem:[%s195 + $0x78] sm:$0xff]
        %v317 = vld [vmem:[%s195 + $0x80] sm:$0xff]
        %v318 = vld [vmem:[%s195 + $0x88] sm:$0xff]
        %v319 = vld [vmem:[%s195 + $0x90] sm:$0xff]
        %v320 = vld [vmem:[%s195 + $0x98] sm:$0xff]
        %v321 = vld [vmem:[%s195 + $0xa0] sm:$0xff]
        %v322 = vld [vmem:[%s195 + $0xa8] sm:$0xff]
        %v323 = vld [vmem:[%s195 + $0xb0] sm:$0xff]
        %v324 = vld [vmem:[%s195 + $0xb8] sm:$0xff]
        %v325 = vld [vmem:[%s195 + $0xc0] sm:$0xff]
        %v326 = vld [vmem:[%s195 + $0xc8] sm:$0xff]
        %v327 = vld [vmem:[%s195 + $0xd0] sm:$0xff]
        %v328 = vld [vmem:[%s195 + $0xd8] sm:$0xff]
        %v329 = vld [vmem:[%s195 + $0xe0] sm:$0xff]
        %v330 = vld [vmem:[%s195 + $0xe8] sm:$0xff]
        %v331 = vld [vmem:[%s195 + $0xf0] sm:$0xff]
        %v332 = vld [vmem:[%s195 + $0xf8] sm:$0xff]
        %v333 = vld [vmem:[%s195 + $0x100] sm:$0xff]
        %v334 = vld [vmem:[%s195 + $0x108] sm:$0xff]
        %v335 = vld [vmem:[%s195 + $0x110] sm:$0xff]
        %v336 = vld [vmem:[%s195 + $0x118] sm:$0xff]
        %v337 = vld [vmem:[%s195 + $0x120] sm:$0xff]
        %v338 = vld [vmem:[%s195 + $0x128] sm:$0xff]
        %v339 = vld [vmem:[%s195 + $0x130] sm:$0xff]
        %v340 = vld [vmem:[%s195 + $0x138] sm:$0xff]
        %v341 = vld [vmem:[%s195 + $0x140] sm:$0xff]
        %v342 = vld [vmem:[%s195 + $0x148] sm:$0xff]
        %v343 = vld [vmem:[%s195 + $0x150] sm:$0xff]
        %v344 = vld [vmem:[%s195 + $0x158] sm:$0xff]
        %v345 = vld [vmem:[%s195 + $0x160] sm:$0xff]
        %v346 = vld [vmem:[%s195 + $0x168] sm:$0xff]
        %v347 = vld [vmem:[%s195 + $0x170] sm:$0xff]
        %v348 = vld [vmem:[%s195 + $0x178] sm:$0xff]
        %v349 = vld [vmem:[%s195 + $0x180] sm:$0xff]
        %v350 = vld [vmem:[%s195 + $0x188] sm:$0xff]
        %v351 = vld [vmem:[%s195 + $0x190] sm:$0xff]
        %v352 = vld [vmem:[%s195 + $0x198] sm:$0xff]
        %v353 = vld [vmem:[%s195 + $0x1a0] sm:$0xff]
        %v354 = vld [vmem:[%s195 + $0x1a8] sm:$0xff]
        %v355 = vld [vmem:[%s195 + $0x1b0] sm:$0xff]
        %v356 = vld [vmem:[%s195 + $0x1b8] sm:$0xff]
        %v357 = vld [vmem:[%s195 + $0x1c0] sm:$0xff]
        %v358 = vld [vmem:[%s195 + $0x1c8] sm:$0xff]
        %v359 = vld [vmem:[%s195 + $0x1d0] sm:$0xff]
        %v360 = vld [vmem:[%s195 + $0x1d8] sm:$0xff]
        %v361 = vld [vmem:[%s195 + $0x1e0] sm:$0xff]
        %v362 = vld [vmem:[%s195 + $0x1e8] sm:$0xff]
        %v363 = vld [vmem:[%s195 + $0x1f0] sm:$0xff]
        %v364 = vld [vmem:[%s195 + $0x1f8] sm:$0xff]
        %v365 = vld [vmem:[%s195 + $0x200] sm:$0xff]
        %v366 = vld [vmem:[%s195 + $0x208] sm:$0xff]
        %v367 = vld [vmem:[%s195 + $0x210] sm:$0xff]
        %v368 = vld [vmem:[%s195 + $0x218] sm:$0xff]
        %v369 = vld [vmem:[%s195 + $0x220] sm:$0xff]
        %v370 = vld [vmem:[%s195 + $0x228] sm:$0xff]
        %v371 = vld [vmem:[%s195 + $0x230] sm:$0xff]
        %v372 = vld [vmem:[%s195 + $0x238] sm:$0xff]
        %v373 = vld [vmem:[%s195 + $0x240] sm:$0xff]
        %v374 = vld [vmem:[%s195 + $0x248] sm:$0xff]
        %v375 = vld [vmem:[%s195 + $0x250] sm:$0xff]
        %v376 = vld [vmem:[%s195 + $0x258] sm:$0xff]
        %v377 = vld [vmem:[%s195 + $0x260] sm:$0xff]
        %v378 = vld [vmem:[%s195 + $0x268] sm:$0xff]
        %v379 = vld [vmem:[%s195 + $0x270] sm:$0xff]
        %v380 = vld [vmem:[%s195 + $0x278] sm:$0xff]
        %v381 = vld [vmem:[%s195 + $0x280] sm:$0xff]
        %v382 = vld [vmem:[%s195 + $0x288] sm:$0xff]
        %v383 = vld [vmem:[%s195 + $0x290] sm:$0xff]
        %v384 = vld [vmem:[%s195 + $0x298] sm:$0xff]
        %v385 = vld [vmem:[%s195 + $0x2a0] sm:$0xff]
        %v386 = vld [vmem:[%s195 + $0x2a8] sm:$0xff]
        %v387 = vld [vmem:[%s195 + $0x2b0] sm:$0xff]
        %v388 = vld [vmem:[%s195 + $0x2b8] sm:$0xff]
        %v389 = vld [vmem:[%s195 + $0x2c0] sm:$0xff]
        %v390 = vld [vmem:[%s195 + $0x2c8] sm:$0xff]
        %v391 = vld [vmem:[%s195 + $0x2d0] sm:$0xff]
        %v392 = vld [vmem:[%s195 + $0x2d8] sm:$0xff]
        %v393 = vld [vmem:[%s195 + $0x2e0] sm:$0xff]
        %v394 = vld [vmem:[%s195 + $0x2e8] sm:$0xff]
        %v395 = vld [vmem:[%s195 + $0x2f0] sm:$0xff]
        %v396 = vld [vmem:[%s195 + $0x2f8] sm:$0xff]
        %v397 = vld [vmem:[%s195 + $0x300] sm:$0xff]
        %v398 = vld [vmem:[%s195 + $0x308] sm:$0xff]
        %v399 = vld [vmem:[%s195 + $0x310] sm:$0xff]
        %v400 = vld [vmem:[%s195 + $0x318] sm:$0xff]
        %v401 = vld [vmem:[%s195 + $0x320] sm:$0xff]
        %v402 = vld [vmem:[%s195 + $0x328] sm:$0xff]
        %v403 = vld [vmem:[%s195 + $0x330] sm:$0xff]
        %v404 = vld [vmem:[%s195 + $0x338] sm:$0xff]
        %v405 = vld [vmem:[%s195 + $0x340] sm:$0xff]
        %v406 = vld [vmem:[%s195 + $0x348] sm:$0xff]
        %v407 = vld [vmem:[%s195 + $0x350] sm:$0xff]
        %v408 = vld [vmem:[%s195 + $0x358] sm:$0xff]
        %v409 = vld [vmem:[%s195 + $0x360] sm:$0xff]
        %v410 = vld [vmem:[%s195 + $0x368] sm:$0xff]
        %v411 = vld [vmem:[%s195 + $0x370] sm:$0xff]
        %v412 = vld [vmem:[%s195 + $0x378] sm:$0xff]
        %v413 = vld [vmem:[%s195 + $0x380] sm:$0xff]
        %v414 = vld [vmem:[%s195 + $0x388] sm:$0xff]
        %v415 = vld [vmem:[%s195 + $0x390] sm:$0xff]
        %v416 = vld [vmem:[%s195 + $0x398] sm:$0xff]
        %v417 = vld [vmem:[%s195 + $0x3a0] sm:$0xff]
        %v418 = vld [vmem:[%s195 + $0x3a8] sm:$0xff]
        %v419 = vld [vmem:[%s195 + $0x3b0] sm:$0xff]
        %v420 = vld [vmem:[%s195 + $0x3b8] sm:$0xff]
        %v421 = vld [vmem:[%s195 + $0x3c0] sm:$0xff]
        %v422 = vld [vmem:[%s195 + $0x3c8] sm:$0xff]
        %v423 = vld [vmem:[%s195 + $0x3d0] sm:$0xff]
        %v424 = vld [vmem:[%s195 + $0x3d8] sm:$0xff]
        %v425 = vld [vmem:[%s195 + $0x3e0] sm:$0xff]
        %v426 = vld [vmem:[%s195 + $0x3e8] sm:$0xff]
        %v427 = vld [vmem:[%s195 + $0x3f0] sm:$0xff]
        %v428 = vld [vmem:[%s195 + $0x3f8] sm:$0xff]
        %v429 = vld [vmem:[%s195 + $0x400] sm:$0xff]
        %v430 = vld [vmem:[%s195 + $0x408] sm:$0xff]
        %v431 = vld [vmem:[%s195 + $0x410] sm:$0xff]
        %v432 = vld [vmem:[%s195 + $0x418] sm:$0xff]
        %v433 = vld [vmem:[%s195 + $0x420] sm:$0xff]
        %v434 = vld [vmem:[%s195 + $0x428] sm:$0xff]
        %v435 = vld [vmem:[%s195 + $0x430] sm:$0xff]
        %v436 = vld [vmem:[%s195 + $0x438] sm:$0xff]
        %v437 = vld [vmem:[%s195 + $0x440] sm:$0xff]
        %v438 = vld [vmem:[%s195 + $0x448] sm:$0xff]
        %v439 = vld [vmem:[%s195 + $0x450] sm:$0xff]
        %v440 = vld [vmem:[%s195 + $0x458] sm:$0xff]
        %v441 = vld [vmem:[%s195 + $0x460] sm:$0xff]
        %v442 = vld [vmem:[%s195 + $0x468] sm:$0xff]
        %v443 = vld [vmem:[%s195 + $0x470] sm:$0xff]
        %v444 = vld [vmem:[%s195 + $0x478] sm:$0xff]
        %v445 = vld [vmem:[%s195 + $0x480] sm:$0xff]
        %v446 = vld [vmem:[%s195 + $0x488] sm:$0xff]
        %v447 = vld [vmem:[%s195 + $0x490] sm:$0xff]
        %v448 = vld [vmem:[%s195 + $0x498] sm:$0xff]
        %v449 = vld [vmem:[%s195 + $0x4a0] sm:$0xff]
        %v450 = vld [vmem:[%s195 + $0x4a8] sm:$0xff]
        %v451 = vld [vmem:[%s195 + $0x4b0] sm:$0xff]
        %v452 = vld [vmem:[%s195 + $0x4b8] sm:$0xff]
        %v453 = vld [vmem:[%s195 + $0x4c0] sm:$0xff]
        %v454 = vld [vmem:[%s195 + $0x4c8] sm:$0xff]
        %v455 = vld [vmem:[%s195 + $0x4d0] sm:$0xff]
        %v456 = vld [vmem:[%s195 + $0x4d8] sm:$0xff]
        %v457 = vld [vmem:[%s195 + $0x4e0] sm:$0xff]
        %v458 = vld [vmem:[%s195 + $0x4e8] sm:$0xff]
        %v459 = vld [vmem:[%s195 + $0x4f0] sm:$0xff]
        %v460 = vld [vmem:[%s195 + $0x4f8] sm:$0xff]
        %v461 = vld [vmem:[%s195 + $0x500] sm:$0xff]
        %v462 = vld [vmem:[%s195 + $0x508] sm:$0xff]
        %v463 = vld [vmem:[%s195 + $0x510] sm:$0xff]
        %v464 = vld [vmem:[%s195 + $0x518] sm:$0xff]
        %v465 = vld [vmem:[%s195 + $0x520] sm:$0xff]
        %v466 = vld [vmem:[%s195 + $0x528] sm:$0xff]
        %v467 = vld [vmem:[%s195 + $0x530] sm:$0xff]
        %v468 = vld [vmem:[%s195 + $0x538] sm:$0xff]
        %v469 = vld [vmem:[%s195 + $0x540] sm:$0xff]
        %v470 = vld [vmem:[%s195 + $0x548] sm:$0xff]
        %v471 = vld [vmem:[%s195 + $0x550] sm:$0xff]
        %v472 = vld [vmem:[%s195 + $0x558] sm:$0xff]
        %v473 = vld [vmem:[%s195 + $0x560] sm:$0xff]
        %v474 = vld [vmem:[%s195 + $0x568] sm:$0xff]
        %v475 = vld [vmem:[%s195 + $0x570] sm:$0xff]
        %v476 = vld [vmem:[%s195 + $0x578] sm:$0xff]
        %v477 = vld [vmem:[%s195 + $0x580] sm:$0xff]
        %v478 = vld [vmem:[%s195 + $0x588] sm:$0xff]
        %v479 = vld [vmem:[%s195 + $0x590] sm:$0xff]
        %v480 = vld [vmem:[%s195 + $0x598] sm:$0xff]
        %v481 = vld [vmem:[%s195 + $0x5a0] sm:$0xff]
        %v482 = vld [vmem:[%s195 + $0x5a8] sm:$0xff]
        %v483 = vld [vmem:[%s195 + $0x5b0] sm:$0xff]
        %v484 = vld [vmem:[%s195 + $0x5b8] sm:$0xff]
        %v485 = vld [vmem:[%s195 + $0x5c0] sm:$0xff]
        %v486 = vld [vmem:[%s195 + $0x5c8] sm:$0xff]
        %v487 = vld [vmem:[%s195 + $0x5d0] sm:$0xff]
        %v488 = vld [vmem:[%s195 + $0x5d8] sm:$0xff]
        %v489 = vld [vmem:[%s195 + $0x5e0] sm:$0xff]
        %v490 = vld [vmem:[%s195 + $0x5e8] sm:$0xff]
        %v491 = vld [vmem:[%s195 + $0x5f0] sm:$0xff]
        %v492 = vld [vmem:[%s195 + $0x5f8] sm:$0xff]
        %v493 = vld [vmem:[%s195 + $0x600] sm:$0xff]
        %v494 = vld [vmem:[%s195 + $0x608] sm:$0xff]
        %v495 = vld [vmem:[%s195 + $0x610] sm:$0xff]
        %v496 = vld [vmem:[%s195 + $0x618] sm:$0xff]
        %v497 = vld [vmem:[%s195 + $0x620] sm:$0xff]
        %v498 = vld [vmem:[%s195 + $0x628] sm:$0xff]
        %v499 = vld [vmem:[%s195 + $0x630] sm:$0xff]
        %v500 = vld [vmem:[%s195 + $0x638] sm:$0xff]
        %v501 = vld [vmem:[%s195 + $0x640] sm:$0xff]
        %v502 = vld [vmem:[%s195 + $0x648] sm:$0xff]
        %v503 = vld [vmem:[%s195 + $0x650] sm:$0xff]
        %v504 = vld [vmem:[%s195 + $0x658] sm:$0xff]
        %v505 = vld [vmem:[%s195 + $0x660] sm:$0xff]
        %v506 = vld [vmem:[%s195 + $0x668] sm:$0xff]
        %v507 = vld [vmem:[%s195 + $0x670] sm:$0xff]
        %v508 = vld [vmem:[%s195 + $0x678] sm:$0xff]
        %v509 = vld [vmem:[%s195 + $0x680] sm:$0xff]
        %v510 = vld [vmem:[%s195 + $0x688] sm:$0xff]
        %v511 = vld [vmem:[%s195 + $0x690] sm:$0xff]
        %v512 = vld [vmem:[%s195 + $0x698] sm:$0xff]
        %v513 = vld [vmem:[%s195 + $0x6a0] sm:$0xff]
        %v514 = vld [vmem:[%s195 + $0x6a8] sm:$0xff]
        %v515 = vld [vmem:[%s195 + $0x6b0] sm:$0xff]
        %v516 = vld [vmem:[%s195 + $0x6b8] sm:$0xff]
        %v517 = vld [vmem:[%s195 + $0x6c0] sm:$0xff]
        %v518 = vld [vmem:[%s195 + $0x6c8] sm:$0xff]
        %v519 = vld [vmem:[%s195 + $0x6d0] sm:$0xff]
        %v520 = vld [vmem:[%s195 + $0x6d8] sm:$0xff]
        %v521 = vld [vmem:[%s195 + $0x6e0] sm:$0xff]
        %v522 = vld [vmem:[%s195 + $0x6e8] sm:$0xff]
        %v523 = vld [vmem:[%s195 + $0x6f0] sm:$0xff]
        %v524 = vld [vmem:[%s195 + $0x6f8] sm:$0xff]
        %v525 = vld [vmem:[%s195 + $0x700] sm:$0xff]
        %v526 = vld [vmem:[%s195 + $0x708] sm:$0xff]
        %v527 = vld [vmem:[%s195 + $0x710] sm:$0xff]
        %v528 = vld [vmem:[%s195 + $0x718] sm:$0xff]
        %v529 = vld [vmem:[%s195 + $0x720] sm:$0xff]
        %v530 = vld [vmem:[%s195 + $0x728] sm:$0xff]
        %v531 = vld [vmem:[%s195 + $0x730] sm:$0xff]
        %v532 = vld [vmem:[%s195 + $0x738] sm:$0xff]
        %v533 = vld [vmem:[%s195 + $0x740] sm:$0xff]
        %v534 = vld [vmem:[%s195 + $0x748] sm:$0xff]
        %v535 = vld [vmem:[%s195 + $0x750] sm:$0xff]
        %v536 = vld [vmem:[%s195 + $0x758] sm:$0xff]
        %v537 = vld [vmem:[%s195 + $0x760] sm:$0xff]
        %v538 = vld [vmem:[%s195 + $0x768] sm:$0xff]
        %v539 = vld [vmem:[%s195 + $0x770] sm:$0xff]
        %v540 = vld [vmem:[%s195 + $0x778] sm:$0xff]
        %v541 = vld [vmem:[%s195 + $0x780] sm:$0xff]
        %v542 = vld [vmem:[%s195 + $0x788] sm:$0xff]
        %v543 = vld [vmem:[%s195 + $0x790] sm:$0xff]
        %v544 = vld [vmem:[%s195 + $0x798] sm:$0xff]
        %v545 = vld [vmem:[%s195 + $0x7a0] sm:$0xff]
        %v546 = vld [vmem:[%s195 + $0x7a8] sm:$0xff]
        %v547 = vld [vmem:[%s195 + $0x7b0] sm:$0xff]
        %v548 = vld [vmem:[%s195 + $0x7b8] sm:$0xff]
        %v549 = vld [vmem:[%s195 + $0x7c0] sm:$0xff]
        %v550 = vld [vmem:[%s195 + $0x7c8] sm:$0xff]
        %v551 = vld [vmem:[%s195 + $0x7d0] sm:$0xff]
        %v552 = vld [vmem:[%s195 + $0x7d8] sm:$0xff]
        %v553 = vld [vmem:[%s195 + $0x7e0] sm:$0xff]
        %v554 = vld [vmem:[%s195 + $0x7e8] sm:$0xff]
        %v555 = vld [vmem:[%s195 + $0x7f0] sm:$0xff]
        %v556 = vld [vmem:[%s195 + $0x7f8] sm:$0xff]
        %v557 = vld [vmem:[%s195 + $0x800] sm:$0x3]
        %v558 = vld [vmem:[%s195 + $0x808] sm:$0x3]
        %v559 = vld [vmem:[%s195 + $0x810] sm:$0x3]
        %v560 = vld [vmem:[%s195 + $0x818] sm:$0x3]
        %v561 = vld [vmem:[%s195 + $0x820] sm:$0x3]
        %v562 = vld [vmem:[%s195 + $0x828] sm:$0x3]
        %v563 = vld [vmem:[%s195 + $0x830] sm:$0x3]
        %v564 = vld [vmem:[%s195 + $0x838] sm:$0x3]
        %v565 = vld [vmem:[%s195 + $0x840] sm:$0x3]
        %v566 = vld [vmem:[%s195 + $0x848] sm:$0x3]
        %v567 = vld [vmem:[%s195 + $0x850] sm:$0x3]
        %v568 = vld [vmem:[%s195 + $0x858] sm:$0x3]
        %v569 = vld [vmem:[%s195 + $0x860] sm:$0x3]
        %v570 = vld [vmem:[%s195 + $0x868] sm:$0x3]
        %v571 = vld [vmem:[%s195 + $0x870] sm:$0x3]
        %v572 = vld [vmem:[%s195 + $0x878] sm:$0x3]
        %v573 = vld [vmem:[%s195 + $0x880] sm:$0x3]
        %v574 = vld [vmem:[%s195 + $0x888] sm:$0x3]
        %v575 = vld [vmem:[%s195 + $0x890] sm:$0x3]
        %v576 = vld [vmem:[%s195 + $0x898] sm:$0x3]
        %v577 = vld [vmem:[%s195 + $0x8a0] sm:$0x3]
        %v578 = vld [vmem:[%s195 + $0x8a8] sm:$0x3]
        %v579 = vld [vmem:[%s195 + $0x8b0] sm:$0x3]
        %v580 = vld [vmem:[%s195 + $0x8b8] sm:$0x3]
        %v581 = vld [vmem:[%s195 + $0x8c0] sm:$0x3]
        %v582 = vld [vmem:[%s195 + $0x8c8] sm:$0x3]
        %v583 = vld [vmem:[%s195 + $0x8d0] sm:$0x3]
        %v584 = vld [vmem:[%s195 + $0x8d8] sm:$0x3]
        %v585 = vld [vmem:[%s195 + $0x8e0] sm:$0x3]
        %v586 = vld [vmem:[%s195 + $0x8e8] sm:$0x3]
        %v587 = vld [vmem:[%s195 + $0x8f0] sm:$0x3]
        %v588 = vld [vmem:[%s195 + $0x8f8] sm:$0x3]
        %v589 = vld [vmem:[%s195 + $0x900] sm:$0x3]
        %v590 = vld [vmem:[%s195 + $0x908] sm:$0x3]
        %v591 = vld [vmem:[%s195 + $0x910] sm:$0x3]
        %v592 = vld [vmem:[%s195 + $0x918] sm:$0x3]
        %v593 = vld [vmem:[%s195 + $0x920] sm:$0x3]
        %v594 = vld [vmem:[%s195 + $0x928] sm:$0x3]
        %v595 = vld [vmem:[%s195 + $0x930] sm:$0x3]
        %v596 = vld [vmem:[%s195 + $0x938] sm:$0x3]
        %v597 = vld [vmem:[%s195 + $0x940] sm:$0x3]
        %v598 = vld [vmem:[%s195 + $0x948] sm:$0x3]
        %v599 = vld [vmem:[%s195 + $0x950] sm:$0x3]
        %v600 = vld [vmem:[%s195 + $0x958] sm:$0x3]
        %v601 = vld [vmem:[%s195 + $0x960] sm:$0x3]
        %v602 = vld [vmem:[%s195 + $0x968] sm:$0x3]
        %v603 = vld [vmem:[%s195 + $0x970] sm:$0x3]
        %v604 = vld [vmem:[%s195 + $0x978] sm:$0x3]
        %v605 = vld [vmem:[%s195 + $0x980] sm:$0x3]
        %v606 = vld [vmem:[%s195 + $0x988] sm:$0x3]
        %v607 = vld [vmem:[%s195 + $0x990] sm:$0x3]
        %v608 = vld [vmem:[%s195 + $0x998] sm:$0x3]
        %v609 = vld [vmem:[%s195 + $0x9a0] sm:$0x3]
        %v610 = vld [vmem:[%s195 + $0x9a8] sm:$0x3]
        %v611 = vld [vmem:[%s195 + $0x9b0] sm:$0x3]
        %v612 = vld [vmem:[%s195 + $0x9b8] sm:$0x3]
        %v613 = vld [vmem:[%s195 + $0x9c0] sm:$0x3]
        %v614 = vld [vmem:[%s195 + $0x9c8] sm:$0x3]
        %v615 = vld [vmem:[%s195 + $0x9d0] sm:$0x3]
        %v616 = vld [vmem:[%s195 + $0x9d8] sm:$0x3]
        %v617 = vld [vmem:[%s195 + $0x9e0] sm:$0x3]
        %v618 = vld [vmem:[%s195 + $0x9e8] sm:$0x3]
        %v619 = vld [vmem:[%s195 + $0x9f0] sm:$0x3]
        %v620 = vld [vmem:[%s195 + $0x9f8] sm:$0x3]
        %v621 = vld [vmem:[%s195 + $0xa00] sm:$0x3]
        %v622 = vld [vmem:[%s195 + $0xa08] sm:$0x3]
        %v623 = vld [vmem:[%s195 + $0xa10] sm:$0x3]
        %v624 = vld [vmem:[%s195 + $0xa18] sm:$0x3]
        %v625 = vld [vmem:[%s195 + $0xa20] sm:$0x3]
        %v626 = vld [vmem:[%s195 + $0xa28] sm:$0x3]
        %v627 = vld [vmem:[%s195 + $0xa30] sm:$0x3]
        %v628 = vld [vmem:[%s195 + $0xa38] sm:$0x3]
        %v629 = vld [vmem:[%s195 + $0xa40] sm:$0x3]
        %v630 = vld [vmem:[%s195 + $0xa48] sm:$0x3]
        %v631 = vld [vmem:[%s195 + $0xa50] sm:$0x3]
        %v632 = vld [vmem:[%s195 + $0xa58] sm:$0x3]
        %v633 = vld [vmem:[%s195 + $0xa60] sm:$0x3]
        %v634 = vld [vmem:[%s195 + $0xa68] sm:$0x3]
        %v635 = vld [vmem:[%s195 + $0xa70] sm:$0x3]
        %v636 = vld [vmem:[%s195 + $0xa78] sm:$0x3]
        %v637 = vld [vmem:[%s195 + $0xa80] sm:$0x3]
        %v638 = vld [vmem:[%s195 + $0xa88] sm:$0x3]
        %v639 = vld [vmem:[%s195 + $0xa90] sm:$0x3]
        %v640 = vld [vmem:[%s195 + $0xa98] sm:$0x3]
        %v641 = vld [vmem:[%s195 + $0xaa0] sm:$0x3]
        %v642 = vld [vmem:[%s195 + $0xaa8] sm:$0x3]
        %v643 = vld [vmem:[%s195 + $0xab0] sm:$0x3]
        %v644 = vld [vmem:[%s195 + $0xab8] sm:$0x3]
        %v645 = vld [vmem:[%s195 + $0xac0] sm:$0x3]
        %v646 = vld [vmem:[%s195 + $0xac8] sm:$0x3]
        %v647 = vld [vmem:[%s195 + $0xad0] sm:$0x3]
        %v648 = vld [vmem:[%s195 + $0xad8] sm:$0x3]
        %v649 = vld [vmem:[%s195 + $0xae0] sm:$0x3]
        %v650 = vld [vmem:[%s195 + $0xae8] sm:$0x3]
        %v651 = vld [vmem:[%s195 + $0xaf0] sm:$0x3]
        %v652 = vld [vmem:[%s195 + $0xaf8] sm:$0x3]
        %v653 = vld [vmem:[%s195 + $0xb00] sm:$0x3]
        %v654 = vld [vmem:[%s195 + $0xb08] sm:$0x3]
        %v655 = vld [vmem:[%s195 + $0xb10] sm:$0x3]
        %v656 = vld [vmem:[%s195 + $0xb18] sm:$0x3]
        %v657 = vld [vmem:[%s195 + $0xb20] sm:$0x3]
        %v658 = vld [vmem:[%s195 + $0xb28] sm:$0x3]
        %v659 = vld [vmem:[%s195 + $0xb30] sm:$0x3]
        %v660 = vld [vmem:[%s195 + $0xb38] sm:$0x3]
        %v661 = vld [vmem:[%s195 + $0xb40] sm:$0x3]
        %v662 = vld [vmem:[%s195 + $0xb48] sm:$0x3]
        %v663 = vld [vmem:[%s195 + $0xb50] sm:$0x3]
        %v664 = vld [vmem:[%s195 + $0xb58] sm:$0x3]
        %v665 = vld [vmem:[%s195 + $0xb60] sm:$0x3]
        %v666 = vld [vmem:[%s195 + $0xb68] sm:$0x3]
        %v667 = vld [vmem:[%s195 + $0xb70] sm:$0x3]
        %v668 = vld [vmem:[%s195 + $0xb78] sm:$0x3]
        %v669 = vld [vmem:[%s195 + $0xb80] sm:$0x3]
        %v670 = vld [vmem:[%s195 + $0xb88] sm:$0x3]
        %v671 = vld [vmem:[%s195 + $0xb90] sm:$0x3]
        %v672 = vld [vmem:[%s195 + $0xb98] sm:$0x3]
        %v673 = vld [vmem:[%s195 + $0xba0] sm:$0x3]
        %v674 = vld [vmem:[%s195 + $0xba8] sm:$0x3]
        %v675 = vld [vmem:[%s195 + $0xbb0] sm:$0x3]
        %v676 = vld [vmem:[%s195 + $0xbb8] sm:$0x3]
        %v677 = vld [vmem:[%s195 + $0xbc0] sm:$0x3]
        %v678 = vld [vmem:[%s195 + $0xbc8] sm:$0x3]
        %v679 = vld [vmem:[%s195 + $0xbd0] sm:$0x3]
        %v680 = vld [vmem:[%s195 + $0xbd8] sm:$0x3]
        %v681 = vld [vmem:[%s195 + $0xbe0] sm:$0x3]
        %v682 = vld [vmem:[%s195 + $0xbe8] sm:$0x3]
        %v683 = vld [vmem:[%s195 + $0xbf0] sm:$0x3]
        %v684 = vld [vmem:[%s195 + $0xbf8] sm:$0x3]
        %v685 = vld [vmem:[%s195 + $0xc00] sm:$0x3]
        %v686 = vld [vmem:[%s195 + $0xc08] sm:$0x3]
        %v687 = vld [vmem:[%s195 + $0xc10] sm:$0x3]
        %v688 = vld [vmem:[%s195 + $0xc18] sm:$0x3]
        %v689 = vld [vmem:[%s195 + $0xc20] sm:$0x3]
        %v690 = vld [vmem:[%s195 + $0xc28] sm:$0x3]
        %v691 = vld [vmem:[%s195 + $0xc30] sm:$0x3]
        %v692 = vld [vmem:[%s195 + $0xc38] sm:$0x3]
        %v693 = vld [vmem:[%s195 + $0xc40] sm:$0x3]
        %v694 = vld [vmem:[%s195 + $0xc48] sm:$0x3]
        %v695 = vld [vmem:[%s195 + $0xc50] sm:$0x3]
        %v696 = vld [vmem:[%s195 + $0xc58] sm:$0x3]
        %v697 = vld [vmem:[%s195 + $0xc60] sm:$0x3]
        %v698 = vld [vmem:[%s195 + $0xc68] sm:$0x3]
        %v699 = vld [vmem:[%s195 + $0xc70] sm:$0x3]
        %v700 = vld [vmem:[%s195 + $0xc78] sm:$0x3]
        %v701 = vld [vmem:[%s195 + $0xc80] sm:$0x3]
        %v702 = vld [vmem:[%s195 + $0xc88] sm:$0x3]
        %v703 = vld [vmem:[%s195 + $0xc90] sm:$0x3]
        %v704 = vld [vmem:[%s195 + $0xc98] sm:$0x3]
        %v705 = vld [vmem:[%s195 + $0xca0] sm:$0x3]
        %v706 = vld [vmem:[%s195 + $0xca8] sm:$0x3]
        %v707 = vld [vmem:[%s195 + $0xcb0] sm:$0x3]
        %v708 = vld [vmem:[%s195 + $0xcb8] sm:$0x3]
        %v709 = vld [vmem:[%s195 + $0xcc0] sm:$0x3]
        %v710 = vld [vmem:[%s195 + $0xcc8] sm:$0x3]
        %v711 = vld [vmem:[%s195 + $0xcd0] sm:$0x3]
        %v712 = vld [vmem:[%s195 + $0xcd8] sm:$0x3]
        %v713 = vld [vmem:[%s195 + $0xce0] sm:$0x3]
        %v714 = vld [vmem:[%s195 + $0xce8] sm:$0x3]
        %v715 = vld [vmem:[%s195 + $0xcf0] sm:$0x3]
        %v716 = vld [vmem:[%s195 + $0xcf8] sm:$0x3]
        %v717 = vld [vmem:[%s195 + $0xd00] sm:$0x3]
        %v718 = vld [vmem:[%s195 + $0xd08] sm:$0x3]
        %v719 = vld [vmem:[%s195 + $0xd10] sm:$0x3]
        %v720 = vld [vmem:[%s195 + $0xd18] sm:$0x3]
        %v721 = vld [vmem:[%s195 + $0xd20] sm:$0x3]
        %v722 = vld [vmem:[%s195 + $0xd28] sm:$0x3]
        %v723 = vld [vmem:[%s195 + $0xd30] sm:$0x3]
        %v724 = vld [vmem:[%s195 + $0xd38] sm:$0x3]
        %v725 = vld [vmem:[%s195 + $0xd40] sm:$0x3]
        %v726 = vld [vmem:[%s195 + $0xd48] sm:$0x3]
        %v727 = vld [vmem:[%s195 + $0xd50] sm:$0x3]
        %v728 = vld [vmem:[%s195 + $0xd58] sm:$0x3]
        %v729 = vld [vmem:[%s195 + $0xd60] sm:$0x3]
        %v730 = vld [vmem:[%s195 + $0xd68] sm:$0x3]
        %v731 = vld [vmem:[%s195 + $0xd70] sm:$0x3]
        %v732 = vld [vmem:[%s195 + $0xd78] sm:$0x3]
        %v733 = vld [vmem:[%s195 + $0xd80] sm:$0x3]
        %v734 = vld [vmem:[%s195 + $0xd88] sm:$0x3]
        %v735 = vld [vmem:[%s195 + $0xd90] sm:$0x3]
        %v736 = vld [vmem:[%s195 + $0xd98] sm:$0x3]
        %v737 = vld [vmem:[%s195 + $0xda0] sm:$0x3]
        %v738 = vld [vmem:[%s195 + $0xda8] sm:$0x3]
        %v739 = vld [vmem:[%s195 + $0xdb0] sm:$0x3]
        %v740 = vld [vmem:[%s195 + $0xdb8] sm:$0x3]
        %v741 = vld [vmem:[%s195 + $0xdc0] sm:$0x3]
        %v742 = vld [vmem:[%s195 + $0xdc8] sm:$0x3]
        %v743 = vld [vmem:[%s195 + $0xdd0] sm:$0x3]
        %v744 = vld [vmem:[%s195 + $0xdd8] sm:$0x3]
        %v745 = vld [vmem:[%s195 + $0xde0] sm:$0x3]
        %v746 = vld [vmem:[%s195 + $0xde8] sm:$0x3]
        %v747 = vld [vmem:[%s195 + $0xdf0] sm:$0x3]
        %v748 = vld [vmem:[%s195 + $0xdf8] sm:$0x3]
        %v749 = vld [vmem:[%s195 + $0xe00] sm:$0x3]
        %v750 = vld [vmem:[%s195 + $0xe08] sm:$0x3]
        %v751 = vld [vmem:[%s195 + $0xe10] sm:$0x3]
        %v752 = vld [vmem:[%s195 + $0xe18] sm:$0x3]
        %v753 = vld [vmem:[%s195 + $0xe20] sm:$0x3]
        %v754 = vld [vmem:[%s195 + $0xe28] sm:$0x3]
        %v755 = vld [vmem:[%s195 + $0xe30] sm:$0x3]
        %v756 = vld [vmem:[%s195 + $0xe38] sm:$0x3]
        %v757 = vld [vmem:[%s195 + $0xe40] sm:$0x3]
        %v758 = vld [vmem:[%s195 + $0xe48] sm:$0x3]
        %v759 = vld [vmem:[%s195 + $0xe50] sm:$0x3]
        %v760 = vld [vmem:[%s195 + $0xe58] sm:$0x3]
        %v761 = vld [vmem:[%s195 + $0xe60] sm:$0x3]
        %v762 = vld [vmem:[%s195 + $0xe68] sm:$0x3]
        %v763 = vld [vmem:[%s195 + $0xe70] sm:$0x3]
        %v764 = vld [vmem:[%s195 + $0xe78] sm:$0x3]
        %v765 = vld [vmem:[%s195 + $0xe80] sm:$0x3]
        %v766 = vld [vmem:[%s195 + $0xe88] sm:$0x3]
        %v767 = vld [vmem:[%s195 + $0xe90] sm:$0x3]
        %v768 = vld [vmem:[%s195 + $0xe98] sm:$0x3]
        %v769 = vld [vmem:[%s195 + $0xea0] sm:$0x3]
        %v770 = vld [vmem:[%s195 + $0xea8] sm:$0x3]
        %v771 = vld [vmem:[%s195 + $0xeb0] sm:$0x3]
        %v772 = vld [vmem:[%s195 + $0xeb8] sm:$0x3]
        %v773 = vld [vmem:[%s195 + $0xec0] sm:$0x3]
        %v774 = vld [vmem:[%s195 + $0xec8] sm:$0x3]
        %v775 = vld [vmem:[%s195 + $0xed0] sm:$0x3]
        %v776 = vld [vmem:[%s195 + $0xed8] sm:$0x3]
        %v777 = vld [vmem:[%s195 + $0xee0] sm:$0x3]
        %v778 = vld [vmem:[%s195 + $0xee8] sm:$0x3]
        %v779 = vld [vmem:[%s195 + $0xef0] sm:$0x3]
        %v780 = vld [vmem:[%s195 + $0xef8] sm:$0x3]
        %v781 = vld [vmem:[%s195 + $0xf00] sm:$0x3]
        %v782 = vld [vmem:[%s195 + $0xf08] sm:$0x3]
        %v783 = vld [vmem:[%s195 + $0xf10] sm:$0x3]
        %v784 = vld [vmem:[%s195 + $0xf18] sm:$0x3]
        %v785 = vld [vmem:[%s195 + $0xf20] sm:$0x3]
        %v786 = vld [vmem:[%s195 + $0xf28] sm:$0x3]
        %v787 = vld [vmem:[%s195 + $0xf30] sm:$0x3]
        %v788 = vld [vmem:[%s195 + $0xf38] sm:$0x3]
        %v789 = vld [vmem:[%s195 + $0xf40] sm:$0x3]
        %v790 = vld [vmem:[%s195 + $0xf48] sm:$0x3]
        %v791 = vld [vmem:[%s195 + $0xf50] sm:$0x3]
        %v792 = vld [vmem:[%s195 + $0xf58] sm:$0x3]
        %v793 = vld [vmem:[%s195 + $0xf60] sm:$0x3]
        %v794 = vld [vmem:[%s195 + $0xf68] sm:$0x3]
        %v795 = vld [vmem:[%s195 + $0xf70] sm:$0x3]
        %v796 = vld [vmem:[%s195 + $0xf78] sm:$0x3]
        %v797 = vld [vmem:[%s195 + $0xf80] sm:$0x3]
        %v798 = vld [vmem:[%s195 + $0xf88] sm:$0x3]
        %v799 = vld [vmem:[%s195 + $0xf90] sm:$0x3]
        %v800 = vld [vmem:[%s195 + $0xf98] sm:$0x3]
        %v801 = vld [vmem:[%s195 + $0xfa0] sm:$0x3]
        %v802 = vld [vmem:[%s195 + $0xfa8] sm:$0x3]
        %v803 = vld [vmem:[%s195 + $0xfb0] sm:$0x3]
        %v804 = vld [vmem:[%s195 + $0xfb8] sm:$0x3]
        %v805 = vld [vmem:[%s195 + $0xfc0] sm:$0x3]
        %v806 = vld [vmem:[%s195 + $0xfc8] sm:$0x3]
        %v807 = vld [vmem:[%s195 + $0xfd0] sm:$0x3]
        %v808 = vld [vmem:[%s195 + $0xfd8] sm:$0x3]
        %v809 = vld [vmem:[%s195 + $0xfe0] sm:$0x3]
        %v810 = vld [vmem:[%s195 + $0xfe8] sm:$0x3]
        %v811 = vld [vmem:[%s195 + $0xff0] sm:$0x3]
        %v812 = vld [vmem:[%s195 + $0xff8] sm:$0x3]
        %v877 = vcombine.high %v237, %v237
        %v879 = vunpack.c.l.s4 1983009808
        %v880 = vunpack.c.0.s8 %v879
        %v881 = vlaneseq
        %v882 = vshrl.u32 %v881, 7
        %v883 = vsub.s32 %v880, %v882
        %v884 = vrot.slane %v237, %v883
        %v886 = vunpack.c.l.s4 1983009808
        %v887 = vunpack.c.0.s8 %v886
        %v888 = vlaneseq
        %v889 = vshrl.u32 %v888, 7
        %v890 = vsub.s32 %v887, %v889
        %v891 = vrot.slane %v877, %v890
        %v892 = vcombine.high %v884, %v884
        %v893 = vcombine.high %v891, %v891
        %v894 = vcombine.high %v238, %v238
        %v896 = vunpack.c.l.s4 1983009808
        %v897 = vunpack.c.0.s8 %v896
        %v898 = vlaneseq
        %v899 = vshrl.u32 %v898, 7
        %v900 = vsub.s32 %v897, %v899
        %v901 = vrot.slane %v238, %v900
        %v903 = vunpack.c.l.s4 1983009808
        %v904 = vunpack.c.0.s8 %v903
        %v905 = vlaneseq
        %v906 = vshrl.u32 %v905, 7
        %v907 = vsub.s32 %v904, %v906
        %v908 = vrot.slane %v894, %v907
        %v909 = vcombine.high %v901, %v901
        %v910 = vcombine.high %v908, %v908
        %v911 = vcombine.high %v239, %v239
        %v913 = vunpack.c.l.s4 1983009808
        %v914 = vunpack.c.0.s8 %v913
        %v915 = vlaneseq
        %v916 = vshrl.u32 %v915, 7
        %v917 = vsub.s32 %v914, %v916
        %v918 = vrot.slane %v239, %v917
        %v920 = vunpack.c.l.s4 1983009808
        %v921 = vunpack.c.0.s8 %v920
        %v922 = vlaneseq
        %v923 = vshrl.u32 %v922, 7
        %v924 = vsub.s32 %v921, %v923
        %v925 = vrot.slane %v911, %v924
        %v926 = vcombine.high %v918, %v918
        %v927 = vcombine.high %v925, %v925
        %v928 = vcombine.high %v240, %v240
        %v930 = vunpack.c.l.s4 1983009808
        %v931 = vunpack.c.0.s8 %v930
        %v932 = vlaneseq
        %v933 = vshrl.u32 %v932, 7
        %v934 = vsub.s32 %v931, %v933
        %v935 = vrot.slane %v240, %v934
        %v937 = vunpack.c.l.s4 1983009808
        %v938 = vunpack.c.0.s8 %v937
        %v939 = vlaneseq
        %v940 = vshrl.u32 %v939, 7
        %v941 = vsub.s32 %v938, %v940
        %v942 = vrot.slane %v928, %v941
        %v943 = vcombine.high %v935, %v935
        %v944 = vcombine.high %v942, %v942
        %v945 = vcombine.high %v241, %v241
        %v947 = vunpack.c.l.s4 1983009808
        %v948 = vunpack.c.0.s8 %v947
        %v949 = vlaneseq
        %v950 = vshrl.u32 %v949, 7
        %v951 = vsub.s32 %v948, %v950
        %v952 = vrot.slane %v241, %v951
        %v954 = vunpack.c.l.s4 1983009808
        %v955 = vunpack.c.0.s8 %v954
        %v956 = vlaneseq
        %v957 = vshrl.u32 %v956, 7
        %v958 = vsub.s32 %v955, %v957
        %v959 = vrot.slane %v945, %v958
        %v960 = vcombine.high %v952, %v952
        %v961 = vcombine.high %v959, %v959
        %v962 = vcombine.high %v242, %v242
        %v964 = vunpack.c.l.s4 1983009808
        %v965 = vunpack.c.0.s8 %v964
        %v966 = vlaneseq
        %v967 = vshrl.u32 %v966, 7
        %v968 = vsub.s32 %v965, %v967
        %v969 = vrot.slane %v242, %v968
        %v971 = vunpack.c.l.s4 1983009808
        %v972 = vunpack.c.0.s8 %v971
        %v973 = vlaneseq
        %v974 = vshrl.u32 %v973, 7
        %v975 = vsub.s32 %v972, %v974
        %v976 = vrot.slane %v962, %v975
        %v977 = vcombine.high %v969, %v969
        %v978 = vcombine.high %v976, %v976
        %v979 = vcombine.high %v243, %v243
        %v981 = vunpack.c.l.s4 1983009808
        %v982 = vunpack.c.0.s8 %v981
        %v983 = vlaneseq
        %v984 = vshrl.u32 %v983, 7
        %v985 = vsub.s32 %v982, %v984
        %v986 = vrot.slane %v243, %v985
        %v988 = vunpack.c.l.s4 1983009808
        %v989 = vunpack.c.0.s8 %v988
        %v990 = vlaneseq
        %v991 = vshrl.u32 %v990, 7
        %v992 = vsub.s32 %v989, %v991
        %v993 = vrot.slane %v979, %v992
        %v994 = vcombine.high %v986, %v986
        %v995 = vcombine.high %v993, %v993
        %v996 = vcombine.high %v244, %v244
        %v998 = vunpack.c.l.s4 1983009808
        %v999 = vunpack.c.0.s8 %v998
        %v1000 = vlaneseq
        %v1001 = vshrl.u32 %v1000, 7
        %v1002 = vsub.s32 %v999, %v1001
        %v1003 = vrot.slane %v244, %v1002
        %v1005 = vunpack.c.l.s4 1983009808
        %v1006 = vunpack.c.0.s8 %v1005
        %v1007 = vlaneseq
        %v1008 = vshrl.u32 %v1007, 7
        %v1009 = vsub.s32 %v1006, %v1008
        %v1010 = vrot.slane %v996, %v1009
        %v1011 = vcombine.high %v1003, %v1003
        %v1012 = vcombine.high %v1010, %v1010
        %v1013 = vcombine.high %v245, %v245
        %v1015 = vunpack.c.l.s4 1983009808
        %v1016 = vunpack.c.0.s8 %v1015
        %v1017 = vlaneseq
        %v1018 = vshrl.u32 %v1017, 7
        %v1019 = vsub.s32 %v1016, %v1018
        %v1020 = vrot.slane %v245, %v1019
        %v1022 = vunpack.c.l.s4 1983009808
        %v1023 = vunpack.c.0.s8 %v1022
        %v1024 = vlaneseq
        %v1025 = vshrl.u32 %v1024, 7
        %v1026 = vsub.s32 %v1023, %v1025
        %v1027 = vrot.slane %v1013, %v1026
        %v1028 = vcombine.high %v1020, %v1020
        %v1029 = vcombine.high %v1027, %v1027
        %v1030 = vcombine.high %v246, %v246
        %v1032 = vunpack.c.l.s4 1983009808
        %v1033 = vunpack.c.0.s8 %v1032
        %v1034 = vlaneseq
        %v1035 = vshrl.u32 %v1034, 7
        %v1036 = vsub.s32 %v1033, %v1035
        %v1037 = vrot.slane %v246, %v1036
        %v1039 = vunpack.c.l.s4 1983009808
        %v1040 = vunpack.c.0.s8 %v1039
        %v1041 = vlaneseq
        %v1042 = vshrl.u32 %v1041, 7
        %v1043 = vsub.s32 %v1040, %v1042
        %v1044 = vrot.slane %v1030, %v1043
        %v1045 = vcombine.high %v1037, %v1037
        %v1046 = vcombine.high %v1044, %v1044
        %v1047 = vcombine.high %v247, %v247
        %v1049 = vunpack.c.l.s4 1983009808
        %v1050 = vunpack.c.0.s8 %v1049
        %v1051 = vlaneseq
        %v1052 = vshrl.u32 %v1051, 7
        %v1053 = vsub.s32 %v1050, %v1052
        %v1054 = vrot.slane %v247, %v1053
        %v1056 = vunpack.c.l.s4 1983009808
        %v1057 = vunpack.c.0.s8 %v1056
        %v1058 = vlaneseq
        %v1059 = vshrl.u32 %v1058, 7
        %v1060 = vsub.s32 %v1057, %v1059
        %v1061 = vrot.slane %v1047, %v1060
        %v1062 = vcombine.high %v1054, %v1054
        %v1063 = vcombine.high %v1061, %v1061
        %v1064 = vcombine.high %v248, %v248
        %v1066 = vunpack.c.l.s4 1983009808
        %v1067 = vunpack.c.0.s8 %v1066
        %v1068 = vlaneseq
        %v1069 = vshrl.u32 %v1068, 7
        %v1070 = vsub.s32 %v1067, %v1069
        %v1071 = vrot.slane %v248, %v1070
        %v1073 = vunpack.c.l.s4 1983009808
        %v1074 = vunpack.c.0.s8 %v1073
        %v1075 = vlaneseq
        %v1076 = vshrl.u32 %v1075, 7
        %v1077 = vsub.s32 %v1074, %v1076
        %v1078 = vrot.slane %v1064, %v1077
        %v1079 = vcombine.high %v1071, %v1071
        %v1080 = vcombine.high %v1078, %v1078
        %v1081 = vcombine.high %v249, %v249
        %v1083 = vunpack.c.l.s4 1983009808
        %v1084 = vunpack.c.0.s8 %v1083
        %v1085 = vlaneseq
        %v1086 = vshrl.u32 %v1085, 7
        %v1087 = vsub.s32 %v1084, %v1086
        %v1088 = vrot.slane %v249, %v1087
        %v1090 = vunpack.c.l.s4 1983009808
        %v1091 = vunpack.c.0.s8 %v1090
        %v1092 = vlaneseq
        %v1093 = vshrl.u32 %v1092, 7
        %v1094 = vsub.s32 %v1091, %v1093
        %v1095 = vrot.slane %v1081, %v1094
        %v1096 = vcombine.high %v1088, %v1088
        %v1097 = vcombine.high %v1095, %v1095
        %v1098 = vcombine.high %v250, %v250
        %v1100 = vunpack.c.l.s4 1983009808
        %v1101 = vunpack.c.0.s8 %v1100
        %v1102 = vlaneseq
        %v1103 = vshrl.u32 %v1102, 7
        %v1104 = vsub.s32 %v1101, %v1103
        %v1105 = vrot.slane %v250, %v1104
        %v1107 = vunpack.c.l.s4 1983009808
        %v1108 = vunpack.c.0.s8 %v1107
        %v1109 = vlaneseq
        %v1110 = vshrl.u32 %v1109, 7
        %v1111 = vsub.s32 %v1108, %v1110
        %v1112 = vrot.slane %v1098, %v1111
        %v1113 = vcombine.high %v1105, %v1105
        %v1114 = vcombine.high %v1112, %v1112
        %v1115 = vcombine.high %v251, %v251
        %v1117 = vunpack.c.l.s4 1983009808
        %v1118 = vunpack.c.0.s8 %v1117
        %v1119 = vlaneseq
        %v1120 = vshrl.u32 %v1119, 7
        %v1121 = vsub.s32 %v1118, %v1120
        %v1122 = vrot.slane %v251, %v1121
        %v1124 = vunpack.c.l.s4 1983009808
        %v1125 = vunpack.c.0.s8 %v1124
        %v1126 = vlaneseq
        %v1127 = vshrl.u32 %v1126, 7
        %v1128 = vsub.s32 %v1125, %v1127
        %v1129 = vrot.slane %v1115, %v1128
        %v1130 = vcombine.high %v1122, %v1122
        %v1131 = vcombine.high %v1129, %v1129
        %v1132 = vcombine.high %v252, %v252
        %v1134 = vunpack.c.l.s4 1983009808
        %v1135 = vunpack.c.0.s8 %v1134
        %v1136 = vlaneseq
        %v1137 = vshrl.u32 %v1136, 7
        %v1138 = vsub.s32 %v1135, %v1137
        %v1139 = vrot.slane %v252, %v1138
        %v1141 = vunpack.c.l.s4 1983009808
        %v1142 = vunpack.c.0.s8 %v1141
        %v1143 = vlaneseq
        %v1144 = vshrl.u32 %v1143, 7
        %v1145 = vsub.s32 %v1142, %v1144
        %v1146 = vrot.slane %v1132, %v1145
        %v1147 = vcombine.high %v1139, %v1139
        %v1148 = vcombine.high %v1146, %v1146
        %v1149 = vcombine.high %v253, %v253
        %v1151 = vunpack.c.l.s4 1983009808
        %v1152 = vunpack.c.0.s8 %v1151
        %v1153 = vlaneseq
        %v1154 = vshrl.u32 %v1153, 7
        %v1155 = vsub.s32 %v1152, %v1154
        %v1156 = vrot.slane %v253, %v1155
        %v1158 = vunpack.c.l.s4 1983009808
        %v1159 = vunpack.c.0.s8 %v1158
        %v1160 = vlaneseq
        %v1161 = vshrl.u32 %v1160, 7
        %v1162 = vsub.s32 %v1159, %v1161
        %v1163 = vrot.slane %v1149, %v1162
        %v1164 = vcombine.high %v1156, %v1156
        %v1165 = vcombine.high %v1163, %v1163
        %v1166 = vcombine.high %v254, %v254
        %v1168 = vunpack.c.l.s4 1983009808
        %v1169 = vunpack.c.0.s8 %v1168
        %v1170 = vlaneseq
        %v1171 = vshrl.u32 %v1170, 7
        %v1172 = vsub.s32 %v1169, %v1171
        %v1173 = vrot.slane %v254, %v1172
        %v1175 = vunpack.c.l.s4 1983009808
        %v1176 = vunpack.c.0.s8 %v1175
        %v1177 = vlaneseq
        %v1178 = vshrl.u32 %v1177, 7
        %v1179 = vsub.s32 %v1176, %v1178
        %v1180 = vrot.slane %v1166, %v1179
        %v1181 = vcombine.high %v1173, %v1173
        %v1182 = vcombine.high %v1180, %v1180
        %v1183 = vcombine.high %v255, %v255
        %v1185 = vunpack.c.l.s4 1983009808
        %v1186 = vunpack.c.0.s8 %v1185
        %v1187 = vlaneseq
        %v1188 = vshrl.u32 %v1187, 7
        %v1189 = vsub.s32 %v1186, %v1188
        %v1190 = vrot.slane %v255, %v1189
        %v1192 = vunpack.c.l.s4 1983009808
        %v1193 = vunpack.c.0.s8 %v1192
        %v1194 = vlaneseq
        %v1195 = vshrl.u32 %v1194, 7
        %v1196 = vsub.s32 %v1193, %v1195
        %v1197 = vrot.slane %v1183, %v1196
        %v1198 = vcombine.high %v1190, %v1190
        %v1199 = vcombine.high %v1197, %v1197
        %v1200 = vcombine.high %v256, %v256
        %v1202 = vunpack.c.l.s4 1983009808
        %v1203 = vunpack.c.0.s8 %v1202
        %v1204 = vlaneseq
        %v1205 = vshrl.u32 %v1204, 7
        %v1206 = vsub.s32 %v1203, %v1205
        %v1207 = vrot.slane %v256, %v1206
        %v1209 = vunpack.c.l.s4 1983009808
        %v1210 = vunpack.c.0.s8 %v1209
        %v1211 = vlaneseq
        %v1212 = vshrl.u32 %v1211, 7
        %v1213 = vsub.s32 %v1210, %v1212
        %v1214 = vrot.slane %v1200, %v1213
        %v1215 = vcombine.high %v1207, %v1207
        %v1216 = vcombine.high %v1214, %v1214
        %v1217 = vcombine.high %v257, %v257
        %v1219 = vunpack.c.l.s4 1983009808
        %v1220 = vunpack.c.0.s8 %v1219
        %v1221 = vlaneseq
        %v1222 = vshrl.u32 %v1221, 7
        %v1223 = vsub.s32 %v1220, %v1222
        %v1224 = vrot.slane %v257, %v1223
        %v1226 = vunpack.c.l.s4 1983009808
        %v1227 = vunpack.c.0.s8 %v1226
        %v1228 = vlaneseq
        %v1229 = vshrl.u32 %v1228, 7
        %v1230 = vsub.s32 %v1227, %v1229
        %v1231 = vrot.slane %v1217, %v1230
        %v1232 = vcombine.high %v1224, %v1224
        %v1233 = vcombine.high %v1231, %v1231
        %v1234 = vcombine.high %v258, %v258
        %v1236 = vunpack.c.l.s4 1983009808
        %v1237 = vunpack.c.0.s8 %v1236
        %v1238 = vlaneseq
        %v1239 = vshrl.u32 %v1238, 7
        %v1240 = vsub.s32 %v1237, %v1239
        %v1241 = vrot.slane %v258, %v1240
        %v1243 = vunpack.c.l.s4 1983009808
        %v1244 = vunpack.c.0.s8 %v1243
        %v1245 = vlaneseq
        %v1246 = vshrl.u32 %v1245, 7
        %v1247 = vsub.s32 %v1244, %v1246
        %v1248 = vrot.slane %v1234, %v1247
        %v1249 = vcombine.high %v1241, %v1241
        %v1250 = vcombine.high %v1248, %v1248
        %v1251 = vcombine.high %v259, %v259
        %v1253 = vunpack.c.l.s4 1983009808
        %v1254 = vunpack.c.0.s8 %v1253
        %v1255 = vlaneseq
        %v1256 = vshrl.u32 %v1255, 7
        %v1257 = vsub.s32 %v1254, %v1256
        %v1258 = vrot.slane %v259, %v1257
        %v1260 = vunpack.c.l.s4 1983009808
        %v1261 = vunpack.c.0.s8 %v1260
        %v1262 = vlaneseq
        %v1263 = vshrl.u32 %v1262, 7
        %v1264 = vsub.s32 %v1261, %v1263
        %v1265 = vrot.slane %v1251, %v1264
        %v1266 = vcombine.high %v1258, %v1258
        %v1267 = vcombine.high %v1265, %v1265
        %v1268 = vcombine.high %v260, %v260
        %v1270 = vunpack.c.l.s4 1983009808
        %v1271 = vunpack.c.0.s8 %v1270
        %v1272 = vlaneseq
        %v1273 = vshrl.u32 %v1272, 7
        %v1274 = vsub.s32 %v1271, %v1273
        %v1275 = vrot.slane %v260, %v1274
        %v1277 = vunpack.c.l.s4 1983009808
        %v1278 = vunpack.c.0.s8 %v1277
        %v1279 = vlaneseq
        %v1280 = vshrl.u32 %v1279, 7
        %v1281 = vsub.s32 %v1278, %v1280
        %v1282 = vrot.slane %v1268, %v1281
        %v1283 = vcombine.high %v1275, %v1275
        %v1284 = vcombine.high %v1282, %v1282
        %v1285 = vcombine.high %v261, %v261
        %v1287 = vunpack.c.l.s4 1983009808
        %v1288 = vunpack.c.0.s8 %v1287
        %v1289 = vlaneseq
        %v1290 = vshrl.u32 %v1289, 7
        %v1291 = vsub.s32 %v1288, %v1290
        %v1292 = vrot.slane %v261, %v1291
        %v1294 = vunpack.c.l.s4 1983009808
        %v1295 = vunpack.c.0.s8 %v1294
        %v1296 = vlaneseq
        %v1297 = vshrl.u32 %v1296, 7
        %v1298 = vsub.s32 %v1295, %v1297
        %v1299 = vrot.slane %v1285, %v1298
        %v1300 = vcombine.high %v1292, %v1292
        %v1301 = vcombine.high %v1299, %v1299
        %v1302 = vcombine.high %v262, %v262
        %v1304 = vunpack.c.l.s4 1983009808
        %v1305 = vunpack.c.0.s8 %v1304
        %v1306 = vlaneseq
        %v1307 = vshrl.u32 %v1306, 7
        %v1308 = vsub.s32 %v1305, %v1307
        %v1309 = vrot.slane %v262, %v1308
        %v1311 = vunpack.c.l.s4 1983009808
        %v1312 = vunpack.c.0.s8 %v1311
        %v1313 = vlaneseq
        %v1314 = vshrl.u32 %v1313, 7
        %v1315 = vsub.s32 %v1312, %v1314
        %v1316 = vrot.slane %v1302, %v1315
        %v1317 = vcombine.high %v1309, %v1309
        %v1318 = vcombine.high %v1316, %v1316
        %v1319 = vcombine.high %v263, %v263
        %v1321 = vunpack.c.l.s4 1983009808
        %v1322 = vunpack.c.0.s8 %v1321
        %v1323 = vlaneseq
        %v1324 = vshrl.u32 %v1323, 7
        %v1325 = vsub.s32 %v1322, %v1324
        %v1326 = vrot.slane %v263, %v1325
        %v1328 = vunpack.c.l.s4 1983009808
        %v1329 = vunpack.c.0.s8 %v1328
        %v1330 = vlaneseq
        %v1331 = vshrl.u32 %v1330, 7
        %v1332 = vsub.s32 %v1329, %v1331
        %v1333 = vrot.slane %v1319, %v1332
        %v1334 = vcombine.high %v1326, %v1326
        %v1335 = vcombine.high %v1333, %v1333
        %v1336 = vcombine.high %v264, %v264
        %v1338 = vunpack.c.l.s4 1983009808
        %v1339 = vunpack.c.0.s8 %v1338
        %v1340 = vlaneseq
        %v1341 = vshrl.u32 %v1340, 7
        %v1342 = vsub.s32 %v1339, %v1341
        %v1343 = vrot.slane %v264, %v1342
        %v1345 = vunpack.c.l.s4 1983009808
        %v1346 = vunpack.c.0.s8 %v1345
        %v1347 = vlaneseq
        %v1348 = vshrl.u32 %v1347, 7
        %v1349 = vsub.s32 %v1346, %v1348
        %v1350 = vrot.slane %v1336, %v1349
        %v1351 = vcombine.high %v1343, %v1343
        %v1352 = vcombine.high %v1350, %v1350
        %v1353 = vcombine.high %v265, %v265
        %v1355 = vunpack.c.l.s4 1983009808
        %v1356 = vunpack.c.0.s8 %v1355
        %v1357 = vlaneseq
        %v1358 = vshrl.u32 %v1357, 7
        %v1359 = vsub.s32 %v1356, %v1358
        %v1360 = vrot.slane %v265, %v1359
        %v1362 = vunpack.c.l.s4 1983009808
        %v1363 = vunpack.c.0.s8 %v1362
        %v1364 = vlaneseq
        %v1365 = vshrl.u32 %v1364, 7
        %v1366 = vsub.s32 %v1363, %v1365
        %v1367 = vrot.slane %v1353, %v1366
        %v1368 = vcombine.high %v1360, %v1360
        %v1369 = vcombine.high %v1367, %v1367
        %v1370 = vcombine.high %v266, %v266
        %v1372 = vunpack.c.l.s4 1983009808
        %v1373 = vunpack.c.0.s8 %v1372
        %v1374 = vlaneseq
        %v1375 = vshrl.u32 %v1374, 7
        %v1376 = vsub.s32 %v1373, %v1375
        %v1377 = vrot.slane %v266, %v1376
        %v1379 = vunpack.c.l.s4 1983009808
        %v1380 = vunpack.c.0.s8 %v1379
        %v1381 = vlaneseq
        %v1382 = vshrl.u32 %v1381, 7
        %v1383 = vsub.s32 %v1380, %v1382
        %v1384 = vrot.slane %v1370, %v1383
        %v1385 = vcombine.high %v1377, %v1377
        %v1386 = vcombine.high %v1384, %v1384
        %v1387 = vcombine.high %v267, %v267
        %v1389 = vunpack.c.l.s4 1983009808
        %v1390 = vunpack.c.0.s8 %v1389
        %v1391 = vlaneseq
        %v1392 = vshrl.u32 %v1391, 7
        %v1393 = vsub.s32 %v1390, %v1392
        %v1394 = vrot.slane %v267, %v1393
        %v1396 = vunpack.c.l.s4 1983009808
        %v1397 = vunpack.c.0.s8 %v1396
        %v1398 = vlaneseq
        %v1399 = vshrl.u32 %v1398, 7
        %v1400 = vsub.s32 %v1397, %v1399
        %v1401 = vrot.slane %v1387, %v1400
        %v1402 = vcombine.high %v1394, %v1394
        %v1403 = vcombine.high %v1401, %v1401
        %v1404 = vcombine.high %v268, %v268
        %v1406 = vunpack.c.l.s4 1983009808
        %v1407 = vunpack.c.0.s8 %v1406
        %v1408 = vlaneseq
        %v1409 = vshrl.u32 %v1408, 7
        %v1410 = vsub.s32 %v1407, %v1409
        %v1411 = vrot.slane %v268, %v1410
        %v1413 = vunpack.c.l.s4 1983009808
        %v1414 = vunpack.c.0.s8 %v1413
        %v1415 = vlaneseq
        %v1416 = vshrl.u32 %v1415, 7
        %v1417 = vsub.s32 %v1414, %v1416
        %v1418 = vrot.slane %v1404, %v1417
        %v1419 = vcombine.high %v1411, %v1411
        %v1420 = vcombine.high %v1418, %v1418
        %v1421 = vcombine.high %v269, %v269
        %v1423 = vunpack.c.l.s4 1983009808
        %v1424 = vunpack.c.0.s8 %v1423
        %v1425 = vlaneseq
        %v1426 = vshrl.u32 %v1425, 7
        %v1427 = vsub.s32 %v1424, %v1426
        %v1428 = vrot.slane %v269, %v1427
        %v1430 = vunpack.c.l.s4 1983009808
        %v1431 = vunpack.c.0.s8 %v1430
        %v1432 = vlaneseq
        %v1433 = vshrl.u32 %v1432, 7
        %v1434 = vsub.s32 %v1431, %v1433
        %v1435 = vrot.slane %v1421, %v1434
        %v1436 = vcombine.high %v1428, %v1428
        %v1437 = vcombine.high %v1435, %v1435
        %v1438 = vcombine.high %v270, %v270
        %v1440 = vunpack.c.l.s4 1983009808
        %v1441 = vunpack.c.0.s8 %v1440
        %v1442 = vlaneseq
        %v1443 = vshrl.u32 %v1442, 7
        %v1444 = vsub.s32 %v1441, %v1443
        %v1445 = vrot.slane %v270, %v1444
        %v1447 = vunpack.c.l.s4 1983009808
        %v1448 = vunpack.c.0.s8 %v1447
        %v1449 = vlaneseq
        %v1450 = vshrl.u32 %v1449, 7
        %v1451 = vsub.s32 %v1448, %v1450
        %v1452 = vrot.slane %v1438, %v1451
        %v1453 = vcombine.high %v1445, %v1445
        %v1454 = vcombine.high %v1452, %v1452
        %v1455 = vcombine.high %v271, %v271
        %v1457 = vunpack.c.l.s4 1983009808
        %v1458 = vunpack.c.0.s8 %v1457
        %v1459 = vlaneseq
        %v1460 = vshrl.u32 %v1459, 7
        %v1461 = vsub.s32 %v1458, %v1460
        %v1462 = vrot.slane %v271, %v1461
        %v1464 = vunpack.c.l.s4 1983009808
        %v1465 = vunpack.c.0.s8 %v1464
        %v1466 = vlaneseq
        %v1467 = vshrl.u32 %v1466, 7
        %v1468 = vsub.s32 %v1465, %v1467
        %v1469 = vrot.slane %v1455, %v1468
        %v1470 = vcombine.high %v1462, %v1462
        %v1471 = vcombine.high %v1469, %v1469
        %v1472 = vcombine.high %v272, %v272
        %v1474 = vunpack.c.l.s4 1983009808
        %v1475 = vunpack.c.0.s8 %v1474
        %v1476 = vlaneseq
        %v1477 = vshrl.u32 %v1476, 7
        %v1478 = vsub.s32 %v1475, %v1477
        %v1479 = vrot.slane %v272, %v1478
        %v1481 = vunpack.c.l.s4 1983009808
        %v1482 = vunpack.c.0.s8 %v1481
        %v1483 = vlaneseq
        %v1484 = vshrl.u32 %v1483, 7
        %v1485 = vsub.s32 %v1482, %v1484
        %v1486 = vrot.slane %v1472, %v1485
        %v1487 = vcombine.high %v1479, %v1479
        %v1488 = vcombine.high %v1486, %v1486
        %v1489 = vcombine.high %v273, %v273
        %v1491 = vunpack.c.l.s4 1983009808
        %v1492 = vunpack.c.0.s8 %v1491
        %v1493 = vlaneseq
        %v1494 = vshrl.u32 %v1493, 7
        %v1495 = vsub.s32 %v1492, %v1494
        %v1496 = vrot.slane %v273, %v1495
        %v1498 = vunpack.c.l.s4 1983009808
        %v1499 = vunpack.c.0.s8 %v1498
        %v1500 = vlaneseq
        %v1501 = vshrl.u32 %v1500, 7
        %v1502 = vsub.s32 %v1499, %v1501
        %v1503 = vrot.slane %v1489, %v1502
        %v1504 = vcombine.high %v1496, %v1496
        %v1505 = vcombine.high %v1503, %v1503
        %v1506 = vcombine.high %v274, %v274
        %v1508 = vunpack.c.l.s4 1983009808
        %v1509 = vunpack.c.0.s8 %v1508
        %v1510 = vlaneseq
        %v1511 = vshrl.u32 %v1510, 7
        %v1512 = vsub.s32 %v1509, %v1511
        %v1513 = vrot.slane %v274, %v1512
        %v1515 = vunpack.c.l.s4 1983009808
        %v1516 = vunpack.c.0.s8 %v1515
        %v1517 = vlaneseq
        %v1518 = vshrl.u32 %v1517, 7
        %v1519 = vsub.s32 %v1516, %v1518
        %v1520 = vrot.slane %v1506, %v1519
        %v1521 = vcombine.high %v1513, %v1513
        %v1522 = vcombine.high %v1520, %v1520
        %v1523 = vcombine.high %v275, %v275
        %v1525 = vunpack.c.l.s4 1983009808
        %v1526 = vunpack.c.0.s8 %v1525
        %v1527 = vlaneseq
        %v1528 = vshrl.u32 %v1527, 7
        %v1529 = vsub.s32 %v1526, %v1528
        %v1530 = vrot.slane %v275, %v1529
        %v1532 = vunpack.c.l.s4 1983009808
        %v1533 = vunpack.c.0.s8 %v1532
        %v1534 = vlaneseq
        %v1535 = vshrl.u32 %v1534, 7
        %v1536 = vsub.s32 %v1533, %v1535
        %v1537 = vrot.slane %v1523, %v1536
        %v1538 = vcombine.high %v1530, %v1530
        %v1539 = vcombine.high %v1537, %v1537
        %v1540 = vcombine.high %v276, %v276
        %v1542 = vunpack.c.l.s4 1983009808
        %v1543 = vunpack.c.0.s8 %v1542
        %v1544 = vlaneseq
        %v1545 = vshrl.u32 %v1544, 7
        %v1546 = vsub.s32 %v1543, %v1545
        %v1547 = vrot.slane %v276, %v1546
        %v1549 = vunpack.c.l.s4 1983009808
        %v1550 = vunpack.c.0.s8 %v1549
        %v1551 = vlaneseq
        %v1552 = vshrl.u32 %v1551, 7
        %v1553 = vsub.s32 %v1550, %v1552
        %v1554 = vrot.slane %v1540, %v1553
        %v1555 = vcombine.high %v1547, %v1547
        %v1556 = vcombine.high %v1554, %v1554
        %v1557 = vcombine.high %v277, %v277
        %v1559 = vunpack.c.l.s4 1983009808
        %v1560 = vunpack.c.0.s8 %v1559
        %v1561 = vlaneseq
        %v1562 = vshrl.u32 %v1561, 7
        %v1563 = vsub.s32 %v1560, %v1562
        %v1564 = vrot.slane %v277, %v1563
        %v1566 = vunpack.c.l.s4 1983009808
        %v1567 = vunpack.c.0.s8 %v1566
        %v1568 = vlaneseq
        %v1569 = vshrl.u32 %v1568, 7
        %v1570 = vsub.s32 %v1567, %v1569
        %v1571 = vrot.slane %v1557, %v1570
        %v1572 = vcombine.high %v1564, %v1564
        %v1573 = vcombine.high %v1571, %v1571
        %v1574 = vcombine.high %v278, %v278
        %v1576 = vunpack.c.l.s4 1983009808
        %v1577 = vunpack.c.0.s8 %v1576
        %v1578 = vlaneseq
        %v1579 = vshrl.u32 %v1578, 7
        %v1580 = vsub.s32 %v1577, %v1579
        %v1581 = vrot.slane %v278, %v1580
        %v1583 = vunpack.c.l.s4 1983009808
        %v1584 = vunpack.c.0.s8 %v1583
        %v1585 = vlaneseq
        %v1586 = vshrl.u32 %v1585, 7
        %v1587 = vsub.s32 %v1584, %v1586
        %v1588 = vrot.slane %v1574, %v1587
        %v1589 = vcombine.high %v1581, %v1581
        %v1590 = vcombine.high %v1588, %v1588
        %v1591 = vcombine.high %v279, %v279
        %v1593 = vunpack.c.l.s4 1983009808
        %v1594 = vunpack.c.0.s8 %v1593
        %v1595 = vlaneseq
        %v1596 = vshrl.u32 %v1595, 7
        %v1597 = vsub.s32 %v1594, %v1596
        %v1598 = vrot.slane %v279, %v1597
        %v1600 = vunpack.c.l.s4 1983009808
        %v1601 = vunpack.c.0.s8 %v1600
        %v1602 = vlaneseq
        %v1603 = vshrl.u32 %v1602, 7
        %v1604 = vsub.s32 %v1601, %v1603
        %v1605 = vrot.slane %v1591, %v1604
        %v1606 = vcombine.high %v1598, %v1598
        %v1607 = vcombine.high %v1605, %v1605
        %v1608 = vcombine.high %v280, %v280
        %v1610 = vunpack.c.l.s4 1983009808
        %v1611 = vunpack.c.0.s8 %v1610
        %v1612 = vlaneseq
        %v1613 = vshrl.u32 %v1612, 7
        %v1614 = vsub.s32 %v1611, %v1613
        %v1615 = vrot.slane %v280, %v1614
        %v1617 = vunpack.c.l.s4 1983009808
        %v1618 = vunpack.c.0.s8 %v1617
        %v1619 = vlaneseq
        %v1620 = vshrl.u32 %v1619, 7
        %v1621 = vsub.s32 %v1618, %v1620
        %v1622 = vrot.slane %v1608, %v1621
        %v1623 = vcombine.high %v1615, %v1615
        %v1624 = vcombine.high %v1622, %v1622
        %v1625 = vcombine.high %v281, %v281
        %v1627 = vunpack.c.l.s4 1983009808
        %v1628 = vunpack.c.0.s8 %v1627
        %v1629 = vlaneseq
        %v1630 = vshrl.u32 %v1629, 7
        %v1631 = vsub.s32 %v1628, %v1630
        %v1632 = vrot.slane %v281, %v1631
        %v1634 = vunpack.c.l.s4 1983009808
        %v1635 = vunpack.c.0.s8 %v1634
        %v1636 = vlaneseq
        %v1637 = vshrl.u32 %v1636, 7
        %v1638 = vsub.s32 %v1635, %v1637
        %v1639 = vrot.slane %v1625, %v1638
        %v1640 = vcombine.high %v1632, %v1632
        %v1641 = vcombine.high %v1639, %v1639
        %v1642 = vcombine.high %v282, %v282
        %v1644 = vunpack.c.l.s4 1983009808
        %v1645 = vunpack.c.0.s8 %v1644
        %v1646 = vlaneseq
        %v1647 = vshrl.u32 %v1646, 7
        %v1648 = vsub.s32 %v1645, %v1647
        %v1649 = vrot.slane %v282, %v1648
        %v1651 = vunpack.c.l.s4 1983009808
        %v1652 = vunpack.c.0.s8 %v1651
        %v1653 = vlaneseq
        %v1654 = vshrl.u32 %v1653, 7
        %v1655 = vsub.s32 %v1652, %v1654
        %v1656 = vrot.slane %v1642, %v1655
        %v1657 = vcombine.high %v1649, %v1649
        %v1658 = vcombine.high %v1656, %v1656
        %v1659 = vcombine.high %v283, %v283
        %v1661 = vunpack.c.l.s4 1983009808
        %v1662 = vunpack.c.0.s8 %v1661
        %v1663 = vlaneseq
        %v1664 = vshrl.u32 %v1663, 7
        %v1665 = vsub.s32 %v1662, %v1664
        %v1666 = vrot.slane %v283, %v1665
        %v1668 = vunpack.c.l.s4 1983009808
        %v1669 = vunpack.c.0.s8 %v1668
        %v1670 = vlaneseq
        %v1671 = vshrl.u32 %v1670, 7
        %v1672 = vsub.s32 %v1669, %v1671
        %v1673 = vrot.slane %v1659, %v1672
        %v1674 = vcombine.high %v1666, %v1666
        %v1675 = vcombine.high %v1673, %v1673
        %v1676 = vcombine.high %v284, %v284
        %v1678 = vunpack.c.l.s4 1983009808
        %v1679 = vunpack.c.0.s8 %v1678
        %v1680 = vlaneseq
        %v1681 = vshrl.u32 %v1680, 7
        %v1682 = vsub.s32 %v1679, %v1681
        %v1683 = vrot.slane %v284, %v1682
        %v1685 = vunpack.c.l.s4 1983009808
        %v1686 = vunpack.c.0.s8 %v1685
        %v1687 = vlaneseq
        %v1688 = vshrl.u32 %v1687, 7
        %v1689 = vsub.s32 %v1686, %v1688
        %v1690 = vrot.slane %v1676, %v1689
        %v1691 = vcombine.high %v1683, %v1683
        %v1692 = vcombine.high %v1690, %v1690
        %v1693 = vcombine.high %v285, %v285
        %v1695 = vunpack.c.l.s4 1983009808
        %v1696 = vunpack.c.0.s8 %v1695
        %v1697 = vlaneseq
        %v1698 = vshrl.u32 %v1697, 7
        %v1699 = vsub.s32 %v1696, %v1698
        %v1700 = vrot.slane %v285, %v1699
        %v1702 = vunpack.c.l.s4 1983009808
        %v1703 = vunpack.c.0.s8 %v1702
        %v1704 = vlaneseq
        %v1705 = vshrl.u32 %v1704, 7
        %v1706 = vsub.s32 %v1703, %v1705
        %v1707 = vrot.slane %v1693, %v1706
        %v1708 = vcombine.high %v1700, %v1700
        %v1709 = vcombine.high %v1707, %v1707
        %v1710 = vcombine.high %v286, %v286
        %v1712 = vunpack.c.l.s4 1983009808
        %v1713 = vunpack.c.0.s8 %v1712
        %v1714 = vlaneseq
        %v1715 = vshrl.u32 %v1714, 7
        %v1716 = vsub.s32 %v1713, %v1715
        %v1717 = vrot.slane %v286, %v1716
        %v1719 = vunpack.c.l.s4 1983009808
        %v1720 = vunpack.c.0.s8 %v1719
        %v1721 = vlaneseq
        %v1722 = vshrl.u32 %v1721, 7
        %v1723 = vsub.s32 %v1720, %v1722
        %v1724 = vrot.slane %v1710, %v1723
        %v1725 = vcombine.high %v1717, %v1717
        %v1726 = vcombine.high %v1724, %v1724
        %v1727 = vcombine.high %v287, %v287
        %v1729 = vunpack.c.l.s4 1983009808
        %v1730 = vunpack.c.0.s8 %v1729
        %v1731 = vlaneseq
        %v1732 = vshrl.u32 %v1731, 7
        %v1733 = vsub.s32 %v1730, %v1732
        %v1734 = vrot.slane %v287, %v1733
        %v1736 = vunpack.c.l.s4 1983009808
        %v1737 = vunpack.c.0.s8 %v1736
        %v1738 = vlaneseq
        %v1739 = vshrl.u32 %v1738, 7
        %v1740 = vsub.s32 %v1737, %v1739
        %v1741 = vrot.slane %v1727, %v1740
        %v1742 = vcombine.high %v1734, %v1734
        %v1743 = vcombine.high %v1741, %v1741
        %v1744 = vcombine.high %v288, %v288
        %v1746 = vunpack.c.l.s4 1983009808
        %v1747 = vunpack.c.0.s8 %v1746
        %v1748 = vlaneseq
        %v1749 = vshrl.u32 %v1748, 7
        %v1750 = vsub.s32 %v1747, %v1749
        %v1751 = vrot.slane %v288, %v1750
        %v1753 = vunpack.c.l.s4 1983009808
        %v1754 = vunpack.c.0.s8 %v1753
        %v1755 = vlaneseq
        %v1756 = vshrl.u32 %v1755, 7
        %v1757 = vsub.s32 %v1754, %v1756
        %v1758 = vrot.slane %v1744, %v1757
        %v1759 = vcombine.high %v1751, %v1751
        %v1760 = vcombine.high %v1758, %v1758
        %v1761 = vcombine.high %v289, %v289
        %v1763 = vunpack.c.l.s4 1983009808
        %v1764 = vunpack.c.0.s8 %v1763
        %v1765 = vlaneseq
        %v1766 = vshrl.u32 %v1765, 7
        %v1767 = vsub.s32 %v1764, %v1766
        %v1768 = vrot.slane %v289, %v1767
        %v1770 = vunpack.c.l.s4 1983009808
        %v1771 = vunpack.c.0.s8 %v1770
        %v1772 = vlaneseq
        %v1773 = vshrl.u32 %v1772, 7
        %v1774 = vsub.s32 %v1771, %v1773
        %v1775 = vrot.slane %v1761, %v1774
        %v1776 = vcombine.high %v1768, %v1768
        %v1777 = vcombine.high %v1775, %v1775
        %v1778 = vcombine.high %v290, %v290
        %v1780 = vunpack.c.l.s4 1983009808
        %v1781 = vunpack.c.0.s8 %v1780
        %v1782 = vlaneseq
        %v1783 = vshrl.u32 %v1782, 7
        %v1784 = vsub.s32 %v1781, %v1783
        %v1785 = vrot.slane %v290, %v1784
        %v1787 = vunpack.c.l.s4 1983009808
        %v1788 = vunpack.c.0.s8 %v1787
        %v1789 = vlaneseq
        %v1790 = vshrl.u32 %v1789, 7
        %v1791 = vsub.s32 %v1788, %v1790
        %v1792 = vrot.slane %v1778, %v1791
        %v1793 = vcombine.high %v1785, %v1785
        %v1794 = vcombine.high %v1792, %v1792
        %v1795 = vcombine.high %v291, %v291
        %v1797 = vunpack.c.l.s4 1983009808
        %v1798 = vunpack.c.0.s8 %v1797
        %v1799 = vlaneseq
        %v1800 = vshrl.u32 %v1799, 7
        %v1801 = vsub.s32 %v1798, %v1800
        %v1802 = vrot.slane %v291, %v1801
        %v1804 = vunpack.c.l.s4 1983009808
        %v1805 = vunpack.c.0.s8 %v1804
        %v1806 = vlaneseq
        %v1807 = vshrl.u32 %v1806, 7
        %v1808 = vsub.s32 %v1805, %v1807
        %v1809 = vrot.slane %v1795, %v1808
        %v1810 = vcombine.high %v1802, %v1802
        %v1811 = vcombine.high %v1809, %v1809
        %v1812 = vcombine.high %v292, %v292
        %v1814 = vunpack.c.l.s4 1983009808
        %v1815 = vunpack.c.0.s8 %v1814
        %v1816 = vlaneseq
        %v1817 = vshrl.u32 %v1816, 7
        %v1818 = vsub.s32 %v1815, %v1817
        %v1819 = vrot.slane %v292, %v1818
        %v1821 = vunpack.c.l.s4 1983009808
        %v1822 = vunpack.c.0.s8 %v1821
        %v1823 = vlaneseq
        %v1824 = vshrl.u32 %v1823, 7
        %v1825 = vsub.s32 %v1822, %v1824
        %v1826 = vrot.slane %v1812, %v1825
        %v1827 = vcombine.high %v1819, %v1819
        %v1828 = vcombine.high %v1826, %v1826
        %v1829 = vcombine.high %v293, %v293
        %v1831 = vunpack.c.l.s4 1983009808
        %v1832 = vunpack.c.0.s8 %v1831
        %v1833 = vlaneseq
        %v1834 = vshrl.u32 %v1833, 7
        %v1835 = vsub.s32 %v1832, %v1834
        %v1836 = vrot.slane %v293, %v1835
        %v1838 = vunpack.c.l.s4 1983009808
        %v1839 = vunpack.c.0.s8 %v1838
        %v1840 = vlaneseq
        %v1841 = vshrl.u32 %v1840, 7
        %v1842 = vsub.s32 %v1839, %v1841
        %v1843 = vrot.slane %v1829, %v1842
        %v1844 = vcombine.high %v1836, %v1836
        %v1845 = vcombine.high %v1843, %v1843
        %v1846 = vcombine.high %v294, %v294
        %v1848 = vunpack.c.l.s4 1983009808
        %v1849 = vunpack.c.0.s8 %v1848
        %v1850 = vlaneseq
        %v1851 = vshrl.u32 %v1850, 7
        %v1852 = vsub.s32 %v1849, %v1851
        %v1853 = vrot.slane %v294, %v1852
        %v1855 = vunpack.c.l.s4 1983009808
        %v1856 = vunpack.c.0.s8 %v1855
        %v1857 = vlaneseq
        %v1858 = vshrl.u32 %v1857, 7
        %v1859 = vsub.s32 %v1856, %v1858
        %v1860 = vrot.slane %v1846, %v1859
        %v1861 = vcombine.high %v1853, %v1853
        %v1862 = vcombine.high %v1860, %v1860
        %v1863 = vcombine.high %v295, %v295
        %v1865 = vunpack.c.l.s4 1983009808
        %v1866 = vunpack.c.0.s8 %v1865
        %v1867 = vlaneseq
        %v1868 = vshrl.u32 %v1867, 7
        %v1869 = vsub.s32 %v1866, %v1868
        %v1870 = vrot.slane %v295, %v1869
        %v1872 = vunpack.c.l.s4 1983009808
        %v1873 = vunpack.c.0.s8 %v1872
        %v1874 = vlaneseq
        %v1875 = vshrl.u32 %v1874, 7
        %v1876 = vsub.s32 %v1873, %v1875
        %v1877 = vrot.slane %v1863, %v1876
        %v1878 = vcombine.high %v1870, %v1870
        %v1879 = vcombine.high %v1877, %v1877
        %v1880 = vcombine.high %v296, %v296
        %v1882 = vunpack.c.l.s4 1983009808
        %v1883 = vunpack.c.0.s8 %v1882
        %v1884 = vlaneseq
        %v1885 = vshrl.u32 %v1884, 7
        %v1886 = vsub.s32 %v1883, %v1885
        %v1887 = vrot.slane %v296, %v1886
        %v1889 = vunpack.c.l.s4 1983009808
        %v1890 = vunpack.c.0.s8 %v1889
        %v1891 = vlaneseq
        %v1892 = vshrl.u32 %v1891, 7
        %v1893 = vsub.s32 %v1890, %v1892
        %v1894 = vrot.slane %v1880, %v1893
        %v1895 = vcombine.high %v1887, %v1887
        %v1896 = vcombine.high %v1894, %v1894
        %v1897 = vcombine.high %v297, %v297
        %v1899 = vunpack.c.l.s4 1983009808
        %v1900 = vunpack.c.0.s8 %v1899
        %v1901 = vlaneseq
        %v1902 = vshrl.u32 %v1901, 7
        %v1903 = vsub.s32 %v1900, %v1902
        %v1904 = vrot.slane %v297, %v1903
        %v1906 = vunpack.c.l.s4 1983009808
        %v1907 = vunpack.c.0.s8 %v1906
        %v1908 = vlaneseq
        %v1909 = vshrl.u32 %v1908, 7
        %v1910 = vsub.s32 %v1907, %v1909
        %v1911 = vrot.slane %v1897, %v1910
        %v1912 = vcombine.high %v1904, %v1904
        %v1913 = vcombine.high %v1911, %v1911
        %v1914 = vcombine.high %v298, %v298
        %v1916 = vunpack.c.l.s4 1983009808
        %v1917 = vunpack.c.0.s8 %v1916
        %v1918 = vlaneseq
        %v1919 = vshrl.u32 %v1918, 7
        %v1920 = vsub.s32 %v1917, %v1919
        %v1921 = vrot.slane %v298, %v1920
        %v1923 = vunpack.c.l.s4 1983009808
        %v1924 = vunpack.c.0.s8 %v1923
        %v1925 = vlaneseq
        %v1926 = vshrl.u32 %v1925, 7
        %v1927 = vsub.s32 %v1924, %v1926
        %v1928 = vrot.slane %v1914, %v1927
        %v1929 = vcombine.high %v1921, %v1921
        %v1930 = vcombine.high %v1928, %v1928
        %v1931 = vcombine.high %v299, %v299
        %v1933 = vunpack.c.l.s4 1983009808
        %v1934 = vunpack.c.0.s8 %v1933
        %v1935 = vlaneseq
        %v1936 = vshrl.u32 %v1935, 7
        %v1937 = vsub.s32 %v1934, %v1936
        %v1938 = vrot.slane %v299, %v1937
        %v1940 = vunpack.c.l.s4 1983009808
        %v1941 = vunpack.c.0.s8 %v1940
        %v1942 = vlaneseq
        %v1943 = vshrl.u32 %v1942, 7
        %v1944 = vsub.s32 %v1941, %v1943
        %v1945 = vrot.slane %v1931, %v1944
        %v1946 = vcombine.high %v1938, %v1938
        %v1947 = vcombine.high %v1945, %v1945
        %v1948 = vcombine.high %v300, %v300
        %v1950 = vunpack.c.l.s4 1983009808
        %v1951 = vunpack.c.0.s8 %v1950
        %v1952 = vlaneseq
        %v1953 = vshrl.u32 %v1952, 7
        %v1954 = vsub.s32 %v1951, %v1953
        %v1955 = vrot.slane %v300, %v1954
        %v1957 = vunpack.c.l.s4 1983009808
        %v1958 = vunpack.c.0.s8 %v1957
        %v1959 = vlaneseq
        %v1960 = vshrl.u32 %v1959, 7
        %v1961 = vsub.s32 %v1958, %v1960
        %v1962 = vrot.slane %v1948, %v1961
        %v1963 = vcombine.high %v1955, %v1955
        %v1964 = vcombine.high %v1962, %v1962
        %2221 = vmatprep.subr.mxu0 %v302
        %2222 = vmatpush1.xpose.msra.mxu0 %v301
        %2223 = vmatprep.subr.mxu0 %v558
        %2224 = vmatpush1.xpose.msra.mxu0 %v557
        %2225 = vmatprep.subr.mxu0 0.0
        %2226 = vmatpush1.xpose.msra.mxu0 0.0
        %2227 = vmatprep.subr.mxu0 0.0
        %2228 = vmatpush1.xpose.msra.mxu0 0.0
        %2229 = vmatprep.subr.mxu0 0.0
        %2230 = vmatpush1.xpose.msra.mxu0 0.0
        %2231 = vmatprep.subr.mxu0 0.0
        %2232 = vmatpush1.xpose.msra.mxu0 0.0
        %2233 = vmatprep.subr.mxu0 0.0
        %2234 = vmatpush1.xpose.msra.mxu0 0.0
        %2235 = vmatprep.subr.mxu0 0.0
        %2236 = vmatpush1.xpose.msra.mxu0 0.0
        %2237 = vmatprep.subr.mxu0 0.0
        %2238 = vmatpush1.xpose.msra.mxu0 0.0
        %2239 = vmatprep.subr.mxu0 0.0
        %2240 = vmatpush1.xpose.msra.mxu0 0.0
        %2241 = vmatprep.subr.mxu0 0.0
        %2242 = vmatpush1.xpose.msra.mxu0 0.0
        %2243 = vmatprep.subr.mxu0 0.0
        %2244 = vmatpush1.xpose.msra.mxu0 0.0
        %2245 = vmatprep.subr.mxu0 0.0
        %2246 = vmatpush1.xpose.msra.mxu0 0.0
        %2247 = vmatprep.subr.mxu0 0.0
        %2248 = vmatpush1.xpose.msra.mxu0 0.0
        %2249 = vmatprep.subr.mxu0 0.0
        %2250 = vmatpush1.xpose.msra.mxu0 0.0
        %2251 = vmatprep.subr.mxu0 0.0
        %2252 = vmatpush1.xpose.msra.mxu0 0.0
        %2253 = vmatprep.subr.mxu0 0.0
        %2254 = vmatpush1.xpose.msra.mxu0 0.0
        %2255 = vmatprep.subr.mxu0 0.0
        %2256 = vmatpush1.xpose.msra.mxu0 0.0
        %2257 = vmatprep.subr.mxu0 0.0
        %2258 = vmatpush1.xpose.msra.mxu0 0.0
        %2259 = vmatprep.subr.mxu0 0.0
        %2260 = vmatpush1.xpose.msra.mxu0 0.0
        %2261 = vmatprep.subr.mxu0 0.0
        %2262 = vmatpush1.xpose.msra.mxu0 0.0
        %2263 = vmatprep.subr.mxu0 0.0
        %2264 = vmatpush1.xpose.msra.mxu0 0.0
        %2265 = vmatprep.subr.mxu0 0.0
        %2266 = vmatpush1.xpose.msra.mxu0 0.0
        %2267 = vmatprep.subr.mxu0 0.0
        %2268 = vmatpush1.xpose.msra.mxu0 0.0
        %2269 = vmatprep.subr.mxu0 0.0
        %2270 = vmatpush1.xpose.msra.mxu0 0.0
        %2271 = vmatprep.subr.mxu0 0.0
        %2272 = vmatpush1.xpose.msra.mxu0 0.0
        %2273 = vmatprep.subr.mxu0 0.0
        %2274 = vmatpush1.xpose.msra.mxu0 0.0
        %2275 = vmatprep.subr.mxu0 0.0
        %2276 = vmatpush1.xpose.msra.mxu0 0.0
        %2277 = vmatprep.subr.mxu0 0.0
        %2278 = vmatpush1.xpose.msra.mxu0 0.0
        %2279 = vmatprep.subr.mxu0 0.0
        %2280 = vmatpush1.xpose.msra.mxu0 0.0
        %2281 = vmatprep.subr.mxu0 0.0
        %2282 = vmatpush1.xpose.msra.mxu0 0.0
        %2283 = vmatprep.subr.mxu0 0.0
        %2284 = vmatpush1.xpose.msra.mxu0 0.0
        %2285 = vmatprep.mubr.f32.mxu0 %v892
        %2286 = vmatmul.mubr.f32.gmra.mrb[0].mxu0 %v884
        %v2287 = vpop.f32.mrb[0].mxu0
        %v2288 = vadd.f32 0.0, %v2287
        %v2289 = vpop.f32.mrb[0].mxu0
        %2290 = vdwg.mxu0
        %2291 = vmatprep.subr.mxu0 %v304
        %2292 = vmatpush1.xpose.msra.mxu0 %v303
        %2293 = vmatprep.subr.mxu0 %v560
        %2294 = vmatpush1.xpose.msra.mxu0 %v559
        %2295 = vmatprep.subr.mxu0 0.0
        %2296 = vmatpush1.xpose.msra.mxu0 0.0
        %2297 = vmatprep.subr.mxu0 0.0
        %2298 = vmatpush1.xpose.msra.mxu0 0.0
        %2299 = vmatprep.subr.mxu0 0.0
        %2300 = vmatpush1.xpose.msra.mxu0 0.0
        %2301 = vmatprep.subr.mxu0 0.0
        %2302 = vmatpush1.xpose.msra.mxu0 0.0
        %2303 = vmatprep.subr.mxu0 0.0
        %2304 = vmatpush1.xpose.msra.mxu0 0.0
        %2305 = vmatprep.subr.mxu0 0.0
        %2306 = vmatpush1.xpose.msra.mxu0 0.0
        %2307 = vmatprep.subr.mxu0 0.0
        %2308 = vmatpush1.xpose.msra.mxu0 0.0
        %2309 = vmatprep.subr.mxu0 0.0
        %2310 = vmatpush1.xpose.msra.mxu0 0.0
        %2311 = vmatprep.subr.mxu0 0.0
        %2312 = vmatpush1.xpose.msra.mxu0 0.0
        %2313 = vmatprep.subr.mxu0 0.0
        %2314 = vmatpush1.xpose.msra.mxu0 0.0
        %2315 = vmatprep.subr.mxu0 0.0
        %2316 = vmatpush1.xpose.msra.mxu0 0.0
        %2317 = vmatprep.subr.mxu0 0.0
        %2318 = vmatpush1.xpose.msra.mxu0 0.0
        %2319 = vmatprep.subr.mxu0 0.0
        %2320 = vmatpush1.xpose.msra.mxu0 0.0
        %2321 = vmatprep.subr.mxu0 0.0
        %2322 = vmatpush1.xpose.msra.mxu0 0.0
        %2323 = vmatprep.subr.mxu0 0.0
        %2324 = vmatpush1.xpose.msra.mxu0 0.0
        %2325 = vmatprep.subr.mxu0 0.0
        %2326 = vmatpush1.xpose.msra.mxu0 0.0
        %2327 = vmatprep.subr.mxu0 0.0
        %2328 = vmatpush1.xpose.msra.mxu0 0.0
        %2329 = vmatprep.subr.mxu0 0.0
        %2330 = vmatpush1.xpose.msra.mxu0 0.0
        %2331 = vmatprep.subr.mxu0 0.0
        %2332 = vmatpush1.xpose.msra.mxu0 0.0
        %2333 = vmatprep.subr.mxu0 0.0
        %2334 = vmatpush1.xpose.msra.mxu0 0.0
        %2335 = vmatprep.subr.mxu0 0.0
        %2336 = vmatpush1.xpose.msra.mxu0 0.0
        %2337 = vmatprep.subr.mxu0 0.0
        %2338 = vmatpush1.xpose.msra.mxu0 0.0
        %2339 = vmatprep.subr.mxu0 0.0
        %2340 = vmatpush1.xpose.msra.mxu0 0.0
        %2341 = vmatprep.subr.mxu0 0.0
        %2342 = vmatpush1.xpose.msra.mxu0 0.0
        %2343 = vmatprep.subr.mxu0 0.0
        %2344 = vmatpush1.xpose.msra.mxu0 0.0
        %2345 = vmatprep.subr.mxu0 0.0
        %2346 = vmatpush1.xpose.msra.mxu0 0.0
        %2347 = vmatprep.subr.mxu0 0.0
        %2348 = vmatpush1.xpose.msra.mxu0 0.0
        %2349 = vmatprep.subr.mxu0 0.0
        %2350 = vmatpush1.xpose.msra.mxu0 0.0
        %2351 = vmatprep.subr.mxu0 0.0
        %2352 = vmatpush1.xpose.msra.mxu0 0.0
        %2353 = vmatprep.subr.mxu0 0.0
        %2354 = vmatpush1.xpose.msra.mxu0 0.0
        %2355 = vmatprep.mubr.f32.mxu0 %v893
        %2356 = vmatmul.mubr.f32.gmra.mrb[0].mxu0 %v891
        %v2357 = vpop.f32.mrb[0].mxu0
        %v2358 = vadd.f32 %v2288, %v2357
        %v2359 = vpop.f32.mrb[0].mxu0
        %2360 = vdwg.mxu0
        %2361 = vmatprep.subr.mxu0 %v306
        %2362 = vmatpush1.xpose.msra.mxu0 %v305
        %2363 = vmatprep.subr.mxu0 %v562
        %2364 = vmatpush1.xpose.msra.mxu0 %v561
        %2365 = vmatprep.subr.mxu0 0.0
        %2366 = vmatpush1.xpose.msra.mxu0 0.0
        %2367 = vmatprep.subr.mxu0 0.0
        %2368 = vmatpush1.xpose.msra.mxu0 0.0
        %2369 = vmatprep.subr.mxu0 0.0
        %2370 = vmatpush1.xpose.msra.mxu0 0.0
        %2371 = vmatprep.subr.mxu0 0.0
        %2372 = vmatpush1.xpose.msra.mxu0 0.0
        %2373 = vmatprep.subr.mxu0 0.0
        %2374 = vmatpush1.xpose.msra.mxu0 0.0
        %2375 = vmatprep.subr.mxu0 0.0
        %2376 = vmatpush1.xpose.msra.mxu0 0.0
        %2377 = vmatprep.subr.mxu0 0.0
        %2378 = vmatpush1.xpose.msra.mxu0 0.0
        %2379 = vmatprep.subr.mxu0 0.0
        %2380 = vmatpush1.xpose.msra.mxu0 0.0
        %2381 = vmatprep.subr.mxu0 0.0
        %2382 = vmatpush1.xpose.msra.mxu0 0.0
        %2383 = vmatprep.subr.mxu0 0.0
        %2384 = vmatpush1.xpose.msra.mxu0 0.0
        %2385 = vmatprep.subr.mxu0 0.0
        %2386 = vmatpush1.xpose.msra.mxu0 0.0
        %2387 = vmatprep.subr.mxu0 0.0
        %2388 = vmatpush1.xpose.msra.mxu0 0.0
        %2389 = vmatprep.subr.mxu0 0.0
        %2390 = vmatpush1.xpose.msra.mxu0 0.0
        %2391 = vmatprep.subr.mxu0 0.0
        %2392 = vmatpush1.xpose.msra.mxu0 0.0
        %2393 = vmatprep.subr.mxu0 0.0
        %2394 = vmatpush1.xpose.msra.mxu0 0.0
        %2395 = vmatprep.subr.mxu0 0.0
        %2396 = vmatpush1.xpose.msra.mxu0 0.0
        %2397 = vmatprep.subr.mxu0 0.0
        %2398 = vmatpush1.xpose.msra.mxu0 0.0
        %2399 = vmatprep.subr.mxu0 0.0
        %2400 = vmatpush1.xpose.msra.mxu0 0.0
        %2401 = vmatprep.subr.mxu0 0.0
        %2402 = vmatpush1.xpose.msra.mxu0 0.0
        %2403 = vmatprep.subr.mxu0 0.0
        %2404 = vmatpush1.xpose.msra.mxu0 0.0
        %2405 = vmatprep.subr.mxu0 0.0
        %2406 = vmatpush1.xpose.msra.mxu0 0.0
        %2407 = vmatprep.subr.mxu0 0.0
        %2408 = vmatpush1.xpose.msra.mxu0 0.0
        %2409 = vmatprep.subr.mxu0 0.0
        %2410 = vmatpush1.xpose.msra.mxu0 0.0
        %2411 = vmatprep.subr.mxu0 0.0
        %2412 = vmatpush1.xpose.msra.mxu0 0.0
        %2413 = vmatprep.subr.mxu0 0.0
        %2414 = vmatpush1.xpose.msra.mxu0 0.0
        %2415 = vmatprep.subr.mxu0 0.0
        %2416 = vmatpush1.xpose.msra.mxu0 0.0
        %2417 = vmatprep.subr.mxu0 0.0
        %2418 = vmatpush1.xpose.msra.mxu0 0.0
        %2419 = vmatprep.subr.mxu0 0.0
        %2420 = vmatpush1.xpose.msra.mxu0 0.0
        %2421 = vmatprep.subr.mxu0 0.0
        %2422 = vmatpush1.xpose.msra.mxu0 0.0
        %2423 = vmatprep.subr.mxu0 0.0
        %2424 = vmatpush1.xpose.msra.mxu0 0.0
        %2425 = vmatprep.mubr.f32.mxu0 %v909
        %2426 = vmatmul.mubr.f32.gmra.mrb[0].mxu0 %v901
        %v2427 = vpop.f32.mrb[0].mxu0
        %v2428 = vadd.f32 %v2358, %v2427
        %v2429 = vpop.f32.mrb[0].mxu0
        %2430 = vdwg.mxu0
        %2431 = vmatprep.subr.mxu0 %v308
        %2432 = vmatpush1.xpose.msra.mxu0 %v307
        %2433 = vmatprep.subr.mxu0 %v564
        %2434 = vmatpush1.xpose.msra.mxu0 %v563
        %2435 = vmatprep.subr.mxu0 0.0
        %2436 = vmatpush1.xpose.msra.mxu0 0.0
        %2437 = vmatprep.subr.mxu0 0.0
        %2438 = vmatpush1.xpose.msra.mxu0 0.0
        %2439 = vmatprep.subr.mxu0 0.0
        %2440 = vmatpush1.xpose.msra.mxu0 0.0
        %2441 = vmatprep.subr.mxu0 0.0
        %2442 = vmatpush1.xpose.msra.mxu0 0.0
        %2443 = vmatprep.subr.mxu0 0.0
        %2444 = vmatpush1.xpose.msra.mxu0 0.0
        %2445 = vmatprep.subr.mxu0 0.0
        %2446 = vmatpush1.xpose.msra.mxu0 0.0
        %2447 = vmatprep.subr.mxu0 0.0
        %2448 = vmatpush1.xpose.msra.mxu0 0.0
        %2449 = vmatprep.subr.mxu0 0.0
        %2450 = vmatpush1.xpose.msra.mxu0 0.0
        %2451 = vmatprep.subr.mxu0 0.0
        %2452 = vmatpush1.xpose.msra.mxu0 0.0
        %2453 = vmatprep.subr.mxu0 0.0
        %2454 = vmatpush1.xpose.msra.mxu0 0.0
        %2455 = vmatprep.subr.mxu0 0.0
        %2456 = vmatpush1.xpose.msra.mxu0 0.0
        %2457 = vmatprep.subr.mxu0 0.0
        %2458 = vmatpush1.xpose.msra.mxu0 0.0
        %2459 = vmatprep.subr.mxu0 0.0
        %2460 = vmatpush1.xpose.msra.mxu0 0.0
        %2461 = vmatprep.subr.mxu0 0.0
        %2462 = vmatpush1.xpose.msra.mxu0 0.0
        %2463 = vmatprep.subr.mxu0 0.0
        %2464 = vmatpush1.xpose.msra.mxu0 0.0
        %2465 = vmatprep.subr.mxu0 0.0
        %2466 = vmatpush1.xpose.msra.mxu0 0.0
        %2467 = vmatprep.subr.mxu0 0.0
        %2468 = vmatpush1.xpose.msra.mxu0 0.0
        %2469 = vmatprep.subr.mxu0 0.0
        %2470 = vmatpush1.xpose.msra.mxu0 0.0
        %2471 = vmatprep.subr.mxu0 0.0
        %2472 = vmatpush1.xpose.msra.mxu0 0.0
        %2473 = vmatprep.subr.mxu0 0.0
        %2474 = vmatpush1.xpose.msra.mxu0 0.0
        %2475 = vmatprep.subr.mxu0 0.0
        %2476 = vmatpush1.xpose.msra.mxu0 0.0
        %2477 = vmatprep.subr.mxu0 0.0
        %2478 = vmatpush1.xpose.msra.mxu0 0.0
        %2479 = vmatprep.subr.mxu0 0.0
        %2480 = vmatpush1.xpose.msra.mxu0 0.0
        %2481 = vmatprep.subr.mxu0 0.0
        %2482 = vmatpush1.xpose.msra.mxu0 0.0
        %2483 = vmatprep.subr.mxu0 0.0
        %2484 = vmatpush1.xpose.msra.mxu0 0.0
        %2485 = vmatprep.subr.mxu0 0.0
        %2486 = vmatpush1.xpose.msra.mxu0 0.0
        %2487 = vmatprep.subr.mxu0 0.0
        %2488 = vmatpush1.xpose.msra.mxu0 0.0
        %2489 = vmatprep.subr.mxu0 0.0
        %2490 = vmatpush1.xpose.msra.mxu0 0.0
        %2491 = vmatprep.subr.mxu0 0.0
        %2492 = vmatpush1.xpose.msra.mxu0 0.0
        %2493 = vmatprep.subr.mxu0 0.0
        %2494 = vmatpush1.xpose.msra.mxu0 0.0
        %2495 = vmatprep.mubr.f32.mxu0 %v910
        %2496 = vmatmul.mubr.f32.gmra.mrb[0].mxu0 %v908
        %v2497 = vpop.f32.mrb[0].mxu0
        %v2498 = vadd.f32 %v2428, %v2497
        %v2499 = vpop.f32.mrb[0].mxu0
        %2500 = vdwg.mxu0
        %2501 = vmatprep.subr.mxu0 %v310
        %2502 = vmatpush1.xpose.msra.mxu0 %v309
        %2503 = vmatprep.subr.mxu0 %v566
        %2504 = vmatpush1.xpose.msra.mxu0 %v565
        %2505 = vmatprep.subr.mxu0 0.0
        %2506 = vmatpush1.xpose.msra.mxu0 0.0
        %2507 = vmatprep.subr.mxu0 0.0
        %2508 = vmatpush1.xpose.msra.mxu0 0.0
        %2509 = vmatprep.subr.mxu0 0.0
        %2510 = vmatpush1.xpose.msra.mxu0 0.0
        %2511 = vmatprep.subr.mxu0 0.0
        %2512 = vmatpush1.xpose.msra.mxu0 0.0
        %2513 = vmatprep.subr.mxu0 0.0
        %2514 = vmatpush1.xpose.msra.mxu0 0.0
        %2515 = vmatprep.subr.mxu0 0.0
        %2516 = vmatpush1.xpose.msra.mxu0 0.0
        %2517 = vmatprep.subr.mxu0 0.0
        %2518 = vmatpush1.xpose.msra.mxu0 0.0
        %2519 = vmatprep.subr.mxu0 0.0
        %2520 = vmatpush1.xpose.msra.mxu0 0.0
        %2521 = vmatprep.subr.mxu0 0.0
        %2522 = vmatpush1.xpose.msra.mxu0 0.0
        %2523 = vmatprep.subr.mxu0 0.0
        %2524 = vmatpush1.xpose.msra.mxu0 0.0
        %2525 = vmatprep.subr.mxu0 0.0
        %2526 = vmatpush1.xpose.msra.mxu0 0.0
        %2527 = vmatprep.subr.mxu0 0.0
        %2528 = vmatpush1.xpose.msra.mxu0 0.0
        %2529 = vmatprep.subr.mxu0 0.0
        %2530 = vmatpush1.xpose.msra.mxu0 0.0
        %2531 = vmatprep.subr.mxu0 0.0
        %2532 = vmatpush1.xpose.msra.mxu0 0.0
        %2533 = vmatprep.subr.mxu0 0.0
        %2534 = vmatpush1.xpose.msra.mxu0 0.0
        %2535 = vmatprep.subr.mxu0 0.0
        %2536 = vmatpush1.xpose.msra.mxu0 0.0
        %2537 = vmatprep.subr.mxu0 0.0
        %2538 = vmatpush1.xpose.msra.mxu0 0.0
        %2539 = vmatprep.subr.mxu0 0.0
        %2540 = vmatpush1.xpose.msra.mxu0 0.0
        %2541 = vmatprep.subr.mxu0 0.0
        %2542 = vmatpush1.xpose.msra.mxu0 0.0
        %2543 = vmatprep.subr.mxu0 0.0
        %2544 = vmatpush1.xpose.msra.mxu0 0.0
        %2545 = vmatprep.subr.mxu0 0.0
        %2546 = vmatpush1.xpose.msra.mxu0 0.0
        %2547 = vmatprep.subr.mxu0 0.0
        %2548 = vmatpush1.xpose.msra.mxu0 0.0
        %2549 = vmatprep.subr.mxu0 0.0
        %2550 = vmatpush1.xpose.msra.mxu0 0.0
        %2551 = vmatprep.subr.mxu0 0.0
        %2552 = vmatpush1.xpose.msra.mxu0 0.0
        %2553 = vmatprep.subr.mxu0 0.0
        %2554 = vmatpush1.xpose.msra.mxu0 0.0
        %2555 = vmatprep.subr.mxu0 0.0
        %2556 = vmatpush1.xpose.msra.mxu0 0.0
        %2557 = vmatprep.subr.mxu0 0.0
        %2558 = vmatpush1.xpose.msra.mxu0 0.0
        %2559 = vmatprep.subr.mxu0 0.0
        %2560 = vmatpush1.xpose.msra.mxu0 0.0
        %2561 = vmatprep.subr.mxu0 0.0
        %2562 = vmatpush1.xpose.msra.mxu0 0.0
        %2563 = vmatprep.subr.mxu0 0.0
        %2564 = vmatpush1.xpose.msra.mxu0 0.0
        %2565 = vmatprep.mubr.f32.mxu0 %v926
        %2566 = vmatmul.mubr.f32.gmra.mrb[0].mxu0 %v918
        %v2567 = vpop.f32.mrb[0].mxu0
        %v2568 = vadd.f32 %v2498, %v2567
        %v2569 = vpop.f32.mrb[0].mxu0
        %2570 = vdwg.mxu0
        %2571 = vmatprep.subr.mxu0 %v312
        %2572 = vmatpush1.xpose.msra.mxu0 %v311
        %2573 = vmatprep.subr.mxu0 %v568
        %2574 = vmatpush1.xpose.msra.mxu0 %v567
        %2575 = vmatprep.subr.mxu0 0.0
        %2576 = vmatpush1.xpose.msra.mxu0 0.0
        %2577 = vmatprep.subr.mxu0 0.0
        %2578 = vmatpush1.xpose.msra.mxu0 0.0
        %2579 = vmatprep.subr.mxu0 0.0
        %2580 = vmatpush1.xpose.msra.mxu0 0.0
        %2581 = vmatprep.subr.mxu0 0.0
        %2582 = vmatpush1.xpose.msra.mxu0 0.0
        %2583 = vmatprep.subr.mxu0 0.0
        %2584 = vmatpush1.xpose.msra.mxu0 0.0
        %2585 = vmatprep.subr.mxu0 0.0
        %2586 = vmatpush1.xpose.msra.mxu0 0.0
        %2587 = vmatprep.subr.mxu0 0.0
        %2588 = vmatpush1.xpose.msra.mxu0 0.0
        %2589 = vmatprep.subr.mxu0 0.0
        %2590 = vmatpush1.xpose.msra.mxu0 0.0
        %2591 = vmatprep.subr.mxu0 0.0
        %2592 = vmatpush1.xpose.msra.mxu0 0.0
        %2593 = vmatprep.subr.mxu0 0.0
        %2594 = vmatpush1.xpose.msra.mxu0 0.0
        %2595 = vmatprep.subr.mxu0 0.0
        %2596 = vmatpush1.xpose.msra.mxu0 0.0
        %2597 = vmatprep.subr.mxu0 0.0
        %2598 = vmatpush1.xpose.msra.mxu0 0.0
        %2599 = vmatprep.subr.mxu0 0.0
        %2600 = vmatpush1.xpose.msra.mxu0 0.0
        %2601 = vmatprep.subr.mxu0 0.0
        %2602 = vmatpush1.xpose.msra.mxu0 0.0
        %2603 = vmatprep.subr.mxu0 0.0
        %2604 = vmatpush1.xpose.msra.mxu0 0.0
        %2605 = vmatprep.subr.mxu0 0.0
        %2606 = vmatpush1.xpose.msra.mxu0 0.0
        %2607 = vmatprep.subr.mxu0 0.0
        %2608 = vmatpush1.xpose.msra.mxu0 0.0
        %2609 = vmatprep.subr.mxu0 0.0
        %2610 = vmatpush1.xpose.msra.mxu0 0.0
        %2611 = vmatprep.subr.mxu0 0.0
        %2612 = vmatpush1.xpose.msra.mxu0 0.0
        %2613 = vmatprep.subr.mxu0 0.0
        %2614 = vmatpush1.xpose.msra.mxu0 0.0
        %2615 = vmatprep.subr.mxu0 0.0
        %2616 = vmatpush1.xpose.msra.mxu0 0.0
        %2617 = vmatprep.subr.mxu0 0.0
        %2618 = vmatpush1.xpose.msra.mxu0 0.0
        %2619 = vmatprep.subr.mxu0 0.0
        %2620 = vmatpush1.xpose.msra.mxu0 0.0
        %2621 = vmatprep.subr.mxu0 0.0
        %2622 = vmatpush1.xpose.msra.mxu0 0.0
        %2623 = vmatprep.subr.mxu0 0.0
        %2624 = vmatpush1.xpose.msra.mxu0 0.0
        %2625 = vmatprep.subr.mxu0 0.0
        %2626 = vmatpush1.xpose.msra.mxu0 0.0
        %2627 = vmatprep.subr.mxu0 0.0
        %2628 = vmatpush1.xpose.msra.mxu0 0.0
        %2629 = vmatprep.subr.mxu0 0.0
        %2630 = vmatpush1.xpose.msra.mxu0 0.0
        %2631 = vmatprep.subr.mxu0 0.0
        %2632 = vmatpush1.xpose.msra.mxu0 0.0
        %2633 = vmatprep.subr.mxu0 0.0
        %2634 = vmatpush1.xpose.msra.mxu0 0.0
        %2635 = vmatprep.mubr.f32.mxu0 %v927
        %2636 = vmatmul.mubr.f32.gmra.mrb[0].mxu0 %v925
        %v2637 = vpop.f32.mrb[0].mxu0
        %v2638 = vadd.f32 %v2568, %v2637
        %v2639 = vpop.f32.mrb[0].mxu0
        %2640 = vdwg.mxu0
        %2641 = vmatprep.subr.mxu0 %v314
        %2642 = vmatpush1.xpose.msra.mxu0 %v313
        %2643 = vmatprep.subr.mxu0 %v570
        %2644 = vmatpush1.xpose.msra.mxu0 %v569
        %2645 = vmatprep.subr.mxu0 0.0
        %2646 = vmatpush1.xpose.msra.mxu0 0.0
        %2647 = vmatprep.subr.mxu0 0.0
        %2648 = vmatpush1.xpose.msra.mxu0 0.0
        %2649 = vmatprep.subr.mxu0 0.0
        %2650 = vmatpush1.xpose.msra.mxu0 0.0
        %2651 = vmatprep.subr.mxu0 0.0
        %2652 = vmatpush1.xpose.msra.mxu0 0.0
        %2653 = vmatprep.subr.mxu0 0.0
        %2654 = vmatpush1.xpose.msra.mxu0 0.0
        %2655 = vmatprep.subr.mxu0 0.0
        %2656 = vmatpush1.xpose.msra.mxu0 0.0
        %2657 = vmatprep.subr.mxu0 0.0
        %2658 = vmatpush1.xpose.msra.mxu0 0.0
        %2659 = vmatprep.subr.mxu0 0.0
        %2660 = vmatpush1.xpose.msra.mxu0 0.0
        %2661 = vmatprep.subr.mxu0 0.0
        %2662 = vmatpush1.xpose.msra.mxu0 0.0
        %2663 = vmatprep.subr.mxu0 0.0
        %2664 = vmatpush1.xpose.msra.mxu0 0.0
        %2665 = vmatprep.subr.mxu0 0.0
        %2666 = vmatpush1.xpose.msra.mxu0 0.0
        %2667 = vmatprep.subr.mxu0 0.0
        %2668 = vmatpush1.xpose.msra.mxu0 0.0
        %2669 = vmatprep.subr.mxu0 0.0
        %2670 = vmatpush1.xpose.msra.mxu0 0.0
        %2671 = vmatprep.subr.mxu0 0.0
        %2672 = vmatpush1.xpose.msra.mxu0 0.0
        %2673 = vmatprep.subr.mxu0 0.0
        %2674 = vmatpush1.xpose.msra.mxu0 0.0
        %2675 = vmatprep.subr.mxu0 0.0
        %2676 = vmatpush1.xpose.msra.mxu0 0.0
        %2677 = vmatprep.subr.mxu0 0.0
        %2678 = vmatpush1.xpose.msra.mxu0 0.0
        %2679 = vmatprep.subr.mxu0 0.0
        %2680 = vmatpush1.xpose.msra.mxu0 0.0
        %2681 = vmatprep.subr.mxu0 0.0
        %2682 = vmatpush1.xpose.msra.mxu0 0.0
        %2683 = vmatprep.subr.mxu0 0.0
        %2684 = vmatpush1.xpose.msra.mxu0 0.0
        %2685 = vmatprep.subr.mxu0 0.0
        %2686 = vmatpush1.xpose.msra.mxu0 0.0
        %2687 = vmatprep.subr.mxu0 0.0
        %2688 = vmatpush1.xpose.msra.mxu0 0.0
        %2689 = vmatprep.subr.mxu0 0.0
        %2690 = vmatpush1.xpose.msra.mxu0 0.0
        %2691 = vmatprep.subr.mxu0 0.0
        %2692 = vmatpush1.xpose.msra.mxu0 0.0
        %2693 = vmatprep.subr.mxu0 0.0
        %2694 = vmatpush1.xpose.msra.mxu0 0.0
        %2695 = vmatprep.subr.mxu0 0.0
        %2696 = vmatpush1.xpose.msra.mxu0 0.0
        %2697 = vmatprep.subr.mxu0 0.0
        %2698 = vmatpush1.xpose.msra.mxu0 0.0
        %2699 = vmatprep.subr.mxu0 0.0
        %2700 = vmatpush1.xpose.msra.mxu0 0.0
        %2701 = vmatprep.subr.mxu0 0.0
        %2702 = vmatpush1.xpose.msra.mxu0 0.0
        %2703 = vmatprep.subr.mxu0 0.0
        %2704 = vmatpush1.xpose.msra.mxu0 0.0
        %2705 = vmatprep.mubr.f32.mxu0 %v943
        %2706 = vmatmul.mubr.f32.gmra.mrb[0].mxu0 %v935
        %v2707 = vpop.f32.mrb[0].mxu0
        %v2708 = vadd.f32 %v2638, %v2707
        %v2709 = vpop.f32.mrb[0].mxu0
        %2710 = vdwg.mxu0
        %2711 = vmatprep.subr.mxu0 %v316
        %2712 = vmatpush1.xpose.msra.mxu0 %v315
        %2713 = vmatprep.subr.mxu0 %v572
        %2714 = vmatpush1.xpose.msra.mxu0 %v571
        %2715 = vmatprep.subr.mxu0 0.0
        %2716 = vmatpush1.xpose.msra.mxu0 0.0
        %2717 = vmatprep.subr.mxu0 0.0
        %2718 = vmatpush1.xpose.msra.mxu0 0.0
        %2719 = vmatprep.subr.mxu0 0.0
        %2720 = vmatpush1.xpose.msra.mxu0 0.0
        %2721 = vmatprep.subr.mxu0 0.0
        %2722 = vmatpush1.xpose.msra.mxu0 0.0
        %2723 = vmatprep.subr.mxu0 0.0
        %2724 = vmatpush1.xpose.msra.mxu0 0.0
        %2725 = vmatprep.subr.mxu0 0.0
        %2726 = vmatpush1.xpose.msra.mxu0 0.0
        %2727 = vmatprep.subr.mxu0 0.0
        %2728 = vmatpush1.xpose.msra.mxu0 0.0
        %2729 = vmatprep.subr.mxu0 0.0
        %2730 = vmatpush1.xpose.msra.mxu0 0.0
        %2731 = vmatprep.subr.mxu0 0.0
        %2732 = vmatpush1.xpose.msra.mxu0 0.0
        %2733 = vmatprep.subr.mxu0 0.0
        %2734 = vmatpush1.xpose.msra.mxu0 0.0
        %2735 = vmatprep.subr.mxu0 0.0
        %2736 = vmatpush1.xpose.msra.mxu0 0.0
        %2737 = vmatprep.subr.mxu0 0.0
        %2738 = vmatpush1.xpose.msra.mxu0 0.0
        %2739 = vmatprep.subr.mxu0 0.0
        %2740 = vmatpush1.xpose.msra.mxu0 0.0
        %2741 = vmatprep.subr.mxu0 0.0
        %2742 = vmatpush1.xpose.msra.mxu0 0.0
        %2743 = vmatprep.subr.mxu0 0.0
        %2744 = vmatpush1.xpose.msra.mxu0 0.0
        %2745 = vmatprep.subr.mxu0 0.0
        %2746 = vmatpush1.xpose.msra.mxu0 0.0
        %2747 = vmatprep.subr.mxu0 0.0
        %2748 = vmatpush1.xpose.msra.mxu0 0.0
        %2749 = vmatprep.subr.mxu0 0.0
        %2750 = vmatpush1.xpose.msra.mxu0 0.0
        %2751 = vmatprep.subr.mxu0 0.0
        %2752 = vmatpush1.xpose.msra.mxu0 0.0
        %2753 = vmatprep.subr.mxu0 0.0
        %2754 = vmatpush1.xpose.msra.mxu0 0.0
        %2755 = vmatprep.subr.mxu0 0.0
        %2756 = vmatpush1.xpose.msra.mxu0 0.0
        %2757 = vmatprep.subr.mxu0 0.0
        %2758 = vmatpush1.xpose.msra.mxu0 0.0
        %2759 = vmatprep.subr.mxu0 0.0
        %2760 = vmatpush1.xpose.msra.mxu0 0.0
        %2761 = vmatprep.subr.mxu0 0.0
        %2762 = vmatpush1.xpose.msra.mxu0 0.0
        %2763 = vmatprep.subr.mxu0 0.0
        %2764 = vmatpush1.xpose.msra.mxu0 0.0
        %2765 = vmatprep.subr.mxu0 0.0
        %2766 = vmatpush1.xpose.msra.mxu0 0.0
        %2767 = vmatprep.subr.mxu0 0.0
        %2768 = vmatpush1.xpose.msra.mxu0 0.0
        %2769 = vmatprep.subr.mxu0 0.0
        %2770 = vmatpush1.xpose.msra.mxu0 0.0
        %2771 = vmatprep.subr.mxu0 0.0
        %2772 = vmatpush1.xpose.msra.mxu0 0.0
        %2773 = vmatprep.subr.mxu0 0.0
        %2774 = vmatpush1.xpose.msra.mxu0 0.0
        %2775 = vmatprep.mubr.f32.mxu0 %v944
        %2776 = vmatmul.mubr.f32.gmra.mrb[0].mxu0 %v942
        %v2777 = vpop.f32.mrb[0].mxu0
        %v2778 = vadd.f32 %v2708, %v2777
        %v2779 = vpop.f32.mrb[0].mxu0
        %2780 = vdwg.mxu0
        %2781 = vmatprep.subr.mxu0 %v318
        %2782 = vmatpush1.xpose.msra.mxu0 %v317
        %2783 = vmatprep.subr.mxu0 %v574
        %2784 = vmatpush1.xpose.msra.mxu0 %v573
        %2785 = vmatprep.subr.mxu0 0.0
        %2786 = vmatpush1.xpose.msra.mxu0 0.0
        %2787 = vmatprep.subr.mxu0 0.0
        %2788 = vmatpush1.xpose.msra.mxu0 0.0
        %2789 = vmatprep.subr.mxu0 0.0
        %2790 = vmatpush1.xpose.msra.mxu0 0.0
        %2791 = vmatprep.subr.mxu0 0.0
        %2792 = vmatpush1.xpose.msra.mxu0 0.0
        %2793 = vmatprep.subr.mxu0 0.0
        %2794 = vmatpush1.xpose.msra.mxu0 0.0
        %2795 = vmatprep.subr.mxu0 0.0
        %2796 = vmatpush1.xpose.msra.mxu0 0.0
        %2797 = vmatprep.subr.mxu0 0.0
        %2798 = vmatpush1.xpose.msra.mxu0 0.0
        %2799 = vmatprep.subr.mxu0 0.0
        %2800 = vmatpush1.xpose.msra.mxu0 0.0
        %2801 = vmatprep.subr.mxu0 0.0
        %2802 = vmatpush1.xpose.msra.mxu0 0.0
        %2803 = vmatprep.subr.mxu0 0.0
        %2804 = vmatpush1.xpose.msra.mxu0 0.0
        %2805 = vmatprep.subr.mxu0 0.0
        %2806 = vmatpush1.xpose.msra.mxu0 0.0
        %2807 = vmatprep.subr.mxu0 0.0
        %2808 = vmatpush1.xpose.msra.mxu0 0.0
        %2809 = vmatprep.subr.mxu0 0.0
        %2810 = vmatpush1.xpose.msra.mxu0 0.0
        %2811 = vmatprep.subr.mxu0 0.0
        %2812 = vmatpush1.xpose.msra.mxu0 0.0
        %2813 = vmatprep.subr.mxu0 0.0
        %2814 = vmatpush1.xpose.msra.mxu0 0.0
        %2815 = vmatprep.subr.mxu0 0.0
        %2816 = vmatpush1.xpose.msra.mxu0 0.0
        %2817 = vmatprep.subr.mxu0 0.0
        %2818 = vmatpush1.xpose.msra.mxu0 0.0
        %2819 = vmatprep.subr.mxu0 0.0
        %2820 = vmatpush1.xpose.msra.mxu0 0.0
        %2821 = vmatprep.subr.mxu0 0.0
        %2822 = vmatpush1.xpose.msra.mxu0 0.0
        %2823 = vmatprep.subr.mxu0 0.0
        %2824 = vmatpush1.xpose.msra.mxu0 0.0
        %2825 = vmatprep.subr.mxu0 0.0
        %2826 = vmatpush1.xpose.msra.mxu0 0.0
        %2827 = vmatprep.subr.mxu0 0.0
        %2828 = vmatpush1.xpose.msra.mxu0 0.0
        %2829 = vmatprep.subr.mxu0 0.0
        %2830 = vmatpush1.xpose.msra.mxu0 0.0
        %2831 = vmatprep.subr.mxu0 0.0
        %2832 = vmatpush1.xpose.msra.mxu0 0.0
        %2833 = vmatprep.subr.mxu0 0.0
        %2834 = vmatpush1.xpose.msra.mxu0 0.0
        %2835 = vmatprep.subr.mxu0 0.0
        %2836 = vmatpush1.xpose.msra.mxu0 0.0
        %2837 = vmatprep.subr.mxu0 0.0
        %2838 = vmatpush1.xpose.msra.mxu0 0.0
        %2839 = vmatprep.subr.mxu0 0.0
        %2840 = vmatpush1.xpose.msra.mxu0 0.0
        %2841 = vmatprep.subr.mxu0 0.0
        %2842 = vmatpush1.xpose.msra.mxu0 0.0
        %2843 = vmatprep.subr.mxu0 0.0
        %2844 = vmatpush1.xpose.msra.mxu0 0.0
        %2845 = vmatprep.mubr.f32.mxu0 %v960
        %2846 = vmatmul.mubr.f32.gmra.mrb[0].mxu0 %v952
        %v2847 = vpop.f32.mrb[0].mxu0
        %v2848 = vadd.f32 %v2778, %v2847
        %v2849 = vpop.f32.mrb[0].mxu0
        %2850 = vdwg.mxu0
        %2851 = vmatprep.subr.mxu0 %v320
        %2852 = vmatpush1.xpose.msra.mxu0 %v319
        %2853 = vmatprep.subr.mxu0 %v576
        %2854 = vmatpush1.xpose.msra.mxu0 %v575
        %2855 = vmatprep.subr.mxu0 0.0
        %2856 = vmatpush1.xpose.msra.mxu0 0.0
        %2857 = vmatprep.subr.mxu0 0.0
        %2858 = vmatpush1.xpose.msra.mxu0 0.0
        %2859 = vmatprep.subr.mxu0 0.0
        %2860 = vmatpush1.xpose.msra.mxu0 0.0
        %2861 = vmatprep.subr.mxu0 0.0
        %2862 = vmatpush1.xpose.msra.mxu0 0.0
        %2863 = vmatprep.subr.mxu0 0.0
        %2864 = vmatpush1.xpose.msra.mxu0 0.0
        %2865 = vmatprep.subr.mxu0 0.0
        %2866 = vmatpush1.xpose.msra.mxu0 0.0
        %2867 = vmatprep.subr.mxu0 0.0
        %2868 = vmatpush1.xpose.msra.mxu0 0.0
        %2869 = vmatprep.subr.mxu0 0.0
        %2870 = vmatpush1.xpose.msra.mxu0 0.0
        %2871 = vmatprep.subr.mxu0 0.0
        %2872 = vmatpush1.xpose.msra.mxu0 0.0
        %2873 = vmatprep.subr.mxu0 0.0
        %2874 = vmatpush1.xpose.msra.mxu0 0.0
        %2875 = vmatprep.subr.mxu0 0.0
        %2876 = vmatpush1.xpose.msra.mxu0 0.0
        %2877 = vmatprep.subr.mxu0 0.0
        %2878 = vmatpush1.xpose.msra.mxu0 0.0
        %2879 = vmatprep.subr.mxu0 0.0
        %2880 = vmatpush1.xpose.msra.mxu0 0.0
        %2881 = vmatprep.subr.mxu0 0.0
        %2882 = vmatpush1.xpose.msra.mxu0 0.0
        %2883 = vmatprep.subr.mxu0 0.0
        %2884 = vmatpush1.xpose.msra.mxu0 0.0
        %2885 = vmatprep.subr.mxu0 0.0
        %2886 = vmatpush1.xpose.msra.mxu0 0.0
        %2887 = vmatprep.subr.mxu0 0.0
        %2888 = vmatpush1.xpose.msra.mxu0 0.0
        %2889 = vmatprep.subr.mxu0 0.0
        %2890 = vmatpush1.xpose.msra.mxu0 0.0
        %2891 = vmatprep.subr.mxu0 0.0
        %2892 = vmatpush1.xpose.msra.mxu0 0.0
        %2893 = vmatprep.subr.mxu0 0.0
        %2894 = vmatpush1.xpose.msra.mxu0 0.0
        %2895 = vmatprep.subr.mxu0 0.0
        %2896 = vmatpush1.xpose.msra.mxu0 0.0
        %2897 = vmatprep.subr.mxu0 0.0
        %2898 = vmatpush1.xpose.msra.mxu0 0.0
        %2899 = vmatprep.subr.mxu0 0.0
        %2900 = vmatpush1.xpose.msra.mxu0 0.0
        %2901 = vmatprep.subr.mxu0 0.0
        %2902 = vmatpush1.xpose.msra.mxu0 0.0
        %2903 = vmatprep.subr.mxu0 0.0
        %2904 = vmatpush1.xpose.msra.mxu0 0.0
        %2905 = vmatprep.subr.mxu0 0.0
        %2906 = vmatpush1.xpose.msra.mxu0 0.0
        %2907 = vmatprep.subr.mxu0 0.0
        %2908 = vmatpush1.xpose.msra.mxu0 0.0
        %2909 = vmatprep.subr.mxu0 0.0
        %2910 = vmatpush1.xpose.msra.mxu0 0.0
        %2911 = vmatprep.subr.mxu0 0.0
        %2912 = vmatpush1.xpose.msra.mxu0 0.0
        %2913 = vmatprep.subr.mxu0 0.0
        %2914 = vmatpush1.xpose.msra.mxu0 0.0
        %2915 = vmatprep.mubr.f32.mxu0 %v961
        %2916 = vmatmul.mubr.f32.gmra.mrb[0].mxu0 %v959
        %v2917 = vpop.f32.mrb[0].mxu0
        %v2918 = vadd.f32 %v2848, %v2917
        %v2919 = vpop.f32.mrb[0].mxu0
        %2920 = vdwg.mxu0
        %2921 = vmatprep.subr.mxu0 %v322
        %2922 = vmatpush1.xpose.msra.mxu0 %v321
        %2923 = vmatprep.subr.mxu0 %v578
        %2924 = vmatpush1.xpose.msra.mxu0 %v577
        %2925 = vmatprep.subr.mxu0 0.0
        %2926 = vmatpush1.xpose.msra.mxu0 0.0
        %2927 = vmatprep.subr.mxu0 0.0
        %2928 = vmatpush1.xpose.msra.mxu0 0.0
        %2929 = vmatprep.subr.mxu0 0.0
        %2930 = vmatpush1.xpose.msra.mxu0 0.0
        %2931 = vmatprep.subr.mxu0 0.0
        %2932 = vmatpush1.xpose.msra.mxu0 0.0
        %2933 = vmatprep.subr.mxu0 0.0
        %2934 = vmatpush1.xpose.msra.mxu0 0.0
        %2935 = vmatprep.subr.mxu0 0.0
        %2936 = vmatpush1.xpose.msra.mxu0 0.0
        %2937 = vmatprep.subr.mxu0 0.0
        %2938 = vmatpush1.xpose.msra.mxu0 0.0
        %2939 = vmatprep.subr.mxu0 0.0
        %2940 = vmatpush1.xpose.msra.mxu0 0.0
        %2941 = vmatprep.subr.mxu0 0.0
        %2942 = vmatpush1.xpose.msra.mxu0 0.0
        %2943 = vmatprep.subr.mxu0 0.0
        %2944 = vmatpush1.xpose.msra.mxu0 0.0
        %2945 = vmatprep.subr.mxu0 0.0
        %2946 = vmatpush1.xpose.msra.mxu0 0.0
        %2947 = vmatprep.subr.mxu0 0.0
        %2948 = vmatpush1.xpose.msra.mxu0 0.0
        %2949 = vmatprep.subr.mxu0 0.0
        %2950 = vmatpush1.xpose.msra.mxu0 0.0
        %2951 = vmatprep.subr.mxu0 0.0
        %2952 = vmatpush1.xpose.msra.mxu0 0.0
        %2953 = vmatprep.subr.mxu0 0.0
        %2954 = vmatpush1.xpose.msra.mxu0 0.0
        %2955 = vmatprep.subr.mxu0 0.0
        %2956 = vmatpush1.xpose.msra.mxu0 0.0
        %2957 = vmatprep.subr.mxu0 0.0
        %2958 = vmatpush1.xpose.msra.mxu0 0.0
        %2959 = vmatprep.subr.mxu0 0.0
        %2960 = vmatpush1.xpose.msra.mxu0 0.0
        %2961 = vmatprep.subr.mxu0 0.0
        %2962 = vmatpush1.xpose.msra.mxu0 0.0
        %2963 = vmatprep.subr.mxu0 0.0
        %2964 = vmatpush1.xpose.msra.mxu0 0.0
        %2965 = vmatprep.subr.mxu0 0.0
        %2966 = vmatpush1.xpose.msra.mxu0 0.0
        %2967 = vmatprep.subr.mxu0 0.0
        %2968 = vmatpush1.xpose.msra.mxu0 0.0
        %2969 = vmatprep.subr.mxu0 0.0
        %2970 = vmatpush1.xpose.msra.mxu0 0.0
        %2971 = vmatprep.subr.mxu0 0.0
        %2972 = vmatpush1.xpose.msra.mxu0 0.0
        %2973 = vmatprep.subr.mxu0 0.0
        %2974 = vmatpush1.xpose.msra.mxu0 0.0
        %2975 = vmatprep.subr.mxu0 0.0
        %2976 = vmatpush1.xpose.msra.mxu0 0.0
        %2977 = vmatprep.subr.mxu0 0.0
        %2978 = vmatpush1.xpose.msra.mxu0 0.0
        %2979 = vmatprep.subr.mxu0 0.0
        %2980 = vmatpush1.xpose.msra.mxu0 0.0
        %2981 = vmatprep.subr.mxu0 0.0
        %2982 = vmatpush1.xpose.msra.mxu0 0.0
        %2983 = vmatprep.subr.mxu0 0.0
        %2984 = vmatpush1.xpose.msra.mxu0 0.0
        %2985 = vmatprep.mubr.f32.mxu0 %v977
        %2986 = vmatmul.mubr.f32.gmra.mrb[0].mxu0 %v969
        %v2987 = vpop.f32.mrb[0].mxu0
        %v2988 = vadd.f32 %v2918, %v2987
        %v2989 = vpop.f32.mrb[0].mxu0
        %2990 = vdwg.mxu0
        %2991 = vmatprep.subr.mxu0 %v324
        %2992 = vmatpush1.xpose.msra.mxu0 %v323
        %2993 = vmatprep.subr.mxu0 %v580
        %2994 = vmatpush1.xpose.msra.mxu0 %v579
        %2995 = vmatprep.subr.mxu0 0.0
        %2996 = vmatpush1.xpose.msra.mxu0 0.0
        %2997 = vmatprep.subr.mxu0 0.0
        %2998 = vmatpush1.xpose.msra.mxu0 0.0
        %2999 = vmatprep.subr.mxu0 0.0
        %3000 = vmatpush1.xpose.msra.mxu0 0.0
        %3001 = vmatprep.subr.mxu0 0.0
        %3002 = vmatpush1.xpose.msra.mxu0 0.0
        %3003 = vmatprep.subr.mxu0 0.0
        %3004 = vmatpush1.xpose.msra.mxu0 0.0
        %3005 = vmatprep.subr.mxu0 0.0
        %3006 = vmatpush1.xpose.msra.mxu0 0.0
        %3007 = vmatprep.subr.mxu0 0.0
        %3008 = vmatpush1.xpose.msra.mxu0 0.0
        %3009 = vmatprep.subr.mxu0 0.0
        %3010 = vmatpush1.xpose.msra.mxu0 0.0
        %3011 = vmatprep.subr.mxu0 0.0
        %3012 = vmatpush1.xpose.msra.mxu0 0.0
        %3013 = vmatprep.subr.mxu0 0.0
        %3014 = vmatpush1.xpose.msra.mxu0 0.0
        %3015 = vmatprep.subr.mxu0 0.0
        %3016 = vmatpush1.xpose.msra.mxu0 0.0
        %3017 = vmatprep.subr.mxu0 0.0
        %3018 = vmatpush1.xpose.msra.mxu0 0.0
        %3019 = vmatprep.subr.mxu0 0.0
        %3020 = vmatpush1.xpose.msra.mxu0 0.0
        %3021 = vmatprep.subr.mxu0 0.0
        %3022 = vmatpush1.xpose.msra.mxu0 0.0
        %3023 = vmatprep.subr.mxu0 0.0
        %3024 = vmatpush1.xpose.msra.mxu0 0.0
        %3025 = vmatprep.subr.mxu0 0.0
        %3026 = vmatpush1.xpose.msra.mxu0 0.0
        %3027 = vmatprep.subr.mxu0 0.0
        %3028 = vmatpush1.xpose.msra.mxu0 0.0
        %3029 = vmatprep.subr.mxu0 0.0
        %3030 = vmatpush1.xpose.msra.mxu0 0.0
        %3031 = vmatprep.subr.mxu0 0.0
        %3032 = vmatpush1.xpose.msra.mxu0 0.0
        %3033 = vmatprep.subr.mxu0 0.0
        %3034 = vmatpush1.xpose.msra.mxu0 0.0
        %3035 = vmatprep.subr.mxu0 0.0
        %3036 = vmatpush1.xpose.msra.mxu0 0.0
        %3037 = vmatprep.subr.mxu0 0.0
        %3038 = vmatpush1.xpose.msra.mxu0 0.0
        %3039 = vmatprep.subr.mxu0 0.0
        %3040 = vmatpush1.xpose.msra.mxu0 0.0
        %3041 = vmatprep.subr.mxu0 0.0
        %3042 = vmatpush1.xpose.msra.mxu0 0.0
        %3043 = vmatprep.subr.mxu0 0.0
        %3044 = vmatpush1.xpose.msra.mxu0 0.0
        %3045 = vmatprep.subr.mxu0 0.0
        %3046 = vmatpush1.xpose.msra.mxu0 0.0
        %3047 = vmatprep.subr.mxu0 0.0
        %3048 = vmatpush1.xpose.msra.mxu0 0.0
        %3049 = vmatprep.subr.mxu0 0.0
        %3050 = vmatpush1.xpose.msra.mxu0 0.0
        %3051 = vmatprep.subr.mxu0 0.0
        %3052 = vmatpush1.xpose.msra.mxu0 0.0
        %3053 = vmatprep.subr.mxu0 0.0
        %3054 = vmatpush1.xpose.msra.mxu0 0.0
        %3055 = vmatprep.mubr.f32.mxu0 %v978
        %3056 = vmatmul.mubr.f32.gmra.mrb[0].mxu0 %v976
        %v3057 = vpop.f32.mrb[0].mxu0
        %v3058 = vadd.f32 %v2988, %v3057
        %v3059 = vpop.f32.mrb[0].mxu0
        %3060 = vdwg.mxu0
        %3061 = vmatprep.subr.mxu0 %v326
        %3062 = vmatpush1.xpose.msra.mxu0 %v325
        %3063 = vmatprep.subr.mxu0 %v582
        %3064 = vmatpush1.xpose.msra.mxu0 %v581
        %3065 = vmatprep.subr.mxu0 0.0
        %3066 = vmatpush1.xpose.msra.mxu0 0.0
        %3067 = vmatprep.subr.mxu0 0.0
        %3068 = vmatpush1.xpose.msra.mxu0 0.0
        %3069 = vmatprep.subr.mxu0 0.0
        %3070 = vmatpush1.xpose.msra.mxu0 0.0
        %3071 = vmatprep.subr.mxu0 0.0
        %3072 = vmatpush1.xpose.msra.mxu0 0.0
        %3073 = vmatprep.subr.mxu0 0.0
        %3074 = vmatpush1.xpose.msra.mxu0 0.0
        %3075 = vmatprep.subr.mxu0 0.0
        %3076 = vmatpush1.xpose.msra.mxu0 0.0
        %3077 = vmatprep.subr.mxu0 0.0
        %3078 = vmatpush1.xpose.msra.mxu0 0.0
        %3079 = vmatprep.subr.mxu0 0.0
        %3080 = vmatpush1.xpose.msra.mxu0 0.0
        %3081 = vmatprep.subr.mxu0 0.0
        %3082 = vmatpush1.xpose.msra.mxu0 0.0
        %3083 = vmatprep.subr.mxu0 0.0
        %3084 = vmatpush1.xpose.msra.mxu0 0.0
        %3085 = vmatprep.subr.mxu0 0.0
        %3086 = vmatpush1.xpose.msra.mxu0 0.0
        %3087 = vmatprep.subr.mxu0 0.0
        %3088 = vmatpush1.xpose.msra.mxu0 0.0
        %3089 = vmatprep.subr.mxu0 0.0
        %3090 = vmatpush1.xpose.msra.mxu0 0.0
        %3091 = vmatprep.subr.mxu0 0.0
        %3092 = vmatpush1.xpose.msra.mxu0 0.0
        %3093 = vmatprep.subr.mxu0 0.0
        %3094 = vmatpush1.xpose.msra.mxu0 0.0
        %3095 = vmatprep.subr.mxu0 0.0
        %3096 = vmatpush1.xpose.msra.mxu0 0.0
        %3097 = vmatprep.subr.mxu0 0.0
        %3098 = vmatpush1.xpose.msra.mxu0 0.0
        %3099 = vmatprep.subr.mxu0 0.0
        %3100 = vmatpush1.xpose.msra.mxu0 0.0
        %3101 = vmatprep.subr.mxu0 0.0
        %3102 = vmatpush1.xpose.msra.mxu0 0.0
        %3103 = vmatprep.subr.mxu0 0.0
        %3104 = vmatpush1.xpose.msra.mxu0 0.0
        %3105 = vmatprep.subr.mxu0 0.0
        %3106 = vmatpush1.xpose.msra.mxu0 0.0
        %3107 = vmatprep.subr.mxu0 0.0
        %3108 = vmatpush1.xpose.msra.mxu0 0.0
        %3109 = vmatprep.subr.mxu0 0.0
        %3110 = vmatpush1.xpose.msra.mxu0 0.0
        %3111 = vmatprep.subr.mxu0 0.0
        %3112 = vmatpush1.xpose.msra.mxu0 0.0
        %3113 = vmatprep.subr.mxu0 0.0
        %3114 = vmatpush1.xpose.msra.mxu0 0.0
        %3115 = vmatprep.subr.mxu0 0.0
        %3116 = vmatpush1.xpose.msra.mxu0 0.0
        %3117 = vmatprep.subr.mxu0 0.0
        %3118 = vmatpush1.xpose.msra.mxu0 0.0
        %3119 = vmatprep.subr.mxu0 0.0
        %3120 = vmatpush1.xpose.msra.mxu0 0.0
        %3121 = vmatprep.subr.mxu0 0.0
        %3122 = vmatpush1.xpose.msra.mxu0 0.0
        %3123 = vmatprep.subr.mxu0 0.0
        %3124 = vmatpush1.xpose.msra.mxu0 0.0
        %3125 = vmatprep.mubr.f32.mxu0 %v994
        %3126 = vmatmul.mubr.f32.gmra.mrb[0].mxu0 %v986
        %v3127 = vpop.f32.mrb[0].mxu0
        %v3128 = vadd.f32 %v3058, %v3127
        %v3129 = vpop.f32.mrb[0].mxu0
        %3130 = vdwg.mxu0
        %3131 = vmatprep.subr.mxu0 %v328
        %3132 = vmatpush1.xpose.msra.mxu0 %v327
        %3133 = vmatprep.subr.mxu0 %v584
        %3134 = vmatpush1.xpose.msra.mxu0 %v583
        %3135 = vmatprep.subr.mxu0 0.0
        %3136 = vmatpush1.xpose.msra.mxu0 0.0
        %3137 = vmatprep.subr.mxu0 0.0
        %3138 = vmatpush1.xpose.msra.mxu0 0.0
        %3139 = vmatprep.subr.mxu0 0.0
        %3140 = vmatpush1.xpose.msra.mxu0 0.0
        %3141 = vmatprep.subr.mxu0 0.0
        %3142 = vmatpush1.xpose.msra.mxu0 0.0
        %3143 = vmatprep.subr.mxu0 0.0
        %3144 = vmatpush1.xpose.msra.mxu0 0.0
        %3145 = vmatprep.subr.mxu0 0.0
        %3146 = vmatpush1.xpose.msra.mxu0 0.0
        %3147 = vmatprep.subr.mxu0 0.0
        %3148 = vmatpush1.xpose.msra.mxu0 0.0
        %3149 = vmatprep.subr.mxu0 0.0
        %3150 = vmatpush1.xpose.msra.mxu0 0.0
        %3151 = vmatprep.subr.mxu0 0.0
        %3152 = vmatpush1.xpose.msra.mxu0 0.0
        %3153 = vmatprep.subr.mxu0 0.0
        %3154 = vmatpush1.xpose.msra.mxu0 0.0
        %3155 = vmatprep.subr.mxu0 0.0
        %3156 = vmatpush1.xpose.msra.mxu0 0.0
        %3157 = vmatprep.subr.mxu0 0.0
        %3158 = vmatpush1.xpose.msra.mxu0 0.0
        %3159 = vmatprep.subr.mxu0 0.0
        %3160 = vmatpush1.xpose.msra.mxu0 0.0
        %3161 = vmatprep.subr.mxu0 0.0
        %3162 = vmatpush1.xpose.msra.mxu0 0.0
        %3163 = vmatprep.subr.mxu0 0.0
        %3164 = vmatpush1.xpose.msra.mxu0 0.0
        %3165 = vmatprep.subr.mxu0 0.0
        %3166 = vmatpush1.xpose.msra.mxu0 0.0
        %3167 = vmatprep.subr.mxu0 0.0
        %3168 = vmatpush1.xpose.msra.mxu0 0.0
        %3169 = vmatprep.subr.mxu0 0.0
        %3170 = vmatpush1.xpose.msra.mxu0 0.0
        %3171 = vmatprep.subr.mxu0 0.0
        %3172 = vmatpush1.xpose.msra.mxu0 0.0
        %3173 = vmatprep.subr.mxu0 0.0
        %3174 = vmatpush1.xpose.msra.mxu0 0.0
        %3175 = vmatprep.subr.mxu0 0.0
        %3176 = vmatpush1.xpose.msra.mxu0 0.0
        %3177 = vmatprep.subr.mxu0 0.0
        %3178 = vmatpush1.xpose.msra.mxu0 0.0
        %3179 = vmatprep.subr.mxu0 0.0
        %3180 = vmatpush1.xpose.msra.mxu0 0.0
        %3181 = vmatprep.subr.mxu0 0.0
        %3182 = vmatpush1.xpose.msra.mxu0 0.0
        %3183 = vmatprep.subr.mxu0 0.0
        %3184 = vmatpush1.xpose.msra.mxu0 0.0
        %3185 = vmatprep.subr.mxu0 0.0
        %3186 = vmatpush1.xpose.msra.mxu0 0.0
        %3187 = vmatprep.subr.mxu0 0.0
        %3188 = vmatpush1.xpose.msra.mxu0 0.0
        %3189 = vmatprep.subr.mxu0 0.0
        %3190 = vmatpush1.xpose.msra.mxu0 0.0
        %3191 = vmatprep.subr.mxu0 0.0
        %3192 = vmatpush1.xpose.msra.mxu0 0.0
        %3193 = vmatprep.subr.mxu0 0.0
        %3194 = vmatpush1.xpose.msra.mxu0 0.0
        %3195 = vmatprep.mubr.f32.mxu0 %v995
        %3196 = vmatmul.mubr.f32.gmra.mrb[0].mxu0 %v993
        %v3197 = vpop.f32.mrb[0].mxu0
        %v3198 = vadd.f32 %v3128, %v3197
        %v3199 = vpop.f32.mrb[0].mxu0
        %3200 = vdwg.mxu0
        %3201 = vmatprep.subr.mxu0 %v330
        %3202 = vmatpush1.xpose.msra.mxu0 %v329
        %3203 = vmatprep.subr.mxu0 %v586
        %3204 = vmatpush1.xpose.msra.mxu0 %v585
        %3205 = vmatprep.subr.mxu0 0.0
        %3206 = vmatpush1.xpose.msra.mxu0 0.0
        %3207 = vmatprep.subr.mxu0 0.0
        %3208 = vmatpush1.xpose.msra.mxu0 0.0
        %3209 = vmatprep.subr.mxu0 0.0
        %3210 = vmatpush1.xpose.msra.mxu0 0.0
        %3211 = vmatprep.subr.mxu0 0.0
        %3212 = vmatpush1.xpose.msra.mxu0 0.0
        %3213 = vmatprep.subr.mxu0 0.0
        %3214 = vmatpush1.xpose.msra.mxu0 0.0
        %3215 = vmatprep.subr.mxu0 0.0
        %3216 = vmatpush1.xpose.msra.mxu0 0.0
        %3217 = vmatprep.subr.mxu0 0.0
        %3218 = vmatpush1.xpose.msra.mxu0 0.0
        %3219 = vmatprep.subr.mxu0 0.0
        %3220 = vmatpush1.xpose.msra.mxu0 0.0
        %3221 = vmatprep.subr.mxu0 0.0
        %3222 = vmatpush1.xpose.msra.mxu0 0.0
        %3223 = vmatprep.subr.mxu0 0.0
        %3224 = vmatpush1.xpose.msra.mxu0 0.0
        %3225 = vmatprep.subr.mxu0 0.0
        %3226 = vmatpush1.xpose.msra.mxu0 0.0
        %3227 = vmatprep.subr.mxu0 0.0
        %3228 = vmatpush1.xpose.msra.mxu0 0.0
        %3229 = vmatprep.subr.mxu0 0.0
        %3230 = vmatpush1.xpose.msra.mxu0 0.0
        %3231 = vmatprep.subr.mxu0 0.0
        %3232 = vmatpush1.xpose.msra.mxu0 0.0
        %3233 = vmatprep.subr.mxu0 0.0
        %3234 = vmatpush1.xpose.msra.mxu0 0.0
        %3235 = vmatprep.subr.mxu0 0.0
        %3236 = vmatpush1.xpose.msra.mxu0 0.0
        %3237 = vmatprep.subr.mxu0 0.0
        %3238 = vmatpush1.xpose.msra.mxu0 0.0
        %3239 = vmatprep.subr.mxu0 0.0
        %3240 = vmatpush1.xpose.msra.mxu0 0.0
        %3241 = vmatprep.subr.mxu0 0.0
        %3242 = vmatpush1.xpose.msra.mxu0 0.0
        %3243 = vmatprep.subr.mxu0 0.0
        %3244 = vmatpush1.xpose.msra.mxu0 0.0
        %3245 = vmatprep.subr.mxu0 0.0
        %3246 = vmatpush1.xpose.msra.mxu0 0.0
        %3247 = vmatprep.subr.mxu0 0.0
        %3248 = vmatpush1.xpose.msra.mxu0 0.0
        %3249 = vmatprep.subr.mxu0 0.0
        %3250 = vmatpush1.xpose.msra.mxu0 0.0
        %3251 = vmatprep.subr.mxu0 0.0
        %3252 = vmatpush1.xpose.msra.mxu0 0.0
        %3253 = vmatprep.subr.mxu0 0.0
        %3254 = vmatpush1.xpose.msra.mxu0 0.0
        %3255 = vmatprep.subr.mxu0 0.0
        %3256 = vmatpush1.xpose.msra.mxu0 0.0
        %3257 = vmatprep.subr.mxu0 0.0
        %3258 = vmatpush1.xpose.msra.mxu0 0.0
        %3259 = vmatprep.subr.mxu0 0.0
        %3260 = vmatpush1.xpose.msra.mxu0 0.0
        %3261 = vmatprep.subr.mxu0 0.0
        %3262 = vmatpush1.xpose.msra.mxu0 0.0
        %3263 = vmatprep.subr.mxu0 0.0
        %3264 = vmatpush1.xpose.msra.mxu0 0.0
        %3265 = vmatprep.mubr.f32.mxu0 %v1011
        %3266 = vmatmul.mubr.f32.gmra.mrb[0].mxu0 %v1003
        %v3267 = vpop.f32.mrb[0].mxu0
        %v3268 = vadd.f32 %v3198, %v3267
        %v3269 = vpop.f32.mrb[0].mxu0
        %3270 = vdwg.mxu0
        %3271 = vmatprep.subr.mxu0 %v332
        %3272 = vmatpush1.xpose.msra.mxu0 %v331
        %3273 = vmatprep.subr.mxu0 %v588
        %3274 = vmatpush1.xpose.msra.mxu0 %v587
        %3275 = vmatprep.subr.mxu0 0.0
        %3276 = vmatpush1.xpose.msra.mxu0 0.0
        %3277 = vmatprep.subr.mxu0 0.0
        %3278 = vmatpush1.xpose.msra.mxu0 0.0
        %3279 = vmatprep.subr.mxu0 0.0
        %3280 = vmatpush1.xpose.msra.mxu0 0.0
        %3281 = vmatprep.subr.mxu0 0.0
        %3282 = vmatpush1.xpose.msra.mxu0 0.0
        %3283 = vmatprep.subr.mxu0 0.0
        %3284 = vmatpush1.xpose.msra.mxu0 0.0
        %3285 = vmatprep.subr.mxu0 0.0
        %3286 = vmatpush1.xpose.msra.mxu0 0.0
        %3287 = vmatprep.subr.mxu0 0.0
        %3288 = vmatpush1.xpose.msra.mxu0 0.0
        %3289 = vmatprep.subr.mxu0 0.0
        %3290 = vmatpush1.xpose.msra.mxu0 0.0
        %3291 = vmatprep.subr.mxu0 0.0
        %3292 = vmatpush1.xpose.msra.mxu0 0.0
        %3293 = vmatprep.subr.mxu0 0.0
        %3294 = vmatpush1.xpose.msra.mxu0 0.0
        %3295 = vmatprep.subr.mxu0 0.0
        %3296 = vmatpush1.xpose.msra.mxu0 0.0
        %3297 = vmatprep.subr.mxu0 0.0
        %3298 = vmatpush1.xpose.msra.mxu0 0.0
        %3299 = vmatprep.subr.mxu0 0.0
        %3300 = vmatpush1.xpose.msra.mxu0 0.0
        %3301 = vmatprep.subr.mxu0 0.0
        %3302 = vmatpush1.xpose.msra.mxu0 0.0
        %3303 = vmatprep.subr.mxu0 0.0
        %3304 = vmatpush1.xpose.msra.mxu0 0.0
        %3305 = vmatprep.subr.mxu0 0.0
        %3306 = vmatpush1.xpose.msra.mxu0 0.0
        %3307 = vmatprep.subr.mxu0 0.0
        %3308 = vmatpush1.xpose.msra.mxu0 0.0
        %3309 = vmatprep.subr.mxu0 0.0
        %3310 = vmatpush1.xpose.msra.mxu0 0.0
        %3311 = vmatprep.subr.mxu0 0.0
        %3312 = vmatpush1.xpose.msra.mxu0 0.0
        %3313 = vmatprep.subr.mxu0 0.0
        %3314 = vmatpush1.xpose.msra.mxu0 0.0
        %3315 = vmatprep.subr.mxu0 0.0
        %3316 = vmatpush1.xpose.msra.mxu0 0.0
        %3317 = vmatprep.subr.mxu0 0.0
        %3318 = vmatpush1.xpose.msra.mxu0 0.0
        %3319 = vmatprep.subr.mxu0 0.0
        %3320 = vmatpush1.xpose.msra.mxu0 0.0
        %3321 = vmatprep.subr.mxu0 0.0
        %3322 = vmatpush1.xpose.msra.mxu0 0.0
        %3323 = vmatprep.subr.mxu0 0.0
        %3324 = vmatpush1.xpose.msra.mxu0 0.0
        %3325 = vmatprep.subr.mxu0 0.0
        %3326 = vmatpush1.xpose.msra.mxu0 0.0
        %3327 = vmatprep.subr.mxu0 0.0
        %3328 = vmatpush1.xpose.msra.mxu0 0.0
        %3329 = vmatprep.subr.mxu0 0.0
        %3330 = vmatpush1.xpose.msra.mxu0 0.0
        %3331 = vmatprep.subr.mxu0 0.0
        %3332 = vmatpush1.xpose.msra.mxu0 0.0
        %3333 = vmatprep.subr.mxu0 0.0
        %3334 = vmatpush1.xpose.msra.mxu0 0.0
        %3335 = vmatprep.mubr.f32.mxu0 %v1012
        %3336 = vmatmul.mubr.f32.gmra.mrb[0].mxu0 %v1010
        %v3337 = vpop.f32.mrb[0].mxu0
        %v3338 = vadd.f32 %v3268, %v3337
        %v3339 = vpop.f32.mrb[0].mxu0
        %3340 = vdwg.mxu0
        %3341 = vmatprep.subr.mxu0 %v334
        %3342 = vmatpush1.xpose.msra.mxu0 %v333
        %3343 = vmatprep.subr.mxu0 %v590
        %3344 = vmatpush1.xpose.msra.mxu0 %v589
        %3345 = vmatprep.subr.mxu0 0.0
        %3346 = vmatpush1.xpose.msra.mxu0 0.0
        %3347 = vmatprep.subr.mxu0 0.0
        %3348 = vmatpush1.xpose.msra.mxu0 0.0
        %3349 = vmatprep.subr.mxu0 0.0
        %3350 = vmatpush1.xpose.msra.mxu0 0.0
        %3351 = vmatprep.subr.mxu0 0.0
        %3352 = vmatpush1.xpose.msra.mxu0 0.0
        %3353 = vmatprep.subr.mxu0 0.0
        %3354 = vmatpush1.xpose.msra.mxu0 0.0
        %3355 = vmatprep.subr.mxu0 0.0
        %3356 = vmatpush1.xpose.msra.mxu0 0.0
        %3357 = vmatprep.subr.mxu0 0.0
        %3358 = vmatpush1.xpose.msra.mxu0 0.0
        %3359 = vmatprep.subr.mxu0 0.0
        %3360 = vmatpush1.xpose.msra.mxu0 0.0
        %3361 = vmatprep.subr.mxu0 0.0
        %3362 = vmatpush1.xpose.msra.mxu0 0.0
        %3363 = vmatprep.subr.mxu0 0.0
        %3364 = vmatpush1.xpose.msra.mxu0 0.0
        %3365 = vmatprep.subr.mxu0 0.0
        %3366 = vmatpush1.xpose.msra.mxu0 0.0
        %3367 = vmatprep.subr.mxu0 0.0
        %3368 = vmatpush1.xpose.msra.mxu0 0.0
        %3369 = vmatprep.subr.mxu0 0.0
        %3370 = vmatpush1.xpose.msra.mxu0 0.0
        %3371 = vmatprep.subr.mxu0 0.0
        %3372 = vmatpush1.xpose.msra.mxu0 0.0
        %3373 = vmatprep.subr.mxu0 0.0
        %3374 = vmatpush1.xpose.msra.mxu0 0.0
        %3375 = vmatprep.subr.mxu0 0.0
        %3376 = vmatpush1.xpose.msra.mxu0 0.0
        %3377 = vmatprep.subr.mxu0 0.0
        %3378 = vmatpush1.xpose.msra.mxu0 0.0
        %3379 = vmatprep.subr.mxu0 0.0
        %3380 = vmatpush1.xpose.msra.mxu0 0.0
        %3381 = vmatprep.subr.mxu0 0.0
        %3382 = vmatpush1.xpose.msra.mxu0 0.0
        %3383 = vmatprep.subr.mxu0 0.0
        %3384 = vmatpush1.xpose.msra.mxu0 0.0
        %3385 = vmatprep.subr.mxu0 0.0
        %3386 = vmatpush1.xpose.msra.mxu0 0.0
        %3387 = vmatprep.subr.mxu0 0.0
        %3388 = vmatpush1.xpose.msra.mxu0 0.0
        %3389 = vmatprep.subr.mxu0 0.0
        %3390 = vmatpush1.xpose.msra.mxu0 0.0
        %3391 = vmatprep.subr.mxu0 0.0
        %3392 = vmatpush1.xpose.msra.mxu0 0.0
        %3393 = vmatprep.subr.mxu0 0.0
        %3394 = vmatpush1.xpose.msra.mxu0 0.0
        %3395 = vmatprep.subr.mxu0 0.0
        %3396 = vmatpush1.xpose.msra.mxu0 0.0
        %3397 = vmatprep.subr.mxu0 0.0
        %3398 = vmatpush1.xpose.msra.mxu0 0.0
        %3399 = vmatprep.subr.mxu0 0.0
        %3400 = vmatpush1.xpose.msra.mxu0 0.0
        %3401 = vmatprep.subr.mxu0 0.0
        %3402 = vmatpush1.xpose.msra.mxu0 0.0
        %3403 = vmatprep.subr.mxu0 0.0
        %3404 = vmatpush1.xpose.msra.mxu0 0.0
        %3405 = vmatprep.mubr.f32.mxu0 %v1028
        %3406 = vmatmul.mubr.f32.gmra.mrb[0].mxu0 %v1020
        %v3407 = vpop.f32.mrb[0].mxu0
        %v3408 = vadd.f32 %v3338, %v3407
        %v3409 = vpop.f32.mrb[0].mxu0
        %3410 = vdwg.mxu0
        %3411 = vmatprep.subr.mxu0 %v336
        %3412 = vmatpush1.xpose.msra.mxu0 %v335
        %3413 = vmatprep.subr.mxu0 %v592
        %3414 = vmatpush1.xpose.msra.mxu0 %v591
        %3415 = vmatprep.subr.mxu0 0.0
        %3416 = vmatpush1.xpose.msra.mxu0 0.0
        %3417 = vmatprep.subr.mxu0 0.0
        %3418 = vmatpush1.xpose.msra.mxu0 0.0
        %3419 = vmatprep.subr.mxu0 0.0
        %3420 = vmatpush1.xpose.msra.mxu0 0.0
        %3421 = vmatprep.subr.mxu0 0.0
        %3422 = vmatpush1.xpose.msra.mxu0 0.0
        %3423 = vmatprep.subr.mxu0 0.0
        %3424 = vmatpush1.xpose.msra.mxu0 0.0
        %3425 = vmatprep.subr.mxu0 0.0
        %3426 = vmatpush1.xpose.msra.mxu0 0.0
        %3427 = vmatprep.subr.mxu0 0.0
        %3428 = vmatpush1.xpose.msra.mxu0 0.0
        %3429 = vmatprep.subr.mxu0 0.0
        %3430 = vmatpush1.xpose.msra.mxu0 0.0
        %3431 = vmatprep.subr.mxu0 0.0
        %3432 = vmatpush1.xpose.msra.mxu0 0.0
        %3433 = vmatprep.subr.mxu0 0.0
        %3434 = vmatpush1.xpose.msra.mxu0 0.0
        %3435 = vmatprep.subr.mxu0 0.0
        %3436 = vmatpush1.xpose.msra.mxu0 0.0
        %3437 = vmatprep.subr.mxu0 0.0
        %3438 = vmatpush1.xpose.msra.mxu0 0.0
        %3439 = vmatprep.subr.mxu0 0.0
        %3440 = vmatpush1.xpose.msra.mxu0 0.0
        %3441 = vmatprep.subr.mxu0 0.0
        %3442 = vmatpush1.xpose.msra.mxu0 0.0
        %3443 = vmatprep.subr.mxu0 0.0
        %3444 = vmatpush1.xpose.msra.mxu0 0.0
        %3445 = vmatprep.subr.mxu0 0.0
        %3446 = vmatpush1.xpose.msra.mxu0 0.0
        %3447 = vmatprep.subr.mxu0 0.0
        %3448 = vmatpush1.xpose.msra.mxu0 0.0
        %3449 = vmatprep.subr.mxu0 0.0
        %3450 = vmatpush1.xpose.msra.mxu0 0.0
        %3451 = vmatprep.subr.mxu0 0.0
        %3452 = vmatpush1.xpose.msra.mxu0 0.0
        %3453 = vmatprep.subr.mxu0 0.0
        %3454 = vmatpush1.xpose.msra.mxu0 0.0
        %3455 = vmatprep.subr.mxu0 0.0
        %3456 = vmatpush1.xpose.msra.mxu0 0.0
        %3457 = vmatprep.subr.mxu0 0.0
        %3458 = vmatpush1.xpose.msra.mxu0 0.0
        %3459 = vmatprep.subr.mxu0 0.0
        %3460 = vmatpush1.xpose.msra.mxu0 0.0
        %3461 = vmatprep.subr.mxu0 0.0
        %3462 = vmatpush1.xpose.msra.mxu0 0.0
        %3463 = vmatprep.subr.mxu0 0.0
        %3464 = vmatpush1.xpose.msra.mxu0 0.0
        %3465 = vmatprep.subr.mxu0 0.0
        %3466 = vmatpush1.xpose.msra.mxu0 0.0
        %3467 = vmatprep.subr.mxu0 0.0
        %3468 = vmatpush1.xpose.msra.mxu0 0.0
        %3469 = vmatprep.subr.mxu0 0.0
        %3470 = vmatpush1.xpose.msra.mxu0 0.0
        %3471 = vmatprep.subr.mxu0 0.0
        %3472 = vmatpush1.xpose.msra.mxu0 0.0
        %3473 = vmatprep.subr.mxu0 0.0
        %3474 = vmatpush1.xpose.msra.mxu0 0.0
        %3475 = vmatprep.mubr.f32.mxu0 %v1029
        %3476 = vmatmul.mubr.f32.gmra.mrb[0].mxu0 %v1027
        %v3477 = vpop.f32.mrb[0].mxu0
        %v3478 = vadd.f32 %v3408, %v3477
        %v3479 = vpop.f32.mrb[0].mxu0
        %3480 = vdwg.mxu0
        %3481 = vmatprep.subr.mxu0 %v338
        %3482 = vmatpush1.xpose.msra.mxu0 %v337
        %3483 = vmatprep.subr.mxu0 %v594
        %3484 = vmatpush1.xpose.msra.mxu0 %v593
        %3485 = vmatprep.subr.mxu0 0.0
        %3486 = vmatpush1.xpose.msra.mxu0 0.0
        %3487 = vmatprep.subr.mxu0 0.0
        %3488 = vmatpush1.xpose.msra.mxu0 0.0
        %3489 = vmatprep.subr.mxu0 0.0
        %3490 = vmatpush1.xpose.msra.mxu0 0.0
        %3491 = vmatprep.subr.mxu0 0.0
        %3492 = vmatpush1.xpose.msra.mxu0 0.0
        %3493 = vmatprep.subr.mxu0 0.0
        %3494 = vmatpush1.xpose.msra.mxu0 0.0
        %3495 = vmatprep.subr.mxu0 0.0
        %3496 = vmatpush1.xpose.msra.mxu0 0.0
        %3497 = vmatprep.subr.mxu0 0.0
        %3498 = vmatpush1.xpose.msra.mxu0 0.0
        %3499 = vmatprep.subr.mxu0 0.0
        %3500 = vmatpush1.xpose.msra.mxu0 0.0
        %3501 = vmatprep.subr.mxu0 0.0
        %3502 = vmatpush1.xpose.msra.mxu0 0.0
        %3503 = vmatprep.subr.mxu0 0.0
        %3504 = vmatpush1.xpose.msra.mxu0 0.0
        %3505 = vmatprep.subr.mxu0 0.0
        %3506 = vmatpush1.xpose.msra.mxu0 0.0
        %3507 = vmatprep.subr.mxu0 0.0
        %3508 = vmatpush1.xpose.msra.mxu0 0.0
        %3509 = vmatprep.subr.mxu0 0.0
        %3510 = vmatpush1.xpose.msra.mxu0 0.0
        %3511 = vmatprep.subr.mxu0 0.0
        %3512 = vmatpush1.xpose.msra.mxu0 0.0
        %3513 = vmatprep.subr.mxu0 0.0
        %3514 = vmatpush1.xpose.msra.mxu0 0.0
        %3515 = vmatprep.subr.mxu0 0.0
        %3516 = vmatpush1.xpose.msra.mxu0 0.0
        %3517 = vmatprep.subr.mxu0 0.0
        %3518 = vmatpush1.xpose.msra.mxu0 0.0
        %3519 = vmatprep.subr.mxu0 0.0
        %3520 = vmatpush1.xpose.msra.mxu0 0.0
        %3521 = vmatprep.subr.mxu0 0.0
        %3522 = vmatpush1.xpose.msra.mxu0 0.0
        %3523 = vmatprep.subr.mxu0 0.0
        %3524 = vmatpush1.xpose.msra.mxu0 0.0
        %3525 = vmatprep.subr.mxu0 0.0
        %3526 = vmatpush1.xpose.msra.mxu0 0.0
        %3527 = vmatprep.subr.mxu0 0.0
        %3528 = vmatpush1.xpose.msra.mxu0 0.0
        %3529 = vmatprep.subr.mxu0 0.0
        %3530 = vmatpush1.xpose.msra.mxu0 0.0
        %3531 = vmatprep.subr.mxu0 0.0
        %3532 = vmatpush1.xpose.msra.mxu0 0.0
        %3533 = vmatprep.subr.mxu0 0.0
        %3534 = vmatpush1.xpose.msra.mxu0 0.0
        %3535 = vmatprep.subr.mxu0 0.0
        %3536 = vmatpush1.xpose.msra.mxu0 0.0
        %3537 = vmatprep.subr.mxu0 0.0
        %3538 = vmatpush1.xpose.msra.mxu0 0.0
        %3539 = vmatprep.subr.mxu0 0.0
        %3540 = vmatpush1.xpose.msra.mxu0 0.0
        %3541 = vmatprep.subr.mxu0 0.0
        %3542 = vmatpush1.xpose.msra.mxu0 0.0
        %3543 = vmatprep.subr.mxu0 0.0
        %3544 = vmatpush1.xpose.msra.mxu0 0.0
        %3545 = vmatprep.mubr.f32.mxu0 %v1045
        %3546 = vmatmul.mubr.f32.gmra.mrb[0].mxu0 %v1037
        %v3547 = vpop.f32.mrb[0].mxu0
        %v3548 = vadd.f32 %v3478, %v3547
        %v3549 = vpop.f32.mrb[0].mxu0
        %3550 = vdwg.mxu0
        %3551 = vmatprep.subr.mxu0 %v340
        %3552 = vmatpush1.xpose.msra.mxu0 %v339
        %3553 = vmatprep.subr.mxu0 %v596
        %3554 = vmatpush1.xpose.msra.mxu0 %v595
        %3555 = vmatprep.subr.mxu0 0.0
        %3556 = vmatpush1.xpose.msra.mxu0 0.0
        %3557 = vmatprep.subr.mxu0 0.0
        %3558 = vmatpush1.xpose.msra.mxu0 0.0
        %3559 = vmatprep.subr.mxu0 0.0
        %3560 = vmatpush1.xpose.msra.mxu0 0.0
        %3561 = vmatprep.subr.mxu0 0.0
        %3562 = vmatpush1.xpose.msra.mxu0 0.0
        %3563 = vmatprep.subr.mxu0 0.0
        %3564 = vmatpush1.xpose.msra.mxu0 0.0
        %3565 = vmatprep.subr.mxu0 0.0
        %3566 = vmatpush1.xpose.msra.mxu0 0.0
        %3567 = vmatprep.subr.mxu0 0.0
        %3568 = vmatpush1.xpose.msra.mxu0 0.0
        %3569 = vmatprep.subr.mxu0 0.0
        %3570 = vmatpush1.xpose.msra.mxu0 0.0
        %3571 = vmatprep.subr.mxu0 0.0
        %3572 = vmatpush1.xpose.msra.mxu0 0.0
        %3573 = vmatprep.subr.mxu0 0.0
        %3574 = vmatpush1.xpose.msra.mxu0 0.0
        %3575 = vmatprep.subr.mxu0 0.0
        %3576 = vmatpush1.xpose.msra.mxu0 0.0
        %3577 = vmatprep.subr.mxu0 0.0
        %3578 = vmatpush1.xpose.msra.mxu0 0.0
        %3579 = vmatprep.subr.mxu0 0.0
        %3580 = vmatpush1.xpose.msra.mxu0 0.0
        %3581 = vmatprep.subr.mxu0 0.0
        %3582 = vmatpush1.xpose.msra.mxu0 0.0
        %3583 = vmatprep.subr.mxu0 0.0
        %3584 = vmatpush1.xpose.msra.mxu0 0.0
        %3585 = vmatprep.subr.mxu0 0.0
        %3586 = vmatpush1.xpose.msra.mxu0 0.0
        %3587 = vmatprep.subr.mxu0 0.0
        %3588 = vmatpush1.xpose.msra.mxu0 0.0
        %3589 = vmatprep.subr.mxu0 0.0
        %3590 = vmatpush1.xpose.msra.mxu0 0.0
        %3591 = vmatprep.subr.mxu0 0.0
        %3592 = vmatpush1.xpose.msra.mxu0 0.0
        %3593 = vmatprep.subr.mxu0 0.0
        %3594 = vmatpush1.xpose.msra.mxu0 0.0
        %3595 = vmatprep.subr.mxu0 0.0
        %3596 = vmatpush1.xpose.msra.mxu0 0.0
        %3597 = vmatprep.subr.mxu0 0.0
        %3598 = vmatpush1.xpose.msra.mxu0 0.0
        %3599 = vmatprep.subr.mxu0 0.0
        %3600 = vmatpush1.xpose.msra.mxu0 0.0
        %3601 = vmatprep.subr.mxu0 0.0
        %3602 = vmatpush1.xpose.msra.mxu0 0.0
        %3603 = vmatprep.subr.mxu0 0.0
        %3604 = vmatpush1.xpose.msra.mxu0 0.0
        %3605 = vmatprep.subr.mxu0 0.0
        %3606 = vmatpush1.xpose.msra.mxu0 0.0
        %3607 = vmatprep.subr.mxu0 0.0
        %3608 = vmatpush1.xpose.msra.mxu0 0.0
        %3609 = vmatprep.subr.mxu0 0.0
        %3610 = vmatpush1.xpose.msra.mxu0 0.0
        %3611 = vmatprep.subr.mxu0 0.0
        %3612 = vmatpush1.xpose.msra.mxu0 0.0
        %3613 = vmatprep.subr.mxu0 0.0
        %3614 = vmatpush1.xpose.msra.mxu0 0.0
        %3615 = vmatprep.mubr.f32.mxu0 %v1046
        %3616 = vmatmul.mubr.f32.gmra.mrb[0].mxu0 %v1044
        %v3617 = vpop.f32.mrb[0].mxu0
        %v3618 = vadd.f32 %v3548, %v3617
        %v3619 = vpop.f32.mrb[0].mxu0
        %3620 = vdwg.mxu0
        %3621 = vmatprep.subr.mxu0 %v342
        %3622 = vmatpush1.xpose.msra.mxu0 %v341
        %3623 = vmatprep.subr.mxu0 %v598
        %3624 = vmatpush1.xpose.msra.mxu0 %v597
        %3625 = vmatprep.subr.mxu0 0.0
        %3626 = vmatpush1.xpose.msra.mxu0 0.0
        %3627 = vmatprep.subr.mxu0 0.0
        %3628 = vmatpush1.xpose.msra.mxu0 0.0
        %3629 = vmatprep.subr.mxu0 0.0
        %3630 = vmatpush1.xpose.msra.mxu0 0.0
        %3631 = vmatprep.subr.mxu0 0.0
        %3632 = vmatpush1.xpose.msra.mxu0 0.0
        %3633 = vmatprep.subr.mxu0 0.0
        %3634 = vmatpush1.xpose.msra.mxu0 0.0
        %3635 = vmatprep.subr.mxu0 0.0
        %3636 = vmatpush1.xpose.msra.mxu0 0.0
        %3637 = vmatprep.subr.mxu0 0.0
        %3638 = vmatpush1.xpose.msra.mxu0 0.0
        %3639 = vmatprep.subr.mxu0 0.0
        %3640 = vmatpush1.xpose.msra.mxu0 0.0
        %3641 = vmatprep.subr.mxu0 0.0
        %3642 = vmatpush1.xpose.msra.mxu0 0.0
        %3643 = vmatprep.subr.mxu0 0.0
        %3644 = vmatpush1.xpose.msra.mxu0 0.0
        %3645 = vmatprep.subr.mxu0 0.0
        %3646 = vmatpush1.xpose.msra.mxu0 0.0
        %3647 = vmatprep.subr.mxu0 0.0
        %3648 = vmatpush1.xpose.msra.mxu0 0.0
        %3649 = vmatprep.subr.mxu0 0.0
        %3650 = vmatpush1.xpose.msra.mxu0 0.0
        %3651 = vmatprep.subr.mxu0 0.0
        %3652 = vmatpush1.xpose.msra.mxu0 0.0
        %3653 = vmatprep.subr.mxu0 0.0
        %3654 = vmatpush1.xpose.msra.mxu0 0.0
        %3655 = vmatprep.subr.mxu0 0.0
        %3656 = vmatpush1.xpose.msra.mxu0 0.0
        %3657 = vmatprep.subr.mxu0 0.0
        %3658 = vmatpush1.xpose.msra.mxu0 0.0
        %3659 = vmatprep.subr.mxu0 0.0
        %3660 = vmatpush1.xpose.msra.mxu0 0.0
        %3661 = vmatprep.subr.mxu0 0.0
        %3662 = vmatpush1.xpose.msra.mxu0 0.0
        %3663 = vmatprep.subr.mxu0 0.0
        %3664 = vmatpush1.xpose.msra.mxu0 0.0
        %3665 = vmatprep.subr.mxu0 0.0
        %3666 = vmatpush1.xpose.msra.mxu0 0.0
        %3667 = vmatprep.subr.mxu0 0.0
        %3668 = vmatpush1.xpose.msra.mxu0 0.0
        %3669 = vmatprep.subr.mxu0 0.0
        %3670 = vmatpush1.xpose.msra.mxu0 0.0
        %3671 = vmatprep.subr.mxu0 0.0
        %3672 = vmatpush1.xpose.msra.mxu0 0.0
        %3673 = vmatprep.subr.mxu0 0.0
        %3674 = vmatpush1.xpose.msra.mxu0 0.0
        %3675 = vmatprep.subr.mxu0 0.0
        %3676 = vmatpush1.xpose.msra.mxu0 0.0
        %3677 = vmatprep.subr.mxu0 0.0
        %3678 = vmatpush1.xpose.msra.mxu0 0.0
        %3679 = vmatprep.subr.mxu0 0.0
        %3680 = vmatpush1.xpose.msra.mxu0 0.0
        %3681 = vmatprep.subr.mxu0 0.0
        %3682 = vmatpush1.xpose.msra.mxu0 0.0
        %3683 = vmatprep.subr.mxu0 0.0
        %3684 = vmatpush1.xpose.msra.mxu0 0.0
        %3685 = vmatprep.mubr.f32.mxu0 %v1062
        %3686 = vmatmul.mubr.f32.gmra.mrb[0].mxu0 %v1054
        %v3687 = vpop.f32.mrb[0].mxu0
        %v3688 = vadd.f32 %v3618, %v3687
        %v3689 = vpop.f32.mrb[0].mxu0
        %3690 = vdwg.mxu0
        %3691 = vmatprep.subr.mxu0 %v344
        %3692 = vmatpush1.xpose.msra.mxu0 %v343
        %3693 = vmatprep.subr.mxu0 %v600
        %3694 = vmatpush1.xpose.msra.mxu0 %v599
        %3695 = vmatprep.subr.mxu0 0.0
        %3696 = vmatpush1.xpose.msra.mxu0 0.0
        %3697 = vmatprep.subr.mxu0 0.0
        %3698 = vmatpush1.xpose.msra.mxu0 0.0
        %3699 = vmatprep.subr.mxu0 0.0
        %3700 = vmatpush1.xpose.msra.mxu0 0.0
        %3701 = vmatprep.subr.mxu0 0.0
        %3702 = vmatpush1.xpose.msra.mxu0 0.0
        %3703 = vmatprep.subr.mxu0 0.0
        %3704 = vmatpush1.xpose.msra.mxu0 0.0
        %3705 = vmatprep.subr.mxu0 0.0
        %3706 = vmatpush1.xpose.msra.mxu0 0.0
        %3707 = vmatprep.subr.mxu0 0.0
        %3708 = vmatpush1.xpose.msra.mxu0 0.0
        %3709 = vmatprep.subr.mxu0 0.0
        %3710 = vmatpush1.xpose.msra.mxu0 0.0
        %3711 = vmatprep.subr.mxu0 0.0
        %3712 = vmatpush1.xpose.msra.mxu0 0.0
        %3713 = vmatprep.subr.mxu0 0.0
        %3714 = vmatpush1.xpose.msra.mxu0 0.0
        %3715 = vmatprep.subr.mxu0 0.0
        %3716 = vmatpush1.xpose.msra.mxu0 0.0
        %3717 = vmatprep.subr.mxu0 0.0
        %3718 = vmatpush1.xpose.msra.mxu0 0.0
        %3719 = vmatprep.subr.mxu0 0.0
        %3720 = vmatpush1.xpose.msra.mxu0 0.0
        %3721 = vmatprep.subr.mxu0 0.0
        %3722 = vmatpush1.xpose.msra.mxu0 0.0
        %3723 = vmatprep.subr.mxu0 0.0
        %3724 = vmatpush1.xpose.msra.mxu0 0.0
        %3725 = vmatprep.subr.mxu0 0.0
        %3726 = vmatpush1.xpose.msra.mxu0 0.0
        %3727 = vmatprep.subr.mxu0 0.0
        %3728 = vmatpush1.xpose.msra.mxu0 0.0
        %3729 = vmatprep.subr.mxu0 0.0
        %3730 = vmatpush1.xpose.msra.mxu0 0.0
        %3731 = vmatprep.subr.mxu0 0.0
        %3732 = vmatpush1.xpose.msra.mxu0 0.0
        %3733 = vmatprep.subr.mxu0 0.0
        %3734 = vmatpush1.xpose.msra.mxu0 0.0
        %3735 = vmatprep.subr.mxu0 0.0
        %3736 = vmatpush1.xpose.msra.mxu0 0.0
        %3737 = vmatprep.subr.mxu0 0.0
        %3738 = vmatpush1.xpose.msra.mxu0 0.0
        %3739 = vmatprep.subr.mxu0 0.0
        %3740 = vmatpush1.xpose.msra.mxu0 0.0
        %3741 = vmatprep.subr.mxu0 0.0
        %3742 = vmatpush1.xpose.msra.mxu0 0.0
        %3743 = vmatprep.subr.mxu0 0.0
        %3744 = vmatpush1.xpose.msra.mxu0 0.0
        %3745 = vmatprep.subr.mxu0 0.0
        %3746 = vmatpush1.xpose.msra.mxu0 0.0
        %3747 = vmatprep.subr.mxu0 0.0
        %3748 = vmatpush1.xpose.msra.mxu0 0.0
        %3749 = vmatprep.subr.mxu0 0.0
        %3750 = vmatpush1.xpose.msra.mxu0 0.0
        %3751 = vmatprep.subr.mxu0 0.0
        %3752 = vmatpush1.xpose.msra.mxu0 0.0
        %3753 = vmatprep.subr.mxu0 0.0
        %3754 = vmatpush1.xpose.msra.mxu0 0.0
        %3755 = vmatprep.mubr.f32.mxu0 %v1063
        %3756 = vmatmul.mubr.f32.gmra.mrb[0].mxu0 %v1061
        %v3757 = vpop.f32.mrb[0].mxu0
        %v3758 = vadd.f32 %v3688, %v3757
        %v3759 = vpop.f32.mrb[0].mxu0
        %3760 = vdwg.mxu0
        %3761 = vmatprep.subr.mxu0 %v346
        %3762 = vmatpush1.xpose.msra.mxu0 %v345
        %3763 = vmatprep.subr.mxu0 %v602
        %3764 = vmatpush1.xpose.msra.mxu0 %v601
        %3765 = vmatprep.subr.mxu0 0.0
        %3766 = vmatpush1.xpose.msra.mxu0 0.0
        %3767 = vmatprep.subr.mxu0 0.0
        %3768 = vmatpush1.xpose.msra.mxu0 0.0
        %3769 = vmatprep.subr.mxu0 0.0
        %3770 = vmatpush1.xpose.msra.mxu0 0.0
        %3771 = vmatprep.subr.mxu0 0.0
        %3772 = vmatpush1.xpose.msra.mxu0 0.0
        %3773 = vmatprep.subr.mxu0 0.0
        %3774 = vmatpush1.xpose.msra.mxu0 0.0
        %3775 = vmatprep.subr.mxu0 0.0
        %3776 = vmatpush1.xpose.msra.mxu0 0.0
        %3777 = vmatprep.subr.mxu0 0.0
        %3778 = vmatpush1.xpose.msra.mxu0 0.0
        %3779 = vmatprep.subr.mxu0 0.0
        %3780 = vmatpush1.xpose.msra.mxu0 0.0
        %3781 = vmatprep.subr.mxu0 0.0
        %3782 = vmatpush1.xpose.msra.mxu0 0.0
        %3783 = vmatprep.subr.mxu0 0.0
        %3784 = vmatpush1.xpose.msra.mxu0 0.0
        %3785 = vmatprep.subr.mxu0 0.0
        %3786 = vmatpush1.xpose.msra.mxu0 0.0
        %3787 = vmatprep.subr.mxu0 0.0
        %3788 = vmatpush1.xpose.msra.mxu0 0.0
        %3789 = vmatprep.subr.mxu0 0.0
        %3790 = vmatpush1.xpose.msra.mxu0 0.0
        %3791 = vmatprep.subr.mxu0 0.0
        %3792 = vmatpush1.xpose.msra.mxu0 0.0
        %3793 = vmatprep.subr.mxu0 0.0
        %3794 = vmatpush1.xpose.msra.mxu0 0.0
        %3795 = vmatprep.subr.mxu0 0.0
        %3796 = vmatpush1.xpose.msra.mxu0 0.0
        %3797 = vmatprep.subr.mxu0 0.0
        %3798 = vmatpush1.xpose.msra.mxu0 0.0
        %3799 = vmatprep.subr.mxu0 0.0
        %3800 = vmatpush1.xpose.msra.mxu0 0.0
        %3801 = vmatprep.subr.mxu0 0.0
        %3802 = vmatpush1.xpose.msra.mxu0 0.0
        %3803 = vmatprep.subr.mxu0 0.0
        %3804 = vmatpush1.xpose.msra.mxu0 0.0
        %3805 = vmatprep.subr.mxu0 0.0
        %3806 = vmatpush1.xpose.msra.mxu0 0.0
        %3807 = vmatprep.subr.mxu0 0.0
        %3808 = vmatpush1.xpose.msra.mxu0 0.0
        %3809 = vmatprep.subr.mxu0 0.0
        %3810 = vmatpush1.xpose.msra.mxu0 0.0
        %3811 = vmatprep.subr.mxu0 0.0
        %3812 = vmatpush1.xpose.msra.mxu0 0.0
        %3813 = vmatprep.subr.mxu0 0.0
        %3814 = vmatpush1.xpose.msra.mxu0 0.0
        %3815 = vmatprep.subr.mxu0 0.0
        %3816 = vmatpush1.xpose.msra.mxu0 0.0
        %3817 = vmatprep.subr.mxu0 0.0
        %3818 = vmatpush1.xpose.msra.mxu0 0.0
        %3819 = vmatprep.subr.mxu0 0.0
        %3820 = vmatpush1.xpose.msra.mxu0 0.0
        %3821 = vmatprep.subr.mxu0 0.0
        %3822 = vmatpush1.xpose.msra.mxu0 0.0
        %3823 = vmatprep.subr.mxu0 0.0
        %3824 = vmatpush1.xpose.msra.mxu0 0.0
        %3825 = vmatprep.mubr.f32.mxu0 %v1079
        %3826 = vmatmul.mubr.f32.gmra.mrb[0].mxu0 %v1071
        %v3827 = vpop.f32.mrb[0].mxu0
        %v3828 = vadd.f32 %v3758, %v3827
        %v3829 = vpop.f32.mrb[0].mxu0
        %3830 = vdwg.mxu0
        %3831 = vmatprep.subr.mxu0 %v348
        %3832 = vmatpush1.xpose.msra.mxu0 %v347
        %3833 = vmatprep.subr.mxu0 %v604
        %3834 = vmatpush1.xpose.msra.mxu0 %v603
        %3835 = vmatprep.subr.mxu0 0.0
        %3836 = vmatpush1.xpose.msra.mxu0 0.0
        %3837 = vmatprep.subr.mxu0 0.0
        %3838 = vmatpush1.xpose.msra.mxu0 0.0
        %3839 = vmatprep.subr.mxu0 0.0
        %3840 = vmatpush1.xpose.msra.mxu0 0.0
        %3841 = vmatprep.subr.mxu0 0.0
        %3842 = vmatpush1.xpose.msra.mxu0 0.0
        %3843 = vmatprep.subr.mxu0 0.0
        %3844 = vmatpush1.xpose.msra.mxu0 0.0
        %3845 = vmatprep.subr.mxu0 0.0
        %3846 = vmatpush1.xpose.msra.mxu0 0.0
        %3847 = vmatprep.subr.mxu0 0.0
        %3848 = vmatpush1.xpose.msra.mxu0 0.0
        %3849 = vmatprep.subr.mxu0 0.0
        %3850 = vmatpush1.xpose.msra.mxu0 0.0
        %3851 = vmatprep.subr.mxu0 0.0
        %3852 = vmatpush1.xpose.msra.mxu0 0.0
        %3853 = vmatprep.subr.mxu0 0.0
        %3854 = vmatpush1.xpose.msra.mxu0 0.0
        %3855 = vmatprep.subr.mxu0 0.0
        %3856 = vmatpush1.xpose.msra.mxu0 0.0
        %3857 = vmatprep.subr.mxu0 0.0
        %3858 = vmatpush1.xpose.msra.mxu0 0.0
        %3859 = vmatprep.subr.mxu0 0.0
        %3860 = vmatpush1.xpose.msra.mxu0 0.0
        %3861 = vmatprep.subr.mxu0 0.0
        %3862 = vmatpush1.xpose.msra.mxu0 0.0
        %3863 = vmatprep.subr.mxu0 0.0
        %3864 = vmatpush1.xpose.msra.mxu0 0.0
        %3865 = vmatprep.subr.mxu0 0.0
        %3866 = vmatpush1.xpose.msra.mxu0 0.0
        %3867 = vmatprep.subr.mxu0 0.0
        %3868 = vmatpush1.xpose.msra.mxu0 0.0
        %3869 = vmatprep.subr.mxu0 0.0
        %3870 = vmatpush1.xpose.msra.mxu0 0.0
        %3871 = vmatprep.subr.mxu0 0.0
        %3872 = vmatpush1.xpose.msra.mxu0 0.0
        %3873 = vmatprep.subr.mxu0 0.0
        %3874 = vmatpush1.xpose.msra.mxu0 0.0
        %3875 = vmatprep.subr.mxu0 0.0
        %3876 = vmatpush1.xpose.msra.mxu0 0.0
        %3877 = vmatprep.subr.mxu0 0.0
        %3878 = vmatpush1.xpose.msra.mxu0 0.0
        %3879 = vmatprep.subr.mxu0 0.0
        %3880 = vmatpush1.xpose.msra.mxu0 0.0
        %3881 = vmatprep.subr.mxu0 0.0
        %3882 = vmatpush1.xpose.msra.mxu0 0.0
        %3883 = vmatprep.subr.mxu0 0.0
        %3884 = vmatpush1.xpose.msra.mxu0 0.0
        %3885 = vmatprep.subr.mxu0 0.0
        %3886 = vmatpush1.xpose.msra.mxu0 0.0
        %3887 = vmatprep.subr.mxu0 0.0
        %3888 = vmatpush1.xpose.msra.mxu0 0.0
        %3889 = vmatprep.subr.mxu0 0.0
        %3890 = vmatpush1.xpose.msra.mxu0 0.0
        %3891 = vmatprep.subr.mxu0 0.0
        %3892 = vmatpush1.xpose.msra.mxu0 0.0
        %3893 = vmatprep.subr.mxu0 0.0
        %3894 = vmatpush1.xpose.msra.mxu0 0.0
        %3895 = vmatprep.mubr.f32.mxu0 %v1080
        %3896 = vmatmul.mubr.f32.gmra.mrb[0].mxu0 %v1078
        %v3897 = vpop.f32.mrb[0].mxu0
        %v3898 = vadd.f32 %v3828, %v3897
        %v3899 = vpop.f32.mrb[0].mxu0
        %3900 = vdwg.mxu0
        %3901 = vmatprep.subr.mxu0 %v350
        %3902 = vmatpush1.xpose.msra.mxu0 %v349
        %3903 = vmatprep.subr.mxu0 %v606
        %3904 = vmatpush1.xpose.msra.mxu0 %v605
        %3905 = vmatprep.subr.mxu0 0.0
        %3906 = vmatpush1.xpose.msra.mxu0 0.0
        %3907 = vmatprep.subr.mxu0 0.0
        %3908 = vmatpush1.xpose.msra.mxu0 0.0
        %3909 = vmatprep.subr.mxu0 0.0
        %3910 = vmatpush1.xpose.msra.mxu0 0.0
        %3911 = vmatprep.subr.mxu0 0.0
        %3912 = vmatpush1.xpose.msra.mxu0 0.0
        %3913 = vmatprep.subr.mxu0 0.0
        %3914 = vmatpush1.xpose.msra.mxu0 0.0
        %3915 = vmatprep.subr.mxu0 0.0
        %3916 = vmatpush1.xpose.msra.mxu0 0.0
        %3917 = vmatprep.subr.mxu0 0.0
        %3918 = vmatpush1.xpose.msra.mxu0 0.0
        %3919 = vmatprep.subr.mxu0 0.0
        %3920 = vmatpush1.xpose.msra.mxu0 0.0
        %3921 = vmatprep.subr.mxu0 0.0
        %3922 = vmatpush1.xpose.msra.mxu0 0.0
        %3923 = vmatprep.subr.mxu0 0.0
        %3924 = vmatpush1.xpose.msra.mxu0 0.0
        %3925 = vmatprep.subr.mxu0 0.0
        %3926 = vmatpush1.xpose.msra.mxu0 0.0
        %3927 = vmatprep.subr.mxu0 0.0
        %3928 = vmatpush1.xpose.msra.mxu0 0.0
        %3929 = vmatprep.subr.mxu0 0.0
        %3930 = vmatpush1.xpose.msra.mxu0 0.0
        %3931 = vmatprep.subr.mxu0 0.0
        %3932 = vmatpush1.xpose.msra.mxu0 0.0
        %3933 = vmatprep.subr.mxu0 0.0
        %3934 = vmatpush1.xpose.msra.mxu0 0.0
        %3935 = vmatprep.subr.mxu0 0.0
        %3936 = vmatpush1.xpose.msra.mxu0 0.0
        %3937 = vmatprep.subr.mxu0 0.0
        %3938 = vmatpush1.xpose.msra.mxu0 0.0
        %3939 = vmatprep.subr.mxu0 0.0
        %3940 = vmatpush1.xpose.msra.mxu0 0.0
        %3941 = vmatprep.subr.mxu0 0.0
        %3942 = vmatpush1.xpose.msra.mxu0 0.0
        %3943 = vmatprep.subr.mxu0 0.0
        %3944 = vmatpush1.xpose.msra.mxu0 0.0
        %3945 = vmatprep.subr.mxu0 0.0
        %3946 = vmatpush1.xpose.msra.mxu0 0.0
        %3947 = vmatprep.subr.mxu0 0.0
        %3948 = vmatpush1.xpose.msra.mxu0 0.0
        %3949 = vmatprep.subr.mxu0 0.0
        %3950 = vmatpush1.xpose.msra.mxu0 0.0
        %3951 = vmatprep.subr.mxu0 0.0
        %3952 = vmatpush1.xpose.msra.mxu0 0.0
        %3953 = vmatprep.subr.mxu0 0.0
        %3954 = vmatpush1.xpose.msra.mxu0 0.0
        %3955 = vmatprep.subr.mxu0 0.0
        %3956 = vmatpush1.xpose.msra.mxu0 0.0
        %3957 = vmatprep.subr.mxu0 0.0
        %3958 = vmatpush1.xpose.msra.mxu0 0.0
        %3959 = vmatprep.subr.mxu0 0.0
        %3960 = vmatpush1.xpose.msra.mxu0 0.0
        %3961 = vmatprep.subr.mxu0 0.0
        %3962 = vmatpush1.xpose.msra.mxu0 0.0
        %3963 = vmatprep.subr.mxu0 0.0
        %3964 = vmatpush1.xpose.msra.mxu0 0.0
        %3965 = vmatprep.mubr.f32.mxu0 %v1096
        %3966 = vmatmul.mubr.f32.gmra.mrb[0].mxu0 %v1088
        %v3967 = vpop.f32.mrb[0].mxu0
        %v3968 = vadd.f32 %v3898, %v3967
        %v3969 = vpop.f32.mrb[0].mxu0
        %3970 = vdwg.mxu0
        %3971 = vmatprep.subr.mxu0 %v352
        %3972 = vmatpush1.xpose.msra.mxu0 %v351
        %3973 = vmatprep.subr.mxu0 %v608
        %3974 = vmatpush1.xpose.msra.mxu0 %v607
        %3975 = vmatprep.subr.mxu0 0.0
        %3976 = vmatpush1.xpose.msra.mxu0 0.0
        %3977 = vmatprep.subr.mxu0 0.0
        %3978 = vmatpush1.xpose.msra.mxu0 0.0
        %3979 = vmatprep.subr.mxu0 0.0
        %3980 = vmatpush1.xpose.msra.mxu0 0.0
        %3981 = vmatprep.subr.mxu0 0.0
        %3982 = vmatpush1.xpose.msra.mxu0 0.0
        %3983 = vmatprep.subr.mxu0 0.0
        %3984 = vmatpush1.xpose.msra.mxu0 0.0
        %3985 = vmatprep.subr.mxu0 0.0
        %3986 = vmatpush1.xpose.msra.mxu0 0.0
        %3987 = vmatprep.subr.mxu0 0.0
        %3988 = vmatpush1.xpose.msra.mxu0 0.0
        %3989 = vmatprep.subr.mxu0 0.0
        %3990 = vmatpush1.xpose.msra.mxu0 0.0
        %3991 = vmatprep.subr.mxu0 0.0
        %3992 = vmatpush1.xpose.msra.mxu0 0.0
        %3993 = vmatprep.subr.mxu0 0.0
        %3994 = vmatpush1.xpose.msra.mxu0 0.0
        %3995 = vmatprep.subr.mxu0 0.0
        %3996 = vmatpush1.xpose.msra.mxu0 0.0
        %3997 = vmatprep.subr.mxu0 0.0
        %3998 = vmatpush1.xpose.msra.mxu0 0.0
        %3999 = vmatprep.subr.mxu0 0.0
        %4000 = vmatpush1.xpose.msra.mxu0 0.0
        %4001 = vmatprep.subr.mxu0 0.0
        %4002 = vmatpush1.xpose.msra.mxu0 0.0
        %4003 = vmatprep.subr.mxu0 0.0
        %4004 = vmatpush1.xpose.msra.mxu0 0.0
        %4005 = vmatprep.subr.mxu0 0.0
        %4006 = vmatpush1.xpose.msra.mxu0 0.0
        %4007 = vmatprep.subr.mxu0 0.0
        %4008 = vmatpush1.xpose.msra.mxu0 0.0
        %4009 = vmatprep.subr.mxu0 0.0
        %4010 = vmatpush1.xpose.msra.mxu0 0.0
        %4011 = vmatprep.subr.mxu0 0.0
        %4012 = vmatpush1.xpose.msra.mxu0 0.0
        %4013 = vmatprep.subr.mxu0 0.0
        %4014 = vmatpush1.xpose.msra.mxu0 0.0
        %4015 = vmatprep.subr.mxu0 0.0
        %4016 = vmatpush1.xpose.msra.mxu0 0.0
        %4017 = vmatprep.subr.mxu0 0.0
        %4018 = vmatpush1.xpose.msra.mxu0 0.0
        %4019 = vmatprep.subr.mxu0 0.0
        %4020 = vmatpush1.xpose.msra.mxu0 0.0
        %4021 = vmatprep.subr.mxu0 0.0
        %4022 = vmatpush1.xpose.msra.mxu0 0.0
        %4023 = vmatprep.subr.mxu0 0.0
        %4024 = vmatpush1.xpose.msra.mxu0 0.0
        %4025 = vmatprep.subr.mxu0 0.0
        %4026 = vmatpush1.xpose.msra.mxu0 0.0
        %4027 = vmatprep.subr.mxu0 0.0
        %4028 = vmatpush1.xpose.msra.mxu0 0.0
        %4029 = vmatprep.subr.mxu0 0.0
        %4030 = vmatpush1.xpose.msra.mxu0 0.0
        %4031 = vmatprep.subr.mxu0 0.0
        %4032 = vmatpush1.xpose.msra.mxu0 0.0
        %4033 = vmatprep.subr.mxu0 0.0
        %4034 = vmatpush1.xpose.msra.mxu0 0.0
        %4035 = vmatprep.mubr.f32.mxu0 %v1097
        %4036 = vmatmul.mubr.f32.gmra.mrb[0].mxu0 %v1095
        %v4037 = vpop.f32.mrb[0].mxu0
        %v4038 = vadd.f32 %v3968, %v4037
        %v4039 = vpop.f32.mrb[0].mxu0
        %4040 = vdwg.mxu0
        %4041 = vmatprep.subr.mxu0 %v354
        %4042 = vmatpush1.xpose.msra.mxu0 %v353
        %4043 = vmatprep.subr.mxu0 %v610
        %4044 = vmatpush1.xpose.msra.mxu0 %v609
        %4045 = vmatprep.subr.mxu0 0.0
        %4046 = vmatpush1.xpose.msra.mxu0 0.0
        %4047 = vmatprep.subr.mxu0 0.0
        %4048 = vmatpush1.xpose.msra.mxu0 0.0
        %4049 = vmatprep.subr.mxu0 0.0
        %4050 = vmatpush1.xpose.msra.mxu0 0.0
        %4051 = vmatprep.subr.mxu0 0.0
        %4052 = vmatpush1.xpose.msra.mxu0 0.0
        %4053 = vmatprep.subr.mxu0 0.0
        %4054 = vmatpush1.xpose.msra.mxu0 0.0
        %4055 = vmatprep.subr.mxu0 0.0
        %4056 = vmatpush1.xpose.msra.mxu0 0.0
        %4057 = vmatprep.subr.mxu0 0.0
        %4058 = vmatpush1.xpose.msra.mxu0 0.0
        %4059 = vmatprep.subr.mxu0 0.0
        %4060 = vmatpush1.xpose.msra.mxu0 0.0
        %4061 = vmatprep.subr.mxu0 0.0
        %4062 = vmatpush1.xpose.msra.mxu0 0.0
        %4063 = vmatprep.subr.mxu0 0.0
        %4064 = vmatpush1.xpose.msra.mxu0 0.0
        %4065 = vmatprep.subr.mxu0 0.0
        %4066 = vmatpush1.xpose.msra.mxu0 0.0
        %4067 = vmatprep.subr.mxu0 0.0
        %4068 = vmatpush1.xpose.msra.mxu0 0.0
        %4069 = vmatprep.subr.mxu0 0.0
        %4070 = vmatpush1.xpose.msra.mxu0 0.0
        %4071 = vmatprep.subr.mxu0 0.0
        %4072 = vmatpush1.xpose.msra.mxu0 0.0
        %4073 = vmatprep.subr.mxu0 0.0
        %4074 = vmatpush1.xpose.msra.mxu0 0.0
        %4075 = vmatprep.subr.mxu0 0.0
        %4076 = vmatpush1.xpose.msra.mxu0 0.0
        %4077 = vmatprep.subr.mxu0 0.0
        %4078 = vmatpush1.xpose.msra.mxu0 0.0
        %4079 = vmatprep.subr.mxu0 0.0
        %4080 = vmatpush1.xpose.msra.mxu0 0.0
        %4081 = vmatprep.subr.mxu0 0.0
        %4082 = vmatpush1.xpose.msra.mxu0 0.0
        %4083 = vmatprep.subr.mxu0 0.0
        %4084 = vmatpush1.xpose.msra.mxu0 0.0
        %4085 = vmatprep.subr.mxu0 0.0
        %4086 = vmatpush1.xpose.msra.mxu0 0.0
        %4087 = vmatprep.subr.mxu0 0.0
        %4088 = vmatpush1.xpose.msra.mxu0 0.0
        %4089 = vmatprep.subr.mxu0 0.0
        %4090 = vmatpush1.xpose.msra.mxu0 0.0
        %4091 = vmatprep.subr.mxu0 0.0
        %4092 = vmatpush1.xpose.msra.mxu0 0.0
        %4093 = vmatprep.subr.mxu0 0.0
        %4094 = vmatpush1.xpose.msra.mxu0 0.0
        %4095 = vmatprep.subr.mxu0 0.0
        %4096 = vmatpush1.xpose.msra.mxu0 0.0
        %4097 = vmatprep.subr.mxu0 0.0
        %4098 = vmatpush1.xpose.msra.mxu0 0.0
        %4099 = vmatprep.subr.mxu0 0.0
        %4100 = vmatpush1.xpose.msra.mxu0 0.0
        %4101 = vmatprep.subr.mxu0 0.0
        %4102 = vmatpush1.xpose.msra.mxu0 0.0
        %4103 = vmatprep.subr.mxu0 0.0
        %4104 = vmatpush1.xpose.msra.mxu0 0.0
        %4105 = vmatprep.mubr.f32.mxu0 %v1113
        %4106 = vmatmul.mubr.f32.gmra.mrb[0].mxu0 %v1105
        %v4107 = vpop.f32.mrb[0].mxu0
        %v4108 = vadd.f32 %v4038, %v4107
        %v4109 = vpop.f32.mrb[0].mxu0
        %4110 = vdwg.mxu0
        %4111 = vmatprep.subr.mxu0 %v356
        %4112 = vmatpush1.xpose.msra.mxu0 %v355
        %4113 = vmatprep.subr.mxu0 %v612
        %4114 = vmatpush1.xpose.msra.mxu0 %v611
        %4115 = vmatprep.subr.mxu0 0.0
        %4116 = vmatpush1.xpose.msra.mxu0 0.0
        %4117 = vmatprep.subr.mxu0 0.0
        %4118 = vmatpush1.xpose.msra.mxu0 0.0
        %4119 = vmatprep.subr.mxu0 0.0
        %4120 = vmatpush1.xpose.msra.mxu0 0.0
        %4121 = vmatprep.subr.mxu0 0.0
        %4122 = vmatpush1.xpose.msra.mxu0 0.0
        %4123 = vmatprep.subr.mxu0 0.0
        %4124 = vmatpush1.xpose.msra.mxu0 0.0
        %4125 = vmatprep.subr.mxu0 0.0
        %4126 = vmatpush1.xpose.msra.mxu0 0.0
        %4127 = vmatprep.subr.mxu0 0.0
        %4128 = vmatpush1.xpose.msra.mxu0 0.0
        %4129 = vmatprep.subr.mxu0 0.0
        %4130 = vmatpush1.xpose.msra.mxu0 0.0
        %4131 = vmatprep.subr.mxu0 0.0
        %4132 = vmatpush1.xpose.msra.mxu0 0.0
        %4133 = vmatprep.subr.mxu0 0.0
        %4134 = vmatpush1.xpose.msra.mxu0 0.0
        %4135 = vmatprep.subr.mxu0 0.0
        %4136 = vmatpush1.xpose.msra.mxu0 0.0
        %4137 = vmatprep.subr.mxu0 0.0
        %4138 = vmatpush1.xpose.msra.mxu0 0.0
        %4139 = vmatprep.subr.mxu0 0.0
        %4140 = vmatpush1.xpose.msra.mxu0 0.0
        %4141 = vmatprep.subr.mxu0 0.0
        %4142 = vmatpush1.xpose.msra.mxu0 0.0
        %4143 = vmatprep.subr.mxu0 0.0
        %4144 = vmatpush1.xpose.msra.mxu0 0.0
        %4145 = vmatprep.subr.mxu0 0.0
        %4146 = vmatpush1.xpose.msra.mxu0 0.0
        %4147 = vmatprep.subr.mxu0 0.0
        %4148 = vmatpush1.xpose.msra.mxu0 0.0
        %4149 = vmatprep.subr.mxu0 0.0
        %4150 = vmatpush1.xpose.msra.mxu0 0.0
        %4151 = vmatprep.subr.mxu0 0.0
        %4152 = vmatpush1.xpose.msra.mxu0 0.0
        %4153 = vmatprep.subr.mxu0 0.0
        %4154 = vmatpush1.xpose.msra.mxu0 0.0
        %4155 = vmatprep.subr.mxu0 0.0
        %4156 = vmatpush1.xpose.msra.mxu0 0.0
        %4157 = vmatprep.subr.mxu0 0.0
        %4158 = vmatpush1.xpose.msra.mxu0 0.0
        %4159 = vmatprep.subr.mxu0 0.0
        %4160 = vmatpush1.xpose.msra.mxu0 0.0
        %4161 = vmatprep.subr.mxu0 0.0
        %4162 = vmatpush1.xpose.msra.mxu0 0.0
        %4163 = vmatprep.subr.mxu0 0.0
        %4164 = vmatpush1.xpose.msra.mxu0 0.0
        %4165 = vmatprep.subr.mxu0 0.0
        %4166 = vmatpush1.xpose.msra.mxu0 0.0
        %4167 = vmatprep.subr.mxu0 0.0
        %4168 = vmatpush1.xpose.msra.mxu0 0.0
        %4169 = vmatprep.subr.mxu0 0.0
        %4170 = vmatpush1.xpose.msra.mxu0 0.0
        %4171 = vmatprep.subr.mxu0 0.0
        %4172 = vmatpush1.xpose.msra.mxu0 0.0
        %4173 = vmatprep.subr.mxu0 0.0
        %4174 = vmatpush1.xpose.msra.mxu0 0.0
        %4175 = vmatprep.mubr.f32.mxu0 %v1114
        %4176 = vmatmul.mubr.f32.gmra.mrb[0].mxu0 %v1112
        %v4177 = vpop.f32.mrb[0].mxu0
        %v4178 = vadd.f32 %v4108, %v4177
        %v4179 = vpop.f32.mrb[0].mxu0
        %4180 = vdwg.mxu0
        %4181 = vmatprep.subr.mxu0 %v358
        %4182 = vmatpush1.xpose.msra.mxu0 %v357
        %4183 = vmatprep.subr.mxu0 %v614
        %4184 = vmatpush1.xpose.msra.mxu0 %v613
        %4185 = vmatprep.subr.mxu0 0.0
        %4186 = vmatpush1.xpose.msra.mxu0 0.0
        %4187 = vmatprep.subr.mxu0 0.0
        %4188 = vmatpush1.xpose.msra.mxu0 0.0
        %4189 = vmatprep.subr.mxu0 0.0
        %4190 = vmatpush1.xpose.msra.mxu0 0.0
        %4191 = vmatprep.subr.mxu0 0.0
        %4192 = vmatpush1.xpose.msra.mxu0 0.0
        %4193 = vmatprep.subr.mxu0 0.0
        %4194 = vmatpush1.xpose.msra.mxu0 0.0
        %4195 = vmatprep.subr.mxu0 0.0
        %4196 = vmatpush1.xpose.msra.mxu0 0.0
        %4197 = vmatprep.subr.mxu0 0.0
        %4198 = vmatpush1.xpose.msra.mxu0 0.0
        %4199 = vmatprep.subr.mxu0 0.0
        %4200 = vmatpush1.xpose.msra.mxu0 0.0
        %4201 = vmatprep.subr.mxu0 0.0
        %4202 = vmatpush1.xpose.msra.mxu0 0.0
        %4203 = vmatprep.subr.mxu0 0.0
        %4204 = vmatpush1.xpose.msra.mxu0 0.0
        %4205 = vmatprep.subr.mxu0 0.0
        %4206 = vmatpush1.xpose.msra.mxu0 0.0
        %4207 = vmatprep.subr.mxu0 0.0
        %4208 = vmatpush1.xpose.msra.mxu0 0.0
        %4209 = vmatprep.subr.mxu0 0.0
        %4210 = vmatpush1.xpose.msra.mxu0 0.0
        %4211 = vmatprep.subr.mxu0 0.0
        %4212 = vmatpush1.xpose.msra.mxu0 0.0
        %4213 = vmatprep.subr.mxu0 0.0
        %4214 = vmatpush1.xpose.msra.mxu0 0.0
        %4215 = vmatprep.subr.mxu0 0.0
        %4216 = vmatpush1.xpose.msra.mxu0 0.0
        %4217 = vmatprep.subr.mxu0 0.0
        %4218 = vmatpush1.xpose.msra.mxu0 0.0
        %4219 = vmatprep.subr.mxu0 0.0
        %4220 = vmatpush1.xpose.msra.mxu0 0.0
        %4221 = vmatprep.subr.mxu0 0.0
        %4222 = vmatpush1.xpose.msra.mxu0 0.0
        %4223 = vmatprep.subr.mxu0 0.0
        %4224 = vmatpush1.xpose.msra.mxu0 0.0
        %4225 = vmatprep.subr.mxu0 0.0
        %4226 = vmatpush1.xpose.msra.mxu0 0.0
        %4227 = vmatprep.subr.mxu0 0.0
        %4228 = vmatpush1.xpose.msra.mxu0 0.0
        %4229 = vmatprep.subr.mxu0 0.0
        %4230 = vmatpush1.xpose.msra.mxu0 0.0
        %4231 = vmatprep.subr.mxu0 0.0
        %4232 = vmatpush1.xpose.msra.mxu0 0.0
        %4233 = vmatprep.subr.mxu0 0.0
        %4234 = vmatpush1.xpose.msra.mxu0 0.0
        %4235 = vmatprep.subr.mxu0 0.0
        %4236 = vmatpush1.xpose.msra.mxu0 0.0
        %4237 = vmatprep.subr.mxu0 0.0
        %4238 = vmatpush1.xpose.msra.mxu0 0.0
        %4239 = vmatprep.subr.mxu0 0.0
        %4240 = vmatpush1.xpose.msra.mxu0 0.0
        %4241 = vmatprep.subr.mxu0 0.0
        %4242 = vmatpush1.xpose.msra.mxu0 0.0
        %4243 = vmatprep.subr.mxu0 0.0
        %4244 = vmatpush1.xpose.msra.mxu0 0.0
        %4245 = vmatprep.mubr.f32.mxu0 %v1130
        %4246 = vmatmul.mubr.f32.gmra.mrb[0].mxu0 %v1122
        %v4247 = vpop.f32.mrb[0].mxu0
        %v4248 = vadd.f32 %v4178, %v4247
        %v4249 = vpop.f32.mrb[0].mxu0
        %4250 = vdwg.mxu0
        %4251 = vmatprep.subr.mxu0 %v360
        %4252 = vmatpush1.xpose.msra.mxu0 %v359
        %4253 = vmatprep.subr.mxu0 %v616
        %4254 = vmatpush1.xpose.msra.mxu0 %v615
        %4255 = vmatprep.subr.mxu0 0.0
        %4256 = vmatpush1.xpose.msra.mxu0 0.0
        %4257 = vmatprep.subr.mxu0 0.0
        %4258 = vmatpush1.xpose.msra.mxu0 0.0
        %4259 = vmatprep.subr.mxu0 0.0
        %4260 = vmatpush1.xpose.msra.mxu0 0.0
        %4261 = vmatprep.subr.mxu0 0.0
        %4262 = vmatpush1.xpose.msra.mxu0 0.0
        %4263 = vmatprep.subr.mxu0 0.0
        %4264 = vmatpush1.xpose.msra.mxu0 0.0
        %4265 = vmatprep.subr.mxu0 0.0
        %4266 = vmatpush1.xpose.msra.mxu0 0.0
        %4267 = vmatprep.subr.mxu0 0.0
        %4268 = vmatpush1.xpose.msra.mxu0 0.0
        %4269 = vmatprep.subr.mxu0 0.0
        %4270 = vmatpush1.xpose.msra.mxu0 0.0
        %4271 = vmatprep.subr.mxu0 0.0
        %4272 = vmatpush1.xpose.msra.mxu0 0.0
        %4273 = vmatprep.subr.mxu0 0.0
        %4274 = vmatpush1.xpose.msra.mxu0 0.0
        %4275 = vmatprep.subr.mxu0 0.0
        %4276 = vmatpush1.xpose.msra.mxu0 0.0
        %4277 = vmatprep.subr.mxu0 0.0
        %4278 = vmatpush1.xpose.msra.mxu0 0.0
        %4279 = vmatprep.subr.mxu0 0.0
        %4280 = vmatpush1.xpose.msra.mxu0 0.0
        %4281 = vmatprep.subr.mxu0 0.0
        %4282 = vmatpush1.xpose.msra.mxu0 0.0
        %4283 = vmatprep.subr.mxu0 0.0
        %4284 = vmatpush1.xpose.msra.mxu0 0.0
        %4285 = vmatprep.subr.mxu0 0.0
        %4286 = vmatpush1.xpose.msra.mxu0 0.0
        %4287 = vmatprep.subr.mxu0 0.0
        %4288 = vmatpush1.xpose.msra.mxu0 0.0
        %4289 = vmatprep.subr.mxu0 0.0
        %4290 = vmatpush1.xpose.msra.mxu0 0.0
        %4291 = vmatprep.subr.mxu0 0.0
        %4292 = vmatpush1.xpose.msra.mxu0 0.0
        %4293 = vmatprep.subr.mxu0 0.0
        %4294 = vmatpush1.xpose.msra.mxu0 0.0
        %4295 = vmatprep.subr.mxu0 0.0
        %4296 = vmatpush1.xpose.msra.mxu0 0.0
        %4297 = vmatprep.subr.mxu0 0.0
        %4298 = vmatpush1.xpose.msra.mxu0 0.0
        %4299 = vmatprep.subr.mxu0 0.0
        %4300 = vmatpush1.xpose.msra.mxu0 0.0
        %4301 = vmatprep.subr.mxu0 0.0
        %4302 = vmatpush1.xpose.msra.mxu0 0.0
        %4303 = vmatprep.subr.mxu0 0.0
        %4304 = vmatpush1.xpose.msra.mxu0 0.0
        %4305 = vmatprep.subr.mxu0 0.0
        %4306 = vmatpush1.xpose.msra.mxu0 0.0
        %4307 = vmatprep.subr.mxu0 0.0
        %4308 = vmatpush1.xpose.msra.mxu0 0.0
        %4309 = vmatprep.subr.mxu0 0.0
        %4310 = vmatpush1.xpose.msra.mxu0 0.0
        %4311 = vmatprep.subr.mxu0 0.0
        %4312 = vmatpush1.xpose.msra.mxu0 0.0
        %4313 = vmatprep.subr.mxu0 0.0
        %4314 = vmatpush1.xpose.msra.mxu0 0.0
        %4315 = vmatprep.mubr.f32.mxu0 %v1131
        %4316 = vmatmul.mubr.f32.gmra.mrb[0].mxu0 %v1129
        %v4317 = vpop.f32.mrb[0].mxu0
        %v4318 = vadd.f32 %v4248, %v4317
        %v4319 = vpop.f32.mrb[0].mxu0
        %4320 = vdwg.mxu0
        %4321 = vmatprep.subr.mxu0 %v362
        %4322 = vmatpush1.xpose.msra.mxu0 %v361
        %4323 = vmatprep.subr.mxu0 %v618
        %4324 = vmatpush1.xpose.msra.mxu0 %v617
        %4325 = vmatprep.subr.mxu0 0.0
        %4326 = vmatpush1.xpose.msra.mxu0 0.0
        %4327 = vmatprep.subr.mxu0 0.0
        %4328 = vmatpush1.xpose.msra.mxu0 0.0
        %4329 = vmatprep.subr.mxu0 0.0
        %4330 = vmatpush1.xpose.msra.mxu0 0.0
        %4331 = vmatprep.subr.mxu0 0.0
        %4332 = vmatpush1.xpose.msra.mxu0 0.0
        %4333 = vmatprep.subr.mxu0 0.0
        %4334 = vmatpush1.xpose.msra.mxu0 0.0
        %4335 = vmatprep.subr.mxu0 0.0
        %4336 = vmatpush1.xpose.msra.mxu0 0.0
        %4337 = vmatprep.subr.mxu0 0.0
        %4338 = vmatpush1.xpose.msra.mxu0 0.0
        %4339 = vmatprep.subr.mxu0 0.0
        %4340 = vmatpush1.xpose.msra.mxu0 0.0
        %4341 = vmatprep.subr.mxu0 0.0
        %4342 = vmatpush1.xpose.msra.mxu0 0.0
        %4343 = vmatprep.subr.mxu0 0.0
        %4344 = vmatpush1.xpose.msra.mxu0 0.0
        %4345 = vmatprep.subr.mxu0 0.0
        %4346 = vmatpush1.xpose.msra.mxu0 0.0
        %4347 = vmatprep.subr.mxu0 0.0
        %4348 = vmatpush1.xpose.msra.mxu0 0.0
        %4349 = vmatprep.subr.mxu0 0.0
        %4350 = vmatpush1.xpose.msra.mxu0 0.0
        %4351 = vmatprep.subr.mxu0 0.0
        %4352 = vmatpush1.xpose.msra.mxu0 0.0
        %4353 = vmatprep.subr.mxu0 0.0
        %4354 = vmatpush1.xpose.msra.mxu0 0.0
        %4355 = vmatprep.subr.mxu0 0.0
        %4356 = vmatpush1.xpose.msra.mxu0 0.0
        %4357 = vmatprep.subr.mxu0 0.0
        %4358 = vmatpush1.xpose.msra.mxu0 0.0
        %4359 = vmatprep.subr.mxu0 0.0
        %4360 = vmatpush1.xpose.msra.mxu0 0.0
        %4361 = vmatprep.subr.mxu0 0.0
        %4362 = vmatpush1.xpose.msra.mxu0 0.0
        %4363 = vmatprep.subr.mxu0 0.0
        %4364 = vmatpush1.xpose.msra.mxu0 0.0
        %4365 = vmatprep.subr.mxu0 0.0
        %4366 = vmatpush1.xpose.msra.mxu0 0.0
        %4367 = vmatprep.subr.mxu0 0.0
        %4368 = vmatpush1.xpose.msra.mxu0 0.0
        %4369 = vmatprep.subr.mxu0 0.0
        %4370 = vmatpush1.xpose.msra.mxu0 0.0
        %4371 = vmatprep.subr.mxu0 0.0
        %4372 = vmatpush1.xpose.msra.mxu0 0.0
        %4373 = vmatprep.subr.mxu0 0.0
        %4374 = vmatpush1.xpose.msra.mxu0 0.0
        %4375 = vmatprep.subr.mxu0 0.0
        %4376 = vmatpush1.xpose.msra.mxu0 0.0
        %4377 = vmatprep.subr.mxu0 0.0
        %4378 = vmatpush1.xpose.msra.mxu0 0.0
        %4379 = vmatprep.subr.mxu0 0.0
        %4380 = vmatpush1.xpose.msra.mxu0 0.0
        %4381 = vmatprep.subr.mxu0 0.0
        %4382 = vmatpush1.xpose.msra.mxu0 0.0
        %4383 = vmatprep.subr.mxu0 0.0
        %4384 = vmatpush1.xpose.msra.mxu0 0.0
        %4385 = vmatprep.mubr.f32.mxu0 %v1147
        %4386 = vmatmul.mubr.f32.gmra.mrb[0].mxu0 %v1139
        %v4387 = vpop.f32.mrb[0].mxu0
        %v4388 = vadd.f32 %v4318, %v4387
        %v4389 = vpop.f32.mrb[0].mxu0
        %4390 = vdwg.mxu0
        %4391 = vmatprep.subr.mxu0 %v364
        %4392 = vmatpush1.xpose.msra.mxu0 %v363
        %4393 = vmatprep.subr.mxu0 %v620
        %4394 = vmatpush1.xpose.msra.mxu0 %v619
        %4395 = vmatprep.subr.mxu0 0.0
        %4396 = vmatpush1.xpose.msra.mxu0 0.0
        %4397 = vmatprep.subr.mxu0 0.0
        %4398 = vmatpush1.xpose.msra.mxu0 0.0
        %4399 = vmatprep.subr.mxu0 0.0
        %4400 = vmatpush1.xpose.msra.mxu0 0.0
        %4401 = vmatprep.subr.mxu0 0.0
        %4402 = vmatpush1.xpose.msra.mxu0 0.0
        %4403 = vmatprep.subr.mxu0 0.0
        %4404 = vmatpush1.xpose.msra.mxu0 0.0
        %4405 = vmatprep.subr.mxu0 0.0
        %4406 = vmatpush1.xpose.msra.mxu0 0.0
        %4407 = vmatprep.subr.mxu0 0.0
        %4408 = vmatpush1.xpose.msra.mxu0 0.0
        %4409 = vmatprep.subr.mxu0 0.0
        %4410 = vmatpush1.xpose.msra.mxu0 0.0
        %4411 = vmatprep.subr.mxu0 0.0
        %4412 = vmatpush1.xpose.msra.mxu0 0.0
        %4413 = vmatprep.subr.mxu0 0.0
        %4414 = vmatpush1.xpose.msra.mxu0 0.0
        %4415 = vmatprep.subr.mxu0 0.0
        %4416 = vmatpush1.xpose.msra.mxu0 0.0
        %4417 = vmatprep.subr.mxu0 0.0
        %4418 = vmatpush1.xpose.msra.mxu0 0.0
        %4419 = vmatprep.subr.mxu0 0.0
        %4420 = vmatpush1.xpose.msra.mxu0 0.0
        %4421 = vmatprep.subr.mxu0 0.0
        %4422 = vmatpush1.xpose.msra.mxu0 0.0
        %4423 = vmatprep.subr.mxu0 0.0
        %4424 = vmatpush1.xpose.msra.mxu0 0.0
        %4425 = vmatprep.subr.mxu0 0.0
        %4426 = vmatpush1.xpose.msra.mxu0 0.0
        %4427 = vmatprep.subr.mxu0 0.0
        %4428 = vmatpush1.xpose.msra.mxu0 0.0
        %4429 = vmatprep.subr.mxu0 0.0
        %4430 = vmatpush1.xpose.msra.mxu0 0.0
        %4431 = vmatprep.subr.mxu0 0.0
        %4432 = vmatpush1.xpose.msra.mxu0 0.0
        %4433 = vmatprep.subr.mxu0 0.0
        %4434 = vmatpush1.xpose.msra.mxu0 0.0
        %4435 = vmatprep.subr.mxu0 0.0
        %4436 = vmatpush1.xpose.msra.mxu0 0.0
        %4437 = vmatprep.subr.mxu0 0.0
        %4438 = vmatpush1.xpose.msra.mxu0 0.0
        %4439 = vmatprep.subr.mxu0 0.0
        %4440 = vmatpush1.xpose.msra.mxu0 0.0
        %4441 = vmatprep.subr.mxu0 0.0
        %4442 = vmatpush1.xpose.msra.mxu0 0.0
        %4443 = vmatprep.subr.mxu0 0.0
        %4444 = vmatpush1.xpose.msra.mxu0 0.0
        %4445 = vmatprep.subr.mxu0 0.0
        %4446 = vmatpush1.xpose.msra.mxu0 0.0
        %4447 = vmatprep.subr.mxu0 0.0
        %4448 = vmatpush1.xpose.msra.mxu0 0.0
        %4449 = vmatprep.subr.mxu0 0.0
        %4450 = vmatpush1.xpose.msra.mxu0 0.0
        %4451 = vmatprep.subr.mxu0 0.0
        %4452 = vmatpush1.xpose.msra.mxu0 0.0
        %4453 = vmatprep.subr.mxu0 0.0
        %4454 = vmatpush1.xpose.msra.mxu0 0.0
        %4455 = vmatprep.mubr.f32.mxu0 %v1148
        %4456 = vmatmul.mubr.f32.gmra.mrb[0].mxu0 %v1146
        %v4457 = vpop.f32.mrb[0].mxu0
        %v4458 = vadd.f32 %v4388, %v4457
        %v4459 = vpop.f32.mrb[0].mxu0
        %4460 = vdwg.mxu0
        %4461 = vmatprep.subr.mxu0 %v366
        %4462 = vmatpush1.xpose.msra.mxu0 %v365
        %4463 = vmatprep.subr.mxu0 %v622
        %4464 = vmatpush1.xpose.msra.mxu0 %v621
        %4465 = vmatprep.subr.mxu0 0.0
        %4466 = vmatpush1.xpose.msra.mxu0 0.0
        %4467 = vmatprep.subr.mxu0 0.0
        %4468 = vmatpush1.xpose.msra.mxu0 0.0
        %4469 = vmatprep.subr.mxu0 0.0
        %4470 = vmatpush1.xpose.msra.mxu0 0.0
        %4471 = vmatprep.subr.mxu0 0.0
        %4472 = vmatpush1.xpose.msra.mxu0 0.0
        %4473 = vmatprep.subr.mxu0 0.0
        %4474 = vmatpush1.xpose.msra.mxu0 0.0
        %4475 = vmatprep.subr.mxu0 0.0
        %4476 = vmatpush1.xpose.msra.mxu0 0.0
        %4477 = vmatprep.subr.mxu0 0.0
        %4478 = vmatpush1.xpose.msra.mxu0 0.0
        %4479 = vmatprep.subr.mxu0 0.0
        %4480 = vmatpush1.xpose.msra.mxu0 0.0
        %4481 = vmatprep.subr.mxu0 0.0
        %4482 = vmatpush1.xpose.msra.mxu0 0.0
        %4483 = vmatprep.subr.mxu0 0.0
        %4484 = vmatpush1.xpose.msra.mxu0 0.0
        %4485 = vmatprep.subr.mxu0 0.0
        %4486 = vmatpush1.xpose.msra.mxu0 0.0
        %4487 = vmatprep.subr.mxu0 0.0
        %4488 = vmatpush1.xpose.msra.mxu0 0.0
        %4489 = vmatprep.subr.mxu0 0.0
        %4490 = vmatpush1.xpose.msra.mxu0 0.0
        %4491 = vmatprep.subr.mxu0 0.0
        %4492 = vmatpush1.xpose.msra.mxu0 0.0
        %4493 = vmatprep.subr.mxu0 0.0
        %4494 = vmatpush1.xpose.msra.mxu0 0.0
        %4495 = vmatprep.subr.mxu0 0.0
        %4496 = vmatpush1.xpose.msra.mxu0 0.0
        %4497 = vmatprep.subr.mxu0 0.0
        %4498 = vmatpush1.xpose.msra.mxu0 0.0
        %4499 = vmatprep.subr.mxu0 0.0
        %4500 = vmatpush1.xpose.msra.mxu0 0.0
        %4501 = vmatprep.subr.mxu0 0.0
        %4502 = vmatpush1.xpose.msra.mxu0 0.0
        %4503 = vmatprep.subr.mxu0 0.0
        %4504 = vmatpush1.xpose.msra.mxu0 0.0
        %4505 = vmatprep.subr.mxu0 0.0
        %4506 = vmatpush1.xpose.msra.mxu0 0.0
        %4507 = vmatprep.subr.mxu0 0.0
        %4508 = vmatpush1.xpose.msra.mxu0 0.0
        %4509 = vmatprep.subr.mxu0 0.0
        %4510 = vmatpush1.xpose.msra.mxu0 0.0
        %4511 = vmatprep.subr.mxu0 0.0
        %4512 = vmatpush1.xpose.msra.mxu0 0.0
        %4513 = vmatprep.subr.mxu0 0.0
        %4514 = vmatpush1.xpose.msra.mxu0 0.0
        %4515 = vmatprep.subr.mxu0 0.0
        %4516 = vmatpush1.xpose.msra.mxu0 0.0
        %4517 = vmatprep.subr.mxu0 0.0
        %4518 = vmatpush1.xpose.msra.mxu0 0.0
        %4519 = vmatprep.subr.mxu0 0.0
        %4520 = vmatpush1.xpose.msra.mxu0 0.0
        %4521 = vmatprep.subr.mxu0 0.0
        %4522 = vmatpush1.xpose.msra.mxu0 0.0
        %4523 = vmatprep.subr.mxu0 0.0
        %4524 = vmatpush1.xpose.msra.mxu0 0.0
        %4525 = vmatprep.mubr.f32.mxu0 %v1164
        %4526 = vmatmul.mubr.f32.gmra.mrb[0].mxu0 %v1156
        %v4527 = vpop.f32.mrb[0].mxu0
        %v4528 = vadd.f32 %v4458, %v4527
        %v4529 = vpop.f32.mrb[0].mxu0
        %4530 = vdwg.mxu0
        %4531 = vmatprep.subr.mxu0 %v368
        %4532 = vmatpush1.xpose.msra.mxu0 %v367
        %4533 = vmatprep.subr.mxu0 %v624
        %4534 = vmatpush1.xpose.msra.mxu0 %v623
        %4535 = vmatprep.subr.mxu0 0.0
        %4536 = vmatpush1.xpose.msra.mxu0 0.0
        %4537 = vmatprep.subr.mxu0 0.0
        %4538 = vmatpush1.xpose.msra.mxu0 0.0
        %4539 = vmatprep.subr.mxu0 0.0
        %4540 = vmatpush1.xpose.msra.mxu0 0.0
        %4541 = vmatprep.subr.mxu0 0.0
        %4542 = vmatpush1.xpose.msra.mxu0 0.0
        %4543 = vmatprep.subr.mxu0 0.0
        %4544 = vmatpush1.xpose.msra.mxu0 0.0
        %4545 = vmatprep.subr.mxu0 0.0
        %4546 = vmatpush1.xpose.msra.mxu0 0.0
        %4547 = vmatprep.subr.mxu0 0.0
        %4548 = vmatpush1.xpose.msra.mxu0 0.0
        %4549 = vmatprep.subr.mxu0 0.0
        %4550 = vmatpush1.xpose.msra.mxu0 0.0
        %4551 = vmatprep.subr.mxu0 0.0
        %4552 = vmatpush1.xpose.msra.mxu0 0.0
        %4553 = vmatprep.subr.mxu0 0.0
        %4554 = vmatpush1.xpose.msra.mxu0 0.0
        %4555 = vmatprep.subr.mxu0 0.0
        %4556 = vmatpush1.xpose.msra.mxu0 0.0
        %4557 = vmatprep.subr.mxu0 0.0
        %4558 = vmatpush1.xpose.msra.mxu0 0.0
        %4559 = vmatprep.subr.mxu0 0.0
        %4560 = vmatpush1.xpose.msra.mxu0 0.0
        %4561 = vmatprep.subr.mxu0 0.0
        %4562 = vmatpush1.xpose.msra.mxu0 0.0
        %4563 = vmatprep.subr.mxu0 0.0
        %4564 = vmatpush1.xpose.msra.mxu0 0.0
        %4565 = vmatprep.subr.mxu0 0.0
        %4566 = vmatpush1.xpose.msra.mxu0 0.0
        %4567 = vmatprep.subr.mxu0 0.0
        %4568 = vmatpush1.xpose.msra.mxu0 0.0
        %4569 = vmatprep.subr.mxu0 0.0
        %4570 = vmatpush1.xpose.msra.mxu0 0.0
        %4571 = vmatprep.subr.mxu0 0.0
        %4572 = vmatpush1.xpose.msra.mxu0 0.0
        %4573 = vmatprep.subr.mxu0 0.0
        %4574 = vmatpush1.xpose.msra.mxu0 0.0
        %4575 = vmatprep.subr.mxu0 0.0
        %4576 = vmatpush1.xpose.msra.mxu0 0.0
        %4577 = vmatprep.subr.mxu0 0.0
        %4578 = vmatpush1.xpose.msra.mxu0 0.0
        %4579 = vmatprep.subr.mxu0 0.0
        %4580 = vmatpush1.xpose.msra.mxu0 0.0
        %4581 = vmatprep.subr.mxu0 0.0
        %4582 = vmatpush1.xpose.msra.mxu0 0.0
        %4583 = vmatprep.subr.mxu0 0.0
        %4584 = vmatpush1.xpose.msra.mxu0 0.0
        %4585 = vmatprep.subr.mxu0 0.0
        %4586 = vmatpush1.xpose.msra.mxu0 0.0
        %4587 = vmatprep.subr.mxu0 0.0
        %4588 = vmatpush1.xpose.msra.mxu0 0.0
        %4589 = vmatprep.subr.mxu0 0.0
        %4590 = vmatpush1.xpose.msra.mxu0 0.0
        %4591 = vmatprep.subr.mxu0 0.0
        %4592 = vmatpush1.xpose.msra.mxu0 0.0
        %4593 = vmatprep.subr.mxu0 0.0
        %4594 = vmatpush1.xpose.msra.mxu0 0.0
        %4595 = vmatprep.mubr.f32.mxu0 %v1165
        %4596 = vmatmul.mubr.f32.gmra.mrb[0].mxu0 %v1163
        %v4597 = vpop.f32.mrb[0].mxu0
        %v4598 = vadd.f32 %v4528, %v4597
        %v4599 = vpop.f32.mrb[0].mxu0
        %4600 = vdwg.mxu0
        %4601 = vmatprep.subr.mxu0 %v370
        %4602 = vmatpush1.xpose.msra.mxu0 %v369
        %4603 = vmatprep.subr.mxu0 %v626
        %4604 = vmatpush1.xpose.msra.mxu0 %v625
        %4605 = vmatprep.subr.mxu0 0.0
        %4606 = vmatpush1.xpose.msra.mxu0 0.0
        %4607 = vmatprep.subr.mxu0 0.0
        %4608 = vmatpush1.xpose.msra.mxu0 0.0
        %4609 = vmatprep.subr.mxu0 0.0
        %4610 = vmatpush1.xpose.msra.mxu0 0.0
        %4611 = vmatprep.subr.mxu0 0.0
        %4612 = vmatpush1.xpose.msra.mxu0 0.0
        %4613 = vmatprep.subr.mxu0 0.0
        %4614 = vmatpush1.xpose.msra.mxu0 0.0
        %4615 = vmatprep.subr.mxu0 0.0
        %4616 = vmatpush1.xpose.msra.mxu0 0.0
        %4617 = vmatprep.subr.mxu0 0.0
        %4618 = vmatpush1.xpose.msra.mxu0 0.0
        %4619 = vmatprep.subr.mxu0 0.0
        %4620 = vmatpush1.xpose.msra.mxu0 0.0
        %4621 = vmatprep.subr.mxu0 0.0
        %4622 = vmatpush1.xpose.msra.mxu0 0.0
        %4623 = vmatprep.subr.mxu0 0.0
        %4624 = vmatpush1.xpose.msra.mxu0 0.0
        %4625 = vmatprep.subr.mxu0 0.0
        %4626 = vmatpush1.xpose.msra.mxu0 0.0
        %4627 = vmatprep.subr.mxu0 0.0
        %4628 = vmatpush1.xpose.msra.mxu0 0.0
        %4629 = vmatprep.subr.mxu0 0.0
        %4630 = vmatpush1.xpose.msra.mxu0 0.0
        %4631 = vmatprep.subr.mxu0 0.0
        %4632 = vmatpush1.xpose.msra.mxu0 0.0
        %4633 = vmatprep.subr.mxu0 0.0
        %4634 = vmatpush1.xpose.msra.mxu0 0.0
        %4635 = vmatprep.subr.mxu0 0.0
        %4636 = vmatpush1.xpose.msra.mxu0 0.0
        %4637 = vmatprep.subr.mxu0 0.0
        %4638 = vmatpush1.xpose.msra.mxu0 0.0
        %4639 = vmatprep.subr.mxu0 0.0
        %4640 = vmatpush1.xpose.msra.mxu0 0.0
        %4641 = vmatprep.subr.mxu0 0.0
        %4642 = vmatpush1.xpose.msra.mxu0 0.0
        %4643 = vmatprep.subr.mxu0 0.0
        %4644 = vmatpush1.xpose.msra.mxu0 0.0
        %4645 = vmatprep.subr.mxu0 0.0
        %4646 = vmatpush1.xpose.msra.mxu0 0.0
        %4647 = vmatprep.subr.mxu0 0.0
        %4648 = vmatpush1.xpose.msra.mxu0 0.0
        %4649 = vmatprep.subr.mxu0 0.0
        %4650 = vmatpush1.xpose.msra.mxu0 0.0
        %4651 = vmatprep.subr.mxu0 0.0
        %4652 = vmatpush1.xpose.msra.mxu0 0.0
        %4653 = vmatprep.subr.mxu0 0.0
        %4654 = vmatpush1.xpose.msra.mxu0 0.0
        %4655 = vmatprep.subr.mxu0 0.0
        %4656 = vmatpush1.xpose.msra.mxu0 0.0
        %4657 = vmatprep.subr.mxu0 0.0
        %4658 = vmatpush1.xpose.msra.mxu0 0.0
        %4659 = vmatprep.subr.mxu0 0.0
        %4660 = vmatpush1.xpose.msra.mxu0 0.0
        %4661 = vmatprep.subr.mxu0 0.0
        %4662 = vmatpush1.xpose.msra.mxu0 0.0
        %4663 = vmatprep.subr.mxu0 0.0
        %4664 = vmatpush1.xpose.msra.mxu0 0.0
        %4665 = vmatprep.mubr.f32.mxu0 %v1181
        %4666 = vmatmul.mubr.f32.gmra.mrb[0].mxu0 %v1173
        %v4667 = vpop.f32.mrb[0].mxu0
        %v4668 = vadd.f32 %v4598, %v4667
        %v4669 = vpop.f32.mrb[0].mxu0
        %4670 = vdwg.mxu0
        %4671 = vmatprep.subr.mxu0 %v372
        %4672 = vmatpush1.xpose.msra.mxu0 %v371
        %4673 = vmatprep.subr.mxu0 %v628
        %4674 = vmatpush1.xpose.msra.mxu0 %v627
        %4675 = vmatprep.subr.mxu0 0.0
        %4676 = vmatpush1.xpose.msra.mxu0 0.0
        %4677 = vmatprep.subr.mxu0 0.0
        %4678 = vmatpush1.xpose.msra.mxu0 0.0
        %4679 = vmatprep.subr.mxu0 0.0
        %4680 = vmatpush1.xpose.msra.mxu0 0.0
        %4681 = vmatprep.subr.mxu0 0.0
        %4682 = vmatpush1.xpose.msra.mxu0 0.0
        %4683 = vmatprep.subr.mxu0 0.0
        %4684 = vmatpush1.xpose.msra.mxu0 0.0
        %4685 = vmatprep.subr.mxu0 0.0
        %4686 = vmatpush1.xpose.msra.mxu0 0.0
        %4687 = vmatprep.subr.mxu0 0.0
        %4688 = vmatpush1.xpose.msra.mxu0 0.0
        %4689 = vmatprep.subr.mxu0 0.0
        %4690 = vmatpush1.xpose.msra.mxu0 0.0
        %4691 = vmatprep.subr.mxu0 0.0
        %4692 = vmatpush1.xpose.msra.mxu0 0.0
        %4693 = vmatprep.subr.mxu0 0.0
        %4694 = vmatpush1.xpose.msra.mxu0 0.0
        %4695 = vmatprep.subr.mxu0 0.0
        %4696 = vmatpush1.xpose.msra.mxu0 0.0
        %4697 = vmatprep.subr.mxu0 0.0
        %4698 = vmatpush1.xpose.msra.mxu0 0.0
        %4699 = vmatprep.subr.mxu0 0.0
        %4700 = vmatpush1.xpose.msra.mxu0 0.0
        %4701 = vmatprep.subr.mxu0 0.0
        %4702 = vmatpush1.xpose.msra.mxu0 0.0
        %4703 = vmatprep.subr.mxu0 0.0
        %4704 = vmatpush1.xpose.msra.mxu0 0.0
        %4705 = vmatprep.subr.mxu0 0.0
        %4706 = vmatpush1.xpose.msra.mxu0 0.0
        %4707 = vmatprep.subr.mxu0 0.0
        %4708 = vmatpush1.xpose.msra.mxu0 0.0
        %4709 = vmatprep.subr.mxu0 0.0
        %4710 = vmatpush1.xpose.msra.mxu0 0.0
        %4711 = vmatprep.subr.mxu0 0.0
        %4712 = vmatpush1.xpose.msra.mxu0 0.0
        %4713 = vmatprep.subr.mxu0 0.0
        %4714 = vmatpush1.xpose.msra.mxu0 0.0
        %4715 = vmatprep.subr.mxu0 0.0
        %4716 = vmatpush1.xpose.msra.mxu0 0.0
        %4717 = vmatprep.subr.mxu0 0.0
        %4718 = vmatpush1.xpose.msra.mxu0 0.0
        %4719 = vmatprep.subr.mxu0 0.0
        %4720 = vmatpush1.xpose.msra.mxu0 0.0
        %4721 = vmatprep.subr.mxu0 0.0
        %4722 = vmatpush1.xpose.msra.mxu0 0.0
        %4723 = vmatprep.subr.mxu0 0.0
        %4724 = vmatpush1.xpose.msra.mxu0 0.0
        %4725 = vmatprep.subr.mxu0 0.0
        %4726 = vmatpush1.xpose.msra.mxu0 0.0
        %4727 = vmatprep.subr.mxu0 0.0
        %4728 = vmatpush1.xpose.msra.mxu0 0.0
        %4729 = vmatprep.subr.mxu0 0.0
        %4730 = vmatpush1.xpose.msra.mxu0 0.0
        %4731 = vmatprep.subr.mxu0 0.0
        %4732 = vmatpush1.xpose.msra.mxu0 0.0
        %4733 = vmatprep.subr.mxu0 0.0
        %4734 = vmatpush1.xpose.msra.mxu0 0.0
        %4735 = vmatprep.mubr.f32.mxu0 %v1182
        %4736 = vmatmul.mubr.f32.gmra.mrb[0].mxu0 %v1180
        %v4737 = vpop.f32.mrb[0].mxu0
        %v4738 = vadd.f32 %v4668, %v4737
        %v4739 = vpop.f32.mrb[0].mxu0
        %4740 = vdwg.mxu0
        %4741 = vmatprep.subr.mxu0 %v374
        %4742 = vmatpush1.xpose.msra.mxu0 %v373
        %4743 = vmatprep.subr.mxu0 %v630
        %4744 = vmatpush1.xpose.msra.mxu0 %v629
        %4745 = vmatprep.subr.mxu0 0.0
        %4746 = vmatpush1.xpose.msra.mxu0 0.0
        %4747 = vmatprep.subr.mxu0 0.0
        %4748 = vmatpush1.xpose.msra.mxu0 0.0
        %4749 = vmatprep.subr.mxu0 0.0
        %4750 = vmatpush1.xpose.msra.mxu0 0.0
        %4751 = vmatprep.subr.mxu0 0.0
        %4752 = vmatpush1.xpose.msra.mxu0 0.0
        %4753 = vmatprep.subr.mxu0 0.0
        %4754 = vmatpush1.xpose.msra.mxu0 0.0
        %4755 = vmatprep.subr.mxu0 0.0
        %4756 = vmatpush1.xpose.msra.mxu0 0.0
        %4757 = vmatprep.subr.mxu0 0.0
        %4758 = vmatpush1.xpose.msra.mxu0 0.0
        %4759 = vmatprep.subr.mxu0 0.0
        %4760 = vmatpush1.xpose.msra.mxu0 0.0
        %4761 = vmatprep.subr.mxu0 0.0
        %4762 = vmatpush1.xpose.msra.mxu0 0.0
        %4763 = vmatprep.subr.mxu0 0.0
        %4764 = vmatpush1.xpose.msra.mxu0 0.0
        %4765 = vmatprep.subr.mxu0 0.0
        %4766 = vmatpush1.xpose.msra.mxu0 0.0
        %4767 = vmatprep.subr.mxu0 0.0
        %4768 = vmatpush1.xpose.msra.mxu0 0.0
        %4769 = vmatprep.subr.mxu0 0.0
        %4770 = vmatpush1.xpose.msra.mxu0 0.0
        %4771 = vmatprep.subr.mxu0 0.0
        %4772 = vmatpush1.xpose.msra.mxu0 0.0
        %4773 = vmatprep.subr.mxu0 0.0
        %4774 = vmatpush1.xpose.msra.mxu0 0.0
        %4775 = vmatprep.subr.mxu0 0.0
        %4776 = vmatpush1.xpose.msra.mxu0 0.0
        %4777 = vmatprep.subr.mxu0 0.0
        %4778 = vmatpush1.xpose.msra.mxu0 0.0
        %4779 = vmatprep.subr.mxu0 0.0
        %4780 = vmatpush1.xpose.msra.mxu0 0.0
        %4781 = vmatprep.subr.mxu0 0.0
        %4782 = vmatpush1.xpose.msra.mxu0 0.0
        %4783 = vmatprep.subr.mxu0 0.0
        %4784 = vmatpush1.xpose.msra.mxu0 0.0
        %4785 = vmatprep.subr.mxu0 0.0
        %4786 = vmatpush1.xpose.msra.mxu0 0.0
        %4787 = vmatprep.subr.mxu0 0.0
        %4788 = vmatpush1.xpose.msra.mxu0 0.0
        %4789 = vmatprep.subr.mxu0 0.0
        %4790 = vmatpush1.xpose.msra.mxu0 0.0
        %4791 = vmatprep.subr.mxu0 0.0
        %4792 = vmatpush1.xpose.msra.mxu0 0.0
        %4793 = vmatprep.subr.mxu0 0.0
        %4794 = vmatpush1.xpose.msra.mxu0 0.0
        %4795 = vmatprep.subr.mxu0 0.0
        %4796 = vmatpush1.xpose.msra.mxu0 0.0
        %4797 = vmatprep.subr.mxu0 0.0
        %4798 = vmatpush1.xpose.msra.mxu0 0.0
        %4799 = vmatprep.subr.mxu0 0.0
        %4800 = vmatpush1.xpose.msra.mxu0 0.0
        %4801 = vmatprep.subr.mxu0 0.0
        %4802 = vmatpush1.xpose.msra.mxu0 0.0
        %4803 = vmatprep.subr.mxu0 0.0
        %4804 = vmatpush1.xpose.msra.mxu0 0.0
        %4805 = vmatprep.mubr.f32.mxu0 %v1198
        %4806 = vmatmul.mubr.f32.gmra.mrb[0].mxu0 %v1190
        %v4807 = vpop.f32.mrb[0].mxu0
        %v4808 = vadd.f32 %v4738, %v4807
        %v4809 = vpop.f32.mrb[0].mxu0
        %4810 = vdwg.mxu0
        %4811 = vmatprep.subr.mxu0 %v376
        %4812 = vmatpush1.xpose.msra.mxu0 %v375
        %4813 = vmatprep.subr.mxu0 %v632
        %4814 = vmatpush1.xpose.msra.mxu0 %v631
        %4815 = vmatprep.subr.mxu0 0.0
        %4816 = vmatpush1.xpose.msra.mxu0 0.0
        %4817 = vmatprep.subr.mxu0 0.0
        %4818 = vmatpush1.xpose.msra.mxu0 0.0
        %4819 = vmatprep.subr.mxu0 0.0
        %4820 = vmatpush1.xpose.msra.mxu0 0.0
        %4821 = vmatprep.subr.mxu0 0.0
        %4822 = vmatpush1.xpose.msra.mxu0 0.0
        %4823 = vmatprep.subr.mxu0 0.0
        %4824 = vmatpush1.xpose.msra.mxu0 0.0
        %4825 = vmatprep.subr.mxu0 0.0
        %4826 = vmatpush1.xpose.msra.mxu0 0.0
        %4827 = vmatprep.subr.mxu0 0.0
        %4828 = vmatpush1.xpose.msra.mxu0 0.0
        %4829 = vmatprep.subr.mxu0 0.0
        %4830 = vmatpush1.xpose.msra.mxu0 0.0
        %4831 = vmatprep.subr.mxu0 0.0
        %4832 = vmatpush1.xpose.msra.mxu0 0.0
        %4833 = vmatprep.subr.mxu0 0.0
        %4834 = vmatpush1.xpose.msra.mxu0 0.0
        %4835 = vmatprep.subr.mxu0 0.0
        %4836 = vmatpush1.xpose.msra.mxu0 0.0
        %4837 = vmatprep.subr.mxu0 0.0
        %4838 = vmatpush1.xpose.msra.mxu0 0.0
        %4839 = vmatprep.subr.mxu0 0.0
        %4840 = vmatpush1.xpose.msra.mxu0 0.0
        %4841 = vmatprep.subr.mxu0 0.0
        %4842 = vmatpush1.xpose.msra.mxu0 0.0
        %4843 = vmatprep.subr.mxu0 0.0
        %4844 = vmatpush1.xpose.msra.mxu0 0.0
        %4845 = vmatprep.subr.mxu0 0.0
        %4846 = vmatpush1.xpose.msra.mxu0 0.0
        %4847 = vmatprep.subr.mxu0 0.0
        %4848 = vmatpush1.xpose.msra.mxu0 0.0
        %4849 = vmatprep.subr.mxu0 0.0
        %4850 = vmatpush1.xpose.msra.mxu0 0.0
        %4851 = vmatprep.subr.mxu0 0.0
        %4852 = vmatpush1.xpose.msra.mxu0 0.0
        %4853 = vmatprep.subr.mxu0 0.0
        %4854 = vmatpush1.xpose.msra.mxu0 0.0
        %4855 = vmatprep.subr.mxu0 0.0
        %4856 = vmatpush1.xpose.msra.mxu0 0.0
        %4857 = vmatprep.subr.mxu0 0.0
        %4858 = vmatpush1.xpose.msra.mxu0 0.0
        %4859 = vmatprep.subr.mxu0 0.0
        %4860 = vmatpush1.xpose.msra.mxu0 0.0
        %4861 = vmatprep.subr.mxu0 0.0
        %4862 = vmatpush1.xpose.msra.mxu0 0.0
        %4863 = vmatprep.subr.mxu0 0.0
        %4864 = vmatpush1.xpose.msra.mxu0 0.0
        %4865 = vmatprep.subr.mxu0 0.0
        %4866 = vmatpush1.xpose.msra.mxu0 0.0
        %4867 = vmatprep.subr.mxu0 0.0
        %4868 = vmatpush1.xpose.msra.mxu0 0.0
        %4869 = vmatprep.subr.mxu0 0.0
        %4870 = vmatpush1.xpose.msra.mxu0 0.0
        %4871 = vmatprep.subr.mxu0 0.0
        %4872 = vmatpush1.xpose.msra.mxu0 0.0
        %4873 = vmatprep.subr.mxu0 0.0
        %4874 = vmatpush1.xpose.msra.mxu0 0.0
        %4875 = vmatprep.mubr.f32.mxu0 %v1199
        %4876 = vmatmul.mubr.f32.gmra.mrb[0].mxu0 %v1197
        %v4877 = vpop.f32.mrb[0].mxu0
        %v4878 = vadd.f32 %v4808, %v4877
        %v4879 = vpop.f32.mrb[0].mxu0
        %4880 = vdwg.mxu0
        %4881 = vmatprep.subr.mxu0 %v378
        %4882 = vmatpush1.xpose.msra.mxu0 %v377
        %4883 = vmatprep.subr.mxu0 %v634
        %4884 = vmatpush1.xpose.msra.mxu0 %v633
        %4885 = vmatprep.subr.mxu0 0.0
        %4886 = vmatpush1.xpose.msra.mxu0 0.0
        %4887 = vmatprep.subr.mxu0 0.0
        %4888 = vmatpush1.xpose.msra.mxu0 0.0
        %4889 = vmatprep.subr.mxu0 0.0
        %4890 = vmatpush1.xpose.msra.mxu0 0.0
        %4891 = vmatprep.subr.mxu0 0.0
        %4892 = vmatpush1.xpose.msra.mxu0 0.0
        %4893 = vmatprep.subr.mxu0 0.0
        %4894 = vmatpush1.xpose.msra.mxu0 0.0
        %4895 = vmatprep.subr.mxu0 0.0
        %4896 = vmatpush1.xpose.msra.mxu0 0.0
        %4897 = vmatprep.subr.mxu0 0.0
        %4898 = vmatpush1.xpose.msra.mxu0 0.0
        %4899 = vmatprep.subr.mxu0 0.0
        %4900 = vmatpush1.xpose.msra.mxu0 0.0
        %4901 = vmatprep.subr.mxu0 0.0
        %4902 = vmatpush1.xpose.msra.mxu0 0.0
        %4903 = vmatprep.subr.mxu0 0.0
        %4904 = vmatpush1.xpose.msra.mxu0 0.0
        %4905 = vmatprep.subr.mxu0 0.0
        %4906 = vmatpush1.xpose.msra.mxu0 0.0
        %4907 = vmatprep.subr.mxu0 0.0
        %4908 = vmatpush1.xpose.msra.mxu0 0.0
        %4909 = vmatprep.subr.mxu0 0.0
        %4910 = vmatpush1.xpose.msra.mxu0 0.0
        %4911 = vmatprep.subr.mxu0 0.0
        %4912 = vmatpush1.xpose.msra.mxu0 0.0
        %4913 = vmatprep.subr.mxu0 0.0
        %4914 = vmatpush1.xpose.msra.mxu0 0.0
        %4915 = vmatprep.subr.mxu0 0.0
        %4916 = vmatpush1.xpose.msra.mxu0 0.0
        %4917 = vmatprep.subr.mxu0 0.0
        %4918 = vmatpush1.xpose.msra.mxu0 0.0
        %4919 = vmatprep.subr.mxu0 0.0
        %4920 = vmatpush1.xpose.msra.mxu0 0.0
        %4921 = vmatprep.subr.mxu0 0.0
        %4922 = vmatpush1.xpose.msra.mxu0 0.0
        %4923 = vmatprep.subr.mxu0 0.0
        %4924 = vmatpush1.xpose.msra.mxu0 0.0
        %4925 = vmatprep.subr.mxu0 0.0
        %4926 = vmatpush1.xpose.msra.mxu0 0.0
        %4927 = vmatprep.subr.mxu0 0.0
        %4928 = vmatpush1.xpose.msra.mxu0 0.0
        %4929 = vmatprep.subr.mxu0 0.0
        %4930 = vmatpush1.xpose.msra.mxu0 0.0
        %4931 = vmatprep.subr.mxu0 0.0
        %4932 = vmatpush1.xpose.msra.mxu0 0.0
        %4933 = vmatprep.subr.mxu0 0.0
        %4934 = vmatpush1.xpose.msra.mxu0 0.0
        %4935 = vmatprep.subr.mxu0 0.0
        %4936 = vmatpush1.xpose.msra.mxu0 0.0
        %4937 = vmatprep.subr.mxu0 0.0
        %4938 = vmatpush1.xpose.msra.mxu0 0.0
        %4939 = vmatprep.subr.mxu0 0.0
        %4940 = vmatpush1.xpose.msra.mxu0 0.0
        %4941 = vmatprep.subr.mxu0 0.0
        %4942 = vmatpush1.xpose.msra.mxu0 0.0
        %4943 = vmatprep.subr.mxu0 0.0
        %4944 = vmatpush1.xpose.msra.mxu0 0.0
        %4945 = vmatprep.mubr.f32.mxu0 %v1215
        %4946 = vmatmul.mubr.f32.gmra.mrb[0].mxu0 %v1207
        %v4947 = vpop.f32.mrb[0].mxu0
        %v4948 = vadd.f32 %v4878, %v4947
        %v4949 = vpop.f32.mrb[0].mxu0
        %4950 = vdwg.mxu0
        %4951 = vmatprep.subr.mxu0 %v380
        %4952 = vmatpush1.xpose.msra.mxu0 %v379
        %4953 = vmatprep.subr.mxu0 %v636
        %4954 = vmatpush1.xpose.msra.mxu0 %v635
        %4955 = vmatprep.subr.mxu0 0.0
        %4956 = vmatpush1.xpose.msra.mxu0 0.0
        %4957 = vmatprep.subr.mxu0 0.0
        %4958 = vmatpush1.xpose.msra.mxu0 0.0
        %4959 = vmatprep.subr.mxu0 0.0
        %4960 = vmatpush1.xpose.msra.mxu0 0.0
        %4961 = vmatprep.subr.mxu0 0.0
        %4962 = vmatpush1.xpose.msra.mxu0 0.0
        %4963 = vmatprep.subr.mxu0 0.0
        %4964 = vmatpush1.xpose.msra.mxu0 0.0
        %4965 = vmatprep.subr.mxu0 0.0
        %4966 = vmatpush1.xpose.msra.mxu0 0.0
        %4967 = vmatprep.subr.mxu0 0.0
        %4968 = vmatpush1.xpose.msra.mxu0 0.0
        %4969 = vmatprep.subr.mxu0 0.0
        %4970 = vmatpush1.xpose.msra.mxu0 0.0
        %4971 = vmatprep.subr.mxu0 0.0
        %4972 = vmatpush1.xpose.msra.mxu0 0.0
        %4973 = vmatprep.subr.mxu0 0.0
        %4974 = vmatpush1.xpose.msra.mxu0 0.0
        %4975 = vmatprep.subr.mxu0 0.0
        %4976 = vmatpush1.xpose.msra.mxu0 0.0
        %4977 = vmatprep.subr.mxu0 0.0
        %4978 = vmatpush1.xpose.msra.mxu0 0.0
        %4979 = vmatprep.subr.mxu0 0.0
        %4980 = vmatpush1.xpose.msra.mxu0 0.0
        %4981 = vmatprep.subr.mxu0 0.0
        %4982 = vmatpush1.xpose.msra.mxu0 0.0
        %4983 = vmatprep.subr.mxu0 0.0
        %4984 = vmatpush1.xpose.msra.mxu0 0.0
        %4985 = vmatprep.subr.mxu0 0.0
        %4986 = vmatpush1.xpose.msra.mxu0 0.0
        %4987 = vmatprep.subr.mxu0 0.0
        %4988 = vmatpush1.xpose.msra.mxu0 0.0
        %4989 = vmatprep.subr.mxu0 0.0
        %4990 = vmatpush1.xpose.msra.mxu0 0.0
        %4991 = vmatprep.subr.mxu0 0.0
        %4992 = vmatpush1.xpose.msra.mxu0 0.0
        %4993 = vmatprep.subr.mxu0 0.0
        %4994 = vmatpush1.xpose.msra.mxu0 0.0
        %4995 = vmatprep.subr.mxu0 0.0
        %4996 = vmatpush1.xpose.msra.mxu0 0.0
        %4997 = vmatprep.subr.mxu0 0.0
        %4998 = vmatpush1.xpose.msra.mxu0 0.0
        %4999 = vmatprep.subr.mxu0 0.0
        %5000 = vmatpush1.xpose.msra.mxu0 0.0
        %5001 = vmatprep.subr.mxu0 0.0
        %5002 = vmatpush1.xpose.msra.mxu0 0.0
        %5003 = vmatprep.subr.mxu0 0.0
        %5004 = vmatpush1.xpose.msra.mxu0 0.0
        %5005 = vmatprep.subr.mxu0 0.0
        %5006 = vmatpush1.xpose.msra.mxu0 0.0
        %5007 = vmatprep.subr.mxu0 0.0
        %5008 = vmatpush1.xpose.msra.mxu0 0.0
        %5009 = vmatprep.subr.mxu0 0.0
        %5010 = vmatpush1.xpose.msra.mxu0 0.0
        %5011 = vmatprep.subr.mxu0 0.0
        %5012 = vmatpush1.xpose.msra.mxu0 0.0
        %5013 = vmatprep.subr.mxu0 0.0
        %5014 = vmatpush1.xpose.msra.mxu0 0.0
        %5015 = vmatprep.mubr.f32.mxu0 %v1216
        %5016 = vmatmul.mubr.f32.gmra.mrb[0].mxu0 %v1214
        %v5017 = vpop.f32.mrb[0].mxu0
        %v5018 = vadd.f32 %v4948, %v5017
        %v5019 = vpop.f32.mrb[0].mxu0
        %5020 = vdwg.mxu0
        %5021 = vmatprep.subr.mxu0 %v382
        %5022 = vmatpush1.xpose.msra.mxu0 %v381
        %5023 = vmatprep.subr.mxu0 %v638
        %5024 = vmatpush1.xpose.msra.mxu0 %v637
        %5025 = vmatprep.subr.mxu0 0.0
        %5026 = vmatpush1.xpose.msra.mxu0 0.0
        %5027 = vmatprep.subr.mxu0 0.0
        %5028 = vmatpush1.xpose.msra.mxu0 0.0
        %5029 = vmatprep.subr.mxu0 0.0
        %5030 = vmatpush1.xpose.msra.mxu0 0.0
        %5031 = vmatprep.subr.mxu0 0.0
        %5032 = vmatpush1.xpose.msra.mxu0 0.0
        %5033 = vmatprep.subr.mxu0 0.0
        %5034 = vmatpush1.xpose.msra.mxu0 0.0
        %5035 = vmatprep.subr.mxu0 0.0
        %5036 = vmatpush1.xpose.msra.mxu0 0.0
        %5037 = vmatprep.subr.mxu0 0.0
        %5038 = vmatpush1.xpose.msra.mxu0 0.0
        %5039 = vmatprep.subr.mxu0 0.0
        %5040 = vmatpush1.xpose.msra.mxu0 0.0
        %5041 = vmatprep.subr.mxu0 0.0
        %5042 = vmatpush1.xpose.msra.mxu0 0.0
        %5043 = vmatprep.subr.mxu0 0.0
        %5044 = vmatpush1.xpose.msra.mxu0 0.0
        %5045 = vmatprep.subr.mxu0 0.0
        %5046 = vmatpush1.xpose.msra.mxu0 0.0
        %5047 = vmatprep.subr.mxu0 0.0
        %5048 = vmatpush1.xpose.msra.mxu0 0.0
        %5049 = vmatprep.subr.mxu0 0.0
        %5050 = vmatpush1.xpose.msra.mxu0 0.0
        %5051 = vmatprep.subr.mxu0 0.0
        %5052 = vmatpush1.xpose.msra.mxu0 0.0
        %5053 = vmatprep.subr.mxu0 0.0
        %5054 = vmatpush1.xpose.msra.mxu0 0.0
        %5055 = vmatprep.subr.mxu0 0.0
        %5056 = vmatpush1.xpose.msra.mxu0 0.0
        %5057 = vmatprep.subr.mxu0 0.0
        %5058 = vmatpush1.xpose.msra.mxu0 0.0
        %5059 = vmatprep.subr.mxu0 0.0
        %5060 = vmatpush1.xpose.msra.mxu0 0.0
        %5061 = vmatprep.subr.mxu0 0.0
        %5062 = vmatpush1.xpose.msra.mxu0 0.0
        %5063 = vmatprep.subr.mxu0 0.0
        %5064 = vmatpush1.xpose.msra.mxu0 0.0
        %5065 = vmatprep.subr.mxu0 0.0
        %5066 = vmatpush1.xpose.msra.mxu0 0.0
        %5067 = vmatprep.subr.mxu0 0.0
        %5068 = vmatpush1.xpose.msra.mxu0 0.0
        %5069 = vmatprep.subr.mxu0 0.0
        %5070 = vmatpush1.xpose.msra.mxu0 0.0
        %5071 = vmatprep.subr.mxu0 0.0
        %5072 = vmatpush1.xpose.msra.mxu0 0.0
        %5073 = vmatprep.subr.mxu0 0.0
        %5074 = vmatpush1.xpose.msra.mxu0 0.0
        %5075 = vmatprep.subr.mxu0 0.0
        %5076 = vmatpush1.xpose.msra.mxu0 0.0
        %5077 = vmatprep.subr.mxu0 0.0
        %5078 = vmatpush1.xpose.msra.mxu0 0.0
        %5079 = vmatprep.subr.mxu0 0.0
        %5080 = vmatpush1.xpose.msra.mxu0 0.0
        %5081 = vmatprep.subr.mxu0 0.0
        %5082 = vmatpush1.xpose.msra.mxu0 0.0
        %5083 = vmatprep.subr.mxu0 0.0
        %5084 = vmatpush1.xpose.msra.mxu0 0.0
        %5085 = vmatprep.mubr.f32.mxu0 %v1232
        %5086 = vmatmul.mubr.f32.gmra.mrb[0].mxu0 %v1224
        %v5087 = vpop.f32.mrb[0].mxu0
        %v5088 = vadd.f32 %v5018, %v5087
        %v5089 = vpop.f32.mrb[0].mxu0
        %5090 = vdwg.mxu0
        %5091 = vmatprep.subr.mxu0 %v384
        %5092 = vmatpush1.xpose.msra.mxu0 %v383
        %5093 = vmatprep.subr.mxu0 %v640
        %5094 = vmatpush1.xpose.msra.mxu0 %v639
        %5095 = vmatprep.subr.mxu0 0.0
        %5096 = vmatpush1.xpose.msra.mxu0 0.0
        %5097 = vmatprep.subr.mxu0 0.0
        %5098 = vmatpush1.xpose.msra.mxu0 0.0
        %5099 = vmatprep.subr.mxu0 0.0
        %5100 = vmatpush1.xpose.msra.mxu0 0.0
        %5101 = vmatprep.subr.mxu0 0.0
        %5102 = vmatpush1.xpose.msra.mxu0 0.0
        %5103 = vmatprep.subr.mxu0 0.0
        %5104 = vmatpush1.xpose.msra.mxu0 0.0
        %5105 = vmatprep.subr.mxu0 0.0
        %5106 = vmatpush1.xpose.msra.mxu0 0.0
        %5107 = vmatprep.subr.mxu0 0.0
        %5108 = vmatpush1.xpose.msra.mxu0 0.0
        %5109 = vmatprep.subr.mxu0 0.0
        %5110 = vmatpush1.xpose.msra.mxu0 0.0
        %5111 = vmatprep.subr.mxu0 0.0
        %5112 = vmatpush1.xpose.msra.mxu0 0.0
        %5113 = vmatprep.subr.mxu0 0.0
        %5114 = vmatpush1.xpose.msra.mxu0 0.0
        %5115 = vmatprep.subr.mxu0 0.0
        %5116 = vmatpush1.xpose.msra.mxu0 0.0
        %5117 = vmatprep.subr.mxu0 0.0
        %5118 = vmatpush1.xpose.msra.mxu0 0.0
        %5119 = vmatprep.subr.mxu0 0.0
        %5120 = vmatpush1.xpose.msra.mxu0 0.0
        %5121 = vmatprep.subr.mxu0 0.0
        %5122 = vmatpush1.xpose.msra.mxu0 0.0
        %5123 = vmatprep.subr.mxu0 0.0
        %5124 = vmatpush1.xpose.msra.mxu0 0.0
        %5125 = vmatprep.subr.mxu0 0.0
        %5126 = vmatpush1.xpose.msra.mxu0 0.0
        %5127 = vmatprep.subr.mxu0 0.0
        %5128 = vmatpush1.xpose.msra.mxu0 0.0
        %5129 = vmatprep.subr.mxu0 0.0
        %5130 = vmatpush1.xpose.msra.mxu0 0.0
        %5131 = vmatprep.subr.mxu0 0.0
        %5132 = vmatpush1.xpose.msra.mxu0 0.0
        %5133 = vmatprep.subr.mxu0 0.0
        %5134 = vmatpush1.xpose.msra.mxu0 0.0
        %5135 = vmatprep.subr.mxu0 0.0
        %5136 = vmatpush1.xpose.msra.mxu0 0.0
        %5137 = vmatprep.subr.mxu0 0.0
        %5138 = vmatpush1.xpose.msra.mxu0 0.0
        %5139 = vmatprep.subr.mxu0 0.0
        %5140 = vmatpush1.xpose.msra.mxu0 0.0
        %5141 = vmatprep.subr.mxu0 0.0
        %5142 = vmatpush1.xpose.msra.mxu0 0.0
        %5143 = vmatprep.subr.mxu0 0.0
        %5144 = vmatpush1.xpose.msra.mxu0 0.0
        %5145 = vmatprep.subr.mxu0 0.0
        %5146 = vmatpush1.xpose.msra.mxu0 0.0
        %5147 = vmatprep.subr.mxu0 0.0
        %5148 = vmatpush1.xpose.msra.mxu0 0.0
        %5149 = vmatprep.subr.mxu0 0.0
        %5150 = vmatpush1.xpose.msra.mxu0 0.0
        %5151 = vmatprep.subr.mxu0 0.0
        %5152 = vmatpush1.xpose.msra.mxu0 0.0
        %5153 = vmatprep.subr.mxu0 0.0
        %5154 = vmatpush1.xpose.msra.mxu0 0.0
        %5155 = vmatprep.mubr.f32.mxu0 %v1233
        %5156 = vmatmul.mubr.f32.gmra.mrb[0].mxu0 %v1231
        %v5157 = vpop.f32.mrb[0].mxu0
        %v5158 = vadd.f32 %v5088, %v5157
        %v5159 = vpop.f32.mrb[0].mxu0
        %5160 = vdwg.mxu0
        %5161 = vmatprep.subr.mxu0 %v386
        %5162 = vmatpush1.xpose.msra.mxu0 %v385
        %5163 = vmatprep.subr.mxu0 %v642
        %5164 = vmatpush1.xpose.msra.mxu0 %v641
        %5165 = vmatprep.subr.mxu0 0.0
        %5166 = vmatpush1.xpose.msra.mxu0 0.0
        %5167 = vmatprep.subr.mxu0 0.0
        %5168 = vmatpush1.xpose.msra.mxu0 0.0
        %5169 = vmatprep.subr.mxu0 0.0
        %5170 = vmatpush1.xpose.msra.mxu0 0.0
        %5171 = vmatprep.subr.mxu0 0.0
        %5172 = vmatpush1.xpose.msra.mxu0 0.0
        %5173 = vmatprep.subr.mxu0 0.0
        %5174 = vmatpush1.xpose.msra.mxu0 0.0
        %5175 = vmatprep.subr.mxu0 0.0
        %5176 = vmatpush1.xpose.msra.mxu0 0.0
        %5177 = vmatprep.subr.mxu0 0.0
        %5178 = vmatpush1.xpose.msra.mxu0 0.0
        %5179 = vmatprep.subr.mxu0 0.0
        %5180 = vmatpush1.xpose.msra.mxu0 0.0
        %5181 = vmatprep.subr.mxu0 0.0
        %5182 = vmatpush1.xpose.msra.mxu0 0.0
        %5183 = vmatprep.subr.mxu0 0.0
        %5184 = vmatpush1.xpose.msra.mxu0 0.0
        %5185 = vmatprep.subr.mxu0 0.0
        %5186 = vmatpush1.xpose.msra.mxu0 0.0
        %5187 = vmatprep.subr.mxu0 0.0
        %5188 = vmatpush1.xpose.msra.mxu0 0.0
        %5189 = vmatprep.subr.mxu0 0.0
        %5190 = vmatpush1.xpose.msra.mxu0 0.0
        %5191 = vmatprep.subr.mxu0 0.0
        %5192 = vmatpush1.xpose.msra.mxu0 0.0
        %5193 = vmatprep.subr.mxu0 0.0
        %5194 = vmatpush1.xpose.msra.mxu0 0.0
        %5195 = vmatprep.subr.mxu0 0.0
        %5196 = vmatpush1.xpose.msra.mxu0 0.0
        %5197 = vmatprep.subr.mxu0 0.0
        %5198 = vmatpush1.xpose.msra.mxu0 0.0
        %5199 = vmatprep.subr.mxu0 0.0
        %5200 = vmatpush1.xpose.msra.mxu0 0.0
        %5201 = vmatprep.subr.mxu0 0.0
        %5202 = vmatpush1.xpose.msra.mxu0 0.0
        %5203 = vmatprep.subr.mxu0 0.0
        %5204 = vmatpush1.xpose.msra.mxu0 0.0
        %5205 = vmatprep.subr.mxu0 0.0
        %5206 = vmatpush1.xpose.msra.mxu0 0.0
        %5207 = vmatprep.subr.mxu0 0.0
        %5208 = vmatpush1.xpose.msra.mxu0 0.0
        %5209 = vmatprep.subr.mxu0 0.0
        %5210 = vmatpush1.xpose.msra.mxu0 0.0
        %5211 = vmatprep.subr.mxu0 0.0
        %5212 = vmatpush1.xpose.msra.mxu0 0.0
        %5213 = vmatprep.subr.mxu0 0.0
        %5214 = vmatpush1.xpose.msra.mxu0 0.0
        %5215 = vmatprep.subr.mxu0 0.0
        %5216 = vmatpush1.xpose.msra.mxu0 0.0
        %5217 = vmatprep.subr.mxu0 0.0
        %5218 = vmatpush1.xpose.msra.mxu0 0.0
        %5219 = vmatprep.subr.mxu0 0.0
        %5220 = vmatpush1.xpose.msra.mxu0 0.0
        %5221 = vmatprep.subr.mxu0 0.0
        %5222 = vmatpush1.xpose.msra.mxu0 0.0
        %5223 = vmatprep.subr.mxu0 0.0
        %5224 = vmatpush1.xpose.msra.mxu0 0.0
        %5225 = vmatprep.mubr.f32.mxu0 %v1249
        %5226 = vmatmul.mubr.f32.gmra.mrb[0].mxu0 %v1241
        %v5227 = vpop.f32.mrb[0].mxu0
        %v5228 = vadd.f32 %v5158, %v5227
        %v5229 = vpop.f32.mrb[0].mxu0
        %5230 = vdwg.mxu0
        %5231 = vmatprep.subr.mxu0 %v388
        %5232 = vmatpush1.xpose.msra.mxu0 %v387
        %5233 = vmatprep.subr.mxu0 %v644
        %5234 = vmatpush1.xpose.msra.mxu0 %v643
        %5235 = vmatprep.subr.mxu0 0.0
        %5236 = vmatpush1.xpose.msra.mxu0 0.0
        %5237 = vmatprep.subr.mxu0 0.0
        %5238 = vmatpush1.xpose.msra.mxu0 0.0
        %5239 = vmatprep.subr.mxu0 0.0
        %5240 = vmatpush1.xpose.msra.mxu0 0.0
        %5241 = vmatprep.subr.mxu0 0.0
        %5242 = vmatpush1.xpose.msra.mxu0 0.0
        %5243 = vmatprep.subr.mxu0 0.0
        %5244 = vmatpush1.xpose.msra.mxu0 0.0
        %5245 = vmatprep.subr.mxu0 0.0
        %5246 = vmatpush1.xpose.msra.mxu0 0.0
        %5247 = vmatprep.subr.mxu0 0.0
        %5248 = vmatpush1.xpose.msra.mxu0 0.0
        %5249 = vmatprep.subr.mxu0 0.0
        %5250 = vmatpush1.xpose.msra.mxu0 0.0
        %5251 = vmatprep.subr.mxu0 0.0
        %5252 = vmatpush1.xpose.msra.mxu0 0.0
        %5253 = vmatprep.subr.mxu0 0.0
        %5254 = vmatpush1.xpose.msra.mxu0 0.0
        %5255 = vmatprep.subr.mxu0 0.0
        %5256 = vmatpush1.xpose.msra.mxu0 0.0
        %5257 = vmatprep.subr.mxu0 0.0
        %5258 = vmatpush1.xpose.msra.mxu0 0.0
        %5259 = vmatprep.subr.mxu0 0.0
        %5260 = vmatpush1.xpose.msra.mxu0 0.0
        %5261 = vmatprep.subr.mxu0 0.0
        %5262 = vmatpush1.xpose.msra.mxu0 0.0
        %5263 = vmatprep.subr.mxu0 0.0
        %5264 = vmatpush1.xpose.msra.mxu0 0.0
        %5265 = vmatprep.subr.mxu0 0.0
        %5266 = vmatpush1.xpose.msra.mxu0 0.0
        %5267 = vmatprep.subr.mxu0 0.0
        %5268 = vmatpush1.xpose.msra.mxu0 0.0
        %5269 = vmatprep.subr.mxu0 0.0
        %5270 = vmatpush1.xpose.msra.mxu0 0.0
        %5271 = vmatprep.subr.mxu0 0.0
        %5272 = vmatpush1.xpose.msra.mxu0 0.0
        %5273 = vmatprep.subr.mxu0 0.0
        %5274 = vmatpush1.xpose.msra.mxu0 0.0
        %5275 = vmatprep.subr.mxu0 0.0
        %5276 = vmatpush1.xpose.msra.mxu0 0.0
        %5277 = vmatprep.subr.mxu0 0.0
        %5278 = vmatpush1.xpose.msra.mxu0 0.0
        %5279 = vmatprep.subr.mxu0 0.0
        %5280 = vmatpush1.xpose.msra.mxu0 0.0
        %5281 = vmatprep.subr.mxu0 0.0
        %5282 = vmatpush1.xpose.msra.mxu0 0.0
        %5283 = vmatprep.subr.mxu0 0.0
        %5284 = vmatpush1.xpose.msra.mxu0 0.0
        %5285 = vmatprep.subr.mxu0 0.0
        %5286 = vmatpush1.xpose.msra.mxu0 0.0
        %5287 = vmatprep.subr.mxu0 0.0
        %5288 = vmatpush1.xpose.msra.mxu0 0.0
        %5289 = vmatprep.subr.mxu0 0.0
        %5290 = vmatpush1.xpose.msra.mxu0 0.0
        %5291 = vmatprep.subr.mxu0 0.0
        %5292 = vmatpush1.xpose.msra.mxu0 0.0
        %5293 = vmatprep.subr.mxu0 0.0
        %5294 = vmatpush1.xpose.msra.mxu0 0.0
        %5295 = vmatprep.mubr.f32.mxu0 %v1250
        %5296 = vmatmul.mubr.f32.gmra.mrb[0].mxu0 %v1248
        %v5297 = vpop.f32.mrb[0].mxu0
        %v5298 = vadd.f32 %v5228, %v5297
        %v5299 = vpop.f32.mrb[0].mxu0
        %5300 = vdwg.mxu0
        %5301 = vmatprep.subr.mxu0 %v390
        %5302 = vmatpush1.xpose.msra.mxu0 %v389
        %5303 = vmatprep.subr.mxu0 %v646
        %5304 = vmatpush1.xpose.msra.mxu0 %v645
        %5305 = vmatprep.subr.mxu0 0.0
        %5306 = vmatpush1.xpose.msra.mxu0 0.0
        %5307 = vmatprep.subr.mxu0 0.0
        %5308 = vmatpush1.xpose.msra.mxu0 0.0
        %5309 = vmatprep.subr.mxu0 0.0
        %5310 = vmatpush1.xpose.msra.mxu0 0.0
        %5311 = vmatprep.subr.mxu0 0.0
        %5312 = vmatpush1.xpose.msra.mxu0 0.0
        %5313 = vmatprep.subr.mxu0 0.0
        %5314 = vmatpush1.xpose.msra.mxu0 0.0
        %5315 = vmatprep.subr.mxu0 0.0
        %5316 = vmatpush1.xpose.msra.mxu0 0.0
        %5317 = vmatprep.subr.mxu0 0.0
        %5318 = vmatpush1.xpose.msra.mxu0 0.0
        %5319 = vmatprep.subr.mxu0 0.0
        %5320 = vmatpush1.xpose.msra.mxu0 0.0
        %5321 = vmatprep.subr.mxu0 0.0
        %5322 = vmatpush1.xpose.msra.mxu0 0.0
        %5323 = vmatprep.subr.mxu0 0.0
        %5324 = vmatpush1.xpose.msra.mxu0 0.0
        %5325 = vmatprep.subr.mxu0 0.0
        %5326 = vmatpush1.xpose.msra.mxu0 0.0
        %5327 = vmatprep.subr.mxu0 0.0
        %5328 = vmatpush1.xpose.msra.mxu0 0.0
        %5329 = vmatprep.subr.mxu0 0.0
        %5330 = vmatpush1.xpose.msra.mxu0 0.0
        %5331 = vmatprep.subr.mxu0 0.0
        %5332 = vmatpush1.xpose.msra.mxu0 0.0
        %5333 = vmatprep.subr.mxu0 0.0
        %5334 = vmatpush1.xpose.msra.mxu0 0.0
        %5335 = vmatprep.subr.mxu0 0.0
        %5336 = vmatpush1.xpose.msra.mxu0 0.0
        %5337 = vmatprep.subr.mxu0 0.0
        %5338 = vmatpush1.xpose.msra.mxu0 0.0
        %5339 = vmatprep.subr.mxu0 0.0
        %5340 = vmatpush1.xpose.msra.mxu0 0.0
        %5341 = vmatprep.subr.mxu0 0.0
        %5342 = vmatpush1.xpose.msra.mxu0 0.0
        %5343 = vmatprep.subr.mxu0 0.0
        %5344 = vmatpush1.xpose.msra.mxu0 0.0
        %5345 = vmatprep.subr.mxu0 0.0
        %5346 = vmatpush1.xpose.msra.mxu0 0.0
        %5347 = vmatprep.subr.mxu0 0.0
        %5348 = vmatpush1.xpose.msra.mxu0 0.0
        %5349 = vmatprep.subr.mxu0 0.0
        %5350 = vmatpush1.xpose.msra.mxu0 0.0
        %5351 = vmatprep.subr.mxu0 0.0
        %5352 = vmatpush1.xpose.msra.mxu0 0.0
        %5353 = vmatprep.subr.mxu0 0.0
        %5354 = vmatpush1.xpose.msra.mxu0 0.0
        %5355 = vmatprep.subr.mxu0 0.0
        %5356 = vmatpush1.xpose.msra.mxu0 0.0
        %5357 = vmatprep.subr.mxu0 0.0
        %5358 = vmatpush1.xpose.msra.mxu0 0.0
        %5359 = vmatprep.subr.mxu0 0.0
        %5360 = vmatpush1.xpose.msra.mxu0 0.0
        %5361 = vmatprep.subr.mxu0 0.0
        %5362 = vmatpush1.xpose.msra.mxu0 0.0
        %5363 = vmatprep.subr.mxu0 0.0
        %5364 = vmatpush1.xpose.msra.mxu0 0.0
        %5365 = vmatprep.mubr.f32.mxu0 %v1266
        %5366 = vmatmul.mubr.f32.gmra.mrb[0].mxu0 %v1258
        %v5367 = vpop.f32.mrb[0].mxu0
        %v5368 = vadd.f32 %v5298, %v5367
        %v5369 = vpop.f32.mrb[0].mxu0
        %5370 = vdwg.mxu0
        %5371 = vmatprep.subr.mxu0 %v392
        %5372 = vmatpush1.xpose.msra.mxu0 %v391
        %5373 = vmatprep.subr.mxu0 %v648
        %5374 = vmatpush1.xpose.msra.mxu0 %v647
        %5375 = vmatprep.subr.mxu0 0.0
        %5376 = vmatpush1.xpose.msra.mxu0 0.0
        %5377 = vmatprep.subr.mxu0 0.0
        %5378 = vmatpush1.xpose.msra.mxu0 0.0
        %5379 = vmatprep.subr.mxu0 0.0
        %5380 = vmatpush1.xpose.msra.mxu0 0.0
        %5381 = vmatprep.subr.mxu0 0.0
        %5382 = vmatpush1.xpose.msra.mxu0 0.0
        %5383 = vmatprep.subr.mxu0 0.0
        %5384 = vmatpush1.xpose.msra.mxu0 0.0
        %5385 = vmatprep.subr.mxu0 0.0
        %5386 = vmatpush1.xpose.msra.mxu0 0.0
        %5387 = vmatprep.subr.mxu0 0.0
        %5388 = vmatpush1.xpose.msra.mxu0 0.0
        %5389 = vmatprep.subr.mxu0 0.0
        %5390 = vmatpush1.xpose.msra.mxu0 0.0
        %5391 = vmatprep.subr.mxu0 0.0
        %5392 = vmatpush1.xpose.msra.mxu0 0.0
        %5393 = vmatprep.subr.mxu0 0.0
        %5394 = vmatpush1.xpose.msra.mxu0 0.0
        %5395 = vmatprep.subr.mxu0 0.0
        %5396 = vmatpush1.xpose.msra.mxu0 0.0
        %5397 = vmatprep.subr.mxu0 0.0
        %5398 = vmatpush1.xpose.msra.mxu0 0.0
        %5399 = vmatprep.subr.mxu0 0.0
        %5400 = vmatpush1.xpose.msra.mxu0 0.0
        %5401 = vmatprep.subr.mxu0 0.0
        %5402 = vmatpush1.xpose.msra.mxu0 0.0
        %5403 = vmatprep.subr.mxu0 0.0
        %5404 = vmatpush1.xpose.msra.mxu0 0.0
        %5405 = vmatprep.subr.mxu0 0.0
        %5406 = vmatpush1.xpose.msra.mxu0 0.0
        %5407 = vmatprep.subr.mxu0 0.0
        %5408 = vmatpush1.xpose.msra.mxu0 0.0
        %5409 = vmatprep.subr.mxu0 0.0
        %5410 = vmatpush1.xpose.msra.mxu0 0.0
        %5411 = vmatprep.subr.mxu0 0.0
        %5412 = vmatpush1.xpose.msra.mxu0 0.0
        %5413 = vmatprep.subr.mxu0 0.0
        %5414 = vmatpush1.xpose.msra.mxu0 0.0
        %5415 = vmatprep.subr.mxu0 0.0
        %5416 = vmatpush1.xpose.msra.mxu0 0.0
        %5417 = vmatprep.subr.mxu0 0.0
        %5418 = vmatpush1.xpose.msra.mxu0 0.0
        %5419 = vmatprep.subr.mxu0 0.0
        %5420 = vmatpush1.xpose.msra.mxu0 0.0
        %5421 = vmatprep.subr.mxu0 0.0
        %5422 = vmatpush1.xpose.msra.mxu0 0.0
        %5423 = vmatprep.subr.mxu0 0.0
        %5424 = vmatpush1.xpose.msra.mxu0 0.0
        %5425 = vmatprep.subr.mxu0 0.0
        %5426 = vmatpush1.xpose.msra.mxu0 0.0
        %5427 = vmatprep.subr.mxu0 0.0
        %5428 = vmatpush1.xpose.msra.mxu0 0.0
        %5429 = vmatprep.subr.mxu0 0.0
        %5430 = vmatpush1.xpose.msra.mxu0 0.0
        %5431 = vmatprep.subr.mxu0 0.0
        %5432 = vmatpush1.xpose.msra.mxu0 0.0
        %5433 = vmatprep.subr.mxu0 0.0
        %5434 = vmatpush1.xpose.msra.mxu0 0.0
        %5435 = vmatprep.mubr.f32.mxu0 %v1267
        %5436 = vmatmul.mubr.f32.gmra.mrb[0].mxu0 %v1265
        %v5437 = vpop.f32.mrb[0].mxu0
        %v5438 = vadd.f32 %v5368, %v5437
        %v5439 = vpop.f32.mrb[0].mxu0
        %5440 = vdwg.mxu0
        %5441 = vmatprep.subr.mxu0 %v394
        %5442 = vmatpush1.xpose.msra.mxu0 %v393
        %5443 = vmatprep.subr.mxu0 %v650
        %5444 = vmatpush1.xpose.msra.mxu0 %v649
        %5445 = vmatprep.subr.mxu0 0.0
        %5446 = vmatpush1.xpose.msra.mxu0 0.0
        %5447 = vmatprep.subr.mxu0 0.0
        %5448 = vmatpush1.xpose.msra.mxu0 0.0
        %5449 = vmatprep.subr.mxu0 0.0
        %5450 = vmatpush1.xpose.msra.mxu0 0.0
        %5451 = vmatprep.subr.mxu0 0.0
        %5452 = vmatpush1.xpose.msra.mxu0 0.0
        %5453 = vmatprep.subr.mxu0 0.0
        %5454 = vmatpush1.xpose.msra.mxu0 0.0
        %5455 = vmatprep.subr.mxu0 0.0
        %5456 = vmatpush1.xpose.msra.mxu0 0.0
        %5457 = vmatprep.subr.mxu0 0.0
        %5458 = vmatpush1.xpose.msra.mxu0 0.0
        %5459 = vmatprep.subr.mxu0 0.0
        %5460 = vmatpush1.xpose.msra.mxu0 0.0
        %5461 = vmatprep.subr.mxu0 0.0
        %5462 = vmatpush1.xpose.msra.mxu0 0.0
        %5463 = vmatprep.subr.mxu0 0.0
        %5464 = vmatpush1.xpose.msra.mxu0 0.0
        %5465 = vmatprep.subr.mxu0 0.0
        %5466 = vmatpush1.xpose.msra.mxu0 0.0
        %5467 = vmatprep.subr.mxu0 0.0
        %5468 = vmatpush1.xpose.msra.mxu0 0.0
        %5469 = vmatprep.subr.mxu0 0.0
        %5470 = vmatpush1.xpose.msra.mxu0 0.0
        %5471 = vmatprep.subr.mxu0 0.0
        %5472 = vmatpush1.xpose.msra.mxu0 0.0
        %5473 = vmatprep.subr.mxu0 0.0
        %5474 = vmatpush1.xpose.msra.mxu0 0.0
        %5475 = vmatprep.subr.mxu0 0.0
        %5476 = vmatpush1.xpose.msra.mxu0 0.0
        %5477 = vmatprep.subr.mxu0 0.0
        %5478 = vmatpush1.xpose.msra.mxu0 0.0
        %5479 = vmatprep.subr.mxu0 0.0
        %5480 = vmatpush1.xpose.msra.mxu0 0.0
        %5481 = vmatprep.subr.mxu0 0.0
        %5482 = vmatpush1.xpose.msra.mxu0 0.0
        %5483 = vmatprep.subr.mxu0 0.0
        %5484 = vmatpush1.xpose.msra.mxu0 0.0
        %5485 = vmatprep.subr.mxu0 0.0
        %5486 = vmatpush1.xpose.msra.mxu0 0.0
        %5487 = vmatprep.subr.mxu0 0.0
        %5488 = vmatpush1.xpose.msra.mxu0 0.0
        %5489 = vmatprep.subr.mxu0 0.0
        %5490 = vmatpush1.xpose.msra.mxu0 0.0
        %5491 = vmatprep.subr.mxu0 0.0
        %5492 = vmatpush1.xpose.msra.mxu0 0.0
        %5493 = vmatprep.subr.mxu0 0.0
        %5494 = vmatpush1.xpose.msra.mxu0 0.0
        %5495 = vmatprep.subr.mxu0 0.0
        %5496 = vmatpush1.xpose.msra.mxu0 0.0
        %5497 = vmatprep.subr.mxu0 0.0
        %5498 = vmatpush1.xpose.msra.mxu0 0.0
        %5499 = vmatprep.subr.mxu0 0.0
        %5500 = vmatpush1.xpose.msra.mxu0 0.0
        %5501 = vmatprep.subr.mxu0 0.0
        %5502 = vmatpush1.xpose.msra.mxu0 0.0
        %5503 = vmatprep.subr.mxu0 0.0
        %5504 = vmatpush1.xpose.msra.mxu0 0.0
        %5505 = vmatprep.mubr.f32.mxu0 %v1283
        %5506 = vmatmul.mubr.f32.gmra.mrb[0].mxu0 %v1275
        %v5507 = vpop.f32.mrb[0].mxu0
        %v5508 = vadd.f32 %v5438, %v5507
        %v5509 = vpop.f32.mrb[0].mxu0
        %5510 = vdwg.mxu0
        %5511 = vmatprep.subr.mxu0 %v396
        %5512 = vmatpush1.xpose.msra.mxu0 %v395
        %5513 = vmatprep.subr.mxu0 %v652
        %5514 = vmatpush1.xpose.msra.mxu0 %v651
        %5515 = vmatprep.subr.mxu0 0.0
        %5516 = vmatpush1.xpose.msra.mxu0 0.0
        %5517 = vmatprep.subr.mxu0 0.0
        %5518 = vmatpush1.xpose.msra.mxu0 0.0
        %5519 = vmatprep.subr.mxu0 0.0
        %5520 = vmatpush1.xpose.msra.mxu0 0.0
        %5521 = vmatprep.subr.mxu0 0.0
        %5522 = vmatpush1.xpose.msra.mxu0 0.0
        %5523 = vmatprep.subr.mxu0 0.0
        %5524 = vmatpush1.xpose.msra.mxu0 0.0
        %5525 = vmatprep.subr.mxu0 0.0
        %5526 = vmatpush1.xpose.msra.mxu0 0.0
        %5527 = vmatprep.subr.mxu0 0.0
        %5528 = vmatpush1.xpose.msra.mxu0 0.0
        %5529 = vmatprep.subr.mxu0 0.0
        %5530 = vmatpush1.xpose.msra.mxu0 0.0
        %5531 = vmatprep.subr.mxu0 0.0
        %5532 = vmatpush1.xpose.msra.mxu0 0.0
        %5533 = vmatprep.subr.mxu0 0.0
        %5534 = vmatpush1.xpose.msra.mxu0 0.0
        %5535 = vmatprep.subr.mxu0 0.0
        %5536 = vmatpush1.xpose.msra.mxu0 0.0
        %5537 = vmatprep.subr.mxu0 0.0
        %5538 = vmatpush1.xpose.msra.mxu0 0.0
        %5539 = vmatprep.subr.mxu0 0.0
        %5540 = vmatpush1.xpose.msra.mxu0 0.0
        %5541 = vmatprep.subr.mxu0 0.0
        %5542 = vmatpush1.xpose.msra.mxu0 0.0
        %5543 = vmatprep.subr.mxu0 0.0
        %5544 = vmatpush1.xpose.msra.mxu0 0.0
        %5545 = vmatprep.subr.mxu0 0.0
        %5546 = vmatpush1.xpose.msra.mxu0 0.0
        %5547 = vmatprep.subr.mxu0 0.0
        %5548 = vmatpush1.xpose.msra.mxu0 0.0
        %5549 = vmatprep.subr.mxu0 0.0
        %5550 = vmatpush1.xpose.msra.mxu0 0.0
        %5551 = vmatprep.subr.mxu0 0.0
        %5552 = vmatpush1.xpose.msra.mxu0 0.0
        %5553 = vmatprep.subr.mxu0 0.0
        %5554 = vmatpush1.xpose.msra.mxu0 0.0
        %5555 = vmatprep.subr.mxu0 0.0
        %5556 = vmatpush1.xpose.msra.mxu0 0.0
        %5557 = vmatprep.subr.mxu0 0.0
        %5558 = vmatpush1.xpose.msra.mxu0 0.0
        %5559 = vmatprep.subr.mxu0 0.0
        %5560 = vmatpush1.xpose.msra.mxu0 0.0
        %5561 = vmatprep.subr.mxu0 0.0
        %5562 = vmatpush1.xpose.msra.mxu0 0.0
        %5563 = vmatprep.subr.mxu0 0.0
        %5564 = vmatpush1.xpose.msra.mxu0 0.0
        %5565 = vmatprep.subr.mxu0 0.0
        %5566 = vmatpush1.xpose.msra.mxu0 0.0
        %5567 = vmatprep.subr.mxu0 0.0
        %5568 = vmatpush1.xpose.msra.mxu0 0.0
        %5569 = vmatprep.subr.mxu0 0.0
        %5570 = vmatpush1.xpose.msra.mxu0 0.0
        %5571 = vmatprep.subr.mxu0 0.0
        %5572 = vmatpush1.xpose.msra.mxu0 0.0
        %5573 = vmatprep.subr.mxu0 0.0
        %5574 = vmatpush1.xpose.msra.mxu0 0.0
        %5575 = vmatprep.mubr.f32.mxu0 %v1284
        %5576 = vmatmul.mubr.f32.gmra.mrb[0].mxu0 %v1282
        %v5577 = vpop.f32.mrb[0].mxu0
        %v5578 = vadd.f32 %v5508, %v5577
        %v5579 = vpop.f32.mrb[0].mxu0
        %5580 = vdwg.mxu0
        %5581 = vmatprep.subr.mxu0 %v398
        %5582 = vmatpush1.xpose.msra.mxu0 %v397
        %5583 = vmatprep.subr.mxu0 %v654
        %5584 = vmatpush1.xpose.msra.mxu0 %v653
        %5585 = vmatprep.subr.mxu0 0.0
        %5586 = vmatpush1.xpose.msra.mxu0 0.0
        %5587 = vmatprep.subr.mxu0 0.0
        %5588 = vmatpush1.xpose.msra.mxu0 0.0
        %5589 = vmatprep.subr.mxu0 0.0
        %5590 = vmatpush1.xpose.msra.mxu0 0.0
        %5591 = vmatprep.subr.mxu0 0.0
        %5592 = vmatpush1.xpose.msra.mxu0 0.0
        %5593 = vmatprep.subr.mxu0 0.0
        %5594 = vmatpush1.xpose.msra.mxu0 0.0
        %5595 = vmatprep.subr.mxu0 0.0
        %5596 = vmatpush1.xpose.msra.mxu0 0.0
        %5597 = vmatprep.subr.mxu0 0.0
        %5598 = vmatpush1.xpose.msra.mxu0 0.0
        %5599 = vmatprep.subr.mxu0 0.0
        %5600 = vmatpush1.xpose.msra.mxu0 0.0
        %5601 = vmatprep.subr.mxu0 0.0
        %5602 = vmatpush1.xpose.msra.mxu0 0.0
        %5603 = vmatprep.subr.mxu0 0.0
        %5604 = vmatpush1.xpose.msra.mxu0 0.0
        %5605 = vmatprep.subr.mxu0 0.0
        %5606 = vmatpush1.xpose.msra.mxu0 0.0
        %5607 = vmatprep.subr.mxu0 0.0
        %5608 = vmatpush1.xpose.msra.mxu0 0.0
        %5609 = vmatprep.subr.mxu0 0.0
        %5610 = vmatpush1.xpose.msra.mxu0 0.0
        %5611 = vmatprep.subr.mxu0 0.0
        %5612 = vmatpush1.xpose.msra.mxu0 0.0
        %5613 = vmatprep.subr.mxu0 0.0
        %5614 = vmatpush1.xpose.msra.mxu0 0.0
        %5615 = vmatprep.subr.mxu0 0.0
        %5616 = vmatpush1.xpose.msra.mxu0 0.0
        %5617 = vmatprep.subr.mxu0 0.0
        %5618 = vmatpush1.xpose.msra.mxu0 0.0
        %5619 = vmatprep.subr.mxu0 0.0
        %5620 = vmatpush1.xpose.msra.mxu0 0.0
        %5621 = vmatprep.subr.mxu0 0.0
        %5622 = vmatpush1.xpose.msra.mxu0 0.0
        %5623 = vmatprep.subr.mxu0 0.0
        %5624 = vmatpush1.xpose.msra.mxu0 0.0
        %5625 = vmatprep.subr.mxu0 0.0
        %5626 = vmatpush1.xpose.msra.mxu0 0.0
        %5627 = vmatprep.subr.mxu0 0.0
        %5628 = vmatpush1.xpose.msra.mxu0 0.0
        %5629 = vmatprep.subr.mxu0 0.0
        %5630 = vmatpush1.xpose.msra.mxu0 0.0
        %5631 = vmatprep.subr.mxu0 0.0
        %5632 = vmatpush1.xpose.msra.mxu0 0.0
        %5633 = vmatprep.subr.mxu0 0.0
        %5634 = vmatpush1.xpose.msra.mxu0 0.0
        %5635 = vmatprep.subr.mxu0 0.0
        %5636 = vmatpush1.xpose.msra.mxu0 0.0
        %5637 = vmatprep.subr.mxu0 0.0
        %5638 = vmatpush1.xpose.msra.mxu0 0.0
        %5639 = vmatprep.subr.mxu0 0.0
        %5640 = vmatpush1.xpose.msra.mxu0 0.0
        %5641 = vmatprep.subr.mxu0 0.0
        %5642 = vmatpush1.xpose.msra.mxu0 0.0
        %5643 = vmatprep.subr.mxu0 0.0
        %5644 = vmatpush1.xpose.msra.mxu0 0.0
        %5645 = vmatprep.mubr.f32.mxu0 %v1300
        %5646 = vmatmul.mubr.f32.gmra.mrb[0].mxu0 %v1292
        %v5647 = vpop.f32.mrb[0].mxu0
        %v5648 = vadd.f32 %v5578, %v5647
        %v5649 = vpop.f32.mrb[0].mxu0
        %5650 = vdwg.mxu0
        %5651 = vmatprep.subr.mxu0 %v400
        %5652 = vmatpush1.xpose.msra.mxu0 %v399
        %5653 = vmatprep.subr.mxu0 %v656
        %5654 = vmatpush1.xpose.msra.mxu0 %v655
        %5655 = vmatprep.subr.mxu0 0.0
        %5656 = vmatpush1.xpose.msra.mxu0 0.0
        %5657 = vmatprep.subr.mxu0 0.0
        %5658 = vmatpush1.xpose.msra.mxu0 0.0
        %5659 = vmatprep.subr.mxu0 0.0
        %5660 = vmatpush1.xpose.msra.mxu0 0.0
        %5661 = vmatprep.subr.mxu0 0.0
        %5662 = vmatpush1.xpose.msra.mxu0 0.0
        %5663 = vmatprep.subr.mxu0 0.0
        %5664 = vmatpush1.xpose.msra.mxu0 0.0
        %5665 = vmatprep.subr.mxu0 0.0
        %5666 = vmatpush1.xpose.msra.mxu0 0.0
        %5667 = vmatprep.subr.mxu0 0.0
        %5668 = vmatpush1.xpose.msra.mxu0 0.0
        %5669 = vmatprep.subr.mxu0 0.0
        %5670 = vmatpush1.xpose.msra.mxu0 0.0
        %5671 = vmatprep.subr.mxu0 0.0
        %5672 = vmatpush1.xpose.msra.mxu0 0.0
        %5673 = vmatprep.subr.mxu0 0.0
        %5674 = vmatpush1.xpose.msra.mxu0 0.0
        %5675 = vmatprep.subr.mxu0 0.0
        %5676 = vmatpush1.xpose.msra.mxu0 0.0
        %5677 = vmatprep.subr.mxu0 0.0
        %5678 = vmatpush1.xpose.msra.mxu0 0.0
        %5679 = vmatprep.subr.mxu0 0.0
        %5680 = vmatpush1.xpose.msra.mxu0 0.0
        %5681 = vmatprep.subr.mxu0 0.0
        %5682 = vmatpush1.xpose.msra.mxu0 0.0
        %5683 = vmatprep.subr.mxu0 0.0
        %5684 = vmatpush1.xpose.msra.mxu0 0.0
        %5685 = vmatprep.subr.mxu0 0.0
        %5686 = vmatpush1.xpose.msra.mxu0 0.0
        %5687 = vmatprep.subr.mxu0 0.0
        %5688 = vmatpush1.xpose.msra.mxu0 0.0
        %5689 = vmatprep.subr.mxu0 0.0
        %5690 = vmatpush1.xpose.msra.mxu0 0.0
        %5691 = vmatprep.subr.mxu0 0.0
        %5692 = vmatpush1.xpose.msra.mxu0 0.0
        %5693 = vmatprep.subr.mxu0 0.0
        %5694 = vmatpush1.xpose.msra.mxu0 0.0
        %5695 = vmatprep.subr.mxu0 0.0
        %5696 = vmatpush1.xpose.msra.mxu0 0.0
        %5697 = vmatprep.subr.mxu0 0.0
        %5698 = vmatpush1.xpose.msra.mxu0 0.0
        %5699 = vmatprep.subr.mxu0 0.0
        %5700 = vmatpush1.xpose.msra.mxu0 0.0
        %5701 = vmatprep.subr.mxu0 0.0
        %5702 = vmatpush1.xpose.msra.mxu0 0.0
        %5703 = vmatprep.subr.mxu0 0.0
        %5704 = vmatpush1.xpose.msra.mxu0 0.0
        %5705 = vmatprep.subr.mxu0 0.0
        %5706 = vmatpush1.xpose.msra.mxu0 0.0
        %5707 = vmatprep.subr.mxu0 0.0
        %5708 = vmatpush1.xpose.msra.mxu0 0.0
        %5709 = vmatprep.subr.mxu0 0.0
        %5710 = vmatpush1.xpose.msra.mxu0 0.0
        %5711 = vmatprep.subr.mxu0 0.0
        %5712 = vmatpush1.xpose.msra.mxu0 0.0
        %5713 = vmatprep.subr.mxu0 0.0
        %5714 = vmatpush1.xpose.msra.mxu0 0.0
        %5715 = vmatprep.mubr.f32.mxu0 %v1301
        %5716 = vmatmul.mubr.f32.gmra.mrb[0].mxu0 %v1299
        %v5717 = vpop.f32.mrb[0].mxu0
        %v5718 = vadd.f32 %v5648, %v5717
        %v5719 = vpop.f32.mrb[0].mxu0
        %5720 = vdwg.mxu0
        %5721 = vmatprep.subr.mxu0 %v402
        %5722 = vmatpush1.xpose.msra.mxu0 %v401
        %5723 = vmatprep.subr.mxu0 %v658
        %5724 = vmatpush1.xpose.msra.mxu0 %v657
        %5725 = vmatprep.subr.mxu0 0.0
        %5726 = vmatpush1.xpose.msra.mxu0 0.0
        %5727 = vmatprep.subr.mxu0 0.0
        %5728 = vmatpush1.xpose.msra.mxu0 0.0
        %5729 = vmatprep.subr.mxu0 0.0
        %5730 = vmatpush1.xpose.msra.mxu0 0.0
        %5731 = vmatprep.subr.mxu0 0.0
        %5732 = vmatpush1.xpose.msra.mxu0 0.0
        %5733 = vmatprep.subr.mxu0 0.0
        %5734 = vmatpush1.xpose.msra.mxu0 0.0
        %5735 = vmatprep.subr.mxu0 0.0
        %5736 = vmatpush1.xpose.msra.mxu0 0.0
        %5737 = vmatprep.subr.mxu0 0.0
        %5738 = vmatpush1.xpose.msra.mxu0 0.0
        %5739 = vmatprep.subr.mxu0 0.0
        %5740 = vmatpush1.xpose.msra.mxu0 0.0
        %5741 = vmatprep.subr.mxu0 0.0
        %5742 = vmatpush1.xpose.msra.mxu0 0.0
        %5743 = vmatprep.subr.mxu0 0.0
        %5744 = vmatpush1.xpose.msra.mxu0 0.0
        %5745 = vmatprep.subr.mxu0 0.0
        %5746 = vmatpush1.xpose.msra.mxu0 0.0
        %5747 = vmatprep.subr.mxu0 0.0
        %5748 = vmatpush1.xpose.msra.mxu0 0.0
        %5749 = vmatprep.subr.mxu0 0.0
        %5750 = vmatpush1.xpose.msra.mxu0 0.0
        %5751 = vmatprep.subr.mxu0 0.0
        %5752 = vmatpush1.xpose.msra.mxu0 0.0
        %5753 = vmatprep.subr.mxu0 0.0
        %5754 = vmatpush1.xpose.msra.mxu0 0.0
        %5755 = vmatprep.subr.mxu0 0.0
        %5756 = vmatpush1.xpose.msra.mxu0 0.0
        %5757 = vmatprep.subr.mxu0 0.0
        %5758 = vmatpush1.xpose.msra.mxu0 0.0
        %5759 = vmatprep.subr.mxu0 0.0
        %5760 = vmatpush1.xpose.msra.mxu0 0.0
        %5761 = vmatprep.subr.mxu0 0.0
        %5762 = vmatpush1.xpose.msra.mxu0 0.0
        %5763 = vmatprep.subr.mxu0 0.0
        %5764 = vmatpush1.xpose.msra.mxu0 0.0
        %5765 = vmatprep.subr.mxu0 0.0
        %5766 = vmatpush1.xpose.msra.mxu0 0.0
        %5767 = vmatprep.subr.mxu0 0.0
        %5768 = vmatpush1.xpose.msra.mxu0 0.0
        %5769 = vmatprep.subr.mxu0 0.0
        %5770 = vmatpush1.xpose.msra.mxu0 0.0
        %5771 = vmatprep.subr.mxu0 0.0
        %5772 = vmatpush1.xpose.msra.mxu0 0.0
        %5773 = vmatprep.subr.mxu0 0.0
        %5774 = vmatpush1.xpose.msra.mxu0 0.0
        %5775 = vmatprep.subr.mxu0 0.0
        %5776 = vmatpush1.xpose.msra.mxu0 0.0
        %5777 = vmatprep.subr.mxu0 0.0
        %5778 = vmatpush1.xpose.msra.mxu0 0.0
        %5779 = vmatprep.subr.mxu0 0.0
        %5780 = vmatpush1.xpose.msra.mxu0 0.0
        %5781 = vmatprep.subr.mxu0 0.0
        %5782 = vmatpush1.xpose.msra.mxu0 0.0
        %5783 = vmatprep.subr.mxu0 0.0
        %5784 = vmatpush1.xpose.msra.mxu0 0.0
        %5785 = vmatprep.mubr.f32.mxu0 %v1317
        %5786 = vmatmul.mubr.f32.gmra.mrb[0].mxu0 %v1309
        %v5787 = vpop.f32.mrb[0].mxu0
        %v5788 = vadd.f32 %v5718, %v5787
        %v5789 = vpop.f32.mrb[0].mxu0
        %5790 = vdwg.mxu0
        %5791 = vmatprep.subr.mxu0 %v404
        %5792 = vmatpush1.xpose.msra.mxu0 %v403
        %5793 = vmatprep.subr.mxu0 %v660
        %5794 = vmatpush1.xpose.msra.mxu0 %v659
        %5795 = vmatprep.subr.mxu0 0.0
        %5796 = vmatpush1.xpose.msra.mxu0 0.0
        %5797 = vmatprep.subr.mxu0 0.0
        %5798 = vmatpush1.xpose.msra.mxu0 0.0
        %5799 = vmatprep.subr.mxu0 0.0
        %5800 = vmatpush1.xpose.msra.mxu0 0.0
        %5801 = vmatprep.subr.mxu0 0.0
        %5802 = vmatpush1.xpose.msra.mxu0 0.0
        %5803 = vmatprep.subr.mxu0 0.0
        %5804 = vmatpush1.xpose.msra.mxu0 0.0
        %5805 = vmatprep.subr.mxu0 0.0
        %5806 = vmatpush1.xpose.msra.mxu0 0.0
        %5807 = vmatprep.subr.mxu0 0.0
        %5808 = vmatpush1.xpose.msra.mxu0 0.0
        %5809 = vmatprep.subr.mxu0 0.0
        %5810 = vmatpush1.xpose.msra.mxu0 0.0
        %5811 = vmatprep.subr.mxu0 0.0
        %5812 = vmatpush1.xpose.msra.mxu0 0.0
        %5813 = vmatprep.subr.mxu0 0.0
        %5814 = vmatpush1.xpose.msra.mxu0 0.0
        %5815 = vmatprep.subr.mxu0 0.0
        %5816 = vmatpush1.xpose.msra.mxu0 0.0
        %5817 = vmatprep.subr.mxu0 0.0
        %5818 = vmatpush1.xpose.msra.mxu0 0.0
        %5819 = vmatprep.subr.mxu0 0.0
        %5820 = vmatpush1.xpose.msra.mxu0 0.0
        %5821 = vmatprep.subr.mxu0 0.0
        %5822 = vmatpush1.xpose.msra.mxu0 0.0
        %5823 = vmatprep.subr.mxu0 0.0
        %5824 = vmatpush1.xpose.msra.mxu0 0.0
        %5825 = vmatprep.subr.mxu0 0.0
        %5826 = vmatpush1.xpose.msra.mxu0 0.0
        %5827 = vmatprep.subr.mxu0 0.0
        %5828 = vmatpush1.xpose.msra.mxu0 0.0
        %5829 = vmatprep.subr.mxu0 0.0
        %5830 = vmatpush1.xpose.msra.mxu0 0.0
        %5831 = vmatprep.subr.mxu0 0.0
        %5832 = vmatpush1.xpose.msra.mxu0 0.0
        %5833 = vmatprep.subr.mxu0 0.0
        %5834 = vmatpush1.xpose.msra.mxu0 0.0
        %5835 = vmatprep.subr.mxu0 0.0
        %5836 = vmatpush1.xpose.msra.mxu0 0.0
        %5837 = vmatprep.subr.mxu0 0.0
        %5838 = vmatpush1.xpose.msra.mxu0 0.0
        %5839 = vmatprep.subr.mxu0 0.0
        %5840 = vmatpush1.xpose.msra.mxu0 0.0
        %5841 = vmatprep.subr.mxu0 0.0
        %5842 = vmatpush1.xpose.msra.mxu0 0.0
        %5843 = vmatprep.subr.mxu0 0.0
        %5844 = vmatpush1.xpose.msra.mxu0 0.0
        %5845 = vmatprep.subr.mxu0 0.0
        %5846 = vmatpush1.xpose.msra.mxu0 0.0
        %5847 = vmatprep.subr.mxu0 0.0
        %5848 = vmatpush1.xpose.msra.mxu0 0.0
        %5849 = vmatprep.subr.mxu0 0.0
        %5850 = vmatpush1.xpose.msra.mxu0 0.0
        %5851 = vmatprep.subr.mxu0 0.0
        %5852 = vmatpush1.xpose.msra.mxu0 0.0
        %5853 = vmatprep.subr.mxu0 0.0
        %5854 = vmatpush1.xpose.msra.mxu0 0.0
        %5855 = vmatprep.mubr.f32.mxu0 %v1318
        %5856 = vmatmul.mubr.f32.gmra.mrb[0].mxu0 %v1316
        %v5857 = vpop.f32.mrb[0].mxu0
        %v5858 = vadd.f32 %v5788, %v5857
        %v5859 = vpop.f32.mrb[0].mxu0
        %5860 = vdwg.mxu0
        %5861 = vmatprep.subr.mxu0 %v406
        %5862 = vmatpush1.xpose.msra.mxu0 %v405
        %5863 = vmatprep.subr.mxu0 %v662
        %5864 = vmatpush1.xpose.msra.mxu0 %v661
        %5865 = vmatprep.subr.mxu0 0.0
        %5866 = vmatpush1.xpose.msra.mxu0 0.0
        %5867 = vmatprep.subr.mxu0 0.0
        %5868 = vmatpush1.xpose.msra.mxu0 0.0
        %5869 = vmatprep.subr.mxu0 0.0
        %5870 = vmatpush1.xpose.msra.mxu0 0.0
        %5871 = vmatprep.subr.mxu0 0.0
        %5872 = vmatpush1.xpose.msra.mxu0 0.0
        %5873 = vmatprep.subr.mxu0 0.0
        %5874 = vmatpush1.xpose.msra.mxu0 0.0
        %5875 = vmatprep.subr.mxu0 0.0
        %5876 = vmatpush1.xpose.msra.mxu0 0.0
        %5877 = vmatprep.subr.mxu0 0.0
        %5878 = vmatpush1.xpose.msra.mxu0 0.0
        %5879 = vmatprep.subr.mxu0 0.0
        %5880 = vmatpush1.xpose.msra.mxu0 0.0
        %5881 = vmatprep.subr.mxu0 0.0
        %5882 = vmatpush1.xpose.msra.mxu0 0.0
        %5883 = vmatprep.subr.mxu0 0.0
        %5884 = vmatpush1.xpose.msra.mxu0 0.0
        %5885 = vmatprep.subr.mxu0 0.0
        %5886 = vmatpush1.xpose.msra.mxu0 0.0
        %5887 = vmatprep.subr.mxu0 0.0
        %5888 = vmatpush1.xpose.msra.mxu0 0.0
        %5889 = vmatprep.subr.mxu0 0.0
        %5890 = vmatpush1.xpose.msra.mxu0 0.0
        %5891 = vmatprep.subr.mxu0 0.0
        %5892 = vmatpush1.xpose.msra.mxu0 0.0
        %5893 = vmatprep.subr.mxu0 0.0
        %5894 = vmatpush1.xpose.msra.mxu0 0.0
        %5895 = vmatprep.subr.mxu0 0.0
        %5896 = vmatpush1.xpose.msra.mxu0 0.0
        %5897 = vmatprep.subr.mxu0 0.0
        %5898 = vmatpush1.xpose.msra.mxu0 0.0
        %5899 = vmatprep.subr.mxu0 0.0
        %5900 = vmatpush1.xpose.msra.mxu0 0.0
        %5901 = vmatprep.subr.mxu0 0.0
        %5902 = vmatpush1.xpose.msra.mxu0 0.0
        %5903 = vmatprep.subr.mxu0 0.0
        %5904 = vmatpush1.xpose.msra.mxu0 0.0
        %5905 = vmatprep.subr.mxu0 0.0
        %5906 = vmatpush1.xpose.msra.mxu0 0.0
        %5907 = vmatprep.subr.mxu0 0.0
        %5908 = vmatpush1.xpose.msra.mxu0 0.0
        %5909 = vmatprep.subr.mxu0 0.0
        %5910 = vmatpush1.xpose.msra.mxu0 0.0
        %5911 = vmatprep.subr.mxu0 0.0
        %5912 = vmatpush1.xpose.msra.mxu0 0.0
        %5913 = vmatprep.subr.mxu0 0.0
        %5914 = vmatpush1.xpose.msra.mxu0 0.0
        %5915 = vmatprep.subr.mxu0 0.0
        %5916 = vmatpush1.xpose.msra.mxu0 0.0
        %5917 = vmatprep.subr.mxu0 0.0
        %5918 = vmatpush1.xpose.msra.mxu0 0.0
        %5919 = vmatprep.subr.mxu0 0.0
        %5920 = vmatpush1.xpose.msra.mxu0 0.0
        %5921 = vmatprep.subr.mxu0 0.0
        %5922 = vmatpush1.xpose.msra.mxu0 0.0
        %5923 = vmatprep.subr.mxu0 0.0
        %5924 = vmatpush1.xpose.msra.mxu0 0.0
        %5925 = vmatprep.mubr.f32.mxu0 %v1334
        %5926 = vmatmul.mubr.f32.gmra.mrb[0].mxu0 %v1326
        %v5927 = vpop.f32.mrb[0].mxu0
        %v5928 = vadd.f32 %v5858, %v5927
        %v5929 = vpop.f32.mrb[0].mxu0
        %5930 = vdwg.mxu0
        %5931 = vmatprep.subr.mxu0 %v408
        %5932 = vmatpush1.xpose.msra.mxu0 %v407
        %5933 = vmatprep.subr.mxu0 %v664
        %5934 = vmatpush1.xpose.msra.mxu0 %v663
        %5935 = vmatprep.subr.mxu0 0.0
        %5936 = vmatpush1.xpose.msra.mxu0 0.0
        %5937 = vmatprep.subr.mxu0 0.0
        %5938 = vmatpush1.xpose.msra.mxu0 0.0
        %5939 = vmatprep.subr.mxu0 0.0
        %5940 = vmatpush1.xpose.msra.mxu0 0.0
        %5941 = vmatprep.subr.mxu0 0.0
        %5942 = vmatpush1.xpose.msra.mxu0 0.0
        %5943 = vmatprep.subr.mxu0 0.0
        %5944 = vmatpush1.xpose.msra.mxu0 0.0
        %5945 = vmatprep.subr.mxu0 0.0
        %5946 = vmatpush1.xpose.msra.mxu0 0.0
        %5947 = vmatprep.subr.mxu0 0.0
        %5948 = vmatpush1.xpose.msra.mxu0 0.0
        %5949 = vmatprep.subr.mxu0 0.0
        %5950 = vmatpush1.xpose.msra.mxu0 0.0
        %5951 = vmatprep.subr.mxu0 0.0
        %5952 = vmatpush1.xpose.msra.mxu0 0.0
        %5953 = vmatprep.subr.mxu0 0.0
        %5954 = vmatpush1.xpose.msra.mxu0 0.0
        %5955 = vmatprep.subr.mxu0 0.0
        %5956 = vmatpush1.xpose.msra.mxu0 0.0
        %5957 = vmatprep.subr.mxu0 0.0
        %5958 = vmatpush1.xpose.msra.mxu0 0.0
        %5959 = vmatprep.subr.mxu0 0.0
        %5960 = vmatpush1.xpose.msra.mxu0 0.0
        %5961 = vmatprep.subr.mxu0 0.0
        %5962 = vmatpush1.xpose.msra.mxu0 0.0
        %5963 = vmatprep.subr.mxu0 0.0
        %5964 = vmatpush1.xpose.msra.mxu0 0.0
        %5965 = vmatprep.subr.mxu0 0.0
        %5966 = vmatpush1.xpose.msra.mxu0 0.0
        %5967 = vmatprep.subr.mxu0 0.0
        %5968 = vmatpush1.xpose.msra.mxu0 0.0
        %5969 = vmatprep.subr.mxu0 0.0
        %5970 = vmatpush1.xpose.msra.mxu0 0.0
        %5971 = vmatprep.subr.mxu0 0.0
        %5972 = vmatpush1.xpose.msra.mxu0 0.0
        %5973 = vmatprep.subr.mxu0 0.0
        %5974 = vmatpush1.xpose.msra.mxu0 0.0
        %5975 = vmatprep.subr.mxu0 0.0
        %5976 = vmatpush1.xpose.msra.mxu0 0.0
        %5977 = vmatprep.subr.mxu0 0.0
        %5978 = vmatpush1.xpose.msra.mxu0 0.0
        %5979 = vmatprep.subr.mxu0 0.0
        %5980 = vmatpush1.xpose.msra.mxu0 0.0
        %5981 = vmatprep.subr.mxu0 0.0
        %5982 = vmatpush1.xpose.msra.mxu0 0.0
        %5983 = vmatprep.subr.mxu0 0.0
        %5984 = vmatpush1.xpose.msra.mxu0 0.0
        %5985 = vmatprep.subr.mxu0 0.0
        %5986 = vmatpush1.xpose.msra.mxu0 0.0
        %5987 = vmatprep.subr.mxu0 0.0
        %5988 = vmatpush1.xpose.msra.mxu0 0.0
        %5989 = vmatprep.subr.mxu0 0.0
        %5990 = vmatpush1.xpose.msra.mxu0 0.0
        %5991 = vmatprep.subr.mxu0 0.0
        %5992 = vmatpush1.xpose.msra.mxu0 0.0
        %5993 = vmatprep.subr.mxu0 0.0
        %5994 = vmatpush1.xpose.msra.mxu0 0.0
        %5995 = vmatprep.mubr.f32.mxu0 %v1335
        %5996 = vmatmul.mubr.f32.gmra.mrb[0].mxu0 %v1333
        %v5997 = vpop.f32.mrb[0].mxu0
        %v5998 = vadd.f32 %v5928, %v5997
        %v5999 = vpop.f32.mrb[0].mxu0
        %6000 = vdwg.mxu0
        %6001 = vmatprep.subr.mxu0 %v410
        %6002 = vmatpush1.xpose.msra.mxu0 %v409
        %6003 = vmatprep.subr.mxu0 %v666
        %6004 = vmatpush1.xpose.msra.mxu0 %v665
        %6005 = vmatprep.subr.mxu0 0.0
        %6006 = vmatpush1.xpose.msra.mxu0 0.0
        %6007 = vmatprep.subr.mxu0 0.0
        %6008 = vmatpush1.xpose.msra.mxu0 0.0
        %6009 = vmatprep.subr.mxu0 0.0
        %6010 = vmatpush1.xpose.msra.mxu0 0.0
        %6011 = vmatprep.subr.mxu0 0.0
        %6012 = vmatpush1.xpose.msra.mxu0 0.0
        %6013 = vmatprep.subr.mxu0 0.0
        %6014 = vmatpush1.xpose.msra.mxu0 0.0
        %6015 = vmatprep.subr.mxu0 0.0
        %6016 = vmatpush1.xpose.msra.mxu0 0.0
        %6017 = vmatprep.subr.mxu0 0.0
        %6018 = vmatpush1.xpose.msra.mxu0 0.0
        %6019 = vmatprep.subr.mxu0 0.0
        %6020 = vmatpush1.xpose.msra.mxu0 0.0
        %6021 = vmatprep.subr.mxu0 0.0
        %6022 = vmatpush1.xpose.msra.mxu0 0.0
        %6023 = vmatprep.subr.mxu0 0.0
        %6024 = vmatpush1.xpose.msra.mxu0 0.0
        %6025 = vmatprep.subr.mxu0 0.0
        %6026 = vmatpush1.xpose.msra.mxu0 0.0
        %6027 = vmatprep.subr.mxu0 0.0
        %6028 = vmatpush1.xpose.msra.mxu0 0.0
        %6029 = vmatprep.subr.mxu0 0.0
        %6030 = vmatpush1.xpose.msra.mxu0 0.0
        %6031 = vmatprep.subr.mxu0 0.0
        %6032 = vmatpush1.xpose.msra.mxu0 0.0
        %6033 = vmatprep.subr.mxu0 0.0
        %6034 = vmatpush1.xpose.msra.mxu0 0.0
        %6035 = vmatprep.subr.mxu0 0.0
        %6036 = vmatpush1.xpose.msra.mxu0 0.0
        %6037 = vmatprep.subr.mxu0 0.0
        %6038 = vmatpush1.xpose.msra.mxu0 0.0
        %6039 = vmatprep.subr.mxu0 0.0
        %6040 = vmatpush1.xpose.msra.mxu0 0.0
        %6041 = vmatprep.subr.mxu0 0.0
        %6042 = vmatpush1.xpose.msra.mxu0 0.0
        %6043 = vmatprep.subr.mxu0 0.0
        %6044 = vmatpush1.xpose.msra.mxu0 0.0
        %6045 = vmatprep.subr.mxu0 0.0
        %6046 = vmatpush1.xpose.msra.mxu0 0.0
        %6047 = vmatprep.subr.mxu0 0.0
        %6048 = vmatpush1.xpose.msra.mxu0 0.0
        %6049 = vmatprep.subr.mxu0 0.0
        %6050 = vmatpush1.xpose.msra.mxu0 0.0
        %6051 = vmatprep.subr.mxu0 0.0
        %6052 = vmatpush1.xpose.msra.mxu0 0.0
        %6053 = vmatprep.subr.mxu0 0.0
        %6054 = vmatpush1.xpose.msra.mxu0 0.0
        %6055 = vmatprep.subr.mxu0 0.0
        %6056 = vmatpush1.xpose.msra.mxu0 0.0
        %6057 = vmatprep.subr.mxu0 0.0
        %6058 = vmatpush1.xpose.msra.mxu0 0.0
        %6059 = vmatprep.subr.mxu0 0.0
        %6060 = vmatpush1.xpose.msra.mxu0 0.0
        %6061 = vmatprep.subr.mxu0 0.0
        %6062 = vmatpush1.xpose.msra.mxu0 0.0
        %6063 = vmatprep.subr.mxu0 0.0
        %6064 = vmatpush1.xpose.msra.mxu0 0.0
        %6065 = vmatprep.mubr.f32.mxu0 %v1351
        %6066 = vmatmul.mubr.f32.gmra.mrb[0].mxu0 %v1343
        %v6067 = vpop.f32.mrb[0].mxu0
        %v6068 = vadd.f32 %v5998, %v6067
        %v6069 = vpop.f32.mrb[0].mxu0
        %6070 = vdwg.mxu0
        %6071 = vmatprep.subr.mxu0 %v412
        %6072 = vmatpush1.xpose.msra.mxu0 %v411
        %6073 = vmatprep.subr.mxu0 %v668
        %6074 = vmatpush1.xpose.msra.mxu0 %v667
        %6075 = vmatprep.subr.mxu0 0.0
        %6076 = vmatpush1.xpose.msra.mxu0 0.0
        %6077 = vmatprep.subr.mxu0 0.0
        %6078 = vmatpush1.xpose.msra.mxu0 0.0
        %6079 = vmatprep.subr.mxu0 0.0
        %6080 = vmatpush1.xpose.msra.mxu0 0.0
        %6081 = vmatprep.subr.mxu0 0.0
        %6082 = vmatpush1.xpose.msra.mxu0 0.0
        %6083 = vmatprep.subr.mxu0 0.0
        %6084 = vmatpush1.xpose.msra.mxu0 0.0
        %6085 = vmatprep.subr.mxu0 0.0
        %6086 = vmatpush1.xpose.msra.mxu0 0.0
        %6087 = vmatprep.subr.mxu0 0.0
        %6088 = vmatpush1.xpose.msra.mxu0 0.0
        %6089 = vmatprep.subr.mxu0 0.0
        %6090 = vmatpush1.xpose.msra.mxu0 0.0
        %6091 = vmatprep.subr.mxu0 0.0
        %6092 = vmatpush1.xpose.msra.mxu0 0.0
        %6093 = vmatprep.subr.mxu0 0.0
        %6094 = vmatpush1.xpose.msra.mxu0 0.0
        %6095 = vmatprep.subr.mxu0 0.0
        %6096 = vmatpush1.xpose.msra.mxu0 0.0
        %6097 = vmatprep.subr.mxu0 0.0
        %6098 = vmatpush1.xpose.msra.mxu0 0.0
        %6099 = vmatprep.subr.mxu0 0.0
        %6100 = vmatpush1.xpose.msra.mxu0 0.0
        %6101 = vmatprep.subr.mxu0 0.0
        %6102 = vmatpush1.xpose.msra.mxu0 0.0
        %6103 = vmatprep.subr.mxu0 0.0
        %6104 = vmatpush1.xpose.msra.mxu0 0.0
        %6105 = vmatprep.subr.mxu0 0.0
        %6106 = vmatpush1.xpose.msra.mxu0 0.0
        %6107 = vmatprep.subr.mxu0 0.0
        %6108 = vmatpush1.xpose.msra.mxu0 0.0
        %6109 = vmatprep.subr.mxu0 0.0
        %6110 = vmatpush1.xpose.msra.mxu0 0.0
        %6111 = vmatprep.subr.mxu0 0.0
        %6112 = vmatpush1.xpose.msra.mxu0 0.0
        %6113 = vmatprep.subr.mxu0 0.0
        %6114 = vmatpush1.xpose.msra.mxu0 0.0
        %6115 = vmatprep.subr.mxu0 0.0
        %6116 = vmatpush1.xpose.msra.mxu0 0.0
        %6117 = vmatprep.subr.mxu0 0.0
        %6118 = vmatpush1.xpose.msra.mxu0 0.0
        %6119 = vmatprep.subr.mxu0 0.0
        %6120 = vmatpush1.xpose.msra.mxu0 0.0
        %6121 = vmatprep.subr.mxu0 0.0
        %6122 = vmatpush1.xpose.msra.mxu0 0.0
        %6123 = vmatprep.subr.mxu0 0.0
        %6124 = vmatpush1.xpose.msra.mxu0 0.0
        %6125 = vmatprep.subr.mxu0 0.0
        %6126 = vmatpush1.xpose.msra.mxu0 0.0
        %6127 = vmatprep.subr.mxu0 0.0
        %6128 = vmatpush1.xpose.msra.mxu0 0.0
        %6129 = vmatprep.subr.mxu0 0.0
        %6130 = vmatpush1.xpose.msra.mxu0 0.0
        %6131 = vmatprep.subr.mxu0 0.0
        %6132 = vmatpush1.xpose.msra.mxu0 0.0
        %6133 = vmatprep.subr.mxu0 0.0
        %6134 = vmatpush1.xpose.msra.mxu0 0.0
        %6135 = vmatprep.mubr.f32.mxu0 %v1352
        %6136 = vmatmul.mubr.f32.gmra.mrb[0].mxu0 %v1350
        %v6137 = vpop.f32.mrb[0].mxu0
        %v6138 = vadd.f32 %v6068, %v6137
        %v6139 = vpop.f32.mrb[0].mxu0
        %6140 = vdwg.mxu0
        %6141 = vmatprep.subr.mxu0 %v414
        %6142 = vmatpush1.xpose.msra.mxu0 %v413
        %6143 = vmatprep.subr.mxu0 %v670
        %6144 = vmatpush1.xpose.msra.mxu0 %v669
        %6145 = vmatprep.subr.mxu0 0.0
        %6146 = vmatpush1.xpose.msra.mxu0 0.0
        %6147 = vmatprep.subr.mxu0 0.0
        %6148 = vmatpush1.xpose.msra.mxu0 0.0
        %6149 = vmatprep.subr.mxu0 0.0
        %6150 = vmatpush1.xpose.msra.mxu0 0.0
        %6151 = vmatprep.subr.mxu0 0.0
        %6152 = vmatpush1.xpose.msra.mxu0 0.0
        %6153 = vmatprep.subr.mxu0 0.0
        %6154 = vmatpush1.xpose.msra.mxu0 0.0
        %6155 = vmatprep.subr.mxu0 0.0
        %6156 = vmatpush1.xpose.msra.mxu0 0.0
        %6157 = vmatprep.subr.mxu0 0.0
        %6158 = vmatpush1.xpose.msra.mxu0 0.0
        %6159 = vmatprep.subr.mxu0 0.0
        %6160 = vmatpush1.xpose.msra.mxu0 0.0
        %6161 = vmatprep.subr.mxu0 0.0
        %6162 = vmatpush1.xpose.msra.mxu0 0.0
        %6163 = vmatprep.subr.mxu0 0.0
        %6164 = vmatpush1.xpose.msra.mxu0 0.0
        %6165 = vmatprep.subr.mxu0 0.0
        %6166 = vmatpush1.xpose.msra.mxu0 0.0
        %6167 = vmatprep.subr.mxu0 0.0
        %6168 = vmatpush1.xpose.msra.mxu0 0.0
        %6169 = vmatprep.subr.mxu0 0.0
        %6170 = vmatpush1.xpose.msra.mxu0 0.0
        %6171 = vmatprep.subr.mxu0 0.0
        %6172 = vmatpush1.xpose.msra.mxu0 0.0
        %6173 = vmatprep.subr.mxu0 0.0
        %6174 = vmatpush1.xpose.msra.mxu0 0.0
        %6175 = vmatprep.subr.mxu0 0.0
        %6176 = vmatpush1.xpose.msra.mxu0 0.0
        %6177 = vmatprep.subr.mxu0 0.0
        %6178 = vmatpush1.xpose.msra.mxu0 0.0
        %6179 = vmatprep.subr.mxu0 0.0
        %6180 = vmatpush1.xpose.msra.mxu0 0.0
        %6181 = vmatprep.subr.mxu0 0.0
        %6182 = vmatpush1.xpose.msra.mxu0 0.0
        %6183 = vmatprep.subr.mxu0 0.0
        %6184 = vmatpush1.xpose.msra.mxu0 0.0
        %6185 = vmatprep.subr.mxu0 0.0
        %6186 = vmatpush1.xpose.msra.mxu0 0.0
        %6187 = vmatprep.subr.mxu0 0.0
        %6188 = vmatpush1.xpose.msra.mxu0 0.0
        %6189 = vmatprep.subr.mxu0 0.0
        %6190 = vmatpush1.xpose.msra.mxu0 0.0
        %6191 = vmatprep.subr.mxu0 0.0
        %6192 = vmatpush1.xpose.msra.mxu0 0.0
        %6193 = vmatprep.subr.mxu0 0.0
        %6194 = vmatpush1.xpose.msra.mxu0 0.0
        %6195 = vmatprep.subr.mxu0 0.0
        %6196 = vmatpush1.xpose.msra.mxu0 0.0
        %6197 = vmatprep.subr.mxu0 0.0
        %6198 = vmatpush1.xpose.msra.mxu0 0.0
        %6199 = vmatprep.subr.mxu0 0.0
        %6200 = vmatpush1.xpose.msra.mxu0 0.0
        %6201 = vmatprep.subr.mxu0 0.0
        %6202 = vmatpush1.xpose.msra.mxu0 0.0
        %6203 = vmatprep.subr.mxu0 0.0
        %6204 = vmatpush1.xpose.msra.mxu0 0.0
        %6205 = vmatprep.mubr.f32.mxu0 %v1368
        %6206 = vmatmul.mubr.f32.gmra.mrb[0].mxu0 %v1360
        %v6207 = vpop.f32.mrb[0].mxu0
        %v6208 = vadd.f32 %v6138, %v6207
        %v6209 = vpop.f32.mrb[0].mxu0
        %6210 = vdwg.mxu0
        %6211 = vmatprep.subr.mxu0 %v416
        %6212 = vmatpush1.xpose.msra.mxu0 %v415
        %6213 = vmatprep.subr.mxu0 %v672
        %6214 = vmatpush1.xpose.msra.mxu0 %v671
        %6215 = vmatprep.subr.mxu0 0.0
        %6216 = vmatpush1.xpose.msra.mxu0 0.0
        %6217 = vmatprep.subr.mxu0 0.0
        %6218 = vmatpush1.xpose.msra.mxu0 0.0
        %6219 = vmatprep.subr.mxu0 0.0
        %6220 = vmatpush1.xpose.msra.mxu0 0.0
        %6221 = vmatprep.subr.mxu0 0.0
        %6222 = vmatpush1.xpose.msra.mxu0 0.0
        %6223 = vmatprep.subr.mxu0 0.0
        %6224 = vmatpush1.xpose.msra.mxu0 0.0
        %6225 = vmatprep.subr.mxu0 0.0
        %6226 = vmatpush1.xpose.msra.mxu0 0.0
        %6227 = vmatprep.subr.mxu0 0.0
        %6228 = vmatpush1.xpose.msra.mxu0 0.0
        %6229 = vmatprep.subr.mxu0 0.0
        %6230 = vmatpush1.xpose.msra.mxu0 0.0
        %6231 = vmatprep.subr.mxu0 0.0
        %6232 = vmatpush1.xpose.msra.mxu0 0.0
        %6233 = vmatprep.subr.mxu0 0.0
        %6234 = vmatpush1.xpose.msra.mxu0 0.0
        %6235 = vmatprep.subr.mxu0 0.0
        %6236 = vmatpush1.xpose.msra.mxu0 0.0
        %6237 = vmatprep.subr.mxu0 0.0
        %6238 = vmatpush1.xpose.msra.mxu0 0.0
        %6239 = vmatprep.subr.mxu0 0.0
        %6240 = vmatpush1.xpose.msra.mxu0 0.0
        %6241 = vmatprep.subr.mxu0 0.0
        %6242 = vmatpush1.xpose.msra.mxu0 0.0
        %6243 = vmatprep.subr.mxu0 0.0
        %6244 = vmatpush1.xpose.msra.mxu0 0.0
        %6245 = vmatprep.subr.mxu0 0.0
        %6246 = vmatpush1.xpose.msra.mxu0 0.0
        %6247 = vmatprep.subr.mxu0 0.0
        %6248 = vmatpush1.xpose.msra.mxu0 0.0
        %6249 = vmatprep.subr.mxu0 0.0
        %6250 = vmatpush1.xpose.msra.mxu0 0.0
        %6251 = vmatprep.subr.mxu0 0.0
        %6252 = vmatpush1.xpose.msra.mxu0 0.0
        %6253 = vmatprep.subr.mxu0 0.0
        %6254 = vmatpush1.xpose.msra.mxu0 0.0
        %6255 = vmatprep.subr.mxu0 0.0
        %6256 = vmatpush1.xpose.msra.mxu0 0.0
        %6257 = vmatprep.subr.mxu0 0.0
        %6258 = vmatpush1.xpose.msra.mxu0 0.0
        %6259 = vmatprep.subr.mxu0 0.0
        %6260 = vmatpush1.xpose.msra.mxu0 0.0
        %6261 = vmatprep.subr.mxu0 0.0
        %6262 = vmatpush1.xpose.msra.mxu0 0.0
        %6263 = vmatprep.subr.mxu0 0.0
        %6264 = vmatpush1.xpose.msra.mxu0 0.0
        %6265 = vmatprep.subr.mxu0 0.0
        %6266 = vmatpush1.xpose.msra.mxu0 0.0
        %6267 = vmatprep.subr.mxu0 0.0
        %6268 = vmatpush1.xpose.msra.mxu0 0.0
        %6269 = vmatprep.subr.mxu0 0.0
        %6270 = vmatpush1.xpose.msra.mxu0 0.0
        %6271 = vmatprep.subr.mxu0 0.0
        %6272 = vmatpush1.xpose.msra.mxu0 0.0
        %6273 = vmatprep.subr.mxu0 0.0
        %6274 = vmatpush1.xpose.msra.mxu0 0.0
        %6275 = vmatprep.mubr.f32.mxu0 %v1369
        %6276 = vmatmul.mubr.f32.gmra.mrb[0].mxu0 %v1367
        %v6277 = vpop.f32.mrb[0].mxu0
        %v6278 = vadd.f32 %v6208, %v6277
        %v6279 = vpop.f32.mrb[0].mxu0
        %6280 = vdwg.mxu0
        %6281 = vmatprep.subr.mxu0 %v418
        %6282 = vmatpush1.xpose.msra.mxu0 %v417
        %6283 = vmatprep.subr.mxu0 %v674
        %6284 = vmatpush1.xpose.msra.mxu0 %v673
        %6285 = vmatprep.subr.mxu0 0.0
        %6286 = vmatpush1.xpose.msra.mxu0 0.0
        %6287 = vmatprep.subr.mxu0 0.0
        %6288 = vmatpush1.xpose.msra.mxu0 0.0
        %6289 = vmatprep.subr.mxu0 0.0
        %6290 = vmatpush1.xpose.msra.mxu0 0.0
        %6291 = vmatprep.subr.mxu0 0.0
        %6292 = vmatpush1.xpose.msra.mxu0 0.0
        %6293 = vmatprep.subr.mxu0 0.0
        %6294 = vmatpush1.xpose.msra.mxu0 0.0
        %6295 = vmatprep.subr.mxu0 0.0
        %6296 = vmatpush1.xpose.msra.mxu0 0.0
        %6297 = vmatprep.subr.mxu0 0.0
        %6298 = vmatpush1.xpose.msra.mxu0 0.0
        %6299 = vmatprep.subr.mxu0 0.0
        %6300 = vmatpush1.xpose.msra.mxu0 0.0
        %6301 = vmatprep.subr.mxu0 0.0
        %6302 = vmatpush1.xpose.msra.mxu0 0.0
        %6303 = vmatprep.subr.mxu0 0.0
        %6304 = vmatpush1.xpose.msra.mxu0 0.0
        %6305 = vmatprep.subr.mxu0 0.0
        %6306 = vmatpush1.xpose.msra.mxu0 0.0
        %6307 = vmatprep.subr.mxu0 0.0
        %6308 = vmatpush1.xpose.msra.mxu0 0.0
        %6309 = vmatprep.subr.mxu0 0.0
        %6310 = vmatpush1.xpose.msra.mxu0 0.0
        %6311 = vmatprep.subr.mxu0 0.0
        %6312 = vmatpush1.xpose.msra.mxu0 0.0
        %6313 = vmatprep.subr.mxu0 0.0
        %6314 = vmatpush1.xpose.msra.mxu0 0.0
        %6315 = vmatprep.subr.mxu0 0.0
        %6316 = vmatpush1.xpose.msra.mxu0 0.0
        %6317 = vmatprep.subr.mxu0 0.0
        %6318 = vmatpush1.xpose.msra.mxu0 0.0
        %6319 = vmatprep.subr.mxu0 0.0
        %6320 = vmatpush1.xpose.msra.mxu0 0.0
        %6321 = vmatprep.subr.mxu0 0.0
        %6322 = vmatpush1.xpose.msra.mxu0 0.0
        %6323 = vmatprep.subr.mxu0 0.0
        %6324 = vmatpush1.xpose.msra.mxu0 0.0
        %6325 = vmatprep.subr.mxu0 0.0
        %6326 = vmatpush1.xpose.msra.mxu0 0.0
        %6327 = vmatprep.subr.mxu0 0.0
        %6328 = vmatpush1.xpose.msra.mxu0 0.0
        %6329 = vmatprep.subr.mxu0 0.0
        %6330 = vmatpush1.xpose.msra.mxu0 0.0
        %6331 = vmatprep.subr.mxu0 0.0
        %6332 = vmatpush1.xpose.msra.mxu0 0.0
        %6333 = vmatprep.subr.mxu0 0.0
        %6334 = vmatpush1.xpose.msra.mxu0 0.0
        %6335 = vmatprep.subr.mxu0 0.0
        %6336 = vmatpush1.xpose.msra.mxu0 0.0
        %6337 = vmatprep.subr.mxu0 0.0
        %6338 = vmatpush1.xpose.msra.mxu0 0.0
        %6339 = vmatprep.subr.mxu0 0.0
        %6340 = vmatpush1.xpose.msra.mxu0 0.0
        %6341 = vmatprep.subr.mxu0 0.0
        %6342 = vmatpush1.xpose.msra.mxu0 0.0
        %6343 = vmatprep.subr.mxu0 0.0
        %6344 = vmatpush1.xpose.msra.mxu0 0.0
        %6345 = vmatprep.mubr.f32.mxu0 %v1385
        %6346 = vmatmul.mubr.f32.gmra.mrb[0].mxu0 %v1377
        %v6347 = vpop.f32.mrb[0].mxu0
        %v6348 = vadd.f32 %v6278, %v6347
        %v6349 = vpop.f32.mrb[0].mxu0
        %6350 = vdwg.mxu0
        %6351 = vmatprep.subr.mxu0 %v420
        %6352 = vmatpush1.xpose.msra.mxu0 %v419
        %6353 = vmatprep.subr.mxu0 %v676
        %6354 = vmatpush1.xpose.msra.mxu0 %v675
        %6355 = vmatprep.subr.mxu0 0.0
        %6356 = vmatpush1.xpose.msra.mxu0 0.0
        %6357 = vmatprep.subr.mxu0 0.0
        %6358 = vmatpush1.xpose.msra.mxu0 0.0
        %6359 = vmatprep.subr.mxu0 0.0
        %6360 = vmatpush1.xpose.msra.mxu0 0.0
        %6361 = vmatprep.subr.mxu0 0.0
        %6362 = vmatpush1.xpose.msra.mxu0 0.0
        %6363 = vmatprep.subr.mxu0 0.0
        %6364 = vmatpush1.xpose.msra.mxu0 0.0
        %6365 = vmatprep.subr.mxu0 0.0
        %6366 = vmatpush1.xpose.msra.mxu0 0.0
        %6367 = vmatprep.subr.mxu0 0.0
        %6368 = vmatpush1.xpose.msra.mxu0 0.0
        %6369 = vmatprep.subr.mxu0 0.0
        %6370 = vmatpush1.xpose.msra.mxu0 0.0
        %6371 = vmatprep.subr.mxu0 0.0
        %6372 = vmatpush1.xpose.msra.mxu0 0.0
        %6373 = vmatprep.subr.mxu0 0.0
        %6374 = vmatpush1.xpose.msra.mxu0 0.0
        %6375 = vmatprep.subr.mxu0 0.0
        %6376 = vmatpush1.xpose.msra.mxu0 0.0
        %6377 = vmatprep.subr.mxu0 0.0
        %6378 = vmatpush1.xpose.msra.mxu0 0.0
        %6379 = vmatprep.subr.mxu0 0.0
        %6380 = vmatpush1.xpose.msra.mxu0 0.0
        %6381 = vmatprep.subr.mxu0 0.0
        %6382 = vmatpush1.xpose.msra.mxu0 0.0
        %6383 = vmatprep.subr.mxu0 0.0
        %6384 = vmatpush1.xpose.msra.mxu0 0.0
        %6385 = vmatprep.subr.mxu0 0.0
        %6386 = vmatpush1.xpose.msra.mxu0 0.0
        %6387 = vmatprep.subr.mxu0 0.0
        %6388 = vmatpush1.xpose.msra.mxu0 0.0
        %6389 = vmatprep.subr.mxu0 0.0
        %6390 = vmatpush1.xpose.msra.mxu0 0.0
        %6391 = vmatprep.subr.mxu0 0.0
        %6392 = vmatpush1.xpose.msra.mxu0 0.0
        %6393 = vmatprep.subr.mxu0 0.0
        %6394 = vmatpush1.xpose.msra.mxu0 0.0
        %6395 = vmatprep.subr.mxu0 0.0
        %6396 = vmatpush1.xpose.msra.mxu0 0.0
        %6397 = vmatprep.subr.mxu0 0.0
        %6398 = vmatpush1.xpose.msra.mxu0 0.0
        %6399 = vmatprep.subr.mxu0 0.0
        %6400 = vmatpush1.xpose.msra.mxu0 0.0
        %6401 = vmatprep.subr.mxu0 0.0
        %6402 = vmatpush1.xpose.msra.mxu0 0.0
        %6403 = vmatprep.subr.mxu0 0.0
        %6404 = vmatpush1.xpose.msra.mxu0 0.0
        %6405 = vmatprep.subr.mxu0 0.0
        %6406 = vmatpush1.xpose.msra.mxu0 0.0
        %6407 = vmatprep.subr.mxu0 0.0
        %6408 = vmatpush1.xpose.msra.mxu0 0.0
        %6409 = vmatprep.subr.mxu0 0.0
        %6410 = vmatpush1.xpose.msra.mxu0 0.0
        %6411 = vmatprep.subr.mxu0 0.0
        %6412 = vmatpush1.xpose.msra.mxu0 0.0
        %6413 = vmatprep.subr.mxu0 0.0
        %6414 = vmatpush1.xpose.msra.mxu0 0.0
        %6415 = vmatprep.mubr.f32.mxu0 %v1386
        %6416 = vmatmul.mubr.f32.gmra.mrb[0].mxu0 %v1384
        %v6417 = vpop.f32.mrb[0].mxu0
        %v6418 = vadd.f32 %v6348, %v6417
        %v6419 = vpop.f32.mrb[0].mxu0
        %6420 = vdwg.mxu0
        %6421 = vmatprep.subr.mxu0 %v422
        %6422 = vmatpush1.xpose.msra.mxu0 %v421
        %6423 = vmatprep.subr.mxu0 %v678
        %6424 = vmatpush1.xpose.msra.mxu0 %v677
        %6425 = vmatprep.subr.mxu0 0.0
        %6426 = vmatpush1.xpose.msra.mxu0 0.0
        %6427 = vmatprep.subr.mxu0 0.0
        %6428 = vmatpush1.xpose.msra.mxu0 0.0
        %6429 = vmatprep.subr.mxu0 0.0
        %6430 = vmatpush1.xpose.msra.mxu0 0.0
        %6431 = vmatprep.subr.mxu0 0.0
        %6432 = vmatpush1.xpose.msra.mxu0 0.0
        %6433 = vmatprep.subr.mxu0 0.0
        %6434 = vmatpush1.xpose.msra.mxu0 0.0
        %6435 = vmatprep.subr.mxu0 0.0
        %6436 = vmatpush1.xpose.msra.mxu0 0.0
        %6437 = vmatprep.subr.mxu0 0.0
        %6438 = vmatpush1.xpose.msra.mxu0 0.0
        %6439 = vmatprep.subr.mxu0 0.0
        %6440 = vmatpush1.xpose.msra.mxu0 0.0
        %6441 = vmatprep.subr.mxu0 0.0
        %6442 = vmatpush1.xpose.msra.mxu0 0.0
        %6443 = vmatprep.subr.mxu0 0.0
        %6444 = vmatpush1.xpose.msra.mxu0 0.0
        %6445 = vmatprep.subr.mxu0 0.0
        %6446 = vmatpush1.xpose.msra.mxu0 0.0
        %6447 = vmatprep.subr.mxu0 0.0
        %6448 = vmatpush1.xpose.msra.mxu0 0.0
        %6449 = vmatprep.subr.mxu0 0.0
        %6450 = vmatpush1.xpose.msra.mxu0 0.0
        %6451 = vmatprep.subr.mxu0 0.0
        %6452 = vmatpush1.xpose.msra.mxu0 0.0
        %6453 = vmatprep.subr.mxu0 0.0
        %6454 = vmatpush1.xpose.msra.mxu0 0.0
        %6455 = vmatprep.subr.mxu0 0.0
        %6456 = vmatpush1.xpose.msra.mxu0 0.0
        %6457 = vmatprep.subr.mxu0 0.0
        %6458 = vmatpush1.xpose.msra.mxu0 0.0
        %6459 = vmatprep.subr.mxu0 0.0
        %6460 = vmatpush1.xpose.msra.mxu0 0.0
        %6461 = vmatprep.subr.mxu0 0.0
        %6462 = vmatpush1.xpose.msra.mxu0 0.0
        %6463 = vmatprep.subr.mxu0 0.0
        %6464 = vmatpush1.xpose.msra.mxu0 0.0
        %6465 = vmatprep.subr.mxu0 0.0
        %6466 = vmatpush1.xpose.msra.mxu0 0.0
        %6467 = vmatprep.subr.mxu0 0.0
        %6468 = vmatpush1.xpose.msra.mxu0 0.0
        %6469 = vmatprep.subr.mxu0 0.0
        %6470 = vmatpush1.xpose.msra.mxu0 0.0
        %6471 = vmatprep.subr.mxu0 0.0
        %6472 = vmatpush1.xpose.msra.mxu0 0.0
        %6473 = vmatprep.subr.mxu0 0.0
        %6474 = vmatpush1.xpose.msra.mxu0 0.0
        %6475 = vmatprep.subr.mxu0 0.0
        %6476 = vmatpush1.xpose.msra.mxu0 0.0
        %6477 = vmatprep.subr.mxu0 0.0
        %6478 = vmatpush1.xpose.msra.mxu0 0.0
        %6479 = vmatprep.subr.mxu0 0.0
        %6480 = vmatpush1.xpose.msra.mxu0 0.0
        %6481 = vmatprep.subr.mxu0 0.0
        %6482 = vmatpush1.xpose.msra.mxu0 0.0
        %6483 = vmatprep.subr.mxu0 0.0
        %6484 = vmatpush1.xpose.msra.mxu0 0.0
        %6485 = vmatprep.mubr.f32.mxu0 %v1402
        %6486 = vmatmul.mubr.f32.gmra.mrb[0].mxu0 %v1394
        %v6487 = vpop.f32.mrb[0].mxu0
        %v6488 = vadd.f32 %v6418, %v6487
        %v6489 = vpop.f32.mrb[0].mxu0
        %6490 = vdwg.mxu0
        %6491 = vmatprep.subr.mxu0 %v424
        %6492 = vmatpush1.xpose.msra.mxu0 %v423
        %6493 = vmatprep.subr.mxu0 %v680
        %6494 = vmatpush1.xpose.msra.mxu0 %v679
        %6495 = vmatprep.subr.mxu0 0.0
        %6496 = vmatpush1.xpose.msra.mxu0 0.0
        %6497 = vmatprep.subr.mxu0 0.0
        %6498 = vmatpush1.xpose.msra.mxu0 0.0
        %6499 = vmatprep.subr.mxu0 0.0
        %6500 = vmatpush1.xpose.msra.mxu0 0.0
        %6501 = vmatprep.subr.mxu0 0.0
        %6502 = vmatpush1.xpose.msra.mxu0 0.0
        %6503 = vmatprep.subr.mxu0 0.0
        %6504 = vmatpush1.xpose.msra.mxu0 0.0
        %6505 = vmatprep.subr.mxu0 0.0
        %6506 = vmatpush1.xpose.msra.mxu0 0.0
        %6507 = vmatprep.subr.mxu0 0.0
        %6508 = vmatpush1.xpose.msra.mxu0 0.0
        %6509 = vmatprep.subr.mxu0 0.0
        %6510 = vmatpush1.xpose.msra.mxu0 0.0
        %6511 = vmatprep.subr.mxu0 0.0
        %6512 = vmatpush1.xpose.msra.mxu0 0.0
        %6513 = vmatprep.subr.mxu0 0.0
        %6514 = vmatpush1.xpose.msra.mxu0 0.0
        %6515 = vmatprep.subr.mxu0 0.0
        %6516 = vmatpush1.xpose.msra.mxu0 0.0
        %6517 = vmatprep.subr.mxu0 0.0
        %6518 = vmatpush1.xpose.msra.mxu0 0.0
        %6519 = vmatprep.subr.mxu0 0.0
        %6520 = vmatpush1.xpose.msra.mxu0 0.0
        %6521 = vmatprep.subr.mxu0 0.0
        %6522 = vmatpush1.xpose.msra.mxu0 0.0
        %6523 = vmatprep.subr.mxu0 0.0
        %6524 = vmatpush1.xpose.msra.mxu0 0.0
        %6525 = vmatprep.subr.mxu0 0.0
        %6526 = vmatpush1.xpose.msra.mxu0 0.0
        %6527 = vmatprep.subr.mxu0 0.0
        %6528 = vmatpush1.xpose.msra.mxu0 0.0
        %6529 = vmatprep.subr.mxu0 0.0
        %6530 = vmatpush1.xpose.msra.mxu0 0.0
        %6531 = vmatprep.subr.mxu0 0.0
        %6532 = vmatpush1.xpose.msra.mxu0 0.0
        %6533 = vmatprep.subr.mxu0 0.0
        %6534 = vmatpush1.xpose.msra.mxu0 0.0
        %6535 = vmatprep.subr.mxu0 0.0
        %6536 = vmatpush1.xpose.msra.mxu0 0.0
        %6537 = vmatprep.subr.mxu0 0.0
        %6538 = vmatpush1.xpose.msra.mxu0 0.0
        %6539 = vmatprep.subr.mxu0 0.0
        %6540 = vmatpush1.xpose.msra.mxu0 0.0
        %6541 = vmatprep.subr.mxu0 0.0
        %6542 = vmatpush1.xpose.msra.mxu0 0.0
        %6543 = vmatprep.subr.mxu0 0.0
        %6544 = vmatpush1.xpose.msra.mxu0 0.0
        %6545 = vmatprep.subr.mxu0 0.0
        %6546 = vmatpush1.xpose.msra.mxu0 0.0
        %6547 = vmatprep.subr.mxu0 0.0
        %6548 = vmatpush1.xpose.msra.mxu0 0.0
        %6549 = vmatprep.subr.mxu0 0.0
        %6550 = vmatpush1.xpose.msra.mxu0 0.0
        %6551 = vmatprep.subr.mxu0 0.0
        %6552 = vmatpush1.xpose.msra.mxu0 0.0
        %6553 = vmatprep.subr.mxu0 0.0
        %6554 = vmatpush1.xpose.msra.mxu0 0.0
        %6555 = vmatprep.mubr.f32.mxu0 %v1403
        %6556 = vmatmul.mubr.f32.gmra.mrb[0].mxu0 %v1401
        %v6557 = vpop.f32.mrb[0].mxu0
        %v6558 = vadd.f32 %v6488, %v6557
        %v6559 = vpop.f32.mrb[0].mxu0
        %6560 = vdwg.mxu0
        %6561 = vmatprep.subr.mxu0 %v426
        %6562 = vmatpush1.xpose.msra.mxu0 %v425
        %6563 = vmatprep.subr.mxu0 %v682
        %6564 = vmatpush1.xpose.msra.mxu0 %v681
        %6565 = vmatprep.subr.mxu0 0.0
        %6566 = vmatpush1.xpose.msra.mxu0 0.0
        %6567 = vmatprep.subr.mxu0 0.0
        %6568 = vmatpush1.xpose.msra.mxu0 0.0
        %6569 = vmatprep.subr.mxu0 0.0
        %6570 = vmatpush1.xpose.msra.mxu0 0.0
        %6571 = vmatprep.subr.mxu0 0.0
        %6572 = vmatpush1.xpose.msra.mxu0 0.0
        %6573 = vmatprep.subr.mxu0 0.0
        %6574 = vmatpush1.xpose.msra.mxu0 0.0
        %6575 = vmatprep.subr.mxu0 0.0
        %6576 = vmatpush1.xpose.msra.mxu0 0.0
        %6577 = vmatprep.subr.mxu0 0.0
        %6578 = vmatpush1.xpose.msra.mxu0 0.0
        %6579 = vmatprep.subr.mxu0 0.0
        %6580 = vmatpush1.xpose.msra.mxu0 0.0
        %6581 = vmatprep.subr.mxu0 0.0
        %6582 = vmatpush1.xpose.msra.mxu0 0.0
        %6583 = vmatprep.subr.mxu0 0.0
        %6584 = vmatpush1.xpose.msra.mxu0 0.0
        %6585 = vmatprep.subr.mxu0 0.0
        %6586 = vmatpush1.xpose.msra.mxu0 0.0
        %6587 = vmatprep.subr.mxu0 0.0
        %6588 = vmatpush1.xpose.msra.mxu0 0.0
        %6589 = vmatprep.subr.mxu0 0.0
        %6590 = vmatpush1.xpose.msra.mxu0 0.0
        %6591 = vmatprep.subr.mxu0 0.0
        %6592 = vmatpush1.xpose.msra.mxu0 0.0
        %6593 = vmatprep.subr.mxu0 0.0
        %6594 = vmatpush1.xpose.msra.mxu0 0.0
        %6595 = vmatprep.subr.mxu0 0.0
        %6596 = vmatpush1.xpose.msra.mxu0 0.0
        %6597 = vmatprep.subr.mxu0 0.0
        %6598 = vmatpush1.xpose.msra.mxu0 0.0
        %6599 = vmatprep.subr.mxu0 0.0
        %6600 = vmatpush1.xpose.msra.mxu0 0.0
        %6601 = vmatprep.subr.mxu0 0.0
        %6602 = vmatpush1.xpose.msra.mxu0 0.0
        %6603 = vmatprep.subr.mxu0 0.0
        %6604 = vmatpush1.xpose.msra.mxu0 0.0
        %6605 = vmatprep.subr.mxu0 0.0
        %6606 = vmatpush1.xpose.msra.mxu0 0.0
        %6607 = vmatprep.subr.mxu0 0.0
        %6608 = vmatpush1.xpose.msra.mxu0 0.0
        %6609 = vmatprep.subr.mxu0 0.0
        %6610 = vmatpush1.xpose.msra.mxu0 0.0
        %6611 = vmatprep.subr.mxu0 0.0
        %6612 = vmatpush1.xpose.msra.mxu0 0.0
        %6613 = vmatprep.subr.mxu0 0.0
        %6614 = vmatpush1.xpose.msra.mxu0 0.0
        %6615 = vmatprep.subr.mxu0 0.0
        %6616 = vmatpush1.xpose.msra.mxu0 0.0
        %6617 = vmatprep.subr.mxu0 0.0
        %6618 = vmatpush1.xpose.msra.mxu0 0.0
        %6619 = vmatprep.subr.mxu0 0.0
        %6620 = vmatpush1.xpose.msra.mxu0 0.0
        %6621 = vmatprep.subr.mxu0 0.0
        %6622 = vmatpush1.xpose.msra.mxu0 0.0
        %6623 = vmatprep.subr.mxu0 0.0
        %6624 = vmatpush1.xpose.msra.mxu0 0.0
        %6625 = vmatprep.mubr.f32.mxu0 %v1419
        %6626 = vmatmul.mubr.f32.gmra.mrb[0].mxu0 %v1411
        %v6627 = vpop.f32.mrb[0].mxu0
        %v6628 = vadd.f32 %v6558, %v6627
        %v6629 = vpop.f32.mrb[0].mxu0
        %6630 = vdwg.mxu0
        %6631 = vmatprep.subr.mxu0 %v428
        %6632 = vmatpush1.xpose.msra.mxu0 %v427
        %6633 = vmatprep.subr.mxu0 %v684
        %6634 = vmatpush1.xpose.msra.mxu0 %v683
        %6635 = vmatprep.subr.mxu0 0.0
        %6636 = vmatpush1.xpose.msra.mxu0 0.0
        %6637 = vmatprep.subr.mxu0 0.0
        %6638 = vmatpush1.xpose.msra.mxu0 0.0
        %6639 = vmatprep.subr.mxu0 0.0
        %6640 = vmatpush1.xpose.msra.mxu0 0.0
        %6641 = vmatprep.subr.mxu0 0.0
        %6642 = vmatpush1.xpose.msra.mxu0 0.0
        %6643 = vmatprep.subr.mxu0 0.0
        %6644 = vmatpush1.xpose.msra.mxu0 0.0
        %6645 = vmatprep.subr.mxu0 0.0
        %6646 = vmatpush1.xpose.msra.mxu0 0.0
        %6647 = vmatprep.subr.mxu0 0.0
        %6648 = vmatpush1.xpose.msra.mxu0 0.0
        %6649 = vmatprep.subr.mxu0 0.0
        %6650 = vmatpush1.xpose.msra.mxu0 0.0
        %6651 = vmatprep.subr.mxu0 0.0
        %6652 = vmatpush1.xpose.msra.mxu0 0.0
        %6653 = vmatprep.subr.mxu0 0.0
        %6654 = vmatpush1.xpose.msra.mxu0 0.0
        %6655 = vmatprep.subr.mxu0 0.0
        %6656 = vmatpush1.xpose.msra.mxu0 0.0
        %6657 = vmatprep.subr.mxu0 0.0
        %6658 = vmatpush1.xpose.msra.mxu0 0.0
        %6659 = vmatprep.subr.mxu0 0.0
        %6660 = vmatpush1.xpose.msra.mxu0 0.0
        %6661 = vmatprep.subr.mxu0 0.0
        %6662 = vmatpush1.xpose.msra.mxu0 0.0
        %6663 = vmatprep.subr.mxu0 0.0
        %6664 = vmatpush1.xpose.msra.mxu0 0.0
        %6665 = vmatprep.subr.mxu0 0.0
        %6666 = vmatpush1.xpose.msra.mxu0 0.0
        %6667 = vmatprep.subr.mxu0 0.0
        %6668 = vmatpush1.xpose.msra.mxu0 0.0
        %6669 = vmatprep.subr.mxu0 0.0
        %6670 = vmatpush1.xpose.msra.mxu0 0.0
        %6671 = vmatprep.subr.mxu0 0.0
        %6672 = vmatpush1.xpose.msra.mxu0 0.0
        %6673 = vmatprep.subr.mxu0 0.0
        %6674 = vmatpush1.xpose.msra.mxu0 0.0
        %6675 = vmatprep.subr.mxu0 0.0
        %6676 = vmatpush1.xpose.msra.mxu0 0.0
        %6677 = vmatprep.subr.mxu0 0.0
        %6678 = vmatpush1.xpose.msra.mxu0 0.0
        %6679 = vmatprep.subr.mxu0 0.0
        %6680 = vmatpush1.xpose.msra.mxu0 0.0
        %6681 = vmatprep.subr.mxu0 0.0
        %6682 = vmatpush1.xpose.msra.mxu0 0.0
        %6683 = vmatprep.subr.mxu0 0.0
        %6684 = vmatpush1.xpose.msra.mxu0 0.0
        %6685 = vmatprep.subr.mxu0 0.0
        %6686 = vmatpush1.xpose.msra.mxu0 0.0
        %6687 = vmatprep.subr.mxu0 0.0
        %6688 = vmatpush1.xpose.msra.mxu0 0.0
        %6689 = vmatprep.subr.mxu0 0.0
        %6690 = vmatpush1.xpose.msra.mxu0 0.0
        %6691 = vmatprep.subr.mxu0 0.0
        %6692 = vmatpush1.xpose.msra.mxu0 0.0
        %6693 = vmatprep.subr.mxu0 0.0
        %6694 = vmatpush1.xpose.msra.mxu0 0.0
        %6695 = vmatprep.mubr.f32.mxu0 %v1420
        %6696 = vmatmul.mubr.f32.gmra.mrb[0].mxu0 %v1418
        %v6697 = vpop.f32.mrb[0].mxu0
        %v6698 = vadd.f32 %v6628, %v6697
        %v6699 = vpop.f32.mrb[0].mxu0
        %6700 = vdwg.mxu0
        %6701 = vmatprep.subr.mxu0 %v430
        %6702 = vmatpush1.xpose.msra.mxu0 %v429
        %6703 = vmatprep.subr.mxu0 %v686
        %6704 = vmatpush1.xpose.msra.mxu0 %v685
        %6705 = vmatprep.subr.mxu0 0.0
        %6706 = vmatpush1.xpose.msra.mxu0 0.0
        %6707 = vmatprep.subr.mxu0 0.0
        %6708 = vmatpush1.xpose.msra.mxu0 0.0
        %6709 = vmatprep.subr.mxu0 0.0
        %6710 = vmatpush1.xpose.msra.mxu0 0.0
        %6711 = vmatprep.subr.mxu0 0.0
        %6712 = vmatpush1.xpose.msra.mxu0 0.0
        %6713 = vmatprep.subr.mxu0 0.0
        %6714 = vmatpush1.xpose.msra.mxu0 0.0
        %6715 = vmatprep.subr.mxu0 0.0
        %6716 = vmatpush1.xpose.msra.mxu0 0.0
        %6717 = vmatprep.subr.mxu0 0.0
        %6718 = vmatpush1.xpose.msra.mxu0 0.0
        %6719 = vmatprep.subr.mxu0 0.0
        %6720 = vmatpush1.xpose.msra.mxu0 0.0
        %6721 = vmatprep.subr.mxu0 0.0
        %6722 = vmatpush1.xpose.msra.mxu0 0.0
        %6723 = vmatprep.subr.mxu0 0.0
        %6724 = vmatpush1.xpose.msra.mxu0 0.0
        %6725 = vmatprep.subr.mxu0 0.0
        %6726 = vmatpush1.xpose.msra.mxu0 0.0
        %6727 = vmatprep.subr.mxu0 0.0
        %6728 = vmatpush1.xpose.msra.mxu0 0.0
        %6729 = vmatprep.subr.mxu0 0.0
        %6730 = vmatpush1.xpose.msra.mxu0 0.0
        %6731 = vmatprep.subr.mxu0 0.0
        %6732 = vmatpush1.xpose.msra.mxu0 0.0
        %6733 = vmatprep.subr.mxu0 0.0
        %6734 = vmatpush1.xpose.msra.mxu0 0.0
        %6735 = vmatprep.subr.mxu0 0.0
        %6736 = vmatpush1.xpose.msra.mxu0 0.0
        %6737 = vmatprep.subr.mxu0 0.0
        %6738 = vmatpush1.xpose.msra.mxu0 0.0
        %6739 = vmatprep.subr.mxu0 0.0
        %6740 = vmatpush1.xpose.msra.mxu0 0.0
        %6741 = vmatprep.subr.mxu0 0.0
        %6742 = vmatpush1.xpose.msra.mxu0 0.0
        %6743 = vmatprep.subr.mxu0 0.0
        %6744 = vmatpush1.xpose.msra.mxu0 0.0
        %6745 = vmatprep.subr.mxu0 0.0
        %6746 = vmatpush1.xpose.msra.mxu0 0.0
        %6747 = vmatprep.subr.mxu0 0.0
        %6748 = vmatpush1.xpose.msra.mxu0 0.0
        %6749 = vmatprep.subr.mxu0 0.0
        %6750 = vmatpush1.xpose.msra.mxu0 0.0
        %6751 = vmatprep.subr.mxu0 0.0
        %6752 = vmatpush1.xpose.msra.mxu0 0.0
        %6753 = vmatprep.subr.mxu0 0.0
        %6754 = vmatpush1.xpose.msra.mxu0 0.0
        %6755 = vmatprep.subr.mxu0 0.0
        %6756 = vmatpush1.xpose.msra.mxu0 0.0
        %6757 = vmatprep.subr.mxu0 0.0
        %6758 = vmatpush1.xpose.msra.mxu0 0.0
        %6759 = vmatprep.subr.mxu0 0.0
        %6760 = vmatpush1.xpose.msra.mxu0 0.0
        %6761 = vmatprep.subr.mxu0 0.0
        %6762 = vmatpush1.xpose.msra.mxu0 0.0
        %6763 = vmatprep.subr.mxu0 0.0
        %6764 = vmatpush1.xpose.msra.mxu0 0.0
        %6765 = vmatprep.mubr.f32.mxu0 %v1436
        %6766 = vmatmul.mubr.f32.gmra.mrb[0].mxu0 %v1428
        %v6767 = vpop.f32.mrb[0].mxu0
        %v6768 = vadd.f32 %v6698, %v6767
        %v6769 = vpop.f32.mrb[0].mxu0
        %6770 = vdwg.mxu0
        %6771 = vmatprep.subr.mxu0 %v432
        %6772 = vmatpush1.xpose.msra.mxu0 %v431
        %6773 = vmatprep.subr.mxu0 %v688
        %6774 = vmatpush1.xpose.msra.mxu0 %v687
        %6775 = vmatprep.subr.mxu0 0.0
        %6776 = vmatpush1.xpose.msra.mxu0 0.0
        %6777 = vmatprep.subr.mxu0 0.0
        %6778 = vmatpush1.xpose.msra.mxu0 0.0
        %6779 = vmatprep.subr.mxu0 0.0
        %6780 = vmatpush1.xpose.msra.mxu0 0.0
        %6781 = vmatprep.subr.mxu0 0.0
        %6782 = vmatpush1.xpose.msra.mxu0 0.0
        %6783 = vmatprep.subr.mxu0 0.0
        %6784 = vmatpush1.xpose.msra.mxu0 0.0
        %6785 = vmatprep.subr.mxu0 0.0
        %6786 = vmatpush1.xpose.msra.mxu0 0.0
        %6787 = vmatprep.subr.mxu0 0.0
        %6788 = vmatpush1.xpose.msra.mxu0 0.0
        %6789 = vmatprep.subr.mxu0 0.0
        %6790 = vmatpush1.xpose.msra.mxu0 0.0
        %6791 = vmatprep.subr.mxu0 0.0
        %6792 = vmatpush1.xpose.msra.mxu0 0.0
        %6793 = vmatprep.subr.mxu0 0.0
        %6794 = vmatpush1.xpose.msra.mxu0 0.0
        %6795 = vmatprep.subr.mxu0 0.0
        %6796 = vmatpush1.xpose.msra.mxu0 0.0
        %6797 = vmatprep.subr.mxu0 0.0
        %6798 = vmatpush1.xpose.msra.mxu0 0.0
        %6799 = vmatprep.subr.mxu0 0.0
        %6800 = vmatpush1.xpose.msra.mxu0 0.0
        %6801 = vmatprep.subr.mxu0 0.0
        %6802 = vmatpush1.xpose.msra.mxu0 0.0
        %6803 = vmatprep.subr.mxu0 0.0
        %6804 = vmatpush1.xpose.msra.mxu0 0.0
        %6805 = vmatprep.subr.mxu0 0.0
        %6806 = vmatpush1.xpose.msra.mxu0 0.0
        %6807 = vmatprep.subr.mxu0 0.0
        %6808 = vmatpush1.xpose.msra.mxu0 0.0
        %6809 = vmatprep.subr.mxu0 0.0
        %6810 = vmatpush1.xpose.msra.mxu0 0.0
        %6811 = vmatprep.subr.mxu0 0.0
        %6812 = vmatpush1.xpose.msra.mxu0 0.0
        %6813 = vmatprep.subr.mxu0 0.0
        %6814 = vmatpush1.xpose.msra.mxu0 0.0
        %6815 = vmatprep.subr.mxu0 0.0
        %6816 = vmatpush1.xpose.msra.mxu0 0.0
        %6817 = vmatprep.subr.mxu0 0.0
        %6818 = vmatpush1.xpose.msra.mxu0 0.0
        %6819 = vmatprep.subr.mxu0 0.0
        %6820 = vmatpush1.xpose.msra.mxu0 0.0
        %6821 = vmatprep.subr.mxu0 0.0
        %6822 = vmatpush1.xpose.msra.mxu0 0.0
        %6823 = vmatprep.subr.mxu0 0.0
        %6824 = vmatpush1.xpose.msra.mxu0 0.0
        %6825 = vmatprep.subr.mxu0 0.0
        %6826 = vmatpush1.xpose.msra.mxu0 0.0
        %6827 = vmatprep.subr.mxu0 0.0
        %6828 = vmatpush1.xpose.msra.mxu0 0.0
        %6829 = vmatprep.subr.mxu0 0.0
        %6830 = vmatpush1.xpose.msra.mxu0 0.0
        %6831 = vmatprep.subr.mxu0 0.0
        %6832 = vmatpush1.xpose.msra.mxu0 0.0
        %6833 = vmatprep.subr.mxu0 0.0
        %6834 = vmatpush1.xpose.msra.mxu0 0.0
        %6835 = vmatprep.mubr.f32.mxu0 %v1437
        %6836 = vmatmul.mubr.f32.gmra.mrb[0].mxu0 %v1435
        %v6837 = vpop.f32.mrb[0].mxu0
        %v6838 = vadd.f32 %v6768, %v6837
        %v6839 = vpop.f32.mrb[0].mxu0
        %6840 = vdwg.mxu0
        %6841 = vmatprep.subr.mxu0 %v434
        %6842 = vmatpush1.xpose.msra.mxu0 %v433
        %6843 = vmatprep.subr.mxu0 %v690
        %6844 = vmatpush1.xpose.msra.mxu0 %v689
        %6845 = vmatprep.subr.mxu0 0.0
        %6846 = vmatpush1.xpose.msra.mxu0 0.0
        %6847 = vmatprep.subr.mxu0 0.0
        %6848 = vmatpush1.xpose.msra.mxu0 0.0
        %6849 = vmatprep.subr.mxu0 0.0
        %6850 = vmatpush1.xpose.msra.mxu0 0.0
        %6851 = vmatprep.subr.mxu0 0.0
        %6852 = vmatpush1.xpose.msra.mxu0 0.0
        %6853 = vmatprep.subr.mxu0 0.0
        %6854 = vmatpush1.xpose.msra.mxu0 0.0
        %6855 = vmatprep.subr.mxu0 0.0
        %6856 = vmatpush1.xpose.msra.mxu0 0.0
        %6857 = vmatprep.subr.mxu0 0.0
        %6858 = vmatpush1.xpose.msra.mxu0 0.0
        %6859 = vmatprep.subr.mxu0 0.0
        %6860 = vmatpush1.xpose.msra.mxu0 0.0
        %6861 = vmatprep.subr.mxu0 0.0
        %6862 = vmatpush1.xpose.msra.mxu0 0.0
        %6863 = vmatprep.subr.mxu0 0.0
        %6864 = vmatpush1.xpose.msra.mxu0 0.0
        %6865 = vmatprep.subr.mxu0 0.0
        %6866 = vmatpush1.xpose.msra.mxu0 0.0
        %6867 = vmatprep.subr.mxu0 0.0
        %6868 = vmatpush1.xpose.msra.mxu0 0.0
        %6869 = vmatprep.subr.mxu0 0.0
        %6870 = vmatpush1.xpose.msra.mxu0 0.0
        %6871 = vmatprep.subr.mxu0 0.0
        %6872 = vmatpush1.xpose.msra.mxu0 0.0
        %6873 = vmatprep.subr.mxu0 0.0
        %6874 = vmatpush1.xpose.msra.mxu0 0.0
        %6875 = vmatprep.subr.mxu0 0.0
        %6876 = vmatpush1.xpose.msra.mxu0 0.0
        %6877 = vmatprep.subr.mxu0 0.0
        %6878 = vmatpush1.xpose.msra.mxu0 0.0
        %6879 = vmatprep.subr.mxu0 0.0
        %6880 = vmatpush1.xpose.msra.mxu0 0.0
        %6881 = vmatprep.subr.mxu0 0.0
        %6882 = vmatpush1.xpose.msra.mxu0 0.0
        %6883 = vmatprep.subr.mxu0 0.0
        %6884 = vmatpush1.xpose.msra.mxu0 0.0
        %6885 = vmatprep.subr.mxu0 0.0
        %6886 = vmatpush1.xpose.msra.mxu0 0.0
        %6887 = vmatprep.subr.mxu0 0.0
        %6888 = vmatpush1.xpose.msra.mxu0 0.0
        %6889 = vmatprep.subr.mxu0 0.0
        %6890 = vmatpush1.xpose.msra.mxu0 0.0
        %6891 = vmatprep.subr.mxu0 0.0
        %6892 = vmatpush1.xpose.msra.mxu0 0.0
        %6893 = vmatprep.subr.mxu0 0.0
        %6894 = vmatpush1.xpose.msra.mxu0 0.0
        %6895 = vmatprep.subr.mxu0 0.0
        %6896 = vmatpush1.xpose.msra.mxu0 0.0
        %6897 = vmatprep.subr.mxu0 0.0
        %6898 = vmatpush1.xpose.msra.mxu0 0.0
        %6899 = vmatprep.subr.mxu0 0.0
        %6900 = vmatpush1.xpose.msra.mxu0 0.0
        %6901 = vmatprep.subr.mxu0 0.0
        %6902 = vmatpush1.xpose.msra.mxu0 0.0
        %6903 = vmatprep.subr.mxu0 0.0
        %6904 = vmatpush1.xpose.msra.mxu0 0.0
        %6905 = vmatprep.mubr.f32.mxu0 %v1453
        %6906 = vmatmul.mubr.f32.gmra.mrb[0].mxu0 %v1445
        %v6907 = vpop.f32.mrb[0].mxu0
        %v6908 = vadd.f32 %v6838, %v6907
        %v6909 = vpop.f32.mrb[0].mxu0
        %6910 = vdwg.mxu0
        %6911 = vmatprep.subr.mxu0 %v436
        %6912 = vmatpush1.xpose.msra.mxu0 %v435
        %6913 = vmatprep.subr.mxu0 %v692
        %6914 = vmatpush1.xpose.msra.mxu0 %v691
        %6915 = vmatprep.subr.mxu0 0.0
        %6916 = vmatpush1.xpose.msra.mxu0 0.0
        %6917 = vmatprep.subr.mxu0 0.0
        %6918 = vmatpush1.xpose.msra.mxu0 0.0
        %6919 = vmatprep.subr.mxu0 0.0
        %6920 = vmatpush1.xpose.msra.mxu0 0.0
        %6921 = vmatprep.subr.mxu0 0.0
        %6922 = vmatpush1.xpose.msra.mxu0 0.0
        %6923 = vmatprep.subr.mxu0 0.0
        %6924 = vmatpush1.xpose.msra.mxu0 0.0
        %6925 = vmatprep.subr.mxu0 0.0
        %6926 = vmatpush1.xpose.msra.mxu0 0.0
        %6927 = vmatprep.subr.mxu0 0.0
        %6928 = vmatpush1.xpose.msra.mxu0 0.0
        %6929 = vmatprep.subr.mxu0 0.0
        %6930 = vmatpush1.xpose.msra.mxu0 0.0
        %6931 = vmatprep.subr.mxu0 0.0
        %6932 = vmatpush1.xpose.msra.mxu0 0.0
        %6933 = vmatprep.subr.mxu0 0.0
        %6934 = vmatpush1.xpose.msra.mxu0 0.0
        %6935 = vmatprep.subr.mxu0 0.0
        %6936 = vmatpush1.xpose.msra.mxu0 0.0
        %6937 = vmatprep.subr.mxu0 0.0
        %6938 = vmatpush1.xpose.msra.mxu0 0.0
        %6939 = vmatprep.subr.mxu0 0.0
        %6940 = vmatpush1.xpose.msra.mxu0 0.0
        %6941 = vmatprep.subr.mxu0 0.0
        %6942 = vmatpush1.xpose.msra.mxu0 0.0
        %6943 = vmatprep.subr.mxu0 0.0
        %6944 = vmatpush1.xpose.msra.mxu0 0.0
        %6945 = vmatprep.subr.mxu0 0.0
        %6946 = vmatpush1.xpose.msra.mxu0 0.0
        %6947 = vmatprep.subr.mxu0 0.0
        %6948 = vmatpush1.xpose.msra.mxu0 0.0
        %6949 = vmatprep.subr.mxu0 0.0
        %6950 = vmatpush1.xpose.msra.mxu0 0.0
        %6951 = vmatprep.subr.mxu0 0.0
        %6952 = vmatpush1.xpose.msra.mxu0 0.0
        %6953 = vmatprep.subr.mxu0 0.0
        %6954 = vmatpush1.xpose.msra.mxu0 0.0
        %6955 = vmatprep.subr.mxu0 0.0
        %6956 = vmatpush1.xpose.msra.mxu0 0.0
        %6957 = vmatprep.subr.mxu0 0.0
        %6958 = vmatpush1.xpose.msra.mxu0 0.0
        %6959 = vmatprep.subr.mxu0 0.0
        %6960 = vmatpush1.xpose.msra.mxu0 0.0
        %6961 = vmatprep.subr.mxu0 0.0
        %6962 = vmatpush1.xpose.msra.mxu0 0.0
        %6963 = vmatprep.subr.mxu0 0.0
        %6964 = vmatpush1.xpose.msra.mxu0 0.0
        %6965 = vmatprep.subr.mxu0 0.0
        %6966 = vmatpush1.xpose.msra.mxu0 0.0
        %6967 = vmatprep.subr.mxu0 0.0
        %6968 = vmatpush1.xpose.msra.mxu0 0.0
        %6969 = vmatprep.subr.mxu0 0.0
        %6970 = vmatpush1.xpose.msra.mxu0 0.0
        %6971 = vmatprep.subr.mxu0 0.0
        %6972 = vmatpush1.xpose.msra.mxu0 0.0
        %6973 = vmatprep.subr.mxu0 0.0
        %6974 = vmatpush1.xpose.msra.mxu0 0.0
        %6975 = vmatprep.mubr.f32.mxu0 %v1454
        %6976 = vmatmul.mubr.f32.gmra.mrb[0].mxu0 %v1452
        %v6977 = vpop.f32.mrb[0].mxu0
        %v6978 = vadd.f32 %v6908, %v6977
        %v6979 = vpop.f32.mrb[0].mxu0
        %6980 = vdwg.mxu0
        %6981 = vmatprep.subr.mxu0 %v438
        %6982 = vmatpush1.xpose.msra.mxu0 %v437
        %6983 = vmatprep.subr.mxu0 %v694
        %6984 = vmatpush1.xpose.msra.mxu0 %v693
        %6985 = vmatprep.subr.mxu0 0.0
        %6986 = vmatpush1.xpose.msra.mxu0 0.0
        %6987 = vmatprep.subr.mxu0 0.0
        %6988 = vmatpush1.xpose.msra.mxu0 0.0
        %6989 = vmatprep.subr.mxu0 0.0
        %6990 = vmatpush1.xpose.msra.mxu0 0.0
        %6991 = vmatprep.subr.mxu0 0.0
        %6992 = vmatpush1.xpose.msra.mxu0 0.0
        %6993 = vmatprep.subr.mxu0 0.0
        %6994 = vmatpush1.xpose.msra.mxu0 0.0
        %6995 = vmatprep.subr.mxu0 0.0
        %6996 = vmatpush1.xpose.msra.mxu0 0.0
        %6997 = vmatprep.subr.mxu0 0.0
        %6998 = vmatpush1.xpose.msra.mxu0 0.0
        %6999 = vmatprep.subr.mxu0 0.0
        %7000 = vmatpush1.xpose.msra.mxu0 0.0
        %7001 = vmatprep.subr.mxu0 0.0
        %7002 = vmatpush1.xpose.msra.mxu0 0.0
        %7003 = vmatprep.subr.mxu0 0.0
        %7004 = vmatpush1.xpose.msra.mxu0 0.0
        %7005 = vmatprep.subr.mxu0 0.0
        %7006 = vmatpush1.xpose.msra.mxu0 0.0
        %7007 = vmatprep.subr.mxu0 0.0
        %7008 = vmatpush1.xpose.msra.mxu0 0.0
        %7009 = vmatprep.subr.mxu0 0.0
        %7010 = vmatpush1.xpose.msra.mxu0 0.0
        %7011 = vmatprep.subr.mxu0 0.0
        %7012 = vmatpush1.xpose.msra.mxu0 0.0
        %7013 = vmatprep.subr.mxu0 0.0
        %7014 = vmatpush1.xpose.msra.mxu0 0.0
        %7015 = vmatprep.subr.mxu0 0.0
        %7016 = vmatpush1.xpose.msra.mxu0 0.0
        %7017 = vmatprep.subr.mxu0 0.0
        %7018 = vmatpush1.xpose.msra.mxu0 0.0
        %7019 = vmatprep.subr.mxu0 0.0
        %7020 = vmatpush1.xpose.msra.mxu0 0.0
        %7021 = vmatprep.subr.mxu0 0.0
        %7022 = vmatpush1.xpose.msra.mxu0 0.0
        %7023 = vmatprep.subr.mxu0 0.0
        %7024 = vmatpush1.xpose.msra.mxu0 0.0
        %7025 = vmatprep.subr.mxu0 0.0
        %7026 = vmatpush1.xpose.msra.mxu0 0.0
        %7027 = vmatprep.subr.mxu0 0.0
        %7028 = vmatpush1.xpose.msra.mxu0 0.0
        %7029 = vmatprep.subr.mxu0 0.0
        %7030 = vmatpush1.xpose.msra.mxu0 0.0
        %7031 = vmatprep.subr.mxu0 0.0
        %7032 = vmatpush1.xpose.msra.mxu0 0.0
        %7033 = vmatprep.subr.mxu0 0.0
        %7034 = vmatpush1.xpose.msra.mxu0 0.0
        %7035 = vmatprep.subr.mxu0 0.0
        %7036 = vmatpush1.xpose.msra.mxu0 0.0
        %7037 = vmatprep.subr.mxu0 0.0
        %7038 = vmatpush1.xpose.msra.mxu0 0.0
        %7039 = vmatprep.subr.mxu0 0.0
        %7040 = vmatpush1.xpose.msra.mxu0 0.0
        %7041 = vmatprep.subr.mxu0 0.0
        %7042 = vmatpush1.xpose.msra.mxu0 0.0
        %7043 = vmatprep.subr.mxu0 0.0
        %7044 = vmatpush1.xpose.msra.mxu0 0.0
        %7045 = vmatprep.mubr.f32.mxu0 %v1470
        %7046 = vmatmul.mubr.f32.gmra.mrb[0].mxu0 %v1462
        %v7047 = vpop.f32.mrb[0].mxu0
        %v7048 = vadd.f32 %v6978, %v7047
        %v7049 = vpop.f32.mrb[0].mxu0
        %7050 = vdwg.mxu0
        %7051 = vmatprep.subr.mxu0 %v440
        %7052 = vmatpush1.xpose.msra.mxu0 %v439
        %7053 = vmatprep.subr.mxu0 %v696
        %7054 = vmatpush1.xpose.msra.mxu0 %v695
        %7055 = vmatprep.subr.mxu0 0.0
        %7056 = vmatpush1.xpose.msra.mxu0 0.0
        %7057 = vmatprep.subr.mxu0 0.0
        %7058 = vmatpush1.xpose.msra.mxu0 0.0
        %7059 = vmatprep.subr.mxu0 0.0
        %7060 = vmatpush1.xpose.msra.mxu0 0.0
        %7061 = vmatprep.subr.mxu0 0.0
        %7062 = vmatpush1.xpose.msra.mxu0 0.0
        %7063 = vmatprep.subr.mxu0 0.0
        %7064 = vmatpush1.xpose.msra.mxu0 0.0
        %7065 = vmatprep.subr.mxu0 0.0
        %7066 = vmatpush1.xpose.msra.mxu0 0.0
        %7067 = vmatprep.subr.mxu0 0.0
        %7068 = vmatpush1.xpose.msra.mxu0 0.0
        %7069 = vmatprep.subr.mxu0 0.0
        %7070 = vmatpush1.xpose.msra.mxu0 0.0
        %7071 = vmatprep.subr.mxu0 0.0
        %7072 = vmatpush1.xpose.msra.mxu0 0.0
        %7073 = vmatprep.subr.mxu0 0.0
        %7074 = vmatpush1.xpose.msra.mxu0 0.0
        %7075 = vmatprep.subr.mxu0 0.0
        %7076 = vmatpush1.xpose.msra.mxu0 0.0
        %7077 = vmatprep.subr.mxu0 0.0
        %7078 = vmatpush1.xpose.msra.mxu0 0.0
        %7079 = vmatprep.subr.mxu0 0.0
        %7080 = vmatpush1.xpose.msra.mxu0 0.0
        %7081 = vmatprep.subr.mxu0 0.0
        %7082 = vmatpush1.xpose.msra.mxu0 0.0
        %7083 = vmatprep.subr.mxu0 0.0
        %7084 = vmatpush1.xpose.msra.mxu0 0.0
        %7085 = vmatprep.subr.mxu0 0.0
        %7086 = vmatpush1.xpose.msra.mxu0 0.0
        %7087 = vmatprep.subr.mxu0 0.0
        %7088 = vmatpush1.xpose.msra.mxu0 0.0
        %7089 = vmatprep.subr.mxu0 0.0
        %7090 = vmatpush1.xpose.msra.mxu0 0.0
        %7091 = vmatprep.subr.mxu0 0.0
        %7092 = vmatpush1.xpose.msra.mxu0 0.0
        %7093 = vmatprep.subr.mxu0 0.0
        %7094 = vmatpush1.xpose.msra.mxu0 0.0
        %7095 = vmatprep.subr.mxu0 0.0
        %7096 = vmatpush1.xpose.msra.mxu0 0.0
        %7097 = vmatprep.subr.mxu0 0.0
        %7098 = vmatpush1.xpose.msra.mxu0 0.0
        %7099 = vmatprep.subr.mxu0 0.0
        %7100 = vmatpush1.xpose.msra.mxu0 0.0
        %7101 = vmatprep.subr.mxu0 0.0
        %7102 = vmatpush1.xpose.msra.mxu0 0.0
        %7103 = vmatprep.subr.mxu0 0.0
        %7104 = vmatpush1.xpose.msra.mxu0 0.0
        %7105 = vmatprep.subr.mxu0 0.0
        %7106 = vmatpush1.xpose.msra.mxu0 0.0
        %7107 = vmatprep.subr.mxu0 0.0
        %7108 = vmatpush1.xpose.msra.mxu0 0.0
        %7109 = vmatprep.subr.mxu0 0.0
        %7110 = vmatpush1.xpose.msra.mxu0 0.0
        %7111 = vmatprep.subr.mxu0 0.0
        %7112 = vmatpush1.xpose.msra.mxu0 0.0
        %7113 = vmatprep.subr.mxu0 0.0
        %7114 = vmatpush1.xpose.msra.mxu0 0.0
        %7115 = vmatprep.mubr.f32.mxu0 %v1471
        %7116 = vmatmul.mubr.f32.gmra.mrb[0].mxu0 %v1469
        %v7117 = vpop.f32.mrb[0].mxu0
        %v7118 = vadd.f32 %v7048, %v7117
        %v7119 = vpop.f32.mrb[0].mxu0
        %7120 = vdwg.mxu0
        %7121 = vmatprep.subr.mxu0 %v442
        %7122 = vmatpush1.xpose.msra.mxu0 %v441
        %7123 = vmatprep.subr.mxu0 %v698
        %7124 = vmatpush1.xpose.msra.mxu0 %v697
        %7125 = vmatprep.subr.mxu0 0.0
        %7126 = vmatpush1.xpose.msra.mxu0 0.0
        %7127 = vmatprep.subr.mxu0 0.0
        %7128 = vmatpush1.xpose.msra.mxu0 0.0
        %7129 = vmatprep.subr.mxu0 0.0
        %7130 = vmatpush1.xpose.msra.mxu0 0.0
        %7131 = vmatprep.subr.mxu0 0.0
        %7132 = vmatpush1.xpose.msra.mxu0 0.0
        %7133 = vmatprep.subr.mxu0 0.0
        %7134 = vmatpush1.xpose.msra.mxu0 0.0
        %7135 = vmatprep.subr.mxu0 0.0
        %7136 = vmatpush1.xpose.msra.mxu0 0.0
        %7137 = vmatprep.subr.mxu0 0.0
        %7138 = vmatpush1.xpose.msra.mxu0 0.0
        %7139 = vmatprep.subr.mxu0 0.0
        %7140 = vmatpush1.xpose.msra.mxu0 0.0
        %7141 = vmatprep.subr.mxu0 0.0
        %7142 = vmatpush1.xpose.msra.mxu0 0.0
        %7143 = vmatprep.subr.mxu0 0.0
        %7144 = vmatpush1.xpose.msra.mxu0 0.0
        %7145 = vmatprep.subr.mxu0 0.0
        %7146 = vmatpush1.xpose.msra.mxu0 0.0
        %7147 = vmatprep.subr.mxu0 0.0
        %7148 = vmatpush1.xpose.msra.mxu0 0.0
        %7149 = vmatprep.subr.mxu0 0.0
        %7150 = vmatpush1.xpose.msra.mxu0 0.0
        %7151 = vmatprep.subr.mxu0 0.0
        %7152 = vmatpush1.xpose.msra.mxu0 0.0
        %7153 = vmatprep.subr.mxu0 0.0
        %7154 = vmatpush1.xpose.msra.mxu0 0.0
        %7155 = vmatprep.subr.mxu0 0.0
        %7156 = vmatpush1.xpose.msra.mxu0 0.0
        %7157 = vmatprep.subr.mxu0 0.0
        %7158 = vmatpush1.xpose.msra.mxu0 0.0
        %7159 = vmatprep.subr.mxu0 0.0
        %7160 = vmatpush1.xpose.msra.mxu0 0.0
        %7161 = vmatprep.subr.mxu0 0.0
        %7162 = vmatpush1.xpose.msra.mxu0 0.0
        %7163 = vmatprep.subr.mxu0 0.0
        %7164 = vmatpush1.xpose.msra.mxu0 0.0
        %7165 = vmatprep.subr.mxu0 0.0
        %7166 = vmatpush1.xpose.msra.mxu0 0.0
        %7167 = vmatprep.subr.mxu0 0.0
        %7168 = vmatpush1.xpose.msra.mxu0 0.0
        %7169 = vmatprep.subr.mxu0 0.0
        %7170 = vmatpush1.xpose.msra.mxu0 0.0
        %7171 = vmatprep.subr.mxu0 0.0
        %7172 = vmatpush1.xpose.msra.mxu0 0.0
        %7173 = vmatprep.subr.mxu0 0.0
        %7174 = vmatpush1.xpose.msra.mxu0 0.0
        %7175 = vmatprep.subr.mxu0 0.0
        %7176 = vmatpush1.xpose.msra.mxu0 0.0
        %7177 = vmatprep.subr.mxu0 0.0
        %7178 = vmatpush1.xpose.msra.mxu0 0.0
        %7179 = vmatprep.subr.mxu0 0.0
        %7180 = vmatpush1.xpose.msra.mxu0 0.0
        %7181 = vmatprep.subr.mxu0 0.0
        %7182 = vmatpush1.xpose.msra.mxu0 0.0
        %7183 = vmatprep.subr.mxu0 0.0
        %7184 = vmatpush1.xpose.msra.mxu0 0.0
        %7185 = vmatprep.mubr.f32.mxu0 %v1487
        %7186 = vmatmul.mubr.f32.gmra.mrb[0].mxu0 %v1479
        %v7187 = vpop.f32.mrb[0].mxu0
        %v7188 = vadd.f32 %v7118, %v7187
        %v7189 = vpop.f32.mrb[0].mxu0
        %7190 = vdwg.mxu0
        %7191 = vmatprep.subr.mxu0 %v444
        %7192 = vmatpush1.xpose.msra.mxu0 %v443
        %7193 = vmatprep.subr.mxu0 %v700
        %7194 = vmatpush1.xpose.msra.mxu0 %v699
        %7195 = vmatprep.subr.mxu0 0.0
        %7196 = vmatpush1.xpose.msra.mxu0 0.0
        %7197 = vmatprep.subr.mxu0 0.0
        %7198 = vmatpush1.xpose.msra.mxu0 0.0
        %7199 = vmatprep.subr.mxu0 0.0
        %7200 = vmatpush1.xpose.msra.mxu0 0.0
        %7201 = vmatprep.subr.mxu0 0.0
        %7202 = vmatpush1.xpose.msra.mxu0 0.0
        %7203 = vmatprep.subr.mxu0 0.0
        %7204 = vmatpush1.xpose.msra.mxu0 0.0
        %7205 = vmatprep.subr.mxu0 0.0
        %7206 = vmatpush1.xpose.msra.mxu0 0.0
        %7207 = vmatprep.subr.mxu0 0.0
        %7208 = vmatpush1.xpose.msra.mxu0 0.0
        %7209 = vmatprep.subr.mxu0 0.0
        %7210 = vmatpush1.xpose.msra.mxu0 0.0
        %7211 = vmatprep.subr.mxu0 0.0
        %7212 = vmatpush1.xpose.msra.mxu0 0.0
        %7213 = vmatprep.subr.mxu0 0.0
        %7214 = vmatpush1.xpose.msra.mxu0 0.0
        %7215 = vmatprep.subr.mxu0 0.0
        %7216 = vmatpush1.xpose.msra.mxu0 0.0
        %7217 = vmatprep.subr.mxu0 0.0
        %7218 = vmatpush1.xpose.msra.mxu0 0.0
        %7219 = vmatprep.subr.mxu0 0.0
        %7220 = vmatpush1.xpose.msra.mxu0 0.0
        %7221 = vmatprep.subr.mxu0 0.0
        %7222 = vmatpush1.xpose.msra.mxu0 0.0
        %7223 = vmatprep.subr.mxu0 0.0
        %7224 = vmatpush1.xpose.msra.mxu0 0.0
        %7225 = vmatprep.subr.mxu0 0.0
        %7226 = vmatpush1.xpose.msra.mxu0 0.0
        %7227 = vmatprep.subr.mxu0 0.0
        %7228 = vmatpush1.xpose.msra.mxu0 0.0
        %7229 = vmatprep.subr.mxu0 0.0
        %7230 = vmatpush1.xpose.msra.mxu0 0.0
        %7231 = vmatprep.subr.mxu0 0.0
        %7232 = vmatpush1.xpose.msra.mxu0 0.0
        %7233 = vmatprep.subr.mxu0 0.0
        %7234 = vmatpush1.xpose.msra.mxu0 0.0
        %7235 = vmatprep.subr.mxu0 0.0
        %7236 = vmatpush1.xpose.msra.mxu0 0.0
        %7237 = vmatprep.subr.mxu0 0.0
        %7238 = vmatpush1.xpose.msra.mxu0 0.0
        %7239 = vmatprep.subr.mxu0 0.0
        %7240 = vmatpush1.xpose.msra.mxu0 0.0
        %7241 = vmatprep.subr.mxu0 0.0
        %7242 = vmatpush1.xpose.msra.mxu0 0.0
        %7243 = vmatprep.subr.mxu0 0.0
        %7244 = vmatpush1.xpose.msra.mxu0 0.0
        %7245 = vmatprep.subr.mxu0 0.0
        %7246 = vmatpush1.xpose.msra.mxu0 0.0
        %7247 = vmatprep.subr.mxu0 0.0
        %7248 = vmatpush1.xpose.msra.mxu0 0.0
        %7249 = vmatprep.subr.mxu0 0.0
        %7250 = vmatpush1.xpose.msra.mxu0 0.0
        %7251 = vmatprep.subr.mxu0 0.0
        %7252 = vmatpush1.xpose.msra.mxu0 0.0
        %7253 = vmatprep.subr.mxu0 0.0
        %7254 = vmatpush1.xpose.msra.mxu0 0.0
        %7255 = vmatprep.mubr.f32.mxu0 %v1488
        %7256 = vmatmul.mubr.f32.gmra.mrb[0].mxu0 %v1486
        %v7257 = vpop.f32.mrb[0].mxu0
        %v7258 = vadd.f32 %v7188, %v7257
        %v7259 = vpop.f32.mrb[0].mxu0
        %7260 = vdwg.mxu0
        %7261 = vmatprep.subr.mxu0 %v446
        %7262 = vmatpush1.xpose.msra.mxu0 %v445
        %7263 = vmatprep.subr.mxu0 %v702
        %7264 = vmatpush1.xpose.msra.mxu0 %v701
        %7265 = vmatprep.subr.mxu0 0.0
        %7266 = vmatpush1.xpose.msra.mxu0 0.0
        %7267 = vmatprep.subr.mxu0 0.0
        %7268 = vmatpush1.xpose.msra.mxu0 0.0
        %7269 = vmatprep.subr.mxu0 0.0
        %7270 = vmatpush1.xpose.msra.mxu0 0.0
        %7271 = vmatprep.subr.mxu0 0.0
        %7272 = vmatpush1.xpose.msra.mxu0 0.0
        %7273 = vmatprep.subr.mxu0 0.0
        %7274 = vmatpush1.xpose.msra.mxu0 0.0
        %7275 = vmatprep.subr.mxu0 0.0
        %7276 = vmatpush1.xpose.msra.mxu0 0.0
        %7277 = vmatprep.subr.mxu0 0.0
        %7278 = vmatpush1.xpose.msra.mxu0 0.0
        %7279 = vmatprep.subr.mxu0 0.0
        %7280 = vmatpush1.xpose.msra.mxu0 0.0
        %7281 = vmatprep.subr.mxu0 0.0
        %7282 = vmatpush1.xpose.msra.mxu0 0.0
        %7283 = vmatprep.subr.mxu0 0.0
        %7284 = vmatpush1.xpose.msra.mxu0 0.0
        %7285 = vmatprep.subr.mxu0 0.0
        %7286 = vmatpush1.xpose.msra.mxu0 0.0
        %7287 = vmatprep.subr.mxu0 0.0
        %7288 = vmatpush1.xpose.msra.mxu0 0.0
        %7289 = vmatprep.subr.mxu0 0.0
        %7290 = vmatpush1.xpose.msra.mxu0 0.0
        %7291 = vmatprep.subr.mxu0 0.0
        %7292 = vmatpush1.xpose.msra.mxu0 0.0
        %7293 = vmatprep.subr.mxu0 0.0
        %7294 = vmatpush1.xpose.msra.mxu0 0.0
        %7295 = vmatprep.subr.mxu0 0.0
        %7296 = vmatpush1.xpose.msra.mxu0 0.0
        %7297 = vmatprep.subr.mxu0 0.0
        %7298 = vmatpush1.xpose.msra.mxu0 0.0
        %7299 = vmatprep.subr.mxu0 0.0
        %7300 = vmatpush1.xpose.msra.mxu0 0.0
        %7301 = vmatprep.subr.mxu0 0.0
        %7302 = vmatpush1.xpose.msra.mxu0 0.0
        %7303 = vmatprep.subr.mxu0 0.0
        %7304 = vmatpush1.xpose.msra.mxu0 0.0
        %7305 = vmatprep.subr.mxu0 0.0
        %7306 = vmatpush1.xpose.msra.mxu0 0.0
        %7307 = vmatprep.subr.mxu0 0.0
        %7308 = vmatpush1.xpose.msra.mxu0 0.0
        %7309 = vmatprep.subr.mxu0 0.0
        %7310 = vmatpush1.xpose.msra.mxu0 0.0
        %7311 = vmatprep.subr.mxu0 0.0
        %7312 = vmatpush1.xpose.msra.mxu0 0.0
        %7313 = vmatprep.subr.mxu0 0.0
        %7314 = vmatpush1.xpose.msra.mxu0 0.0
        %7315 = vmatprep.subr.mxu0 0.0
        %7316 = vmatpush1.xpose.msra.mxu0 0.0
        %7317 = vmatprep.subr.mxu0 0.0
        %7318 = vmatpush1.xpose.msra.mxu0 0.0
        %7319 = vmatprep.subr.mxu0 0.0
        %7320 = vmatpush1.xpose.msra.mxu0 0.0
        %7321 = vmatprep.subr.mxu0 0.0
        %7322 = vmatpush1.xpose.msra.mxu0 0.0
        %7323 = vmatprep.subr.mxu0 0.0
        %7324 = vmatpush1.xpose.msra.mxu0 0.0
        %7325 = vmatprep.mubr.f32.mxu0 %v1504
        %7326 = vmatmul.mubr.f32.gmra.mrb[0].mxu0 %v1496
        %v7327 = vpop.f32.mrb[0].mxu0
        %v7328 = vadd.f32 %v7258, %v7327
        %v7329 = vpop.f32.mrb[0].mxu0
        %7330 = vdwg.mxu0
        %7331 = vmatprep.subr.mxu0 %v448
        %7332 = vmatpush1.xpose.msra.mxu0 %v447
        %7333 = vmatprep.subr.mxu0 %v704
        %7334 = vmatpush1.xpose.msra.mxu0 %v703
        %7335 = vmatprep.subr.mxu0 0.0
        %7336 = vmatpush1.xpose.msra.mxu0 0.0
        %7337 = vmatprep.subr.mxu0 0.0
        %7338 = vmatpush1.xpose.msra.mxu0 0.0
        %7339 = vmatprep.subr.mxu0 0.0
        %7340 = vmatpush1.xpose.msra.mxu0 0.0
        %7341 = vmatprep.subr.mxu0 0.0
        %7342 = vmatpush1.xpose.msra.mxu0 0.0
        %7343 = vmatprep.subr.mxu0 0.0
        %7344 = vmatpush1.xpose.msra.mxu0 0.0
        %7345 = vmatprep.subr.mxu0 0.0
        %7346 = vmatpush1.xpose.msra.mxu0 0.0
        %7347 = vmatprep.subr.mxu0 0.0
        %7348 = vmatpush1.xpose.msra.mxu0 0.0
        %7349 = vmatprep.subr.mxu0 0.0
        %7350 = vmatpush1.xpose.msra.mxu0 0.0
        %7351 = vmatprep.subr.mxu0 0.0
        %7352 = vmatpush1.xpose.msra.mxu0 0.0
        %7353 = vmatprep.subr.mxu0 0.0
        %7354 = vmatpush1.xpose.msra.mxu0 0.0
        %7355 = vmatprep.subr.mxu0 0.0
        %7356 = vmatpush1.xpose.msra.mxu0 0.0
        %7357 = vmatprep.subr.mxu0 0.0
        %7358 = vmatpush1.xpose.msra.mxu0 0.0
        %7359 = vmatprep.subr.mxu0 0.0
        %7360 = vmatpush1.xpose.msra.mxu0 0.0
        %7361 = vmatprep.subr.mxu0 0.0
        %7362 = vmatpush1.xpose.msra.mxu0 0.0
        %7363 = vmatprep.subr.mxu0 0.0
        %7364 = vmatpush1.xpose.msra.mxu0 0.0
        %7365 = vmatprep.subr.mxu0 0.0
        %7366 = vmatpush1.xpose.msra.mxu0 0.0
        %7367 = vmatprep.subr.mxu0 0.0
        %7368 = vmatpush1.xpose.msra.mxu0 0.0
        %7369 = vmatprep.subr.mxu0 0.0
        %7370 = vmatpush1.xpose.msra.mxu0 0.0
        %7371 = vmatprep.subr.mxu0 0.0
        %7372 = vmatpush1.xpose.msra.mxu0 0.0
        %7373 = vmatprep.subr.mxu0 0.0
        %7374 = vmatpush1.xpose.msra.mxu0 0.0
        %7375 = vmatprep.subr.mxu0 0.0
        %7376 = vmatpush1.xpose.msra.mxu0 0.0
        %7377 = vmatprep.subr.mxu0 0.0
        %7378 = vmatpush1.xpose.msra.mxu0 0.0
        %7379 = vmatprep.subr.mxu0 0.0
        %7380 = vmatpush1.xpose.msra.mxu0 0.0
        %7381 = vmatprep.subr.mxu0 0.0
        %7382 = vmatpush1.xpose.msra.mxu0 0.0
        %7383 = vmatprep.subr.mxu0 0.0
        %7384 = vmatpush1.xpose.msra.mxu0 0.0
        %7385 = vmatprep.subr.mxu0 0.0
        %7386 = vmatpush1.xpose.msra.mxu0 0.0
        %7387 = vmatprep.subr.mxu0 0.0
        %7388 = vmatpush1.xpose.msra.mxu0 0.0
        %7389 = vmatprep.subr.mxu0 0.0
        %7390 = vmatpush1.xpose.msra.mxu0 0.0
        %7391 = vmatprep.subr.mxu0 0.0
        %7392 = vmatpush1.xpose.msra.mxu0 0.0
        %7393 = vmatprep.subr.mxu0 0.0
        %7394 = vmatpush1.xpose.msra.mxu0 0.0
        %7395 = vmatprep.mubr.f32.mxu0 %v1505
        %7396 = vmatmul.mubr.f32.gmra.mrb[0].mxu0 %v1503
        %v7397 = vpop.f32.mrb[0].mxu0
        %v7398 = vadd.f32 %v7328, %v7397
        %v7399 = vpop.f32.mrb[0].mxu0
        %7400 = vdwg.mxu0
        %7401 = vmatprep.subr.mxu0 %v450
        %7402 = vmatpush1.xpose.msra.mxu0 %v449
        %7403 = vmatprep.subr.mxu0 %v706
        %7404 = vmatpush1.xpose.msra.mxu0 %v705
        %7405 = vmatprep.subr.mxu0 0.0
        %7406 = vmatpush1.xpose.msra.mxu0 0.0
        %7407 = vmatprep.subr.mxu0 0.0
        %7408 = vmatpush1.xpose.msra.mxu0 0.0
        %7409 = vmatprep.subr.mxu0 0.0
        %7410 = vmatpush1.xpose.msra.mxu0 0.0
        %7411 = vmatprep.subr.mxu0 0.0
        %7412 = vmatpush1.xpose.msra.mxu0 0.0
        %7413 = vmatprep.subr.mxu0 0.0
        %7414 = vmatpush1.xpose.msra.mxu0 0.0
        %7415 = vmatprep.subr.mxu0 0.0
        %7416 = vmatpush1.xpose.msra.mxu0 0.0
        %7417 = vmatprep.subr.mxu0 0.0
        %7418 = vmatpush1.xpose.msra.mxu0 0.0
        %7419 = vmatprep.subr.mxu0 0.0
        %7420 = vmatpush1.xpose.msra.mxu0 0.0
        %7421 = vmatprep.subr.mxu0 0.0
        %7422 = vmatpush1.xpose.msra.mxu0 0.0
        %7423 = vmatprep.subr.mxu0 0.0
        %7424 = vmatpush1.xpose.msra.mxu0 0.0
        %7425 = vmatprep.subr.mxu0 0.0
        %7426 = vmatpush1.xpose.msra.mxu0 0.0
        %7427 = vmatprep.subr.mxu0 0.0
        %7428 = vmatpush1.xpose.msra.mxu0 0.0
        %7429 = vmatprep.subr.mxu0 0.0
        %7430 = vmatpush1.xpose.msra.mxu0 0.0
        %7431 = vmatprep.subr.mxu0 0.0
        %7432 = vmatpush1.xpose.msra.mxu0 0.0
        %7433 = vmatprep.subr.mxu0 0.0
        %7434 = vmatpush1.xpose.msra.mxu0 0.0
        %7435 = vmatprep.subr.mxu0 0.0
        %7436 = vmatpush1.xpose.msra.mxu0 0.0
        %7437 = vmatprep.subr.mxu0 0.0
        %7438 = vmatpush1.xpose.msra.mxu0 0.0
        %7439 = vmatprep.subr.mxu0 0.0
        %7440 = vmatpush1.xpose.msra.mxu0 0.0
        %7441 = vmatprep.subr.mxu0 0.0
        %7442 = vmatpush1.xpose.msra.mxu0 0.0
        %7443 = vmatprep.subr.mxu0 0.0
        %7444 = vmatpush1.xpose.msra.mxu0 0.0
        %7445 = vmatprep.subr.mxu0 0.0
        %7446 = vmatpush1.xpose.msra.mxu0 0.0
        %7447 = vmatprep.subr.mxu0 0.0
        %7448 = vmatpush1.xpose.msra.mxu0 0.0
        %7449 = vmatprep.subr.mxu0 0.0
        %7450 = vmatpush1.xpose.msra.mxu0 0.0
        %7451 = vmatprep.subr.mxu0 0.0
        %7452 = vmatpush1.xpose.msra.mxu0 0.0
        %7453 = vmatprep.subr.mxu0 0.0
        %7454 = vmatpush1.xpose.msra.mxu0 0.0
        %7455 = vmatprep.subr.mxu0 0.0
        %7456 = vmatpush1.xpose.msra.mxu0 0.0
        %7457 = vmatprep.subr.mxu0 0.0
        %7458 = vmatpush1.xpose.msra.mxu0 0.0
        %7459 = vmatprep.subr.mxu0 0.0
        %7460 = vmatpush1.xpose.msra.mxu0 0.0
        %7461 = vmatprep.subr.mxu0 0.0
        %7462 = vmatpush1.xpose.msra.mxu0 0.0
        %7463 = vmatprep.subr.mxu0 0.0
        %7464 = vmatpush1.xpose.msra.mxu0 0.0
        %7465 = vmatprep.mubr.f32.mxu0 %v1521
        %7466 = vmatmul.mubr.f32.gmra.mrb[0].mxu0 %v1513
        %v7467 = vpop.f32.mrb[0].mxu0
        %v7468 = vadd.f32 %v7398, %v7467
        %v7469 = vpop.f32.mrb[0].mxu0
        %7470 = vdwg.mxu0
        %7471 = vmatprep.subr.mxu0 %v452
        %7472 = vmatpush1.xpose.msra.mxu0 %v451
        %7473 = vmatprep.subr.mxu0 %v708
        %7474 = vmatpush1.xpose.msra.mxu0 %v707
        %7475 = vmatprep.subr.mxu0 0.0
        %7476 = vmatpush1.xpose.msra.mxu0 0.0
        %7477 = vmatprep.subr.mxu0 0.0
        %7478 = vmatpush1.xpose.msra.mxu0 0.0
        %7479 = vmatprep.subr.mxu0 0.0
        %7480 = vmatpush1.xpose.msra.mxu0 0.0
        %7481 = vmatprep.subr.mxu0 0.0
        %7482 = vmatpush1.xpose.msra.mxu0 0.0
        %7483 = vmatprep.subr.mxu0 0.0
        %7484 = vmatpush1.xpose.msra.mxu0 0.0
        %7485 = vmatprep.subr.mxu0 0.0
        %7486 = vmatpush1.xpose.msra.mxu0 0.0
        %7487 = vmatprep.subr.mxu0 0.0
        %7488 = vmatpush1.xpose.msra.mxu0 0.0
        %7489 = vmatprep.subr.mxu0 0.0
        %7490 = vmatpush1.xpose.msra.mxu0 0.0
        %7491 = vmatprep.subr.mxu0 0.0
        %7492 = vmatpush1.xpose.msra.mxu0 0.0
        %7493 = vmatprep.subr.mxu0 0.0
        %7494 = vmatpush1.xpose.msra.mxu0 0.0
        %7495 = vmatprep.subr.mxu0 0.0
        %7496 = vmatpush1.xpose.msra.mxu0 0.0
        %7497 = vmatprep.subr.mxu0 0.0
        %7498 = vmatpush1.xpose.msra.mxu0 0.0
        %7499 = vmatprep.subr.mxu0 0.0
        %7500 = vmatpush1.xpose.msra.mxu0 0.0
        %7501 = vmatprep.subr.mxu0 0.0
        %7502 = vmatpush1.xpose.msra.mxu0 0.0
        %7503 = vmatprep.subr.mxu0 0.0
        %7504 = vmatpush1.xpose.msra.mxu0 0.0
        %7505 = vmatprep.subr.mxu0 0.0
        %7506 = vmatpush1.xpose.msra.mxu0 0.0
        %7507 = vmatprep.subr.mxu0 0.0
        %7508 = vmatpush1.xpose.msra.mxu0 0.0
        %7509 = vmatprep.subr.mxu0 0.0
        %7510 = vmatpush1.xpose.msra.mxu0 0.0
        %7511 = vmatprep.subr.mxu0 0.0
        %7512 = vmatpush1.xpose.msra.mxu0 0.0
        %7513 = vmatprep.subr.mxu0 0.0
        %7514 = vmatpush1.xpose.msra.mxu0 0.0
        %7515 = vmatprep.subr.mxu0 0.0
        %7516 = vmatpush1.xpose.msra.mxu0 0.0
        %7517 = vmatprep.subr.mxu0 0.0
        %7518 = vmatpush1.xpose.msra.mxu0 0.0
        %7519 = vmatprep.subr.mxu0 0.0
        %7520 = vmatpush1.xpose.msra.mxu0 0.0
        %7521 = vmatprep.subr.mxu0 0.0
        %7522 = vmatpush1.xpose.msra.mxu0 0.0
        %7523 = vmatprep.subr.mxu0 0.0
        %7524 = vmatpush1.xpose.msra.mxu0 0.0
        %7525 = vmatprep.subr.mxu0 0.0
        %7526 = vmatpush1.xpose.msra.mxu0 0.0
        %7527 = vmatprep.subr.mxu0 0.0
        %7528 = vmatpush1.xpose.msra.mxu0 0.0
        %7529 = vmatprep.subr.mxu0 0.0
        %7530 = vmatpush1.xpose.msra.mxu0 0.0
        %7531 = vmatprep.subr.mxu0 0.0
        %7532 = vmatpush1.xpose.msra.mxu0 0.0
        %7533 = vmatprep.subr.mxu0 0.0
        %7534 = vmatpush1.xpose.msra.mxu0 0.0
        %7535 = vmatprep.mubr.f32.mxu0 %v1522
        %7536 = vmatmul.mubr.f32.gmra.mrb[0].mxu0 %v1520
        %v7537 = vpop.f32.mrb[0].mxu0
        %v7538 = vadd.f32 %v7468, %v7537
        %v7539 = vpop.f32.mrb[0].mxu0
        %7540 = vdwg.mxu0
        %7541 = vmatprep.subr.mxu0 %v454
        %7542 = vmatpush1.xpose.msra.mxu0 %v453
        %7543 = vmatprep.subr.mxu0 %v710
        %7544 = vmatpush1.xpose.msra.mxu0 %v709
        %7545 = vmatprep.subr.mxu0 0.0
        %7546 = vmatpush1.xpose.msra.mxu0 0.0
        %7547 = vmatprep.subr.mxu0 0.0
        %7548 = vmatpush1.xpose.msra.mxu0 0.0
        %7549 = vmatprep.subr.mxu0 0.0
        %7550 = vmatpush1.xpose.msra.mxu0 0.0
        %7551 = vmatprep.subr.mxu0 0.0
        %7552 = vmatpush1.xpose.msra.mxu0 0.0
        %7553 = vmatprep.subr.mxu0 0.0
        %7554 = vmatpush1.xpose.msra.mxu0 0.0
        %7555 = vmatprep.subr.mxu0 0.0
        %7556 = vmatpush1.xpose.msra.mxu0 0.0
        %7557 = vmatprep.subr.mxu0 0.0
        %7558 = vmatpush1.xpose.msra.mxu0 0.0
        %7559 = vmatprep.subr.mxu0 0.0
        %7560 = vmatpush1.xpose.msra.mxu0 0.0
        %7561 = vmatprep.subr.mxu0 0.0
        %7562 = vmatpush1.xpose.msra.mxu0 0.0
        %7563 = vmatprep.subr.mxu0 0.0
        %7564 = vmatpush1.xpose.msra.mxu0 0.0
        %7565 = vmatprep.subr.mxu0 0.0
        %7566 = vmatpush1.xpose.msra.mxu0 0.0
        %7567 = vmatprep.subr.mxu0 0.0
        %7568 = vmatpush1.xpose.msra.mxu0 0.0
        %7569 = vmatprep.subr.mxu0 0.0
        %7570 = vmatpush1.xpose.msra.mxu0 0.0
        %7571 = vmatprep.subr.mxu0 0.0
        %7572 = vmatpush1.xpose.msra.mxu0 0.0
        %7573 = vmatprep.subr.mxu0 0.0
        %7574 = vmatpush1.xpose.msra.mxu0 0.0
        %7575 = vmatprep.subr.mxu0 0.0
        %7576 = vmatpush1.xpose.msra.mxu0 0.0
        %7577 = vmatprep.subr.mxu0 0.0
        %7578 = vmatpush1.xpose.msra.mxu0 0.0
        %7579 = vmatprep.subr.mxu0 0.0
        %7580 = vmatpush1.xpose.msra.mxu0 0.0
        %7581 = vmatprep.subr.mxu0 0.0
        %7582 = vmatpush1.xpose.msra.mxu0 0.0
        %7583 = vmatprep.subr.mxu0 0.0
        %7584 = vmatpush1.xpose.msra.mxu0 0.0
        %7585 = vmatprep.subr.mxu0 0.0
        %7586 = vmatpush1.xpose.msra.mxu0 0.0
        %7587 = vmatprep.subr.mxu0 0.0
        %7588 = vmatpush1.xpose.msra.mxu0 0.0
        %7589 = vmatprep.subr.mxu0 0.0
        %7590 = vmatpush1.xpose.msra.mxu0 0.0
        %7591 = vmatprep.subr.mxu0 0.0
        %7592 = vmatpush1.xpose.msra.mxu0 0.0
        %7593 = vmatprep.subr.mxu0 0.0
        %7594 = vmatpush1.xpose.msra.mxu0 0.0
        %7595 = vmatprep.subr.mxu0 0.0
        %7596 = vmatpush1.xpose.msra.mxu0 0.0
        %7597 = vmatprep.subr.mxu0 0.0
        %7598 = vmatpush1.xpose.msra.mxu0 0.0
        %7599 = vmatprep.subr.mxu0 0.0
        %7600 = vmatpush1.xpose.msra.mxu0 0.0
        %7601 = vmatprep.subr.mxu0 0.0
        %7602 = vmatpush1.xpose.msra.mxu0 0.0
        %7603 = vmatprep.subr.mxu0 0.0
        %7604 = vmatpush1.xpose.msra.mxu0 0.0
        %7605 = vmatprep.mubr.f32.mxu0 %v1538
        %7606 = vmatmul.mubr.f32.gmra.mrb[0].mxu0 %v1530
        %v7607 = vpop.f32.mrb[0].mxu0
        %v7608 = vadd.f32 %v7538, %v7607
        %v7609 = vpop.f32.mrb[0].mxu0
        %7610 = vdwg.mxu0
        %7611 = vmatprep.subr.mxu0 %v456
        %7612 = vmatpush1.xpose.msra.mxu0 %v455
        %7613 = vmatprep.subr.mxu0 %v712
        %7614 = vmatpush1.xpose.msra.mxu0 %v711
        %7615 = vmatprep.subr.mxu0 0.0
        %7616 = vmatpush1.xpose.msra.mxu0 0.0
        %7617 = vmatprep.subr.mxu0 0.0
        %7618 = vmatpush1.xpose.msra.mxu0 0.0
        %7619 = vmatprep.subr.mxu0 0.0
        %7620 = vmatpush1.xpose.msra.mxu0 0.0
        %7621 = vmatprep.subr.mxu0 0.0
        %7622 = vmatpush1.xpose.msra.mxu0 0.0
        %7623 = vmatprep.subr.mxu0 0.0
        %7624 = vmatpush1.xpose.msra.mxu0 0.0
        %7625 = vmatprep.subr.mxu0 0.0
        %7626 = vmatpush1.xpose.msra.mxu0 0.0
        %7627 = vmatprep.subr.mxu0 0.0
        %7628 = vmatpush1.xpose.msra.mxu0 0.0
        %7629 = vmatprep.subr.mxu0 0.0
        %7630 = vmatpush1.xpose.msra.mxu0 0.0
        %7631 = vmatprep.subr.mxu0 0.0
        %7632 = vmatpush1.xpose.msra.mxu0 0.0
        %7633 = vmatprep.subr.mxu0 0.0
        %7634 = vmatpush1.xpose.msra.mxu0 0.0
        %7635 = vmatprep.subr.mxu0 0.0
        %7636 = vmatpush1.xpose.msra.mxu0 0.0
        %7637 = vmatprep.subr.mxu0 0.0
        %7638 = vmatpush1.xpose.msra.mxu0 0.0
        %7639 = vmatprep.subr.mxu0 0.0
        %7640 = vmatpush1.xpose.msra.mxu0 0.0
        %7641 = vmatprep.subr.mxu0 0.0
        %7642 = vmatpush1.xpose.msra.mxu0 0.0
        %7643 = vmatprep.subr.mxu0 0.0
        %7644 = vmatpush1.xpose.msra.mxu0 0.0
        %7645 = vmatprep.subr.mxu0 0.0
        %7646 = vmatpush1.xpose.msra.mxu0 0.0
        %7647 = vmatprep.subr.mxu0 0.0
        %7648 = vmatpush1.xpose.msra.mxu0 0.0
        %7649 = vmatprep.subr.mxu0 0.0
        %7650 = vmatpush1.xpose.msra.mxu0 0.0
        %7651 = vmatprep.subr.mxu0 0.0
        %7652 = vmatpush1.xpose.msra.mxu0 0.0
        %7653 = vmatprep.subr.mxu0 0.0
        %7654 = vmatpush1.xpose.msra.mxu0 0.0
        %7655 = vmatprep.subr.mxu0 0.0
        %7656 = vmatpush1.xpose.msra.mxu0 0.0
        %7657 = vmatprep.subr.mxu0 0.0
        %7658 = vmatpush1.xpose.msra.mxu0 0.0
        %7659 = vmatprep.subr.mxu0 0.0
        %7660 = vmatpush1.xpose.msra.mxu0 0.0
        %7661 = vmatprep.subr.mxu0 0.0
        %7662 = vmatpush1.xpose.msra.mxu0 0.0
        %7663 = vmatprep.subr.mxu0 0.0
        %7664 = vmatpush1.xpose.msra.mxu0 0.0
        %7665 = vmatprep.subr.mxu0 0.0
        %7666 = vmatpush1.xpose.msra.mxu0 0.0
        %7667 = vmatprep.subr.mxu0 0.0
        %7668 = vmatpush1.xpose.msra.mxu0 0.0
        %7669 = vmatprep.subr.mxu0 0.0
        %7670 = vmatpush1.xpose.msra.mxu0 0.0
        %7671 = vmatprep.subr.mxu0 0.0
        %7672 = vmatpush1.xpose.msra.mxu0 0.0
        %7673 = vmatprep.subr.mxu0 0.0
        %7674 = vmatpush1.xpose.msra.mxu0 0.0
        %7675 = vmatprep.mubr.f32.mxu0 %v1539
        %7676 = vmatmul.mubr.f32.gmra.mrb[0].mxu0 %v1537
        %v7677 = vpop.f32.mrb[0].mxu0
        %v7678 = vadd.f32 %v7608, %v7677
        %v7679 = vpop.f32.mrb[0].mxu0
        %7680 = vdwg.mxu0
        %7681 = vmatprep.subr.mxu0 %v458
        %7682 = vmatpush1.xpose.msra.mxu0 %v457
        %7683 = vmatprep.subr.mxu0 %v714
        %7684 = vmatpush1.xpose.msra.mxu0 %v713
        %7685 = vmatprep.subr.mxu0 0.0
        %7686 = vmatpush1.xpose.msra.mxu0 0.0
        %7687 = vmatprep.subr.mxu0 0.0
        %7688 = vmatpush1.xpose.msra.mxu0 0.0
        %7689 = vmatprep.subr.mxu0 0.0
        %7690 = vmatpush1.xpose.msra.mxu0 0.0
        %7691 = vmatprep.subr.mxu0 0.0
        %7692 = vmatpush1.xpose.msra.mxu0 0.0
        %7693 = vmatprep.subr.mxu0 0.0
        %7694 = vmatpush1.xpose.msra.mxu0 0.0
        %7695 = vmatprep.subr.mxu0 0.0
        %7696 = vmatpush1.xpose.msra.mxu0 0.0
        %7697 = vmatprep.subr.mxu0 0.0
        %7698 = vmatpush1.xpose.msra.mxu0 0.0
        %7699 = vmatprep.subr.mxu0 0.0
        %7700 = vmatpush1.xpose.msra.mxu0 0.0
        %7701 = vmatprep.subr.mxu0 0.0
        %7702 = vmatpush1.xpose.msra.mxu0 0.0
        %7703 = vmatprep.subr.mxu0 0.0
        %7704 = vmatpush1.xpose.msra.mxu0 0.0
        %7705 = vmatprep.subr.mxu0 0.0
        %7706 = vmatpush1.xpose.msra.mxu0 0.0
        %7707 = vmatprep.subr.mxu0 0.0
        %7708 = vmatpush1.xpose.msra.mxu0 0.0
        %7709 = vmatprep.subr.mxu0 0.0
        %7710 = vmatpush1.xpose.msra.mxu0 0.0
        %7711 = vmatprep.subr.mxu0 0.0
        %7712 = vmatpush1.xpose.msra.mxu0 0.0
        %7713 = vmatprep.subr.mxu0 0.0
        %7714 = vmatpush1.xpose.msra.mxu0 0.0
        %7715 = vmatprep.subr.mxu0 0.0
        %7716 = vmatpush1.xpose.msra.mxu0 0.0
        %7717 = vmatprep.subr.mxu0 0.0
        %7718 = vmatpush1.xpose.msra.mxu0 0.0
        %7719 = vmatprep.subr.mxu0 0.0
        %7720 = vmatpush1.xpose.msra.mxu0 0.0
        %7721 = vmatprep.subr.mxu0 0.0
        %7722 = vmatpush1.xpose.msra.mxu0 0.0
        %7723 = vmatprep.subr.mxu0 0.0
        %7724 = vmatpush1.xpose.msra.mxu0 0.0
        %7725 = vmatprep.subr.mxu0 0.0
        %7726 = vmatpush1.xpose.msra.mxu0 0.0
        %7727 = vmatprep.subr.mxu0 0.0
        %7728 = vmatpush1.xpose.msra.mxu0 0.0
        %7729 = vmatprep.subr.mxu0 0.0
        %7730 = vmatpush1.xpose.msra.mxu0 0.0
        %7731 = vmatprep.subr.mxu0 0.0
        %7732 = vmatpush1.xpose.msra.mxu0 0.0
        %7733 = vmatprep.subr.mxu0 0.0
        %7734 = vmatpush1.xpose.msra.mxu0 0.0
        %7735 = vmatprep.subr.mxu0 0.0
        %7736 = vmatpush1.xpose.msra.mxu0 0.0
        %7737 = vmatprep.subr.mxu0 0.0
        %7738 = vmatpush1.xpose.msra.mxu0 0.0
        %7739 = vmatprep.subr.mxu0 0.0
        %7740 = vmatpush1.xpose.msra.mxu0 0.0
        %7741 = vmatprep.subr.mxu0 0.0
        %7742 = vmatpush1.xpose.msra.mxu0 0.0
        %7743 = vmatprep.subr.mxu0 0.0
        %7744 = vmatpush1.xpose.msra.mxu0 0.0
        %7745 = vmatprep.mubr.f32.mxu0 %v1555
        %7746 = vmatmul.mubr.f32.gmra.mrb[0].mxu0 %v1547
        %v7747 = vpop.f32.mrb[0].mxu0
        %v7748 = vadd.f32 %v7678, %v7747
        %v7749 = vpop.f32.mrb[0].mxu0
        %7750 = vdwg.mxu0
        %7751 = vmatprep.subr.mxu0 %v460
        %7752 = vmatpush1.xpose.msra.mxu0 %v459
        %7753 = vmatprep.subr.mxu0 %v716
        %7754 = vmatpush1.xpose.msra.mxu0 %v715
        %7755 = vmatprep.subr.mxu0 0.0
        %7756 = vmatpush1.xpose.msra.mxu0 0.0
        %7757 = vmatprep.subr.mxu0 0.0
        %7758 = vmatpush1.xpose.msra.mxu0 0.0
        %7759 = vmatprep.subr.mxu0 0.0
        %7760 = vmatpush1.xpose.msra.mxu0 0.0
        %7761 = vmatprep.subr.mxu0 0.0
        %7762 = vmatpush1.xpose.msra.mxu0 0.0
        %7763 = vmatprep.subr.mxu0 0.0
        %7764 = vmatpush1.xpose.msra.mxu0 0.0
        %7765 = vmatprep.subr.mxu0 0.0
        %7766 = vmatpush1.xpose.msra.mxu0 0.0
        %7767 = vmatprep.subr.mxu0 0.0
        %7768 = vmatpush1.xpose.msra.mxu0 0.0
        %7769 = vmatprep.subr.mxu0 0.0
        %7770 = vmatpush1.xpose.msra.mxu0 0.0
        %7771 = vmatprep.subr.mxu0 0.0
        %7772 = vmatpush1.xpose.msra.mxu0 0.0
        %7773 = vmatprep.subr.mxu0 0.0
        %7774 = vmatpush1.xpose.msra.mxu0 0.0
        %7775 = vmatprep.subr.mxu0 0.0
        %7776 = vmatpush1.xpose.msra.mxu0 0.0
        %7777 = vmatprep.subr.mxu0 0.0
        %7778 = vmatpush1.xpose.msra.mxu0 0.0
        %7779 = vmatprep.subr.mxu0 0.0
        %7780 = vmatpush1.xpose.msra.mxu0 0.0
        %7781 = vmatprep.subr.mxu0 0.0
        %7782 = vmatpush1.xpose.msra.mxu0 0.0
        %7783 = vmatprep.subr.mxu0 0.0
        %7784 = vmatpush1.xpose.msra.mxu0 0.0
        %7785 = vmatprep.subr.mxu0 0.0
        %7786 = vmatpush1.xpose.msra.mxu0 0.0
        %7787 = vmatprep.subr.mxu0 0.0
        %7788 = vmatpush1.xpose.msra.mxu0 0.0
        %7789 = vmatprep.subr.mxu0 0.0
        %7790 = vmatpush1.xpose.msra.mxu0 0.0
        %7791 = vmatprep.subr.mxu0 0.0
        %7792 = vmatpush1.xpose.msra.mxu0 0.0
        %7793 = vmatprep.subr.mxu0 0.0
        %7794 = vmatpush1.xpose.msra.mxu0 0.0
        %7795 = vmatprep.subr.mxu0 0.0
        %7796 = vmatpush1.xpose.msra.mxu0 0.0
        %7797 = vmatprep.subr.mxu0 0.0
        %7798 = vmatpush1.xpose.msra.mxu0 0.0
        %7799 = vmatprep.subr.mxu0 0.0
        %7800 = vmatpush1.xpose.msra.mxu0 0.0
        %7801 = vmatprep.subr.mxu0 0.0
        %7802 = vmatpush1.xpose.msra.mxu0 0.0
        %7803 = vmatprep.subr.mxu0 0.0
        %7804 = vmatpush1.xpose.msra.mxu0 0.0
        %7805 = vmatprep.subr.mxu0 0.0
        %7806 = vmatpush1.xpose.msra.mxu0 0.0
        %7807 = vmatprep.subr.mxu0 0.0
        %7808 = vmatpush1.xpose.msra.mxu0 0.0
        %7809 = vmatprep.subr.mxu0 0.0
        %7810 = vmatpush1.xpose.msra.mxu0 0.0
        %7811 = vmatprep.subr.mxu0 0.0
        %7812 = vmatpush1.xpose.msra.mxu0 0.0
        %7813 = vmatprep.subr.mxu0 0.0
        %7814 = vmatpush1.xpose.msra.mxu0 0.0
        %7815 = vmatprep.mubr.f32.mxu0 %v1556
        %7816 = vmatmul.mubr.f32.gmra.mrb[0].mxu0 %v1554
        %v7817 = vpop.f32.mrb[0].mxu0
        %v7818 = vadd.f32 %v7748, %v7817
        %v7819 = vpop.f32.mrb[0].mxu0
        %7820 = vdwg.mxu0
        %7821 = vmatprep.subr.mxu0 %v462
        %7822 = vmatpush1.xpose.msra.mxu0 %v461
        %7823 = vmatprep.subr.mxu0 %v718
        %7824 = vmatpush1.xpose.msra.mxu0 %v717
        %7825 = vmatprep.subr.mxu0 0.0
        %7826 = vmatpush1.xpose.msra.mxu0 0.0
        %7827 = vmatprep.subr.mxu0 0.0
        %7828 = vmatpush1.xpose.msra.mxu0 0.0
        %7829 = vmatprep.subr.mxu0 0.0
        %7830 = vmatpush1.xpose.msra.mxu0 0.0
        %7831 = vmatprep.subr.mxu0 0.0
        %7832 = vmatpush1.xpose.msra.mxu0 0.0
        %7833 = vmatprep.subr.mxu0 0.0
        %7834 = vmatpush1.xpose.msra.mxu0 0.0
        %7835 = vmatprep.subr.mxu0 0.0
        %7836 = vmatpush1.xpose.msra.mxu0 0.0
        %7837 = vmatprep.subr.mxu0 0.0
        %7838 = vmatpush1.xpose.msra.mxu0 0.0
        %7839 = vmatprep.subr.mxu0 0.0
        %7840 = vmatpush1.xpose.msra.mxu0 0.0
        %7841 = vmatprep.subr.mxu0 0.0
        %7842 = vmatpush1.xpose.msra.mxu0 0.0
        %7843 = vmatprep.subr.mxu0 0.0
        %7844 = vmatpush1.xpose.msra.mxu0 0.0
        %7845 = vmatprep.subr.mxu0 0.0
        %7846 = vmatpush1.xpose.msra.mxu0 0.0
        %7847 = vmatprep.subr.mxu0 0.0
        %7848 = vmatpush1.xpose.msra.mxu0 0.0
        %7849 = vmatprep.subr.mxu0 0.0
        %7850 = vmatpush1.xpose.msra.mxu0 0.0
        %7851 = vmatprep.subr.mxu0 0.0
        %7852 = vmatpush1.xpose.msra.mxu0 0.0
        %7853 = vmatprep.subr.mxu0 0.0
        %7854 = vmatpush1.xpose.msra.mxu0 0.0
        %7855 = vmatprep.subr.mxu0 0.0
        %7856 = vmatpush1.xpose.msra.mxu0 0.0
        %7857 = vmatprep.subr.mxu0 0.0
        %7858 = vmatpush1.xpose.msra.mxu0 0.0
        %7859 = vmatprep.subr.mxu0 0.0
        %7860 = vmatpush1.xpose.msra.mxu0 0.0
        %7861 = vmatprep.subr.mxu0 0.0
        %7862 = vmatpush1.xpose.msra.mxu0 0.0
        %7863 = vmatprep.subr.mxu0 0.0
        %7864 = vmatpush1.xpose.msra.mxu0 0.0
        %7865 = vmatprep.subr.mxu0 0.0
        %7866 = vmatpush1.xpose.msra.mxu0 0.0
        %7867 = vmatprep.subr.mxu0 0.0
        %7868 = vmatpush1.xpose.msra.mxu0 0.0
        %7869 = vmatprep.subr.mxu0 0.0
        %7870 = vmatpush1.xpose.msra.mxu0 0.0
        %7871 = vmatprep.subr.mxu0 0.0
        %7872 = vmatpush1.xpose.msra.mxu0 0.0
        %7873 = vmatprep.subr.mxu0 0.0
        %7874 = vmatpush1.xpose.msra.mxu0 0.0
        %7875 = vmatprep.subr.mxu0 0.0
        %7876 = vmatpush1.xpose.msra.mxu0 0.0
        %7877 = vmatprep.subr.mxu0 0.0
        %7878 = vmatpush1.xpose.msra.mxu0 0.0
        %7879 = vmatprep.subr.mxu0 0.0
        %7880 = vmatpush1.xpose.msra.mxu0 0.0
        %7881 = vmatprep.subr.mxu0 0.0
        %7882 = vmatpush1.xpose.msra.mxu0 0.0
        %7883 = vmatprep.subr.mxu0 0.0
        %7884 = vmatpush1.xpose.msra.mxu0 0.0
        %7885 = vmatprep.mubr.f32.mxu0 %v1572
        %7886 = vmatmul.mubr.f32.gmra.mrb[0].mxu0 %v1564
        %v7887 = vpop.f32.mrb[0].mxu0
        %v7888 = vadd.f32 %v7818, %v7887
        %v7889 = vpop.f32.mrb[0].mxu0
        %7890 = vdwg.mxu0
        %7891 = vmatprep.subr.mxu0 %v464
        %7892 = vmatpush1.xpose.msra.mxu0 %v463
        %7893 = vmatprep.subr.mxu0 %v720
        %7894 = vmatpush1.xpose.msra.mxu0 %v719
        %7895 = vmatprep.subr.mxu0 0.0
        %7896 = vmatpush1.xpose.msra.mxu0 0.0
        %7897 = vmatprep.subr.mxu0 0.0
        %7898 = vmatpush1.xpose.msra.mxu0 0.0
        %7899 = vmatprep.subr.mxu0 0.0
        %7900 = vmatpush1.xpose.msra.mxu0 0.0
        %7901 = vmatprep.subr.mxu0 0.0
        %7902 = vmatpush1.xpose.msra.mxu0 0.0
        %7903 = vmatprep.subr.mxu0 0.0
        %7904 = vmatpush1.xpose.msra.mxu0 0.0
        %7905 = vmatprep.subr.mxu0 0.0
        %7906 = vmatpush1.xpose.msra.mxu0 0.0
        %7907 = vmatprep.subr.mxu0 0.0
        %7908 = vmatpush1.xpose.msra.mxu0 0.0
        %7909 = vmatprep.subr.mxu0 0.0
        %7910 = vmatpush1.xpose.msra.mxu0 0.0
        %7911 = vmatprep.subr.mxu0 0.0
        %7912 = vmatpush1.xpose.msra.mxu0 0.0
        %7913 = vmatprep.subr.mxu0 0.0
        %7914 = vmatpush1.xpose.msra.mxu0 0.0
        %7915 = vmatprep.subr.mxu0 0.0
        %7916 = vmatpush1.xpose.msra.mxu0 0.0
        %7917 = vmatprep.subr.mxu0 0.0
        %7918 = vmatpush1.xpose.msra.mxu0 0.0
        %7919 = vmatprep.subr.mxu0 0.0
        %7920 = vmatpush1.xpose.msra.mxu0 0.0
        %7921 = vmatprep.subr.mxu0 0.0
        %7922 = vmatpush1.xpose.msra.mxu0 0.0
        %7923 = vmatprep.subr.mxu0 0.0
        %7924 = vmatpush1.xpose.msra.mxu0 0.0
        %7925 = vmatprep.subr.mxu0 0.0
        %7926 = vmatpush1.xpose.msra.mxu0 0.0
        %7927 = vmatprep.subr.mxu0 0.0
        %7928 = vmatpush1.xpose.msra.mxu0 0.0
        %7929 = vmatprep.subr.mxu0 0.0
        %7930 = vmatpush1.xpose.msra.mxu0 0.0
        %7931 = vmatprep.subr.mxu0 0.0
        %7932 = vmatpush1.xpose.msra.mxu0 0.0
        %7933 = vmatprep.subr.mxu0 0.0
        %7934 = vmatpush1.xpose.msra.mxu0 0.0
        %7935 = vmatprep.subr.mxu0 0.0
        %7936 = vmatpush1.xpose.msra.mxu0 0.0
        %7937 = vmatprep.subr.mxu0 0.0
        %7938 = vmatpush1.xpose.msra.mxu0 0.0
        %7939 = vmatprep.subr.mxu0 0.0
        %7940 = vmatpush1.xpose.msra.mxu0 0.0
        %7941 = vmatprep.subr.mxu0 0.0
        %7942 = vmatpush1.xpose.msra.mxu0 0.0
        %7943 = vmatprep.subr.mxu0 0.0
        %7944 = vmatpush1.xpose.msra.mxu0 0.0
        %7945 = vmatprep.subr.mxu0 0.0
        %7946 = vmatpush1.xpose.msra.mxu0 0.0
        %7947 = vmatprep.subr.mxu0 0.0
        %7948 = vmatpush1.xpose.msra.mxu0 0.0
        %7949 = vmatprep.subr.mxu0 0.0
        %7950 = vmatpush1.xpose.msra.mxu0 0.0
        %7951 = vmatprep.subr.mxu0 0.0
        %7952 = vmatpush1.xpose.msra.mxu0 0.0
        %7953 = vmatprep.subr.mxu0 0.0
        %7954 = vmatpush1.xpose.msra.mxu0 0.0
        %7955 = vmatprep.mubr.f32.mxu0 %v1573
        %7956 = vmatmul.mubr.f32.gmra.mrb[0].mxu0 %v1571
        %v7957 = vpop.f32.mrb[0].mxu0
        %v7958 = vadd.f32 %v7888, %v7957
        %v7959 = vpop.f32.mrb[0].mxu0
        %7960 = vdwg.mxu0
        %7961 = vmatprep.subr.mxu0 %v466
        %7962 = vmatpush1.xpose.msra.mxu0 %v465
        %7963 = vmatprep.subr.mxu0 %v722
        %7964 = vmatpush1.xpose.msra.mxu0 %v721
        %7965 = vmatprep.subr.mxu0 0.0
        %7966 = vmatpush1.xpose.msra.mxu0 0.0
        %7967 = vmatprep.subr.mxu0 0.0
        %7968 = vmatpush1.xpose.msra.mxu0 0.0
        %7969 = vmatprep.subr.mxu0 0.0
        %7970 = vmatpush1.xpose.msra.mxu0 0.0
        %7971 = vmatprep.subr.mxu0 0.0
        %7972 = vmatpush1.xpose.msra.mxu0 0.0
        %7973 = vmatprep.subr.mxu0 0.0
        %7974 = vmatpush1.xpose.msra.mxu0 0.0
        %7975 = vmatprep.subr.mxu0 0.0
        %7976 = vmatpush1.xpose.msra.mxu0 0.0
        %7977 = vmatprep.subr.mxu0 0.0
        %7978 = vmatpush1.xpose.msra.mxu0 0.0
        %7979 = vmatprep.subr.mxu0 0.0
        %7980 = vmatpush1.xpose.msra.mxu0 0.0
        %7981 = vmatprep.subr.mxu0 0.0
        %7982 = vmatpush1.xpose.msra.mxu0 0.0
        %7983 = vmatprep.subr.mxu0 0.0
        %7984 = vmatpush1.xpose.msra.mxu0 0.0
        %7985 = vmatprep.subr.mxu0 0.0
        %7986 = vmatpush1.xpose.msra.mxu0 0.0
        %7987 = vmatprep.subr.mxu0 0.0
        %7988 = vmatpush1.xpose.msra.mxu0 0.0
        %7989 = vmatprep.subr.mxu0 0.0
        %7990 = vmatpush1.xpose.msra.mxu0 0.0
        %7991 = vmatprep.subr.mxu0 0.0
        %7992 = vmatpush1.xpose.msra.mxu0 0.0
        %7993 = vmatprep.subr.mxu0 0.0
        %7994 = vmatpush1.xpose.msra.mxu0 0.0
        %7995 = vmatprep.subr.mxu0 0.0
        %7996 = vmatpush1.xpose.msra.mxu0 0.0
        %7997 = vmatprep.subr.mxu0 0.0
        %7998 = vmatpush1.xpose.msra.mxu0 0.0
        %7999 = vmatprep.subr.mxu0 0.0
        %8000 = vmatpush1.xpose.msra.mxu0 0.0
        %8001 = vmatprep.subr.mxu0 0.0
        %8002 = vmatpush1.xpose.msra.mxu0 0.0
        %8003 = vmatprep.subr.mxu0 0.0
        %8004 = vmatpush1.xpose.msra.mxu0 0.0
        %8005 = vmatprep.subr.mxu0 0.0
        %8006 = vmatpush1.xpose.msra.mxu0 0.0
        %8007 = vmatprep.subr.mxu0 0.0
        %8008 = vmatpush1.xpose.msra.mxu0 0.0
        %8009 = vmatprep.subr.mxu0 0.0
        %8010 = vmatpush1.xpose.msra.mxu0 0.0
        %8011 = vmatprep.subr.mxu0 0.0
        %8012 = vmatpush1.xpose.msra.mxu0 0.0
        %8013 = vmatprep.subr.mxu0 0.0
        %8014 = vmatpush1.xpose.msra.mxu0 0.0
        %8015 = vmatprep.subr.mxu0 0.0
        %8016 = vmatpush1.xpose.msra.mxu0 0.0
        %8017 = vmatprep.subr.mxu0 0.0
        %8018 = vmatpush1.xpose.msra.mxu0 0.0
        %8019 = vmatprep.subr.mxu0 0.0
        %8020 = vmatpush1.xpose.msra.mxu0 0.0
        %8021 = vmatprep.subr.mxu0 0.0
        %8022 = vmatpush1.xpose.msra.mxu0 0.0
        %8023 = vmatprep.subr.mxu0 0.0
        %8024 = vmatpush1.xpose.msra.mxu0 0.0
        %8025 = vmatprep.mubr.f32.mxu0 %v1589
        %8026 = vmatmul.mubr.f32.gmra.mrb[0].mxu0 %v1581
        %v8027 = vpop.f32.mrb[0].mxu0
        %v8028 = vadd.f32 %v7958, %v8027
        %v8029 = vpop.f32.mrb[0].mxu0
        %8030 = vdwg.mxu0
        %8031 = vmatprep.subr.mxu0 %v468
        %8032 = vmatpush1.xpose.msra.mxu0 %v467
        %8033 = vmatprep.subr.mxu0 %v724
        %8034 = vmatpush1.xpose.msra.mxu0 %v723
        %8035 = vmatprep.subr.mxu0 0.0
        %8036 = vmatpush1.xpose.msra.mxu0 0.0
        %8037 = vmatprep.subr.mxu0 0.0
        %8038 = vmatpush1.xpose.msra.mxu0 0.0
        %8039 = vmatprep.subr.mxu0 0.0
        %8040 = vmatpush1.xpose.msra.mxu0 0.0
        %8041 = vmatprep.subr.mxu0 0.0
        %8042 = vmatpush1.xpose.msra.mxu0 0.0
        %8043 = vmatprep.subr.mxu0 0.0
        %8044 = vmatpush1.xpose.msra.mxu0 0.0
        %8045 = vmatprep.subr.mxu0 0.0
        %8046 = vmatpush1.xpose.msra.mxu0 0.0
        %8047 = vmatprep.subr.mxu0 0.0
        %8048 = vmatpush1.xpose.msra.mxu0 0.0
        %8049 = vmatprep.subr.mxu0 0.0
        %8050 = vmatpush1.xpose.msra.mxu0 0.0
        %8051 = vmatprep.subr.mxu0 0.0
        %8052 = vmatpush1.xpose.msra.mxu0 0.0
        %8053 = vmatprep.subr.mxu0 0.0
        %8054 = vmatpush1.xpose.msra.mxu0 0.0
        %8055 = vmatprep.subr.mxu0 0.0
        %8056 = vmatpush1.xpose.msra.mxu0 0.0
        %8057 = vmatprep.subr.mxu0 0.0
        %8058 = vmatpush1.xpose.msra.mxu0 0.0
        %8059 = vmatprep.subr.mxu0 0.0
        %8060 = vmatpush1.xpose.msra.mxu0 0.0
        %8061 = vmatprep.subr.mxu0 0.0
        %8062 = vmatpush1.xpose.msra.mxu0 0.0
        %8063 = vmatprep.subr.mxu0 0.0
        %8064 = vmatpush1.xpose.msra.mxu0 0.0
        %8065 = vmatprep.subr.mxu0 0.0
        %8066 = vmatpush1.xpose.msra.mxu0 0.0
        %8067 = vmatprep.subr.mxu0 0.0
        %8068 = vmatpush1.xpose.msra.mxu0 0.0
        %8069 = vmatprep.subr.mxu0 0.0
        %8070 = vmatpush1.xpose.msra.mxu0 0.0
        %8071 = vmatprep.subr.mxu0 0.0
        %8072 = vmatpush1.xpose.msra.mxu0 0.0
        %8073 = vmatprep.subr.mxu0 0.0
        %8074 = vmatpush1.xpose.msra.mxu0 0.0
        %8075 = vmatprep.subr.mxu0 0.0
        %8076 = vmatpush1.xpose.msra.mxu0 0.0
        %8077 = vmatprep.subr.mxu0 0.0
        %8078 = vmatpush1.xpose.msra.mxu0 0.0
        %8079 = vmatprep.subr.mxu0 0.0
        %8080 = vmatpush1.xpose.msra.mxu0 0.0
        %8081 = vmatprep.subr.mxu0 0.0
        %8082 = vmatpush1.xpose.msra.mxu0 0.0
        %8083 = vmatprep.subr.mxu0 0.0
        %8084 = vmatpush1.xpose.msra.mxu0 0.0
        %8085 = vmatprep.subr.mxu0 0.0
        %8086 = vmatpush1.xpose.msra.mxu0 0.0
        %8087 = vmatprep.subr.mxu0 0.0
        %8088 = vmatpush1.xpose.msra.mxu0 0.0
        %8089 = vmatprep.subr.mxu0 0.0
        %8090 = vmatpush1.xpose.msra.mxu0 0.0
        %8091 = vmatprep.subr.mxu0 0.0
        %8092 = vmatpush1.xpose.msra.mxu0 0.0
        %8093 = vmatprep.subr.mxu0 0.0
        %8094 = vmatpush1.xpose.msra.mxu0 0.0
        %8095 = vmatprep.mubr.f32.mxu0 %v1590
        %8096 = vmatmul.mubr.f32.gmra.mrb[0].mxu0 %v1588
        %v8097 = vpop.f32.mrb[0].mxu0
        %v8098 = vadd.f32 %v8028, %v8097
        %v8099 = vpop.f32.mrb[0].mxu0
        %8100 = vdwg.mxu0
        %8101 = vmatprep.subr.mxu0 %v470
        %8102 = vmatpush1.xpose.msra.mxu0 %v469
        %8103 = vmatprep.subr.mxu0 %v726
        %8104 = vmatpush1.xpose.msra.mxu0 %v725
        %8105 = vmatprep.subr.mxu0 0.0
        %8106 = vmatpush1.xpose.msra.mxu0 0.0
        %8107 = vmatprep.subr.mxu0 0.0
        %8108 = vmatpush1.xpose.msra.mxu0 0.0
        %8109 = vmatprep.subr.mxu0 0.0
        %8110 = vmatpush1.xpose.msra.mxu0 0.0
        %8111 = vmatprep.subr.mxu0 0.0
        %8112 = vmatpush1.xpose.msra.mxu0 0.0
        %8113 = vmatprep.subr.mxu0 0.0
        %8114 = vmatpush1.xpose.msra.mxu0 0.0
        %8115 = vmatprep.subr.mxu0 0.0
        %8116 = vmatpush1.xpose.msra.mxu0 0.0
        %8117 = vmatprep.subr.mxu0 0.0
        %8118 = vmatpush1.xpose.msra.mxu0 0.0
        %8119 = vmatprep.subr.mxu0 0.0
        %8120 = vmatpush1.xpose.msra.mxu0 0.0
        %8121 = vmatprep.subr.mxu0 0.0
        %8122 = vmatpush1.xpose.msra.mxu0 0.0
        %8123 = vmatprep.subr.mxu0 0.0
        %8124 = vmatpush1.xpose.msra.mxu0 0.0
        %8125 = vmatprep.subr.mxu0 0.0
        %8126 = vmatpush1.xpose.msra.mxu0 0.0
        %8127 = vmatprep.subr.mxu0 0.0
        %8128 = vmatpush1.xpose.msra.mxu0 0.0
        %8129 = vmatprep.subr.mxu0 0.0
        %8130 = vmatpush1.xpose.msra.mxu0 0.0
        %8131 = vmatprep.subr.mxu0 0.0
        %8132 = vmatpush1.xpose.msra.mxu0 0.0
        %8133 = vmatprep.subr.mxu0 0.0
        %8134 = vmatpush1.xpose.msra.mxu0 0.0
        %8135 = vmatprep.subr.mxu0 0.0
        %8136 = vmatpush1.xpose.msra.mxu0 0.0
        %8137 = vmatprep.subr.mxu0 0.0
        %8138 = vmatpush1.xpose.msra.mxu0 0.0
        %8139 = vmatprep.subr.mxu0 0.0
        %8140 = vmatpush1.xpose.msra.mxu0 0.0
        %8141 = vmatprep.subr.mxu0 0.0
        %8142 = vmatpush1.xpose.msra.mxu0 0.0
        %8143 = vmatprep.subr.mxu0 0.0
        %8144 = vmatpush1.xpose.msra.mxu0 0.0
        %8145 = vmatprep.subr.mxu0 0.0
        %8146 = vmatpush1.xpose.msra.mxu0 0.0
        %8147 = vmatprep.subr.mxu0 0.0
        %8148 = vmatpush1.xpose.msra.mxu0 0.0
        %8149 = vmatprep.subr.mxu0 0.0
        %8150 = vmatpush1.xpose.msra.mxu0 0.0
        %8151 = vmatprep.subr.mxu0 0.0
        %8152 = vmatpush1.xpose.msra.mxu0 0.0
        %8153 = vmatprep.subr.mxu0 0.0
        %8154 = vmatpush1.xpose.msra.mxu0 0.0
        %8155 = vmatprep.subr.mxu0 0.0
        %8156 = vmatpush1.xpose.msra.mxu0 0.0
        %8157 = vmatprep.subr.mxu0 0.0
        %8158 = vmatpush1.xpose.msra.mxu0 0.0
        %8159 = vmatprep.subr.mxu0 0.0
        %8160 = vmatpush1.xpose.msra.mxu0 0.0
        %8161 = vmatprep.subr.mxu0 0.0
        %8162 = vmatpush1.xpose.msra.mxu0 0.0
        %8163 = vmatprep.subr.mxu0 0.0
        %8164 = vmatpush1.xpose.msra.mxu0 0.0
        %8165 = vmatprep.mubr.f32.mxu0 %v1606
        %8166 = vmatmul.mubr.f32.gmra.mrb[0].mxu0 %v1598
        %v8167 = vpop.f32.mrb[0].mxu0
        %v8168 = vadd.f32 %v8098, %v8167
        %v8169 = vpop.f32.mrb[0].mxu0
        %8170 = vdwg.mxu0
        %8171 = vmatprep.subr.mxu0 %v472
        %8172 = vmatpush1.xpose.msra.mxu0 %v471
        %8173 = vmatprep.subr.mxu0 %v728
        %8174 = vmatpush1.xpose.msra.mxu0 %v727
        %8175 = vmatprep.subr.mxu0 0.0
        %8176 = vmatpush1.xpose.msra.mxu0 0.0
        %8177 = vmatprep.subr.mxu0 0.0
        %8178 = vmatpush1.xpose.msra.mxu0 0.0
        %8179 = vmatprep.subr.mxu0 0.0
        %8180 = vmatpush1.xpose.msra.mxu0 0.0
        %8181 = vmatprep.subr.mxu0 0.0
        %8182 = vmatpush1.xpose.msra.mxu0 0.0
        %8183 = vmatprep.subr.mxu0 0.0
        %8184 = vmatpush1.xpose.msra.mxu0 0.0
        %8185 = vmatprep.subr.mxu0 0.0
        %8186 = vmatpush1.xpose.msra.mxu0 0.0
        %8187 = vmatprep.subr.mxu0 0.0
        %8188 = vmatpush1.xpose.msra.mxu0 0.0
        %8189 = vmatprep.subr.mxu0 0.0
        %8190 = vmatpush1.xpose.msra.mxu0 0.0
        %8191 = vmatprep.subr.mxu0 0.0
        %8192 = vmatpush1.xpose.msra.mxu0 0.0
        %8193 = vmatprep.subr.mxu0 0.0
        %8194 = vmatpush1.xpose.msra.mxu0 0.0
        %8195 = vmatprep.subr.mxu0 0.0
        %8196 = vmatpush1.xpose.msra.mxu0 0.0
        %8197 = vmatprep.subr.mxu0 0.0
        %8198 = vmatpush1.xpose.msra.mxu0 0.0
        %8199 = vmatprep.subr.mxu0 0.0
        %8200 = vmatpush1.xpose.msra.mxu0 0.0
        %8201 = vmatprep.subr.mxu0 0.0
        %8202 = vmatpush1.xpose.msra.mxu0 0.0
        %8203 = vmatprep.subr.mxu0 0.0
        %8204 = vmatpush1.xpose.msra.mxu0 0.0
        %8205 = vmatprep.subr.mxu0 0.0
        %8206 = vmatpush1.xpose.msra.mxu0 0.0
        %8207 = vmatprep.subr.mxu0 0.0
        %8208 = vmatpush1.xpose.msra.mxu0 0.0
        %8209 = vmatprep.subr.mxu0 0.0
        %8210 = vmatpush1.xpose.msra.mxu0 0.0
        %8211 = vmatprep.subr.mxu0 0.0
        %8212 = vmatpush1.xpose.msra.mxu0 0.0
        %8213 = vmatprep.subr.mxu0 0.0
        %8214 = vmatpush1.xpose.msra.mxu0 0.0
        %8215 = vmatprep.subr.mxu0 0.0
        %8216 = vmatpush1.xpose.msra.mxu0 0.0
        %8217 = vmatprep.subr.mxu0 0.0
        %8218 = vmatpush1.xpose.msra.mxu0 0.0
        %8219 = vmatprep.subr.mxu0 0.0
        %8220 = vmatpush1.xpose.msra.mxu0 0.0
        %8221 = vmatprep.subr.mxu0 0.0
        %8222 = vmatpush1.xpose.msra.mxu0 0.0
        %8223 = vmatprep.subr.mxu0 0.0
        %8224 = vmatpush1.xpose.msra.mxu0 0.0
        %8225 = vmatprep.subr.mxu0 0.0
        %8226 = vmatpush1.xpose.msra.mxu0 0.0
        %8227 = vmatprep.subr.mxu0 0.0
        %8228 = vmatpush1.xpose.msra.mxu0 0.0
        %8229 = vmatprep.subr.mxu0 0.0
        %8230 = vmatpush1.xpose.msra.mxu0 0.0
        %8231 = vmatprep.subr.mxu0 0.0
        %8232 = vmatpush1.xpose.msra.mxu0 0.0
        %8233 = vmatprep.subr.mxu0 0.0
        %8234 = vmatpush1.xpose.msra.mxu0 0.0
        %8235 = vmatprep.mubr.f32.mxu0 %v1607
        %8236 = vmatmul.mubr.f32.gmra.mrb[0].mxu0 %v1605
        %v8237 = vpop.f32.mrb[0].mxu0
        %v8238 = vadd.f32 %v8168, %v8237
        %v8239 = vpop.f32.mrb[0].mxu0
        %8240 = vdwg.mxu0
        %8241 = vmatprep.subr.mxu0 %v474
        %8242 = vmatpush1.xpose.msra.mxu0 %v473
        %8243 = vmatprep.subr.mxu0 %v730
        %8244 = vmatpush1.xpose.msra.mxu0 %v729
        %8245 = vmatprep.subr.mxu0 0.0
        %8246 = vmatpush1.xpose.msra.mxu0 0.0
        %8247 = vmatprep.subr.mxu0 0.0
        %8248 = vmatpush1.xpose.msra.mxu0 0.0
        %8249 = vmatprep.subr.mxu0 0.0
        %8250 = vmatpush1.xpose.msra.mxu0 0.0
        %8251 = vmatprep.subr.mxu0 0.0
        %8252 = vmatpush1.xpose.msra.mxu0 0.0
        %8253 = vmatprep.subr.mxu0 0.0
        %8254 = vmatpush1.xpose.msra.mxu0 0.0
        %8255 = vmatprep.subr.mxu0 0.0
        %8256 = vmatpush1.xpose.msra.mxu0 0.0
        %8257 = vmatprep.subr.mxu0 0.0
        %8258 = vmatpush1.xpose.msra.mxu0 0.0
        %8259 = vmatprep.subr.mxu0 0.0
        %8260 = vmatpush1.xpose.msra.mxu0 0.0
        %8261 = vmatprep.subr.mxu0 0.0
        %8262 = vmatpush1.xpose.msra.mxu0 0.0
        %8263 = vmatprep.subr.mxu0 0.0
        %8264 = vmatpush1.xpose.msra.mxu0 0.0
        %8265 = vmatprep.subr.mxu0 0.0
        %8266 = vmatpush1.xpose.msra.mxu0 0.0
        %8267 = vmatprep.subr.mxu0 0.0
        %8268 = vmatpush1.xpose.msra.mxu0 0.0
        %8269 = vmatprep.subr.mxu0 0.0
        %8270 = vmatpush1.xpose.msra.mxu0 0.0
        %8271 = vmatprep.subr.mxu0 0.0
        %8272 = vmatpush1.xpose.msra.mxu0 0.0
        %8273 = vmatprep.subr.mxu0 0.0
        %8274 = vmatpush1.xpose.msra.mxu0 0.0
        %8275 = vmatprep.subr.mxu0 0.0
        %8276 = vmatpush1.xpose.msra.mxu0 0.0
        %8277 = vmatprep.subr.mxu0 0.0
        %8278 = vmatpush1.xpose.msra.mxu0 0.0
        %8279 = vmatprep.subr.mxu0 0.0
        %8280 = vmatpush1.xpose.msra.mxu0 0.0
        %8281 = vmatprep.subr.mxu0 0.0
        %8282 = vmatpush1.xpose.msra.mxu0 0.0
        %8283 = vmatprep.subr.mxu0 0.0
        %8284 = vmatpush1.xpose.msra.mxu0 0.0
        %8285 = vmatprep.subr.mxu0 0.0
        %8286 = vmatpush1.xpose.msra.mxu0 0.0
        %8287 = vmatprep.subr.mxu0 0.0
        %8288 = vmatpush1.xpose.msra.mxu0 0.0
        %8289 = vmatprep.subr.mxu0 0.0
        %8290 = vmatpush1.xpose.msra.mxu0 0.0
        %8291 = vmatprep.subr.mxu0 0.0
        %8292 = vmatpush1.xpose.msra.mxu0 0.0
        %8293 = vmatprep.subr.mxu0 0.0
        %8294 = vmatpush1.xpose.msra.mxu0 0.0
        %8295 = vmatprep.subr.mxu0 0.0
        %8296 = vmatpush1.xpose.msra.mxu0 0.0
        %8297 = vmatprep.subr.mxu0 0.0
        %8298 = vmatpush1.xpose.msra.mxu0 0.0
        %8299 = vmatprep.subr.mxu0 0.0
        %8300 = vmatpush1.xpose.msra.mxu0 0.0
        %8301 = vmatprep.subr.mxu0 0.0
        %8302 = vmatpush1.xpose.msra.mxu0 0.0
        %8303 = vmatprep.subr.mxu0 0.0
        %8304 = vmatpush1.xpose.msra.mxu0 0.0
        %8305 = vmatprep.mubr.f32.mxu0 %v1623
        %8306 = vmatmul.mubr.f32.gmra.mrb[0].mxu0 %v1615
        %v8307 = vpop.f32.mrb[0].mxu0
        %v8308 = vadd.f32 %v8238, %v8307
        %v8309 = vpop.f32.mrb[0].mxu0
        %8310 = vdwg.mxu0
        %8311 = vmatprep.subr.mxu0 %v476
        %8312 = vmatpush1.xpose.msra.mxu0 %v475
        %8313 = vmatprep.subr.mxu0 %v732
        %8314 = vmatpush1.xpose.msra.mxu0 %v731
        %8315 = vmatprep.subr.mxu0 0.0
        %8316 = vmatpush1.xpose.msra.mxu0 0.0
        %8317 = vmatprep.subr.mxu0 0.0
        %8318 = vmatpush1.xpose.msra.mxu0 0.0
        %8319 = vmatprep.subr.mxu0 0.0
        %8320 = vmatpush1.xpose.msra.mxu0 0.0
        %8321 = vmatprep.subr.mxu0 0.0
        %8322 = vmatpush1.xpose.msra.mxu0 0.0
        %8323 = vmatprep.subr.mxu0 0.0
        %8324 = vmatpush1.xpose.msra.mxu0 0.0
        %8325 = vmatprep.subr.mxu0 0.0
        %8326 = vmatpush1.xpose.msra.mxu0 0.0
        %8327 = vmatprep.subr.mxu0 0.0
        %8328 = vmatpush1.xpose.msra.mxu0 0.0
        %8329 = vmatprep.subr.mxu0 0.0
        %8330 = vmatpush1.xpose.msra.mxu0 0.0
        %8331 = vmatprep.subr.mxu0 0.0
        %8332 = vmatpush1.xpose.msra.mxu0 0.0
        %8333 = vmatprep.subr.mxu0 0.0
        %8334 = vmatpush1.xpose.msra.mxu0 0.0
        %8335 = vmatprep.subr.mxu0 0.0
        %8336 = vmatpush1.xpose.msra.mxu0 0.0
        %8337 = vmatprep.subr.mxu0 0.0
        %8338 = vmatpush1.xpose.msra.mxu0 0.0
        %8339 = vmatprep.subr.mxu0 0.0
        %8340 = vmatpush1.xpose.msra.mxu0 0.0
        %8341 = vmatprep.subr.mxu0 0.0
        %8342 = vmatpush1.xpose.msra.mxu0 0.0
        %8343 = vmatprep.subr.mxu0 0.0
        %8344 = vmatpush1.xpose.msra.mxu0 0.0
        %8345 = vmatprep.subr.mxu0 0.0
        %8346 = vmatpush1.xpose.msra.mxu0 0.0
        %8347 = vmatprep.subr.mxu0 0.0
        %8348 = vmatpush1.xpose.msra.mxu0 0.0
        %8349 = vmatprep.subr.mxu0 0.0
        %8350 = vmatpush1.xpose.msra.mxu0 0.0
        %8351 = vmatprep.subr.mxu0 0.0
        %8352 = vmatpush1.xpose.msra.mxu0 0.0
        %8353 = vmatprep.subr.mxu0 0.0
        %8354 = vmatpush1.xpose.msra.mxu0 0.0
        %8355 = vmatprep.subr.mxu0 0.0
        %8356 = vmatpush1.xpose.msra.mxu0 0.0
        %8357 = vmatprep.subr.mxu0 0.0
        %8358 = vmatpush1.xpose.msra.mxu0 0.0
        %8359 = vmatprep.subr.mxu0 0.0
        %8360 = vmatpush1.xpose.msra.mxu0 0.0
        %8361 = vmatprep.subr.mxu0 0.0
        %8362 = vmatpush1.xpose.msra.mxu0 0.0
        %8363 = vmatprep.subr.mxu0 0.0
        %8364 = vmatpush1.xpose.msra.mxu0 0.0
        %8365 = vmatprep.subr.mxu0 0.0
        %8366 = vmatpush1.xpose.msra.mxu0 0.0
        %8367 = vmatprep.subr.mxu0 0.0
        %8368 = vmatpush1.xpose.msra.mxu0 0.0
        %8369 = vmatprep.subr.mxu0 0.0
        %8370 = vmatpush1.xpose.msra.mxu0 0.0
        %8371 = vmatprep.subr.mxu0 0.0
        %8372 = vmatpush1.xpose.msra.mxu0 0.0
        %8373 = vmatprep.subr.mxu0 0.0
        %8374 = vmatpush1.xpose.msra.mxu0 0.0
        %8375 = vmatprep.mubr.f32.mxu0 %v1624
        %8376 = vmatmul.mubr.f32.gmra.mrb[0].mxu0 %v1622
        %v8377 = vpop.f32.mrb[0].mxu0
        %v8378 = vadd.f32 %v8308, %v8377
        %v8379 = vpop.f32.mrb[0].mxu0
        %8380 = vdwg.mxu0
        %8381 = vmatprep.subr.mxu0 %v478
        %8382 = vmatpush1.xpose.msra.mxu0 %v477
        %8383 = vmatprep.subr.mxu0 %v734
        %8384 = vmatpush1.xpose.msra.mxu0 %v733
        %8385 = vmatprep.subr.mxu0 0.0
        %8386 = vmatpush1.xpose.msra.mxu0 0.0
        %8387 = vmatprep.subr.mxu0 0.0
        %8388 = vmatpush1.xpose.msra.mxu0 0.0
        %8389 = vmatprep.subr.mxu0 0.0
        %8390 = vmatpush1.xpose.msra.mxu0 0.0
        %8391 = vmatprep.subr.mxu0 0.0
        %8392 = vmatpush1.xpose.msra.mxu0 0.0
        %8393 = vmatprep.subr.mxu0 0.0
        %8394 = vmatpush1.xpose.msra.mxu0 0.0
        %8395 = vmatprep.subr.mxu0 0.0
        %8396 = vmatpush1.xpose.msra.mxu0 0.0
        %8397 = vmatprep.subr.mxu0 0.0
        %8398 = vmatpush1.xpose.msra.mxu0 0.0
        %8399 = vmatprep.subr.mxu0 0.0
        %8400 = vmatpush1.xpose.msra.mxu0 0.0
        %8401 = vmatprep.subr.mxu0 0.0
        %8402 = vmatpush1.xpose.msra.mxu0 0.0
        %8403 = vmatprep.subr.mxu0 0.0
        %8404 = vmatpush1.xpose.msra.mxu0 0.0
        %8405 = vmatprep.subr.mxu0 0.0
        %8406 = vmatpush1.xpose.msra.mxu0 0.0
        %8407 = vmatprep.subr.mxu0 0.0
        %8408 = vmatpush1.xpose.msra.mxu0 0.0
        %8409 = vmatprep.subr.mxu0 0.0
        %8410 = vmatpush1.xpose.msra.mxu0 0.0
        %8411 = vmatprep.subr.mxu0 0.0
        %8412 = vmatpush1.xpose.msra.mxu0 0.0
        %8413 = vmatprep.subr.mxu0 0.0
        %8414 = vmatpush1.xpose.msra.mxu0 0.0
        %8415 = vmatprep.subr.mxu0 0.0
        %8416 = vmatpush1.xpose.msra.mxu0 0.0
        %8417 = vmatprep.subr.mxu0 0.0
        %8418 = vmatpush1.xpose.msra.mxu0 0.0
        %8419 = vmatprep.subr.mxu0 0.0
        %8420 = vmatpush1.xpose.msra.mxu0 0.0
        %8421 = vmatprep.subr.mxu0 0.0
        %8422 = vmatpush1.xpose.msra.mxu0 0.0
        %8423 = vmatprep.subr.mxu0 0.0
        %8424 = vmatpush1.xpose.msra.mxu0 0.0
        %8425 = vmatprep.subr.mxu0 0.0
        %8426 = vmatpush1.xpose.msra.mxu0 0.0
        %8427 = vmatprep.subr.mxu0 0.0
        %8428 = vmatpush1.xpose.msra.mxu0 0.0
        %8429 = vmatprep.subr.mxu0 0.0
        %8430 = vmatpush1.xpose.msra.mxu0 0.0
        %8431 = vmatprep.subr.mxu0 0.0
        %8432 = vmatpush1.xpose.msra.mxu0 0.0
        %8433 = vmatprep.subr.mxu0 0.0
        %8434 = vmatpush1.xpose.msra.mxu0 0.0
        %8435 = vmatprep.subr.mxu0 0.0
        %8436 = vmatpush1.xpose.msra.mxu0 0.0
        %8437 = vmatprep.subr.mxu0 0.0
        %8438 = vmatpush1.xpose.msra.mxu0 0.0
        %8439 = vmatprep.subr.mxu0 0.0
        %8440 = vmatpush1.xpose.msra.mxu0 0.0
        %8441 = vmatprep.subr.mxu0 0.0
        %8442 = vmatpush1.xpose.msra.mxu0 0.0
        %8443 = vmatprep.subr.mxu0 0.0
        %8444 = vmatpush1.xpose.msra.mxu0 0.0
        %8445 = vmatprep.mubr.f32.mxu0 %v1640
        %8446 = vmatmul.mubr.f32.gmra.mrb[0].mxu0 %v1632
        %v8447 = vpop.f32.mrb[0].mxu0
        %v8448 = vadd.f32 %v8378, %v8447
        %v8449 = vpop.f32.mrb[0].mxu0
        %8450 = vdwg.mxu0
        %8451 = vmatprep.subr.mxu0 %v480
        %8452 = vmatpush1.xpose.msra.mxu0 %v479
        %8453 = vmatprep.subr.mxu0 %v736
        %8454 = vmatpush1.xpose.msra.mxu0 %v735
        %8455 = vmatprep.subr.mxu0 0.0
        %8456 = vmatpush1.xpose.msra.mxu0 0.0
        %8457 = vmatprep.subr.mxu0 0.0
        %8458 = vmatpush1.xpose.msra.mxu0 0.0
        %8459 = vmatprep.subr.mxu0 0.0
        %8460 = vmatpush1.xpose.msra.mxu0 0.0
        %8461 = vmatprep.subr.mxu0 0.0
        %8462 = vmatpush1.xpose.msra.mxu0 0.0
        %8463 = vmatprep.subr.mxu0 0.0
        %8464 = vmatpush1.xpose.msra.mxu0 0.0
        %8465 = vmatprep.subr.mxu0 0.0
        %8466 = vmatpush1.xpose.msra.mxu0 0.0
        %8467 = vmatprep.subr.mxu0 0.0
        %8468 = vmatpush1.xpose.msra.mxu0 0.0
        %8469 = vmatprep.subr.mxu0 0.0
        %8470 = vmatpush1.xpose.msra.mxu0 0.0
        %8471 = vmatprep.subr.mxu0 0.0
        %8472 = vmatpush1.xpose.msra.mxu0 0.0
        %8473 = vmatprep.subr.mxu0 0.0
        %8474 = vmatpush1.xpose.msra.mxu0 0.0
        %8475 = vmatprep.subr.mxu0 0.0
        %8476 = vmatpush1.xpose.msra.mxu0 0.0
        %8477 = vmatprep.subr.mxu0 0.0
        %8478 = vmatpush1.xpose.msra.mxu0 0.0
        %8479 = vmatprep.subr.mxu0 0.0
        %8480 = vmatpush1.xpose.msra.mxu0 0.0
        %8481 = vmatprep.subr.mxu0 0.0
        %8482 = vmatpush1.xpose.msra.mxu0 0.0
        %8483 = vmatprep.subr.mxu0 0.0
        %8484 = vmatpush1.xpose.msra.mxu0 0.0
        %8485 = vmatprep.subr.mxu0 0.0
        %8486 = vmatpush1.xpose.msra.mxu0 0.0
        %8487 = vmatprep.subr.mxu0 0.0
        %8488 = vmatpush1.xpose.msra.mxu0 0.0
        %8489 = vmatprep.subr.mxu0 0.0
        %8490 = vmatpush1.xpose.msra.mxu0 0.0
        %8491 = vmatprep.subr.mxu0 0.0
        %8492 = vmatpush1.xpose.msra.mxu0 0.0
        %8493 = vmatprep.subr.mxu0 0.0
        %8494 = vmatpush1.xpose.msra.mxu0 0.0
        %8495 = vmatprep.subr.mxu0 0.0
        %8496 = vmatpush1.xpose.msra.mxu0 0.0
        %8497 = vmatprep.subr.mxu0 0.0
        %8498 = vmatpush1.xpose.msra.mxu0 0.0
        %8499 = vmatprep.subr.mxu0 0.0
        %8500 = vmatpush1.xpose.msra.mxu0 0.0
        %8501 = vmatprep.subr.mxu0 0.0
        %8502 = vmatpush1.xpose.msra.mxu0 0.0
        %8503 = vmatprep.subr.mxu0 0.0
        %8504 = vmatpush1.xpose.msra.mxu0 0.0
        %8505 = vmatprep.subr.mxu0 0.0
        %8506 = vmatpush1.xpose.msra.mxu0 0.0
        %8507 = vmatprep.subr.mxu0 0.0
        %8508 = vmatpush1.xpose.msra.mxu0 0.0
        %8509 = vmatprep.subr.mxu0 0.0
        %8510 = vmatpush1.xpose.msra.mxu0 0.0
        %8511 = vmatprep.subr.mxu0 0.0
        %8512 = vmatpush1.xpose.msra.mxu0 0.0
        %8513 = vmatprep.subr.mxu0 0.0
        %8514 = vmatpush1.xpose.msra.mxu0 0.0
        %8515 = vmatprep.mubr.f32.mxu0 %v1641
        %8516 = vmatmul.mubr.f32.gmra.mrb[0].mxu0 %v1639
        %v8517 = vpop.f32.mrb[0].mxu0
        %v8518 = vadd.f32 %v8448, %v8517
        %v8519 = vpop.f32.mrb[0].mxu0
        %8520 = vdwg.mxu0
        %8521 = vmatprep.subr.mxu0 %v482
        %8522 = vmatpush1.xpose.msra.mxu0 %v481
        %8523 = vmatprep.subr.mxu0 %v738
        %8524 = vmatpush1.xpose.msra.mxu0 %v737
        %8525 = vmatprep.subr.mxu0 0.0
        %8526 = vmatpush1.xpose.msra.mxu0 0.0
        %8527 = vmatprep.subr.mxu0 0.0
        %8528 = vmatpush1.xpose.msra.mxu0 0.0
        %8529 = vmatprep.subr.mxu0 0.0
        %8530 = vmatpush1.xpose.msra.mxu0 0.0
        %8531 = vmatprep.subr.mxu0 0.0
        %8532 = vmatpush1.xpose.msra.mxu0 0.0
        %8533 = vmatprep.subr.mxu0 0.0
        %8534 = vmatpush1.xpose.msra.mxu0 0.0
        %8535 = vmatprep.subr.mxu0 0.0
        %8536 = vmatpush1.xpose.msra.mxu0 0.0
        %8537 = vmatprep.subr.mxu0 0.0
        %8538 = vmatpush1.xpose.msra.mxu0 0.0
        %8539 = vmatprep.subr.mxu0 0.0
        %8540 = vmatpush1.xpose.msra.mxu0 0.0
        %8541 = vmatprep.subr.mxu0 0.0
        %8542 = vmatpush1.xpose.msra.mxu0 0.0
        %8543 = vmatprep.subr.mxu0 0.0
        %8544 = vmatpush1.xpose.msra.mxu0 0.0
        %8545 = vmatprep.subr.mxu0 0.0
        %8546 = vmatpush1.xpose.msra.mxu0 0.0
        %8547 = vmatprep.subr.mxu0 0.0
        %8548 = vmatpush1.xpose.msra.mxu0 0.0
        %8549 = vmatprep.subr.mxu0 0.0
        %8550 = vmatpush1.xpose.msra.mxu0 0.0
        %8551 = vmatprep.subr.mxu0 0.0
        %8552 = vmatpush1.xpose.msra.mxu0 0.0
        %8553 = vmatprep.subr.mxu0 0.0
        %8554 = vmatpush1.xpose.msra.mxu0 0.0
        %8555 = vmatprep.subr.mxu0 0.0
        %8556 = vmatpush1.xpose.msra.mxu0 0.0
        %8557 = vmatprep.subr.mxu0 0.0
        %8558 = vmatpush1.xpose.msra.mxu0 0.0
        %8559 = vmatprep.subr.mxu0 0.0
        %8560 = vmatpush1.xpose.msra.mxu0 0.0
        %8561 = vmatprep.subr.mxu0 0.0
        %8562 = vmatpush1.xpose.msra.mxu0 0.0
        %8563 = vmatprep.subr.mxu0 0.0
        %8564 = vmatpush1.xpose.msra.mxu0 0.0
        %8565 = vmatprep.subr.mxu0 0.0
        %8566 = vmatpush1.xpose.msra.mxu0 0.0
        %8567 = vmatprep.subr.mxu0 0.0
        %8568 = vmatpush1.xpose.msra.mxu0 0.0
        %8569 = vmatprep.subr.mxu0 0.0
        %8570 = vmatpush1.xpose.msra.mxu0 0.0
        %8571 = vmatprep.subr.mxu0 0.0
        %8572 = vmatpush1.xpose.msra.mxu0 0.0
        %8573 = vmatprep.subr.mxu0 0.0
        %8574 = vmatpush1.xpose.msra.mxu0 0.0
        %8575 = vmatprep.subr.mxu0 0.0
        %8576 = vmatpush1.xpose.msra.mxu0 0.0
        %8577 = vmatprep.subr.mxu0 0.0
        %8578 = vmatpush1.xpose.msra.mxu0 0.0
        %8579 = vmatprep.subr.mxu0 0.0
        %8580 = vmatpush1.xpose.msra.mxu0 0.0
        %8581 = vmatprep.subr.mxu0 0.0
        %8582 = vmatpush1.xpose.msra.mxu0 0.0
        %8583 = vmatprep.subr.mxu0 0.0
        %8584 = vmatpush1.xpose.msra.mxu0 0.0
        %8585 = vmatprep.mubr.f32.mxu0 %v1657
        %8586 = vmatmul.mubr.f32.gmra.mrb[0].mxu0 %v1649
        %v8587 = vpop.f32.mrb[0].mxu0
        %v8588 = vadd.f32 %v8518, %v8587
        %v8589 = vpop.f32.mrb[0].mxu0
        %8590 = vdwg.mxu0
        %8591 = vmatprep.subr.mxu0 %v484
        %8592 = vmatpush1.xpose.msra.mxu0 %v483
        %8593 = vmatprep.subr.mxu0 %v740
        %8594 = vmatpush1.xpose.msra.mxu0 %v739
        %8595 = vmatprep.subr.mxu0 0.0
        %8596 = vmatpush1.xpose.msra.mxu0 0.0
        %8597 = vmatprep.subr.mxu0 0.0
        %8598 = vmatpush1.xpose.msra.mxu0 0.0
        %8599 = vmatprep.subr.mxu0 0.0
        %8600 = vmatpush1.xpose.msra.mxu0 0.0
        %8601 = vmatprep.subr.mxu0 0.0
        %8602 = vmatpush1.xpose.msra.mxu0 0.0
        %8603 = vmatprep.subr.mxu0 0.0
        %8604 = vmatpush1.xpose.msra.mxu0 0.0
        %8605 = vmatprep.subr.mxu0 0.0
        %8606 = vmatpush1.xpose.msra.mxu0 0.0
        %8607 = vmatprep.subr.mxu0 0.0
        %8608 = vmatpush1.xpose.msra.mxu0 0.0
        %8609 = vmatprep.subr.mxu0 0.0
        %8610 = vmatpush1.xpose.msra.mxu0 0.0
        %8611 = vmatprep.subr.mxu0 0.0
        %8612 = vmatpush1.xpose.msra.mxu0 0.0
        %8613 = vmatprep.subr.mxu0 0.0
        %8614 = vmatpush1.xpose.msra.mxu0 0.0
        %8615 = vmatprep.subr.mxu0 0.0
        %8616 = vmatpush1.xpose.msra.mxu0 0.0
        %8617 = vmatprep.subr.mxu0 0.0
        %8618 = vmatpush1.xpose.msra.mxu0 0.0
        %8619 = vmatprep.subr.mxu0 0.0
        %8620 = vmatpush1.xpose.msra.mxu0 0.0
        %8621 = vmatprep.subr.mxu0 0.0
        %8622 = vmatpush1.xpose.msra.mxu0 0.0
        %8623 = vmatprep.subr.mxu0 0.0
        %8624 = vmatpush1.xpose.msra.mxu0 0.0
        %8625 = vmatprep.subr.mxu0 0.0
        %8626 = vmatpush1.xpose.msra.mxu0 0.0
        %8627 = vmatprep.subr.mxu0 0.0
        %8628 = vmatpush1.xpose.msra.mxu0 0.0
        %8629 = vmatprep.subr.mxu0 0.0
        %8630 = vmatpush1.xpose.msra.mxu0 0.0
        %8631 = vmatprep.subr.mxu0 0.0
        %8632 = vmatpush1.xpose.msra.mxu0 0.0
        %8633 = vmatprep.subr.mxu0 0.0
        %8634 = vmatpush1.xpose.msra.mxu0 0.0
        %8635 = vmatprep.subr.mxu0 0.0
        %8636 = vmatpush1.xpose.msra.mxu0 0.0
        %8637 = vmatprep.subr.mxu0 0.0
        %8638 = vmatpush1.xpose.msra.mxu0 0.0
        %8639 = vmatprep.subr.mxu0 0.0
        %8640 = vmatpush1.xpose.msra.mxu0 0.0
        %8641 = vmatprep.subr.mxu0 0.0
        %8642 = vmatpush1.xpose.msra.mxu0 0.0
        %8643 = vmatprep.subr.mxu0 0.0
        %8644 = vmatpush1.xpose.msra.mxu0 0.0
        %8645 = vmatprep.subr.mxu0 0.0
        %8646 = vmatpush1.xpose.msra.mxu0 0.0
        %8647 = vmatprep.subr.mxu0 0.0
        %8648 = vmatpush1.xpose.msra.mxu0 0.0
        %8649 = vmatprep.subr.mxu0 0.0
        %8650 = vmatpush1.xpose.msra.mxu0 0.0
        %8651 = vmatprep.subr.mxu0 0.0
        %8652 = vmatpush1.xpose.msra.mxu0 0.0
        %8653 = vmatprep.subr.mxu0 0.0
        %8654 = vmatpush1.xpose.msra.mxu0 0.0
        %8655 = vmatprep.mubr.f32.mxu0 %v1658
        %8656 = vmatmul.mubr.f32.gmra.mrb[0].mxu0 %v1656
        %v8657 = vpop.f32.mrb[0].mxu0
        %v8658 = vadd.f32 %v8588, %v8657
        %v8659 = vpop.f32.mrb[0].mxu0
        %8660 = vdwg.mxu0
        %8661 = vmatprep.subr.mxu0 %v486
        %8662 = vmatpush1.xpose.msra.mxu0 %v485
        %8663 = vmatprep.subr.mxu0 %v742
        %8664 = vmatpush1.xpose.msra.mxu0 %v741
        %8665 = vmatprep.subr.mxu0 0.0
        %8666 = vmatpush1.xpose.msra.mxu0 0.0
        %8667 = vmatprep.subr.mxu0 0.0
        %8668 = vmatpush1.xpose.msra.mxu0 0.0
        %8669 = vmatprep.subr.mxu0 0.0
        %8670 = vmatpush1.xpose.msra.mxu0 0.0
        %8671 = vmatprep.subr.mxu0 0.0
        %8672 = vmatpush1.xpose.msra.mxu0 0.0
        %8673 = vmatprep.subr.mxu0 0.0
        %8674 = vmatpush1.xpose.msra.mxu0 0.0
        %8675 = vmatprep.subr.mxu0 0.0
        %8676 = vmatpush1.xpose.msra.mxu0 0.0
        %8677 = vmatprep.subr.mxu0 0.0
        %8678 = vmatpush1.xpose.msra.mxu0 0.0
        %8679 = vmatprep.subr.mxu0 0.0
        %8680 = vmatpush1.xpose.msra.mxu0 0.0
        %8681 = vmatprep.subr.mxu0 0.0
        %8682 = vmatpush1.xpose.msra.mxu0 0.0
        %8683 = vmatprep.subr.mxu0 0.0
        %8684 = vmatpush1.xpose.msra.mxu0 0.0
        %8685 = vmatprep.subr.mxu0 0.0
        %8686 = vmatpush1.xpose.msra.mxu0 0.0
        %8687 = vmatprep.subr.mxu0 0.0
        %8688 = vmatpush1.xpose.msra.mxu0 0.0
        %8689 = vmatprep.subr.mxu0 0.0
        %8690 = vmatpush1.xpose.msra.mxu0 0.0
        %8691 = vmatprep.subr.mxu0 0.0
        %8692 = vmatpush1.xpose.msra.mxu0 0.0
        %8693 = vmatprep.subr.mxu0 0.0
        %8694 = vmatpush1.xpose.msra.mxu0 0.0
        %8695 = vmatprep.subr.mxu0 0.0
        %8696 = vmatpush1.xpose.msra.mxu0 0.0
        %8697 = vmatprep.subr.mxu0 0.0
        %8698 = vmatpush1.xpose.msra.mxu0 0.0
        %8699 = vmatprep.subr.mxu0 0.0
        %8700 = vmatpush1.xpose.msra.mxu0 0.0
        %8701 = vmatprep.subr.mxu0 0.0
        %8702 = vmatpush1.xpose.msra.mxu0 0.0
        %8703 = vmatprep.subr.mxu0 0.0
        %8704 = vmatpush1.xpose.msra.mxu0 0.0
        %8705 = vmatprep.subr.mxu0 0.0
        %8706 = vmatpush1.xpose.msra.mxu0 0.0
        %8707 = vmatprep.subr.mxu0 0.0
        %8708 = vmatpush1.xpose.msra.mxu0 0.0
        %8709 = vmatprep.subr.mxu0 0.0
        %8710 = vmatpush1.xpose.msra.mxu0 0.0
        %8711 = vmatprep.subr.mxu0 0.0
        %8712 = vmatpush1.xpose.msra.mxu0 0.0
        %8713 = vmatprep.subr.mxu0 0.0
        %8714 = vmatpush1.xpose.msra.mxu0 0.0
        %8715 = vmatprep.subr.mxu0 0.0
        %8716 = vmatpush1.xpose.msra.mxu0 0.0
        %8717 = vmatprep.subr.mxu0 0.0
        %8718 = vmatpush1.xpose.msra.mxu0 0.0
        %8719 = vmatprep.subr.mxu0 0.0
        %8720 = vmatpush1.xpose.msra.mxu0 0.0
        %8721 = vmatprep.subr.mxu0 0.0
        %8722 = vmatpush1.xpose.msra.mxu0 0.0
        %8723 = vmatprep.subr.mxu0 0.0
        %8724 = vmatpush1.xpose.msra.mxu0 0.0
        %8725 = vmatprep.mubr.f32.mxu0 %v1674
        %8726 = vmatmul.mubr.f32.gmra.mrb[0].mxu0 %v1666
        %v8727 = vpop.f32.mrb[0].mxu0
        %v8728 = vadd.f32 %v8658, %v8727
        %v8729 = vpop.f32.mrb[0].mxu0
        %8730 = vdwg.mxu0
        %8731 = vmatprep.subr.mxu0 %v488
        %8732 = vmatpush1.xpose.msra.mxu0 %v487
        %8733 = vmatprep.subr.mxu0 %v744
        %8734 = vmatpush1.xpose.msra.mxu0 %v743
        %8735 = vmatprep.subr.mxu0 0.0
        %8736 = vmatpush1.xpose.msra.mxu0 0.0
        %8737 = vmatprep.subr.mxu0 0.0
        %8738 = vmatpush1.xpose.msra.mxu0 0.0
        %8739 = vmatprep.subr.mxu0 0.0
        %8740 = vmatpush1.xpose.msra.mxu0 0.0
        %8741 = vmatprep.subr.mxu0 0.0
        %8742 = vmatpush1.xpose.msra.mxu0 0.0
        %8743 = vmatprep.subr.mxu0 0.0
        %8744 = vmatpush1.xpose.msra.mxu0 0.0
        %8745 = vmatprep.subr.mxu0 0.0
        %8746 = vmatpush1.xpose.msra.mxu0 0.0
        %8747 = vmatprep.subr.mxu0 0.0
        %8748 = vmatpush1.xpose.msra.mxu0 0.0
        %8749 = vmatprep.subr.mxu0 0.0
        %8750 = vmatpush1.xpose.msra.mxu0 0.0
        %8751 = vmatprep.subr.mxu0 0.0
        %8752 = vmatpush1.xpose.msra.mxu0 0.0
        %8753 = vmatprep.subr.mxu0 0.0
        %8754 = vmatpush1.xpose.msra.mxu0 0.0
        %8755 = vmatprep.subr.mxu0 0.0
        %8756 = vmatpush1.xpose.msra.mxu0 0.0
        %8757 = vmatprep.subr.mxu0 0.0
        %8758 = vmatpush1.xpose.msra.mxu0 0.0
        %8759 = vmatprep.subr.mxu0 0.0
        %8760 = vmatpush1.xpose.msra.mxu0 0.0
        %8761 = vmatprep.subr.mxu0 0.0
        %8762 = vmatpush1.xpose.msra.mxu0 0.0
        %8763 = vmatprep.subr.mxu0 0.0
        %8764 = vmatpush1.xpose.msra.mxu0 0.0
        %8765 = vmatprep.subr.mxu0 0.0
        %8766 = vmatpush1.xpose.msra.mxu0 0.0
        %8767 = vmatprep.subr.mxu0 0.0
        %8768 = vmatpush1.xpose.msra.mxu0 0.0
        %8769 = vmatprep.subr.mxu0 0.0
        %8770 = vmatpush1.xpose.msra.mxu0 0.0
        %8771 = vmatprep.subr.mxu0 0.0
        %8772 = vmatpush1.xpose.msra.mxu0 0.0
        %8773 = vmatprep.subr.mxu0 0.0
        %8774 = vmatpush1.xpose.msra.mxu0 0.0
        %8775 = vmatprep.subr.mxu0 0.0
        %8776 = vmatpush1.xpose.msra.mxu0 0.0
        %8777 = vmatprep.subr.mxu0 0.0
        %8778 = vmatpush1.xpose.msra.mxu0 0.0
        %8779 = vmatprep.subr.mxu0 0.0
        %8780 = vmatpush1.xpose.msra.mxu0 0.0
        %8781 = vmatprep.subr.mxu0 0.0
        %8782 = vmatpush1.xpose.msra.mxu0 0.0
        %8783 = vmatprep.subr.mxu0 0.0
        %8784 = vmatpush1.xpose.msra.mxu0 0.0
        %8785 = vmatprep.subr.mxu0 0.0
        %8786 = vmatpush1.xpose.msra.mxu0 0.0
        %8787 = vmatprep.subr.mxu0 0.0
        %8788 = vmatpush1.xpose.msra.mxu0 0.0
        %8789 = vmatprep.subr.mxu0 0.0
        %8790 = vmatpush1.xpose.msra.mxu0 0.0
        %8791 = vmatprep.subr.mxu0 0.0
        %8792 = vmatpush1.xpose.msra.mxu0 0.0
        %8793 = vmatprep.subr.mxu0 0.0
        %8794 = vmatpush1.xpose.msra.mxu0 0.0
        %8795 = vmatprep.mubr.f32.mxu0 %v1675
        %8796 = vmatmul.mubr.f32.gmra.mrb[0].mxu0 %v1673
        %v8797 = vpop.f32.mrb[0].mxu0
        %v8798 = vadd.f32 %v8728, %v8797
        %v8799 = vpop.f32.mrb[0].mxu0
        %8800 = vdwg.mxu0
        %8801 = vmatprep.subr.mxu0 %v490
        %8802 = vmatpush1.xpose.msra.mxu0 %v489
        %8803 = vmatprep.subr.mxu0 %v746
        %8804 = vmatpush1.xpose.msra.mxu0 %v745
        %8805 = vmatprep.subr.mxu0 0.0
        %8806 = vmatpush1.xpose.msra.mxu0 0.0
        %8807 = vmatprep.subr.mxu0 0.0
        %8808 = vmatpush1.xpose.msra.mxu0 0.0
        %8809 = vmatprep.subr.mxu0 0.0
        %8810 = vmatpush1.xpose.msra.mxu0 0.0
        %8811 = vmatprep.subr.mxu0 0.0
        %8812 = vmatpush1.xpose.msra.mxu0 0.0
        %8813 = vmatprep.subr.mxu0 0.0
        %8814 = vmatpush1.xpose.msra.mxu0 0.0
        %8815 = vmatprep.subr.mxu0 0.0
        %8816 = vmatpush1.xpose.msra.mxu0 0.0
        %8817 = vmatprep.subr.mxu0 0.0
        %8818 = vmatpush1.xpose.msra.mxu0 0.0
        %8819 = vmatprep.subr.mxu0 0.0
        %8820 = vmatpush1.xpose.msra.mxu0 0.0
        %8821 = vmatprep.subr.mxu0 0.0
        %8822 = vmatpush1.xpose.msra.mxu0 0.0
        %8823 = vmatprep.subr.mxu0 0.0
        %8824 = vmatpush1.xpose.msra.mxu0 0.0
        %8825 = vmatprep.subr.mxu0 0.0
        %8826 = vmatpush1.xpose.msra.mxu0 0.0
        %8827 = vmatprep.subr.mxu0 0.0
        %8828 = vmatpush1.xpose.msra.mxu0 0.0
        %8829 = vmatprep.subr.mxu0 0.0
        %8830 = vmatpush1.xpose.msra.mxu0 0.0
        %8831 = vmatprep.subr.mxu0 0.0
        %8832 = vmatpush1.xpose.msra.mxu0 0.0
        %8833 = vmatprep.subr.mxu0 0.0
        %8834 = vmatpush1.xpose.msra.mxu0 0.0
        %8835 = vmatprep.subr.mxu0 0.0
        %8836 = vmatpush1.xpose.msra.mxu0 0.0
        %8837 = vmatprep.subr.mxu0 0.0
        %8838 = vmatpush1.xpose.msra.mxu0 0.0
        %8839 = vmatprep.subr.mxu0 0.0
        %8840 = vmatpush1.xpose.msra.mxu0 0.0
        %8841 = vmatprep.subr.mxu0 0.0
        %8842 = vmatpush1.xpose.msra.mxu0 0.0
        %8843 = vmatprep.subr.mxu0 0.0
        %8844 = vmatpush1.xpose.msra.mxu0 0.0
        %8845 = vmatprep.subr.mxu0 0.0
        %8846 = vmatpush1.xpose.msra.mxu0 0.0
        %8847 = vmatprep.subr.mxu0 0.0
        %8848 = vmatpush1.xpose.msra.mxu0 0.0
        %8849 = vmatprep.subr.mxu0 0.0
        %8850 = vmatpush1.xpose.msra.mxu0 0.0
        %8851 = vmatprep.subr.mxu0 0.0
        %8852 = vmatpush1.xpose.msra.mxu0 0.0
        %8853 = vmatprep.subr.mxu0 0.0
        %8854 = vmatpush1.xpose.msra.mxu0 0.0
        %8855 = vmatprep.subr.mxu0 0.0
        %8856 = vmatpush1.xpose.msra.mxu0 0.0
        %8857 = vmatprep.subr.mxu0 0.0
        %8858 = vmatpush1.xpose.msra.mxu0 0.0
        %8859 = vmatprep.subr.mxu0 0.0
        %8860 = vmatpush1.xpose.msra.mxu0 0.0
        %8861 = vmatprep.subr.mxu0 0.0
        %8862 = vmatpush1.xpose.msra.mxu0 0.0
        %8863 = vmatprep.subr.mxu0 0.0
        %8864 = vmatpush1.xpose.msra.mxu0 0.0
        %8865 = vmatprep.mubr.f32.mxu0 %v1691
        %8866 = vmatmul.mubr.f32.gmra.mrb[0].mxu0 %v1683
        %v8867 = vpop.f32.mrb[0].mxu0
        %v8868 = vadd.f32 %v8798, %v8867
        %v8869 = vpop.f32.mrb[0].mxu0
        %8870 = vdwg.mxu0
        %8871 = vmatprep.subr.mxu0 %v492
        %8872 = vmatpush1.xpose.msra.mxu0 %v491
        %8873 = vmatprep.subr.mxu0 %v748
        %8874 = vmatpush1.xpose.msra.mxu0 %v747
        %8875 = vmatprep.subr.mxu0 0.0
        %8876 = vmatpush1.xpose.msra.mxu0 0.0
        %8877 = vmatprep.subr.mxu0 0.0
        %8878 = vmatpush1.xpose.msra.mxu0 0.0
        %8879 = vmatprep.subr.mxu0 0.0
        %8880 = vmatpush1.xpose.msra.mxu0 0.0
        %8881 = vmatprep.subr.mxu0 0.0
        %8882 = vmatpush1.xpose.msra.mxu0 0.0
        %8883 = vmatprep.subr.mxu0 0.0
        %8884 = vmatpush1.xpose.msra.mxu0 0.0
        %8885 = vmatprep.subr.mxu0 0.0
        %8886 = vmatpush1.xpose.msra.mxu0 0.0
        %8887 = vmatprep.subr.mxu0 0.0
        %8888 = vmatpush1.xpose.msra.mxu0 0.0
        %8889 = vmatprep.subr.mxu0 0.0
        %8890 = vmatpush1.xpose.msra.mxu0 0.0
        %8891 = vmatprep.subr.mxu0 0.0
        %8892 = vmatpush1.xpose.msra.mxu0 0.0
        %8893 = vmatprep.subr.mxu0 0.0
        %8894 = vmatpush1.xpose.msra.mxu0 0.0
        %8895 = vmatprep.subr.mxu0 0.0
        %8896 = vmatpush1.xpose.msra.mxu0 0.0
        %8897 = vmatprep.subr.mxu0 0.0
        %8898 = vmatpush1.xpose.msra.mxu0 0.0
        %8899 = vmatprep.subr.mxu0 0.0
        %8900 = vmatpush1.xpose.msra.mxu0 0.0
        %8901 = vmatprep.subr.mxu0 0.0
        %8902 = vmatpush1.xpose.msra.mxu0 0.0
        %8903 = vmatprep.subr.mxu0 0.0
        %8904 = vmatpush1.xpose.msra.mxu0 0.0
        %8905 = vmatprep.subr.mxu0 0.0
        %8906 = vmatpush1.xpose.msra.mxu0 0.0
        %8907 = vmatprep.subr.mxu0 0.0
        %8908 = vmatpush1.xpose.msra.mxu0 0.0
        %8909 = vmatprep.subr.mxu0 0.0
        %8910 = vmatpush1.xpose.msra.mxu0 0.0
        %8911 = vmatprep.subr.mxu0 0.0
        %8912 = vmatpush1.xpose.msra.mxu0 0.0
        %8913 = vmatprep.subr.mxu0 0.0
        %8914 = vmatpush1.xpose.msra.mxu0 0.0
        %8915 = vmatprep.subr.mxu0 0.0
        %8916 = vmatpush1.xpose.msra.mxu0 0.0
        %8917 = vmatprep.subr.mxu0 0.0
        %8918 = vmatpush1.xpose.msra.mxu0 0.0
        %8919 = vmatprep.subr.mxu0 0.0
        %8920 = vmatpush1.xpose.msra.mxu0 0.0
        %8921 = vmatprep.subr.mxu0 0.0
        %8922 = vmatpush1.xpose.msra.mxu0 0.0
        %8923 = vmatprep.subr.mxu0 0.0
        %8924 = vmatpush1.xpose.msra.mxu0 0.0
        %8925 = vmatprep.subr.mxu0 0.0
        %8926 = vmatpush1.xpose.msra.mxu0 0.0
        %8927 = vmatprep.subr.mxu0 0.0
        %8928 = vmatpush1.xpose.msra.mxu0 0.0
        %8929 = vmatprep.subr.mxu0 0.0
        %8930 = vmatpush1.xpose.msra.mxu0 0.0
        %8931 = vmatprep.subr.mxu0 0.0
        %8932 = vmatpush1.xpose.msra.mxu0 0.0
        %8933 = vmatprep.subr.mxu0 0.0
        %8934 = vmatpush1.xpose.msra.mxu0 0.0
        %8935 = vmatprep.mubr.f32.mxu0 %v1692
        %8936 = vmatmul.mubr.f32.gmra.mrb[0].mxu0 %v1690
        %v8937 = vpop.f32.mrb[0].mxu0
        %v8938 = vadd.f32 %v8868, %v8937
        %v8939 = vpop.f32.mrb[0].mxu0
        %8940 = vdwg.mxu0
        %8941 = vmatprep.subr.mxu0 %v494
        %8942 = vmatpush1.xpose.msra.mxu0 %v493
        %8943 = vmatprep.subr.mxu0 %v750
        %8944 = vmatpush1.xpose.msra.mxu0 %v749
        %8945 = vmatprep.subr.mxu0 0.0
        %8946 = vmatpush1.xpose.msra.mxu0 0.0
        %8947 = vmatprep.subr.mxu0 0.0
        %8948 = vmatpush1.xpose.msra.mxu0 0.0
        %8949 = vmatprep.subr.mxu0 0.0
        %8950 = vmatpush1.xpose.msra.mxu0 0.0
        %8951 = vmatprep.subr.mxu0 0.0
        %8952 = vmatpush1.xpose.msra.mxu0 0.0
        %8953 = vmatprep.subr.mxu0 0.0
        %8954 = vmatpush1.xpose.msra.mxu0 0.0
        %8955 = vmatprep.subr.mxu0 0.0
        %8956 = vmatpush1.xpose.msra.mxu0 0.0
        %8957 = vmatprep.subr.mxu0 0.0
        %8958 = vmatpush1.xpose.msra.mxu0 0.0
        %8959 = vmatprep.subr.mxu0 0.0
        %8960 = vmatpush1.xpose.msra.mxu0 0.0
        %8961 = vmatprep.subr.mxu0 0.0
        %8962 = vmatpush1.xpose.msra.mxu0 0.0
        %8963 = vmatprep.subr.mxu0 0.0
        %8964 = vmatpush1.xpose.msra.mxu0 0.0
        %8965 = vmatprep.subr.mxu0 0.0
        %8966 = vmatpush1.xpose.msra.mxu0 0.0
        %8967 = vmatprep.subr.mxu0 0.0
        %8968 = vmatpush1.xpose.msra.mxu0 0.0
        %8969 = vmatprep.subr.mxu0 0.0
        %8970 = vmatpush1.xpose.msra.mxu0 0.0
        %8971 = vmatprep.subr.mxu0 0.0
        %8972 = vmatpush1.xpose.msra.mxu0 0.0
        %8973 = vmatprep.subr.mxu0 0.0
        %8974 = vmatpush1.xpose.msra.mxu0 0.0
        %8975 = vmatprep.subr.mxu0 0.0
        %8976 = vmatpush1.xpose.msra.mxu0 0.0
        %8977 = vmatprep.subr.mxu0 0.0
        %8978 = vmatpush1.xpose.msra.mxu0 0.0
        %8979 = vmatprep.subr.mxu0 0.0
        %8980 = vmatpush1.xpose.msra.mxu0 0.0
        %8981 = vmatprep.subr.mxu0 0.0
        %8982 = vmatpush1.xpose.msra.mxu0 0.0
        %8983 = vmatprep.subr.mxu0 0.0
        %8984 = vmatpush1.xpose.msra.mxu0 0.0
        %8985 = vmatprep.subr.mxu0 0.0
        %8986 = vmatpush1.xpose.msra.mxu0 0.0
        %8987 = vmatprep.subr.mxu0 0.0
        %8988 = vmatpush1.xpose.msra.mxu0 0.0
        %8989 = vmatprep.subr.mxu0 0.0
        %8990 = vmatpush1.xpose.msra.mxu0 0.0
        %8991 = vmatprep.subr.mxu0 0.0
        %8992 = vmatpush1.xpose.msra.mxu0 0.0
        %8993 = vmatprep.subr.mxu0 0.0
        %8994 = vmatpush1.xpose.msra.mxu0 0.0
        %8995 = vmatprep.subr.mxu0 0.0
        %8996 = vmatpush1.xpose.msra.mxu0 0.0
        %8997 = vmatprep.subr.mxu0 0.0
        %8998 = vmatpush1.xpose.msra.mxu0 0.0
        %8999 = vmatprep.subr.mxu0 0.0
        %9000 = vmatpush1.xpose.msra.mxu0 0.0
        %9001 = vmatprep.subr.mxu0 0.0
        %9002 = vmatpush1.xpose.msra.mxu0 0.0
        %9003 = vmatprep.subr.mxu0 0.0
        %9004 = vmatpush1.xpose.msra.mxu0 0.0
        %9005 = vmatprep.mubr.f32.mxu0 %v1708
        %9006 = vmatmul.mubr.f32.gmra.mrb[0].mxu0 %v1700
        %v9007 = vpop.f32.mrb[0].mxu0
        %v9008 = vadd.f32 %v8938, %v9007
        %v9009 = vpop.f32.mrb[0].mxu0
        %9010 = vdwg.mxu0
        %9011 = vmatprep.subr.mxu0 %v496
        %9012 = vmatpush1.xpose.msra.mxu0 %v495
        %9013 = vmatprep.subr.mxu0 %v752
        %9014 = vmatpush1.xpose.msra.mxu0 %v751
        %9015 = vmatprep.subr.mxu0 0.0
        %9016 = vmatpush1.xpose.msra.mxu0 0.0
        %9017 = vmatprep.subr.mxu0 0.0
        %9018 = vmatpush1.xpose.msra.mxu0 0.0
        %9019 = vmatprep.subr.mxu0 0.0
        %9020 = vmatpush1.xpose.msra.mxu0 0.0
        %9021 = vmatprep.subr.mxu0 0.0
        %9022 = vmatpush1.xpose.msra.mxu0 0.0
        %9023 = vmatprep.subr.mxu0 0.0
        %9024 = vmatpush1.xpose.msra.mxu0 0.0
        %9025 = vmatprep.subr.mxu0 0.0
        %9026 = vmatpush1.xpose.msra.mxu0 0.0
        %9027 = vmatprep.subr.mxu0 0.0
        %9028 = vmatpush1.xpose.msra.mxu0 0.0
        %9029 = vmatprep.subr.mxu0 0.0
        %9030 = vmatpush1.xpose.msra.mxu0 0.0
        %9031 = vmatprep.subr.mxu0 0.0
        %9032 = vmatpush1.xpose.msra.mxu0 0.0
        %9033 = vmatprep.subr.mxu0 0.0
        %9034 = vmatpush1.xpose.msra.mxu0 0.0
        %9035 = vmatprep.subr.mxu0 0.0
        %9036 = vmatpush1.xpose.msra.mxu0 0.0
        %9037 = vmatprep.subr.mxu0 0.0
        %9038 = vmatpush1.xpose.msra.mxu0 0.0
        %9039 = vmatprep.subr.mxu0 0.0
        %9040 = vmatpush1.xpose.msra.mxu0 0.0
        %9041 = vmatprep.subr.mxu0 0.0
        %9042 = vmatpush1.xpose.msra.mxu0 0.0
        %9043 = vmatprep.subr.mxu0 0.0
        %9044 = vmatpush1.xpose.msra.mxu0 0.0
        %9045 = vmatprep.subr.mxu0 0.0
        %9046 = vmatpush1.xpose.msra.mxu0 0.0
        %9047 = vmatprep.subr.mxu0 0.0
        %9048 = vmatpush1.xpose.msra.mxu0 0.0
        %9049 = vmatprep.subr.mxu0 0.0
        %9050 = vmatpush1.xpose.msra.mxu0 0.0
        %9051 = vmatprep.subr.mxu0 0.0
        %9052 = vmatpush1.xpose.msra.mxu0 0.0
        %9053 = vmatprep.subr.mxu0 0.0
        %9054 = vmatpush1.xpose.msra.mxu0 0.0
        %9055 = vmatprep.subr.mxu0 0.0
        %9056 = vmatpush1.xpose.msra.mxu0 0.0
        %9057 = vmatprep.subr.mxu0 0.0
        %9058 = vmatpush1.xpose.msra.mxu0 0.0
        %9059 = vmatprep.subr.mxu0 0.0
        %9060 = vmatpush1.xpose.msra.mxu0 0.0
        %9061 = vmatprep.subr.mxu0 0.0
        %9062 = vmatpush1.xpose.msra.mxu0 0.0
        %9063 = vmatprep.subr.mxu0 0.0
        %9064 = vmatpush1.xpose.msra.mxu0 0.0
        %9065 = vmatprep.subr.mxu0 0.0
        %9066 = vmatpush1.xpose.msra.mxu0 0.0
        %9067 = vmatprep.subr.mxu0 0.0
        %9068 = vmatpush1.xpose.msra.mxu0 0.0
        %9069 = vmatprep.subr.mxu0 0.0
        %9070 = vmatpush1.xpose.msra.mxu0 0.0
        %9071 = vmatprep.subr.mxu0 0.0
        %9072 = vmatpush1.xpose.msra.mxu0 0.0
        %9073 = vmatprep.subr.mxu0 0.0
        %9074 = vmatpush1.xpose.msra.mxu0 0.0
        %9075 = vmatprep.mubr.f32.mxu0 %v1709
        %9076 = vmatmul.mubr.f32.gmra.mrb[0].mxu0 %v1707
        %v9077 = vpop.f32.mrb[0].mxu0
        %v9078 = vadd.f32 %v9008, %v9077
        %v9079 = vpop.f32.mrb[0].mxu0
        %9080 = vdwg.mxu0
        %9081 = vmatprep.subr.mxu0 %v498
        %9082 = vmatpush1.xpose.msra.mxu0 %v497
        %9083 = vmatprep.subr.mxu0 %v754
        %9084 = vmatpush1.xpose.msra.mxu0 %v753
        %9085 = vmatprep.subr.mxu0 0.0
        %9086 = vmatpush1.xpose.msra.mxu0 0.0
        %9087 = vmatprep.subr.mxu0 0.0
        %9088 = vmatpush1.xpose.msra.mxu0 0.0
        %9089 = vmatprep.subr.mxu0 0.0
        %9090 = vmatpush1.xpose.msra.mxu0 0.0
        %9091 = vmatprep.subr.mxu0 0.0
        %9092 = vmatpush1.xpose.msra.mxu0 0.0
        %9093 = vmatprep.subr.mxu0 0.0
        %9094 = vmatpush1.xpose.msra.mxu0 0.0
        %9095 = vmatprep.subr.mxu0 0.0
        %9096 = vmatpush1.xpose.msra.mxu0 0.0
        %9097 = vmatprep.subr.mxu0 0.0
        %9098 = vmatpush1.xpose.msra.mxu0 0.0
        %9099 = vmatprep.subr.mxu0 0.0
        %9100 = vmatpush1.xpose.msra.mxu0 0.0
        %9101 = vmatprep.subr.mxu0 0.0
        %9102 = vmatpush1.xpose.msra.mxu0 0.0
        %9103 = vmatprep.subr.mxu0 0.0
        %9104 = vmatpush1.xpose.msra.mxu0 0.0
        %9105 = vmatprep.subr.mxu0 0.0
        %9106 = vmatpush1.xpose.msra.mxu0 0.0
        %9107 = vmatprep.subr.mxu0 0.0
        %9108 = vmatpush1.xpose.msra.mxu0 0.0
        %9109 = vmatprep.subr.mxu0 0.0
        %9110 = vmatpush1.xpose.msra.mxu0 0.0
        %9111 = vmatprep.subr.mxu0 0.0
        %9112 = vmatpush1.xpose.msra.mxu0 0.0
        %9113 = vmatprep.subr.mxu0 0.0
        %9114 = vmatpush1.xpose.msra.mxu0 0.0
        %9115 = vmatprep.subr.mxu0 0.0
        %9116 = vmatpush1.xpose.msra.mxu0 0.0
        %9117 = vmatprep.subr.mxu0 0.0
        %9118 = vmatpush1.xpose.msra.mxu0 0.0
        %9119 = vmatprep.subr.mxu0 0.0
        %9120 = vmatpush1.xpose.msra.mxu0 0.0
        %9121 = vmatprep.subr.mxu0 0.0
        %9122 = vmatpush1.xpose.msra.mxu0 0.0
        %9123 = vmatprep.subr.mxu0 0.0
        %9124 = vmatpush1.xpose.msra.mxu0 0.0
        %9125 = vmatprep.subr.mxu0 0.0
        %9126 = vmatpush1.xpose.msra.mxu0 0.0
        %9127 = vmatprep.subr.mxu0 0.0
        %9128 = vmatpush1.xpose.msra.mxu0 0.0
        %9129 = vmatprep.subr.mxu0 0.0
        %9130 = vmatpush1.xpose.msra.mxu0 0.0
        %9131 = vmatprep.subr.mxu0 0.0
        %9132 = vmatpush1.xpose.msra.mxu0 0.0
        %9133 = vmatprep.subr.mxu0 0.0
        %9134 = vmatpush1.xpose.msra.mxu0 0.0
        %9135 = vmatprep.subr.mxu0 0.0
        %9136 = vmatpush1.xpose.msra.mxu0 0.0
        %9137 = vmatprep.subr.mxu0 0.0
        %9138 = vmatpush1.xpose.msra.mxu0 0.0
        %9139 = vmatprep.subr.mxu0 0.0
        %9140 = vmatpush1.xpose.msra.mxu0 0.0
        %9141 = vmatprep.subr.mxu0 0.0
        %9142 = vmatpush1.xpose.msra.mxu0 0.0
        %9143 = vmatprep.subr.mxu0 0.0
        %9144 = vmatpush1.xpose.msra.mxu0 0.0
        %9145 = vmatprep.mubr.f32.mxu0 %v1725
        %9146 = vmatmul.mubr.f32.gmra.mrb[0].mxu0 %v1717
        %v9147 = vpop.f32.mrb[0].mxu0
        %v9148 = vadd.f32 %v9078, %v9147
        %v9149 = vpop.f32.mrb[0].mxu0
        %9150 = vdwg.mxu0
        %9151 = vmatprep.subr.mxu0 %v500
        %9152 = vmatpush1.xpose.msra.mxu0 %v499
        %9153 = vmatprep.subr.mxu0 %v756
        %9154 = vmatpush1.xpose.msra.mxu0 %v755
        %9155 = vmatprep.subr.mxu0 0.0
        %9156 = vmatpush1.xpose.msra.mxu0 0.0
        %9157 = vmatprep.subr.mxu0 0.0
        %9158 = vmatpush1.xpose.msra.mxu0 0.0
        %9159 = vmatprep.subr.mxu0 0.0
        %9160 = vmatpush1.xpose.msra.mxu0 0.0
        %9161 = vmatprep.subr.mxu0 0.0
        %9162 = vmatpush1.xpose.msra.mxu0 0.0
        %9163 = vmatprep.subr.mxu0 0.0
        %9164 = vmatpush1.xpose.msra.mxu0 0.0
        %9165 = vmatprep.subr.mxu0 0.0
        %9166 = vmatpush1.xpose.msra.mxu0 0.0
        %9167 = vmatprep.subr.mxu0 0.0
        %9168 = vmatpush1.xpose.msra.mxu0 0.0
        %9169 = vmatprep.subr.mxu0 0.0
        %9170 = vmatpush1.xpose.msra.mxu0 0.0
        %9171 = vmatprep.subr.mxu0 0.0
        %9172 = vmatpush1.xpose.msra.mxu0 0.0
        %9173 = vmatprep.subr.mxu0 0.0
        %9174 = vmatpush1.xpose.msra.mxu0 0.0
        %9175 = vmatprep.subr.mxu0 0.0
        %9176 = vmatpush1.xpose.msra.mxu0 0.0
        %9177 = vmatprep.subr.mxu0 0.0
        %9178 = vmatpush1.xpose.msra.mxu0 0.0
        %9179 = vmatprep.subr.mxu0 0.0
        %9180 = vmatpush1.xpose.msra.mxu0 0.0
        %9181 = vmatprep.subr.mxu0 0.0
        %9182 = vmatpush1.xpose.msra.mxu0 0.0
        %9183 = vmatprep.subr.mxu0 0.0
        %9184 = vmatpush1.xpose.msra.mxu0 0.0
        %9185 = vmatprep.subr.mxu0 0.0
        %9186 = vmatpush1.xpose.msra.mxu0 0.0
        %9187 = vmatprep.subr.mxu0 0.0
        %9188 = vmatpush1.xpose.msra.mxu0 0.0
        %9189 = vmatprep.subr.mxu0 0.0
        %9190 = vmatpush1.xpose.msra.mxu0 0.0
        %9191 = vmatprep.subr.mxu0 0.0
        %9192 = vmatpush1.xpose.msra.mxu0 0.0
        %9193 = vmatprep.subr.mxu0 0.0
        %9194 = vmatpush1.xpose.msra.mxu0 0.0
        %9195 = vmatprep.subr.mxu0 0.0
        %9196 = vmatpush1.xpose.msra.mxu0 0.0
        %9197 = vmatprep.subr.mxu0 0.0
        %9198 = vmatpush1.xpose.msra.mxu0 0.0
        %9199 = vmatprep.subr.mxu0 0.0
        %9200 = vmatpush1.xpose.msra.mxu0 0.0
        %9201 = vmatprep.subr.mxu0 0.0
        %9202 = vmatpush1.xpose.msra.mxu0 0.0
        %9203 = vmatprep.subr.mxu0 0.0
        %9204 = vmatpush1.xpose.msra.mxu0 0.0
        %9205 = vmatprep.subr.mxu0 0.0
        %9206 = vmatpush1.xpose.msra.mxu0 0.0
        %9207 = vmatprep.subr.mxu0 0.0
        %9208 = vmatpush1.xpose.msra.mxu0 0.0
        %9209 = vmatprep.subr.mxu0 0.0
        %9210 = vmatpush1.xpose.msra.mxu0 0.0
        %9211 = vmatprep.subr.mxu0 0.0
        %9212 = vmatpush1.xpose.msra.mxu0 0.0
        %9213 = vmatprep.subr.mxu0 0.0
        %9214 = vmatpush1.xpose.msra.mxu0 0.0
        %9215 = vmatprep.mubr.f32.mxu0 %v1726
        %9216 = vmatmul.mubr.f32.gmra.mrb[0].mxu0 %v1724
        %v9217 = vpop.f32.mrb[0].mxu0
        %v9218 = vadd.f32 %v9148, %v9217
        %v9219 = vpop.f32.mrb[0].mxu0
        %9220 = vdwg.mxu0
        %9221 = vmatprep.subr.mxu0 %v502
        %9222 = vmatpush1.xpose.msra.mxu0 %v501
        %9223 = vmatprep.subr.mxu0 %v758
        %9224 = vmatpush1.xpose.msra.mxu0 %v757
        %9225 = vmatprep.subr.mxu0 0.0
        %9226 = vmatpush1.xpose.msra.mxu0 0.0
        %9227 = vmatprep.subr.mxu0 0.0
        %9228 = vmatpush1.xpose.msra.mxu0 0.0
        %9229 = vmatprep.subr.mxu0 0.0
        %9230 = vmatpush1.xpose.msra.mxu0 0.0
        %9231 = vmatprep.subr.mxu0 0.0
        %9232 = vmatpush1.xpose.msra.mxu0 0.0
        %9233 = vmatprep.subr.mxu0 0.0
        %9234 = vmatpush1.xpose.msra.mxu0 0.0
        %9235 = vmatprep.subr.mxu0 0.0
        %9236 = vmatpush1.xpose.msra.mxu0 0.0
        %9237 = vmatprep.subr.mxu0 0.0
        %9238 = vmatpush1.xpose.msra.mxu0 0.0
        %9239 = vmatprep.subr.mxu0 0.0
        %9240 = vmatpush1.xpose.msra.mxu0 0.0
        %9241 = vmatprep.subr.mxu0 0.0
        %9242 = vmatpush1.xpose.msra.mxu0 0.0
        %9243 = vmatprep.subr.mxu0 0.0
        %9244 = vmatpush1.xpose.msra.mxu0 0.0
        %9245 = vmatprep.subr.mxu0 0.0
        %9246 = vmatpush1.xpose.msra.mxu0 0.0
        %9247 = vmatprep.subr.mxu0 0.0
        %9248 = vmatpush1.xpose.msra.mxu0 0.0
        %9249 = vmatprep.subr.mxu0 0.0
        %9250 = vmatpush1.xpose.msra.mxu0 0.0
        %9251 = vmatprep.subr.mxu0 0.0
        %9252 = vmatpush1.xpose.msra.mxu0 0.0
        %9253 = vmatprep.subr.mxu0 0.0
        %9254 = vmatpush1.xpose.msra.mxu0 0.0
        %9255 = vmatprep.subr.mxu0 0.0
        %9256 = vmatpush1.xpose.msra.mxu0 0.0
        %9257 = vmatprep.subr.mxu0 0.0
        %9258 = vmatpush1.xpose.msra.mxu0 0.0
        %9259 = vmatprep.subr.mxu0 0.0
        %9260 = vmatpush1.xpose.msra.mxu0 0.0
        %9261 = vmatprep.subr.mxu0 0.0
        %9262 = vmatpush1.xpose.msra.mxu0 0.0
        %9263 = vmatprep.subr.mxu0 0.0
        %9264 = vmatpush1.xpose.msra.mxu0 0.0
        %9265 = vmatprep.subr.mxu0 0.0
        %9266 = vmatpush1.xpose.msra.mxu0 0.0
        %9267 = vmatprep.subr.mxu0 0.0
        %9268 = vmatpush1.xpose.msra.mxu0 0.0
        %9269 = vmatprep.subr.mxu0 0.0
        %9270 = vmatpush1.xpose.msra.mxu0 0.0
        %9271 = vmatprep.subr.mxu0 0.0
        %9272 = vmatpush1.xpose.msra.mxu0 0.0
        %9273 = vmatprep.subr.mxu0 0.0
        %9274 = vmatpush1.xpose.msra.mxu0 0.0
        %9275 = vmatprep.subr.mxu0 0.0
        %9276 = vmatpush1.xpose.msra.mxu0 0.0
        %9277 = vmatprep.subr.mxu0 0.0
        %9278 = vmatpush1.xpose.msra.mxu0 0.0
        %9279 = vmatprep.subr.mxu0 0.0
        %9280 = vmatpush1.xpose.msra.mxu0 0.0
        %9281 = vmatprep.subr.mxu0 0.0
        %9282 = vmatpush1.xpose.msra.mxu0 0.0
        %9283 = vmatprep.subr.mxu0 0.0
        %9284 = vmatpush1.xpose.msra.mxu0 0.0
        %9285 = vmatprep.mubr.f32.mxu0 %v1742
        %9286 = vmatmul.mubr.f32.gmra.mrb[0].mxu0 %v1734
        %v9287 = vpop.f32.mrb[0].mxu0
        %v9288 = vadd.f32 %v9218, %v9287
        %v9289 = vpop.f32.mrb[0].mxu0
        %9290 = vdwg.mxu0
        %9291 = vmatprep.subr.mxu0 %v504
        %9292 = vmatpush1.xpose.msra.mxu0 %v503
        %9293 = vmatprep.subr.mxu0 %v760
        %9294 = vmatpush1.xpose.msra.mxu0 %v759
        %9295 = vmatprep.subr.mxu0 0.0
        %9296 = vmatpush1.xpose.msra.mxu0 0.0
        %9297 = vmatprep.subr.mxu0 0.0
        %9298 = vmatpush1.xpose.msra.mxu0 0.0
        %9299 = vmatprep.subr.mxu0 0.0
        %9300 = vmatpush1.xpose.msra.mxu0 0.0
        %9301 = vmatprep.subr.mxu0 0.0
        %9302 = vmatpush1.xpose.msra.mxu0 0.0
        %9303 = vmatprep.subr.mxu0 0.0
        %9304 = vmatpush1.xpose.msra.mxu0 0.0
        %9305 = vmatprep.subr.mxu0 0.0
        %9306 = vmatpush1.xpose.msra.mxu0 0.0
        %9307 = vmatprep.subr.mxu0 0.0
        %9308 = vmatpush1.xpose.msra.mxu0 0.0
        %9309 = vmatprep.subr.mxu0 0.0
        %9310 = vmatpush1.xpose.msra.mxu0 0.0
        %9311 = vmatprep.subr.mxu0 0.0
        %9312 = vmatpush1.xpose.msra.mxu0 0.0
        %9313 = vmatprep.subr.mxu0 0.0
        %9314 = vmatpush1.xpose.msra.mxu0 0.0
        %9315 = vmatprep.subr.mxu0 0.0
        %9316 = vmatpush1.xpose.msra.mxu0 0.0
        %9317 = vmatprep.subr.mxu0 0.0
        %9318 = vmatpush1.xpose.msra.mxu0 0.0
        %9319 = vmatprep.subr.mxu0 0.0
        %9320 = vmatpush1.xpose.msra.mxu0 0.0
        %9321 = vmatprep.subr.mxu0 0.0
        %9322 = vmatpush1.xpose.msra.mxu0 0.0
        %9323 = vmatprep.subr.mxu0 0.0
        %9324 = vmatpush1.xpose.msra.mxu0 0.0
        %9325 = vmatprep.subr.mxu0 0.0
        %9326 = vmatpush1.xpose.msra.mxu0 0.0
        %9327 = vmatprep.subr.mxu0 0.0
        %9328 = vmatpush1.xpose.msra.mxu0 0.0
        %9329 = vmatprep.subr.mxu0 0.0
        %9330 = vmatpush1.xpose.msra.mxu0 0.0
        %9331 = vmatprep.subr.mxu0 0.0
        %9332 = vmatpush1.xpose.msra.mxu0 0.0
        %9333 = vmatprep.subr.mxu0 0.0
        %9334 = vmatpush1.xpose.msra.mxu0 0.0
        %9335 = vmatprep.subr.mxu0 0.0
        %9336 = vmatpush1.xpose.msra.mxu0 0.0
        %9337 = vmatprep.subr.mxu0 0.0
        %9338 = vmatpush1.xpose.msra.mxu0 0.0
        %9339 = vmatprep.subr.mxu0 0.0
        %9340 = vmatpush1.xpose.msra.mxu0 0.0
        %9341 = vmatprep.subr.mxu0 0.0
        %9342 = vmatpush1.xpose.msra.mxu0 0.0
        %9343 = vmatprep.subr.mxu0 0.0
        %9344 = vmatpush1.xpose.msra.mxu0 0.0
        %9345 = vmatprep.subr.mxu0 0.0
        %9346 = vmatpush1.xpose.msra.mxu0 0.0
        %9347 = vmatprep.subr.mxu0 0.0
        %9348 = vmatpush1.xpose.msra.mxu0 0.0
        %9349 = vmatprep.subr.mxu0 0.0
        %9350 = vmatpush1.xpose.msra.mxu0 0.0
        %9351 = vmatprep.subr.mxu0 0.0
        %9352 = vmatpush1.xpose.msra.mxu0 0.0
        %9353 = vmatprep.subr.mxu0 0.0
        %9354 = vmatpush1.xpose.msra.mxu0 0.0
        %9355 = vmatprep.mubr.f32.mxu0 %v1743
        %9356 = vmatmul.mubr.f32.gmra.mrb[0].mxu0 %v1741
        %v9357 = vpop.f32.mrb[0].mxu0
        %v9358 = vadd.f32 %v9288, %v9357
        %v9359 = vpop.f32.mrb[0].mxu0
        %9360 = vdwg.mxu0
        %9361 = vmatprep.subr.mxu0 %v506
        %9362 = vmatpush1.xpose.msra.mxu0 %v505
        %9363 = vmatprep.subr.mxu0 %v762
        %9364 = vmatpush1.xpose.msra.mxu0 %v761
        %9365 = vmatprep.subr.mxu0 0.0
        %9366 = vmatpush1.xpose.msra.mxu0 0.0
        %9367 = vmatprep.subr.mxu0 0.0
        %9368 = vmatpush1.xpose.msra.mxu0 0.0
        %9369 = vmatprep.subr.mxu0 0.0
        %9370 = vmatpush1.xpose.msra.mxu0 0.0
        %9371 = vmatprep.subr.mxu0 0.0
        %9372 = vmatpush1.xpose.msra.mxu0 0.0
        %9373 = vmatprep.subr.mxu0 0.0
        %9374 = vmatpush1.xpose.msra.mxu0 0.0
        %9375 = vmatprep.subr.mxu0 0.0
        %9376 = vmatpush1.xpose.msra.mxu0 0.0
        %9377 = vmatprep.subr.mxu0 0.0
        %9378 = vmatpush1.xpose.msra.mxu0 0.0
        %9379 = vmatprep.subr.mxu0 0.0
        %9380 = vmatpush1.xpose.msra.mxu0 0.0
        %9381 = vmatprep.subr.mxu0 0.0
        %9382 = vmatpush1.xpose.msra.mxu0 0.0
        %9383 = vmatprep.subr.mxu0 0.0
        %9384 = vmatpush1.xpose.msra.mxu0 0.0
        %9385 = vmatprep.subr.mxu0 0.0
        %9386 = vmatpush1.xpose.msra.mxu0 0.0
        %9387 = vmatprep.subr.mxu0 0.0
        %9388 = vmatpush1.xpose.msra.mxu0 0.0
        %9389 = vmatprep.subr.mxu0 0.0
        %9390 = vmatpush1.xpose.msra.mxu0 0.0
        %9391 = vmatprep.subr.mxu0 0.0
        %9392 = vmatpush1.xpose.msra.mxu0 0.0
        %9393 = vmatprep.subr.mxu0 0.0
        %9394 = vmatpush1.xpose.msra.mxu0 0.0
        %9395 = vmatprep.subr.mxu0 0.0
        %9396 = vmatpush1.xpose.msra.mxu0 0.0
        %9397 = vmatprep.subr.mxu0 0.0
        %9398 = vmatpush1.xpose.msra.mxu0 0.0
        %9399 = vmatprep.subr.mxu0 0.0
        %9400 = vmatpush1.xpose.msra.mxu0 0.0
        %9401 = vmatprep.subr.mxu0 0.0
        %9402 = vmatpush1.xpose.msra.mxu0 0.0
        %9403 = vmatprep.subr.mxu0 0.0
        %9404 = vmatpush1.xpose.msra.mxu0 0.0
        %9405 = vmatprep.subr.mxu0 0.0
        %9406 = vmatpush1.xpose.msra.mxu0 0.0
        %9407 = vmatprep.subr.mxu0 0.0
        %9408 = vmatpush1.xpose.msra.mxu0 0.0
        %9409 = vmatprep.subr.mxu0 0.0
        %9410 = vmatpush1.xpose.msra.mxu0 0.0
        %9411 = vmatprep.subr.mxu0 0.0
        %9412 = vmatpush1.xpose.msra.mxu0 0.0
        %9413 = vmatprep.subr.mxu0 0.0
        %9414 = vmatpush1.xpose.msra.mxu0 0.0
        %9415 = vmatprep.subr.mxu0 0.0
        %9416 = vmatpush1.xpose.msra.mxu0 0.0
        %9417 = vmatprep.subr.mxu0 0.0
        %9418 = vmatpush1.xpose.msra.mxu0 0.0
        %9419 = vmatprep.subr.mxu0 0.0
        %9420 = vmatpush1.xpose.msra.mxu0 0.0
        %9421 = vmatprep.subr.mxu0 0.0
        %9422 = vmatpush1.xpose.msra.mxu0 0.0
        %9423 = vmatprep.subr.mxu0 0.0
        %9424 = vmatpush1.xpose.msra.mxu0 0.0
        %9425 = vmatprep.mubr.f32.mxu0 %v1759
        %9426 = vmatmul.mubr.f32.gmra.mrb[0].mxu0 %v1751
        %v9427 = vpop.f32.mrb[0].mxu0
        %v9428 = vadd.f32 %v9358, %v9427
        %v9429 = vpop.f32.mrb[0].mxu0
        %9430 = vdwg.mxu0
        %9431 = vmatprep.subr.mxu0 %v508
        %9432 = vmatpush1.xpose.msra.mxu0 %v507
        %9433 = vmatprep.subr.mxu0 %v764
        %9434 = vmatpush1.xpose.msra.mxu0 %v763
        %9435 = vmatprep.subr.mxu0 0.0
        %9436 = vmatpush1.xpose.msra.mxu0 0.0
        %9437 = vmatprep.subr.mxu0 0.0
        %9438 = vmatpush1.xpose.msra.mxu0 0.0
        %9439 = vmatprep.subr.mxu0 0.0
        %9440 = vmatpush1.xpose.msra.mxu0 0.0
        %9441 = vmatprep.subr.mxu0 0.0
        %9442 = vmatpush1.xpose.msra.mxu0 0.0
        %9443 = vmatprep.subr.mxu0 0.0
        %9444 = vmatpush1.xpose.msra.mxu0 0.0
        %9445 = vmatprep.subr.mxu0 0.0
        %9446 = vmatpush1.xpose.msra.mxu0 0.0
        %9447 = vmatprep.subr.mxu0 0.0
        %9448 = vmatpush1.xpose.msra.mxu0 0.0
        %9449 = vmatprep.subr.mxu0 0.0
        %9450 = vmatpush1.xpose.msra.mxu0 0.0
        %9451 = vmatprep.subr.mxu0 0.0
        %9452 = vmatpush1.xpose.msra.mxu0 0.0
        %9453 = vmatprep.subr.mxu0 0.0
        %9454 = vmatpush1.xpose.msra.mxu0 0.0
        %9455 = vmatprep.subr.mxu0 0.0
        %9456 = vmatpush1.xpose.msra.mxu0 0.0
        %9457 = vmatprep.subr.mxu0 0.0
        %9458 = vmatpush1.xpose.msra.mxu0 0.0
        %9459 = vmatprep.subr.mxu0 0.0
        %9460 = vmatpush1.xpose.msra.mxu0 0.0
        %9461 = vmatprep.subr.mxu0 0.0
        %9462 = vmatpush1.xpose.msra.mxu0 0.0
        %9463 = vmatprep.subr.mxu0 0.0
        %9464 = vmatpush1.xpose.msra.mxu0 0.0
        %9465 = vmatprep.subr.mxu0 0.0
        %9466 = vmatpush1.xpose.msra.mxu0 0.0
        %9467 = vmatprep.subr.mxu0 0.0
        %9468 = vmatpush1.xpose.msra.mxu0 0.0
        %9469 = vmatprep.subr.mxu0 0.0
        %9470 = vmatpush1.xpose.msra.mxu0 0.0
        %9471 = vmatprep.subr.mxu0 0.0
        %9472 = vmatpush1.xpose.msra.mxu0 0.0
        %9473 = vmatprep.subr.mxu0 0.0
        %9474 = vmatpush1.xpose.msra.mxu0 0.0
        %9475 = vmatprep.subr.mxu0 0.0
        %9476 = vmatpush1.xpose.msra.mxu0 0.0
        %9477 = vmatprep.subr.mxu0 0.0
        %9478 = vmatpush1.xpose.msra.mxu0 0.0
        %9479 = vmatprep.subr.mxu0 0.0
        %9480 = vmatpush1.xpose.msra.mxu0 0.0
        %9481 = vmatprep.subr.mxu0 0.0
        %9482 = vmatpush1.xpose.msra.mxu0 0.0
        %9483 = vmatprep.subr.mxu0 0.0
        %9484 = vmatpush1.xpose.msra.mxu0 0.0
        %9485 = vmatprep.subr.mxu0 0.0
        %9486 = vmatpush1.xpose.msra.mxu0 0.0
        %9487 = vmatprep.subr.mxu0 0.0
        %9488 = vmatpush1.xpose.msra.mxu0 0.0
        %9489 = vmatprep.subr.mxu0 0.0
        %9490 = vmatpush1.xpose.msra.mxu0 0.0
        %9491 = vmatprep.subr.mxu0 0.0
        %9492 = vmatpush1.xpose.msra.mxu0 0.0
        %9493 = vmatprep.subr.mxu0 0.0
        %9494 = vmatpush1.xpose.msra.mxu0 0.0
        %9495 = vmatprep.mubr.f32.mxu0 %v1760
        %9496 = vmatmul.mubr.f32.gmra.mrb[0].mxu0 %v1758
        %v9497 = vpop.f32.mrb[0].mxu0
        %v9498 = vadd.f32 %v9428, %v9497
        %v9499 = vpop.f32.mrb[0].mxu0
        %9500 = vdwg.mxu0
        %9501 = vmatprep.subr.mxu0 %v510
        %9502 = vmatpush1.xpose.msra.mxu0 %v509
        %9503 = vmatprep.subr.mxu0 %v766
        %9504 = vmatpush1.xpose.msra.mxu0 %v765
        %9505 = vmatprep.subr.mxu0 0.0
        %9506 = vmatpush1.xpose.msra.mxu0 0.0
        %9507 = vmatprep.subr.mxu0 0.0
        %9508 = vmatpush1.xpose.msra.mxu0 0.0
        %9509 = vmatprep.subr.mxu0 0.0
        %9510 = vmatpush1.xpose.msra.mxu0 0.0
        %9511 = vmatprep.subr.mxu0 0.0
        %9512 = vmatpush1.xpose.msra.mxu0 0.0
        %9513 = vmatprep.subr.mxu0 0.0
        %9514 = vmatpush1.xpose.msra.mxu0 0.0
        %9515 = vmatprep.subr.mxu0 0.0
        %9516 = vmatpush1.xpose.msra.mxu0 0.0
        %9517 = vmatprep.subr.mxu0 0.0
        %9518 = vmatpush1.xpose.msra.mxu0 0.0
        %9519 = vmatprep.subr.mxu0 0.0
        %9520 = vmatpush1.xpose.msra.mxu0 0.0
        %9521 = vmatprep.subr.mxu0 0.0
        %9522 = vmatpush1.xpose.msra.mxu0 0.0
        %9523 = vmatprep.subr.mxu0 0.0
        %9524 = vmatpush1.xpose.msra.mxu0 0.0
        %9525 = vmatprep.subr.mxu0 0.0
        %9526 = vmatpush1.xpose.msra.mxu0 0.0
        %9527 = vmatprep.subr.mxu0 0.0
        %9528 = vmatpush1.xpose.msra.mxu0 0.0
        %9529 = vmatprep.subr.mxu0 0.0
        %9530 = vmatpush1.xpose.msra.mxu0 0.0
        %9531 = vmatprep.subr.mxu0 0.0
        %9532 = vmatpush1.xpose.msra.mxu0 0.0
        %9533 = vmatprep.subr.mxu0 0.0
        %9534 = vmatpush1.xpose.msra.mxu0 0.0
        %9535 = vmatprep.subr.mxu0 0.0
        %9536 = vmatpush1.xpose.msra.mxu0 0.0
        %9537 = vmatprep.subr.mxu0 0.0
        %9538 = vmatpush1.xpose.msra.mxu0 0.0
        %9539 = vmatprep.subr.mxu0 0.0
        %9540 = vmatpush1.xpose.msra.mxu0 0.0
        %9541 = vmatprep.subr.mxu0 0.0
        %9542 = vmatpush1.xpose.msra.mxu0 0.0
        %9543 = vmatprep.subr.mxu0 0.0
        %9544 = vmatpush1.xpose.msra.mxu0 0.0
        %9545 = vmatprep.subr.mxu0 0.0
        %9546 = vmatpush1.xpose.msra.mxu0 0.0
        %9547 = vmatprep.subr.mxu0 0.0
        %9548 = vmatpush1.xpose.msra.mxu0 0.0
        %9549 = vmatprep.subr.mxu0 0.0
        %9550 = vmatpush1.xpose.msra.mxu0 0.0
        %9551 = vmatprep.subr.mxu0 0.0
        %9552 = vmatpush1.xpose.msra.mxu0 0.0
        %9553 = vmatprep.subr.mxu0 0.0
        %9554 = vmatpush1.xpose.msra.mxu0 0.0
        %9555 = vmatprep.subr.mxu0 0.0
        %9556 = vmatpush1.xpose.msra.mxu0 0.0
        %9557 = vmatprep.subr.mxu0 0.0
        %9558 = vmatpush1.xpose.msra.mxu0 0.0
        %9559 = vmatprep.subr.mxu0 0.0
        %9560 = vmatpush1.xpose.msra.mxu0 0.0
        %9561 = vmatprep.subr.mxu0 0.0
        %9562 = vmatpush1.xpose.msra.mxu0 0.0
        %9563 = vmatprep.subr.mxu0 0.0
        %9564 = vmatpush1.xpose.msra.mxu0 0.0
        %9565 = vmatprep.mubr.f32.mxu0 %v1776
        %9566 = vmatmul.mubr.f32.gmra.mrb[0].mxu0 %v1768
        %v9567 = vpop.f32.mrb[0].mxu0
        %v9568 = vadd.f32 %v9498, %v9567
        %v9569 = vpop.f32.mrb[0].mxu0
        %9570 = vdwg.mxu0
        %9571 = vmatprep.subr.mxu0 %v512
        %9572 = vmatpush1.xpose.msra.mxu0 %v511
        %9573 = vmatprep.subr.mxu0 %v768
        %9574 = vmatpush1.xpose.msra.mxu0 %v767
        %9575 = vmatprep.subr.mxu0 0.0
        %9576 = vmatpush1.xpose.msra.mxu0 0.0
        %9577 = vmatprep.subr.mxu0 0.0
        %9578 = vmatpush1.xpose.msra.mxu0 0.0
        %9579 = vmatprep.subr.mxu0 0.0
        %9580 = vmatpush1.xpose.msra.mxu0 0.0
        %9581 = vmatprep.subr.mxu0 0.0
        %9582 = vmatpush1.xpose.msra.mxu0 0.0
        %9583 = vmatprep.subr.mxu0 0.0
        %9584 = vmatpush1.xpose.msra.mxu0 0.0
        %9585 = vmatprep.subr.mxu0 0.0
        %9586 = vmatpush1.xpose.msra.mxu0 0.0
        %9587 = vmatprep.subr.mxu0 0.0
        %9588 = vmatpush1.xpose.msra.mxu0 0.0
        %9589 = vmatprep.subr.mxu0 0.0
        %9590 = vmatpush1.xpose.msra.mxu0 0.0
        %9591 = vmatprep.subr.mxu0 0.0
        %9592 = vmatpush1.xpose.msra.mxu0 0.0
        %9593 = vmatprep.subr.mxu0 0.0
        %9594 = vmatpush1.xpose.msra.mxu0 0.0
        %9595 = vmatprep.subr.mxu0 0.0
        %9596 = vmatpush1.xpose.msra.mxu0 0.0
        %9597 = vmatprep.subr.mxu0 0.0
        %9598 = vmatpush1.xpose.msra.mxu0 0.0
        %9599 = vmatprep.subr.mxu0 0.0
        %9600 = vmatpush1.xpose.msra.mxu0 0.0
        %9601 = vmatprep.subr.mxu0 0.0
        %9602 = vmatpush1.xpose.msra.mxu0 0.0
        %9603 = vmatprep.subr.mxu0 0.0
        %9604 = vmatpush1.xpose.msra.mxu0 0.0
        %9605 = vmatprep.subr.mxu0 0.0
        %9606 = vmatpush1.xpose.msra.mxu0 0.0
        %9607 = vmatprep.subr.mxu0 0.0
        %9608 = vmatpush1.xpose.msra.mxu0 0.0
        %9609 = vmatprep.subr.mxu0 0.0
        %9610 = vmatpush1.xpose.msra.mxu0 0.0
        %9611 = vmatprep.subr.mxu0 0.0
        %9612 = vmatpush1.xpose.msra.mxu0 0.0
        %9613 = vmatprep.subr.mxu0 0.0
        %9614 = vmatpush1.xpose.msra.mxu0 0.0
        %9615 = vmatprep.subr.mxu0 0.0
        %9616 = vmatpush1.xpose.msra.mxu0 0.0
        %9617 = vmatprep.subr.mxu0 0.0
        %9618 = vmatpush1.xpose.msra.mxu0 0.0
        %9619 = vmatprep.subr.mxu0 0.0
        %9620 = vmatpush1.xpose.msra.mxu0 0.0
        %9621 = vmatprep.subr.mxu0 0.0
        %9622 = vmatpush1.xpose.msra.mxu0 0.0
        %9623 = vmatprep.subr.mxu0 0.0
        %9624 = vmatpush1.xpose.msra.mxu0 0.0
        %9625 = vmatprep.subr.mxu0 0.0
        %9626 = vmatpush1.xpose.msra.mxu0 0.0
        %9627 = vmatprep.subr.mxu0 0.0
        %9628 = vmatpush1.xpose.msra.mxu0 0.0
        %9629 = vmatprep.subr.mxu0 0.0
        %9630 = vmatpush1.xpose.msra.mxu0 0.0
        %9631 = vmatprep.subr.mxu0 0.0
        %9632 = vmatpush1.xpose.msra.mxu0 0.0
        %9633 = vmatprep.subr.mxu0 0.0
        %9634 = vmatpush1.xpose.msra.mxu0 0.0
        %9635 = vmatprep.mubr.f32.mxu0 %v1777
        %9636 = vmatmul.mubr.f32.gmra.mrb[0].mxu0 %v1775
        %v9637 = vpop.f32.mrb[0].mxu0
        %v9638 = vadd.f32 %v9568, %v9637
        %v9639 = vpop.f32.mrb[0].mxu0
        %9640 = vdwg.mxu0
        %9641 = vmatprep.subr.mxu0 %v514
        %9642 = vmatpush1.xpose.msra.mxu0 %v513
        %9643 = vmatprep.subr.mxu0 %v770
        %9644 = vmatpush1.xpose.msra.mxu0 %v769
        %9645 = vmatprep.subr.mxu0 0.0
        %9646 = vmatpush1.xpose.msra.mxu0 0.0
        %9647 = vmatprep.subr.mxu0 0.0
        %9648 = vmatpush1.xpose.msra.mxu0 0.0
        %9649 = vmatprep.subr.mxu0 0.0
        %9650 = vmatpush1.xpose.msra.mxu0 0.0
        %9651 = vmatprep.subr.mxu0 0.0
        %9652 = vmatpush1.xpose.msra.mxu0 0.0
        %9653 = vmatprep.subr.mxu0 0.0
        %9654 = vmatpush1.xpose.msra.mxu0 0.0
        %9655 = vmatprep.subr.mxu0 0.0
        %9656 = vmatpush1.xpose.msra.mxu0 0.0
        %9657 = vmatprep.subr.mxu0 0.0
        %9658 = vmatpush1.xpose.msra.mxu0 0.0
        %9659 = vmatprep.subr.mxu0 0.0
        %9660 = vmatpush1.xpose.msra.mxu0 0.0
        %9661 = vmatprep.subr.mxu0 0.0
        %9662 = vmatpush1.xpose.msra.mxu0 0.0
        %9663 = vmatprep.subr.mxu0 0.0
        %9664 = vmatpush1.xpose.msra.mxu0 0.0
        %9665 = vmatprep.subr.mxu0 0.0
        %9666 = vmatpush1.xpose.msra.mxu0 0.0
        %9667 = vmatprep.subr.mxu0 0.0
        %9668 = vmatpush1.xpose.msra.mxu0 0.0
        %9669 = vmatprep.subr.mxu0 0.0
        %9670 = vmatpush1.xpose.msra.mxu0 0.0
        %9671 = vmatprep.subr.mxu0 0.0
        %9672 = vmatpush1.xpose.msra.mxu0 0.0
        %9673 = vmatprep.subr.mxu0 0.0
        %9674 = vmatpush1.xpose.msra.mxu0 0.0
        %9675 = vmatprep.subr.mxu0 0.0
        %9676 = vmatpush1.xpose.msra.mxu0 0.0
        %9677 = vmatprep.subr.mxu0 0.0
        %9678 = vmatpush1.xpose.msra.mxu0 0.0
        %9679 = vmatprep.subr.mxu0 0.0
        %9680 = vmatpush1.xpose.msra.mxu0 0.0
        %9681 = vmatprep.subr.mxu0 0.0
        %9682 = vmatpush1.xpose.msra.mxu0 0.0
        %9683 = vmatprep.subr.mxu0 0.0
        %9684 = vmatpush1.xpose.msra.mxu0 0.0
        %9685 = vmatprep.subr.mxu0 0.0
        %9686 = vmatpush1.xpose.msra.mxu0 0.0
        %9687 = vmatprep.subr.mxu0 0.0
        %9688 = vmatpush1.xpose.msra.mxu0 0.0
        %9689 = vmatprep.subr.mxu0 0.0
        %9690 = vmatpush1.xpose.msra.mxu0 0.0
        %9691 = vmatprep.subr.mxu0 0.0
        %9692 = vmatpush1.xpose.msra.mxu0 0.0
        %9693 = vmatprep.subr.mxu0 0.0
        %9694 = vmatpush1.xpose.msra.mxu0 0.0
        %9695 = vmatprep.subr.mxu0 0.0
        %9696 = vmatpush1.xpose.msra.mxu0 0.0
        %9697 = vmatprep.subr.mxu0 0.0
        %9698 = vmatpush1.xpose.msra.mxu0 0.0
        %9699 = vmatprep.subr.mxu0 0.0
        %9700 = vmatpush1.xpose.msra.mxu0 0.0
        %9701 = vmatprep.subr.mxu0 0.0
        %9702 = vmatpush1.xpose.msra.mxu0 0.0
        %9703 = vmatprep.subr.mxu0 0.0
        %9704 = vmatpush1.xpose.msra.mxu0 0.0
        %9705 = vmatprep.mubr.f32.mxu0 %v1793
        %9706 = vmatmul.mubr.f32.gmra.mrb[0].mxu0 %v1785
        %v9707 = vpop.f32.mrb[0].mxu0
        %v9708 = vadd.f32 %v9638, %v9707
        %v9709 = vpop.f32.mrb[0].mxu0
        %9710 = vdwg.mxu0
        %9711 = vmatprep.subr.mxu0 %v516
        %9712 = vmatpush1.xpose.msra.mxu0 %v515
        %9713 = vmatprep.subr.mxu0 %v772
        %9714 = vmatpush1.xpose.msra.mxu0 %v771
        %9715 = vmatprep.subr.mxu0 0.0
        %9716 = vmatpush1.xpose.msra.mxu0 0.0
        %9717 = vmatprep.subr.mxu0 0.0
        %9718 = vmatpush1.xpose.msra.mxu0 0.0
        %9719 = vmatprep.subr.mxu0 0.0
        %9720 = vmatpush1.xpose.msra.mxu0 0.0
        %9721 = vmatprep.subr.mxu0 0.0
        %9722 = vmatpush1.xpose.msra.mxu0 0.0
        %9723 = vmatprep.subr.mxu0 0.0
        %9724 = vmatpush1.xpose.msra.mxu0 0.0
        %9725 = vmatprep.subr.mxu0 0.0
        %9726 = vmatpush1.xpose.msra.mxu0 0.0
        %9727 = vmatprep.subr.mxu0 0.0
        %9728 = vmatpush1.xpose.msra.mxu0 0.0
        %9729 = vmatprep.subr.mxu0 0.0
        %9730 = vmatpush1.xpose.msra.mxu0 0.0
        %9731 = vmatprep.subr.mxu0 0.0
        %9732 = vmatpush1.xpose.msra.mxu0 0.0
        %9733 = vmatprep.subr.mxu0 0.0
        %9734 = vmatpush1.xpose.msra.mxu0 0.0
        %9735 = vmatprep.subr.mxu0 0.0
        %9736 = vmatpush1.xpose.msra.mxu0 0.0
        %9737 = vmatprep.subr.mxu0 0.0
        %9738 = vmatpush1.xpose.msra.mxu0 0.0
        %9739 = vmatprep.subr.mxu0 0.0
        %9740 = vmatpush1.xpose.msra.mxu0 0.0
        %9741 = vmatprep.subr.mxu0 0.0
        %9742 = vmatpush1.xpose.msra.mxu0 0.0
        %9743 = vmatprep.subr.mxu0 0.0
        %9744 = vmatpush1.xpose.msra.mxu0 0.0
        %9745 = vmatprep.subr.mxu0 0.0
        %9746 = vmatpush1.xpose.msra.mxu0 0.0
        %9747 = vmatprep.subr.mxu0 0.0
        %9748 = vmatpush1.xpose.msra.mxu0 0.0
        %9749 = vmatprep.subr.mxu0 0.0
        %9750 = vmatpush1.xpose.msra.mxu0 0.0
        %9751 = vmatprep.subr.mxu0 0.0
        %9752 = vmatpush1.xpose.msra.mxu0 0.0
        %9753 = vmatprep.subr.mxu0 0.0
        %9754 = vmatpush1.xpose.msra.mxu0 0.0
        %9755 = vmatprep.subr.mxu0 0.0
        %9756 = vmatpush1.xpose.msra.mxu0 0.0
        %9757 = vmatprep.subr.mxu0 0.0
        %9758 = vmatpush1.xpose.msra.mxu0 0.0
        %9759 = vmatprep.subr.mxu0 0.0
        %9760 = vmatpush1.xpose.msra.mxu0 0.0
        %9761 = vmatprep.subr.mxu0 0.0
        %9762 = vmatpush1.xpose.msra.mxu0 0.0
        %9763 = vmatprep.subr.mxu0 0.0
        %9764 = vmatpush1.xpose.msra.mxu0 0.0
        %9765 = vmatprep.subr.mxu0 0.0
        %9766 = vmatpush1.xpose.msra.mxu0 0.0
        %9767 = vmatprep.subr.mxu0 0.0
        %9768 = vmatpush1.xpose.msra.mxu0 0.0
        %9769 = vmatprep.subr.mxu0 0.0
        %9770 = vmatpush1.xpose.msra.mxu0 0.0
        %9771 = vmatprep.subr.mxu0 0.0
        %9772 = vmatpush1.xpose.msra.mxu0 0.0
        %9773 = vmatprep.subr.mxu0 0.0
        %9774 = vmatpush1.xpose.msra.mxu0 0.0
        %9775 = vmatprep.mubr.f32.mxu0 %v1794
        %9776 = vmatmul.mubr.f32.gmra.mrb[0].mxu0 %v1792
        %v9777 = vpop.f32.mrb[0].mxu0
        %v9778 = vadd.f32 %v9708, %v9777
        %v9779 = vpop.f32.mrb[0].mxu0
        %9780 = vdwg.mxu0
        %9781 = vmatprep.subr.mxu0 %v518
        %9782 = vmatpush1.xpose.msra.mxu0 %v517
        %9783 = vmatprep.subr.mxu0 %v774
        %9784 = vmatpush1.xpose.msra.mxu0 %v773
        %9785 = vmatprep.subr.mxu0 0.0
        %9786 = vmatpush1.xpose.msra.mxu0 0.0
        %9787 = vmatprep.subr.mxu0 0.0
        %9788 = vmatpush1.xpose.msra.mxu0 0.0
        %9789 = vmatprep.subr.mxu0 0.0
        %9790 = vmatpush1.xpose.msra.mxu0 0.0
        %9791 = vmatprep.subr.mxu0 0.0
        %9792 = vmatpush1.xpose.msra.mxu0 0.0
        %9793 = vmatprep.subr.mxu0 0.0
        %9794 = vmatpush1.xpose.msra.mxu0 0.0
        %9795 = vmatprep.subr.mxu0 0.0
        %9796 = vmatpush1.xpose.msra.mxu0 0.0
        %9797 = vmatprep.subr.mxu0 0.0
        %9798 = vmatpush1.xpose.msra.mxu0 0.0
        %9799 = vmatprep.subr.mxu0 0.0
        %9800 = vmatpush1.xpose.msra.mxu0 0.0
        %9801 = vmatprep.subr.mxu0 0.0
        %9802 = vmatpush1.xpose.msra.mxu0 0.0
        %9803 = vmatprep.subr.mxu0 0.0
        %9804 = vmatpush1.xpose.msra.mxu0 0.0
        %9805 = vmatprep.subr.mxu0 0.0
        %9806 = vmatpush1.xpose.msra.mxu0 0.0
        %9807 = vmatprep.subr.mxu0 0.0
        %9808 = vmatpush1.xpose.msra.mxu0 0.0
        %9809 = vmatprep.subr.mxu0 0.0
        %9810 = vmatpush1.xpose.msra.mxu0 0.0
        %9811 = vmatprep.subr.mxu0 0.0
        %9812 = vmatpush1.xpose.msra.mxu0 0.0
        %9813 = vmatprep.subr.mxu0 0.0
        %9814 = vmatpush1.xpose.msra.mxu0 0.0
        %9815 = vmatprep.subr.mxu0 0.0
        %9816 = vmatpush1.xpose.msra.mxu0 0.0
        %9817 = vmatprep.subr.mxu0 0.0
        %9818 = vmatpush1.xpose.msra.mxu0 0.0
        %9819 = vmatprep.subr.mxu0 0.0
        %9820 = vmatpush1.xpose.msra.mxu0 0.0
        %9821 = vmatprep.subr.mxu0 0.0
        %9822 = vmatpush1.xpose.msra.mxu0 0.0
        %9823 = vmatprep.subr.mxu0 0.0
        %9824 = vmatpush1.xpose.msra.mxu0 0.0
        %9825 = vmatprep.subr.mxu0 0.0
        %9826 = vmatpush1.xpose.msra.mxu0 0.0
        %9827 = vmatprep.subr.mxu0 0.0
        %9828 = vmatpush1.xpose.msra.mxu0 0.0
        %9829 = vmatprep.subr.mxu0 0.0
        %9830 = vmatpush1.xpose.msra.mxu0 0.0
        %9831 = vmatprep.subr.mxu0 0.0
        %9832 = vmatpush1.xpose.msra.mxu0 0.0
        %9833 = vmatprep.subr.mxu0 0.0
        %9834 = vmatpush1.xpose.msra.mxu0 0.0
        %9835 = vmatprep.subr.mxu0 0.0
        %9836 = vmatpush1.xpose.msra.mxu0 0.0
        %9837 = vmatprep.subr.mxu0 0.0
        %9838 = vmatpush1.xpose.msra.mxu0 0.0
        %9839 = vmatprep.subr.mxu0 0.0
        %9840 = vmatpush1.xpose.msra.mxu0 0.0
        %9841 = vmatprep.subr.mxu0 0.0
        %9842 = vmatpush1.xpose.msra.mxu0 0.0
        %9843 = vmatprep.subr.mxu0 0.0
        %9844 = vmatpush1.xpose.msra.mxu0 0.0
        %9845 = vmatprep.mubr.f32.mxu0 %v1810
        %9846 = vmatmul.mubr.f32.gmra.mrb[0].mxu0 %v1802
        %v9847 = vpop.f32.mrb[0].mxu0
        %v9848 = vadd.f32 %v9778, %v9847
        %v9849 = vpop.f32.mrb[0].mxu0
        %9850 = vdwg.mxu0
        %9851 = vmatprep.subr.mxu0 %v520
        %9852 = vmatpush1.xpose.msra.mxu0 %v519
        %9853 = vmatprep.subr.mxu0 %v776
        %9854 = vmatpush1.xpose.msra.mxu0 %v775
        %9855 = vmatprep.subr.mxu0 0.0
        %9856 = vmatpush1.xpose.msra.mxu0 0.0
        %9857 = vmatprep.subr.mxu0 0.0
        %9858 = vmatpush1.xpose.msra.mxu0 0.0
        %9859 = vmatprep.subr.mxu0 0.0
        %9860 = vmatpush1.xpose.msra.mxu0 0.0
        %9861 = vmatprep.subr.mxu0 0.0
        %9862 = vmatpush1.xpose.msra.mxu0 0.0
        %9863 = vmatprep.subr.mxu0 0.0
        %9864 = vmatpush1.xpose.msra.mxu0 0.0
        %9865 = vmatprep.subr.mxu0 0.0
        %9866 = vmatpush1.xpose.msra.mxu0 0.0
        %9867 = vmatprep.subr.mxu0 0.0
        %9868 = vmatpush1.xpose.msra.mxu0 0.0
        %9869 = vmatprep.subr.mxu0 0.0
        %9870 = vmatpush1.xpose.msra.mxu0 0.0
        %9871 = vmatprep.subr.mxu0 0.0
        %9872 = vmatpush1.xpose.msra.mxu0 0.0
        %9873 = vmatprep.subr.mxu0 0.0
        %9874 = vmatpush1.xpose.msra.mxu0 0.0
        %9875 = vmatprep.subr.mxu0 0.0
        %9876 = vmatpush1.xpose.msra.mxu0 0.0
        %9877 = vmatprep.subr.mxu0 0.0
        %9878 = vmatpush1.xpose.msra.mxu0 0.0
        %9879 = vmatprep.subr.mxu0 0.0
        %9880 = vmatpush1.xpose.msra.mxu0 0.0
        %9881 = vmatprep.subr.mxu0 0.0
        %9882 = vmatpush1.xpose.msra.mxu0 0.0
        %9883 = vmatprep.subr.mxu0 0.0
        %9884 = vmatpush1.xpose.msra.mxu0 0.0
        %9885 = vmatprep.subr.mxu0 0.0
        %9886 = vmatpush1.xpose.msra.mxu0 0.0
        %9887 = vmatprep.subr.mxu0 0.0
        %9888 = vmatpush1.xpose.msra.mxu0 0.0
        %9889 = vmatprep.subr.mxu0 0.0
        %9890 = vmatpush1.xpose.msra.mxu0 0.0
        %9891 = vmatprep.subr.mxu0 0.0
        %9892 = vmatpush1.xpose.msra.mxu0 0.0
        %9893 = vmatprep.subr.mxu0 0.0
        %9894 = vmatpush1.xpose.msra.mxu0 0.0
        %9895 = vmatprep.subr.mxu0 0.0
        %9896 = vmatpush1.xpose.msra.mxu0 0.0
        %9897 = vmatprep.subr.mxu0 0.0
        %9898 = vmatpush1.xpose.msra.mxu0 0.0
        %9899 = vmatprep.subr.mxu0 0.0
        %9900 = vmatpush1.xpose.msra.mxu0 0.0
        %9901 = vmatprep.subr.mxu0 0.0
        %9902 = vmatpush1.xpose.msra.mxu0 0.0
        %9903 = vmatprep.subr.mxu0 0.0
        %9904 = vmatpush1.xpose.msra.mxu0 0.0
        %9905 = vmatprep.subr.mxu0 0.0
        %9906 = vmatpush1.xpose.msra.mxu0 0.0
        %9907 = vmatprep.subr.mxu0 0.0
        %9908 = vmatpush1.xpose.msra.mxu0 0.0
        %9909 = vmatprep.subr.mxu0 0.0
        %9910 = vmatpush1.xpose.msra.mxu0 0.0
        %9911 = vmatprep.subr.mxu0 0.0
        %9912 = vmatpush1.xpose.msra.mxu0 0.0
        %9913 = vmatprep.subr.mxu0 0.0
        %9914 = vmatpush1.xpose.msra.mxu0 0.0
        %9915 = vmatprep.mubr.f32.mxu0 %v1811
        %9916 = vmatmul.mubr.f32.gmra.mrb[0].mxu0 %v1809
        %v9917 = vpop.f32.mrb[0].mxu0
        %v9918 = vadd.f32 %v9848, %v9917
        %v9919 = vpop.f32.mrb[0].mxu0
        %9920 = vdwg.mxu0
        %9921 = vmatprep.subr.mxu0 %v522
        %9922 = vmatpush1.xpose.msra.mxu0 %v521
        %9923 = vmatprep.subr.mxu0 %v778
        %9924 = vmatpush1.xpose.msra.mxu0 %v777
        %9925 = vmatprep.subr.mxu0 0.0
        %9926 = vmatpush1.xpose.msra.mxu0 0.0
        %9927 = vmatprep.subr.mxu0 0.0
        %9928 = vmatpush1.xpose.msra.mxu0 0.0
        %9929 = vmatprep.subr.mxu0 0.0
        %9930 = vmatpush1.xpose.msra.mxu0 0.0
        %9931 = vmatprep.subr.mxu0 0.0
        %9932 = vmatpush1.xpose.msra.mxu0 0.0
        %9933 = vmatprep.subr.mxu0 0.0
        %9934 = vmatpush1.xpose.msra.mxu0 0.0
        %9935 = vmatprep.subr.mxu0 0.0
        %9936 = vmatpush1.xpose.msra.mxu0 0.0
        %9937 = vmatprep.subr.mxu0 0.0
        %9938 = vmatpush1.xpose.msra.mxu0 0.0
        %9939 = vmatprep.subr.mxu0 0.0
        %9940 = vmatpush1.xpose.msra.mxu0 0.0
        %9941 = vmatprep.subr.mxu0 0.0
        %9942 = vmatpush1.xpose.msra.mxu0 0.0
        %9943 = vmatprep.subr.mxu0 0.0
        %9944 = vmatpush1.xpose.msra.mxu0 0.0
        %9945 = vmatprep.subr.mxu0 0.0
        %9946 = vmatpush1.xpose.msra.mxu0 0.0
        %9947 = vmatprep.subr.mxu0 0.0
        %9948 = vmatpush1.xpose.msra.mxu0 0.0
        %9949 = vmatprep.subr.mxu0 0.0
        %9950 = vmatpush1.xpose.msra.mxu0 0.0
        %9951 = vmatprep.subr.mxu0 0.0
        %9952 = vmatpush1.xpose.msra.mxu0 0.0
        %9953 = vmatprep.subr.mxu0 0.0
        %9954 = vmatpush1.xpose.msra.mxu0 0.0
        %9955 = vmatprep.subr.mxu0 0.0
        %9956 = vmatpush1.xpose.msra.mxu0 0.0
        %9957 = vmatprep.subr.mxu0 0.0
        %9958 = vmatpush1.xpose.msra.mxu0 0.0
        %9959 = vmatprep.subr.mxu0 0.0
        %9960 = vmatpush1.xpose.msra.mxu0 0.0
        %9961 = vmatprep.subr.mxu0 0.0
        %9962 = vmatpush1.xpose.msra.mxu0 0.0
        %9963 = vmatprep.subr.mxu0 0.0
        %9964 = vmatpush1.xpose.msra.mxu0 0.0
        %9965 = vmatprep.subr.mxu0 0.0
        %9966 = vmatpush1.xpose.msra.mxu0 0.0
        %9967 = vmatprep.subr.mxu0 0.0
        %9968 = vmatpush1.xpose.msra.mxu0 0.0
        %9969 = vmatprep.subr.mxu0 0.0
        %9970 = vmatpush1.xpose.msra.mxu0 0.0
        %9971 = vmatprep.subr.mxu0 0.0
        %9972 = vmatpush1.xpose.msra.mxu0 0.0
        %9973 = vmatprep.subr.mxu0 0.0
        %9974 = vmatpush1.xpose.msra.mxu0 0.0
        %9975 = vmatprep.subr.mxu0 0.0
        %9976 = vmatpush1.xpose.msra.mxu0 0.0
        %9977 = vmatprep.subr.mxu0 0.0
        %9978 = vmatpush1.xpose.msra.mxu0 0.0
        %9979 = vmatprep.subr.mxu0 0.0
        %9980 = vmatpush1.xpose.msra.mxu0 0.0
        %9981 = vmatprep.subr.mxu0 0.0
        %9982 = vmatpush1.xpose.msra.mxu0 0.0
        %9983 = vmatprep.subr.mxu0 0.0
        %9984 = vmatpush1.xpose.msra.mxu0 0.0
        %9985 = vmatprep.mubr.f32.mxu0 %v1827
        %9986 = vmatmul.mubr.f32.gmra.mrb[0].mxu0 %v1819
        %v9987 = vpop.f32.mrb[0].mxu0
        %v9988 = vadd.f32 %v9918, %v9987
        %v9989 = vpop.f32.mrb[0].mxu0
        %9990 = vdwg.mxu0
        %9991 = vmatprep.subr.mxu0 %v524
        %9992 = vmatpush1.xpose.msra.mxu0 %v523
        %9993 = vmatprep.subr.mxu0 %v780
        %9994 = vmatpush1.xpose.msra.mxu0 %v779
        %9995 = vmatprep.subr.mxu0 0.0
        %9996 = vmatpush1.xpose.msra.mxu0 0.0
        %9997 = vmatprep.subr.mxu0 0.0
        %9998 = vmatpush1.xpose.msra.mxu0 0.0
        %9999 = vmatprep.subr.mxu0 0.0
        %10000 = vmatpush1.xpose.msra.mxu0 0.0
        %10001 = vmatprep.subr.mxu0 0.0
        %10002 = vmatpush1.xpose.msra.mxu0 0.0
        %10003 = vmatprep.subr.mxu0 0.0
        %10004 = vmatpush1.xpose.msra.mxu0 0.0
        %10005 = vmatprep.subr.mxu0 0.0
        %10006 = vmatpush1.xpose.msra.mxu0 0.0
        %10007 = vmatprep.subr.mxu0 0.0
        %10008 = vmatpush1.xpose.msra.mxu0 0.0
        %10009 = vmatprep.subr.mxu0 0.0
        %10010 = vmatpush1.xpose.msra.mxu0 0.0
        %10011 = vmatprep.subr.mxu0 0.0
        %10012 = vmatpush1.xpose.msra.mxu0 0.0
        %10013 = vmatprep.subr.mxu0 0.0
        %10014 = vmatpush1.xpose.msra.mxu0 0.0
        %10015 = vmatprep.subr.mxu0 0.0
        %10016 = vmatpush1.xpose.msra.mxu0 0.0
        %10017 = vmatprep.subr.mxu0 0.0
        %10018 = vmatpush1.xpose.msra.mxu0 0.0
        %10019 = vmatprep.subr.mxu0 0.0
        %10020 = vmatpush1.xpose.msra.mxu0 0.0
        %10021 = vmatprep.subr.mxu0 0.0
        %10022 = vmatpush1.xpose.msra.mxu0 0.0
        %10023 = vmatprep.subr.mxu0 0.0
        %10024 = vmatpush1.xpose.msra.mxu0 0.0
        %10025 = vmatprep.subr.mxu0 0.0
        %10026 = vmatpush1.xpose.msra.mxu0 0.0
        %10027 = vmatprep.subr.mxu0 0.0
        %10028 = vmatpush1.xpose.msra.mxu0 0.0
        %10029 = vmatprep.subr.mxu0 0.0
        %10030 = vmatpush1.xpose.msra.mxu0 0.0
        %10031 = vmatprep.subr.mxu0 0.0
        %10032 = vmatpush1.xpose.msra.mxu0 0.0
        %10033 = vmatprep.subr.mxu0 0.0
        %10034 = vmatpush1.xpose.msra.mxu0 0.0
        %10035 = vmatprep.subr.mxu0 0.0
        %10036 = vmatpush1.xpose.msra.mxu0 0.0
        %10037 = vmatprep.subr.mxu0 0.0
        %10038 = vmatpush1.xpose.msra.mxu0 0.0
        %10039 = vmatprep.subr.mxu0 0.0
        %10040 = vmatpush1.xpose.msra.mxu0 0.0
        %10041 = vmatprep.subr.mxu0 0.0
        %10042 = vmatpush1.xpose.msra.mxu0 0.0
        %10043 = vmatprep.subr.mxu0 0.0
        %10044 = vmatpush1.xpose.msra.mxu0 0.0
        %10045 = vmatprep.subr.mxu0 0.0
        %10046 = vmatpush1.xpose.msra.mxu0 0.0
        %10047 = vmatprep.subr.mxu0 0.0
        %10048 = vmatpush1.xpose.msra.mxu0 0.0
        %10049 = vmatprep.subr.mxu0 0.0
        %10050 = vmatpush1.xpose.msra.mxu0 0.0
        %10051 = vmatprep.subr.mxu0 0.0
        %10052 = vmatpush1.xpose.msra.mxu0 0.0
        %10053 = vmatprep.subr.mxu0 0.0
        %10054 = vmatpush1.xpose.msra.mxu0 0.0
        %10055 = vmatprep.mubr.f32.mxu0 %v1828
        %10056 = vmatmul.mubr.f32.gmra.mrb[0].mxu0 %v1826
        %v10057 = vpop.f32.mrb[0].mxu0
        %v10058 = vadd.f32 %v9988, %v10057
        %v10059 = vpop.f32.mrb[0].mxu0
        %10060 = vdwg.mxu0
        %10061 = vmatprep.subr.mxu0 %v526
        %10062 = vmatpush1.xpose.msra.mxu0 %v525
        %10063 = vmatprep.subr.mxu0 %v782
        %10064 = vmatpush1.xpose.msra.mxu0 %v781
        %10065 = vmatprep.subr.mxu0 0.0
        %10066 = vmatpush1.xpose.msra.mxu0 0.0
        %10067 = vmatprep.subr.mxu0 0.0
        %10068 = vmatpush1.xpose.msra.mxu0 0.0
        %10069 = vmatprep.subr.mxu0 0.0
        %10070 = vmatpush1.xpose.msra.mxu0 0.0
        %10071 = vmatprep.subr.mxu0 0.0
        %10072 = vmatpush1.xpose.msra.mxu0 0.0
        %10073 = vmatprep.subr.mxu0 0.0
        %10074 = vmatpush1.xpose.msra.mxu0 0.0
        %10075 = vmatprep.subr.mxu0 0.0
        %10076 = vmatpush1.xpose.msra.mxu0 0.0
        %10077 = vmatprep.subr.mxu0 0.0
        %10078 = vmatpush1.xpose.msra.mxu0 0.0
        %10079 = vmatprep.subr.mxu0 0.0
        %10080 = vmatpush1.xpose.msra.mxu0 0.0
        %10081 = vmatprep.subr.mxu0 0.0
        %10082 = vmatpush1.xpose.msra.mxu0 0.0
        %10083 = vmatprep.subr.mxu0 0.0
        %10084 = vmatpush1.xpose.msra.mxu0 0.0
        %10085 = vmatprep.subr.mxu0 0.0
        %10086 = vmatpush1.xpose.msra.mxu0 0.0
        %10087 = vmatprep.subr.mxu0 0.0
        %10088 = vmatpush1.xpose.msra.mxu0 0.0
        %10089 = vmatprep.subr.mxu0 0.0
        %10090 = vmatpush1.xpose.msra.mxu0 0.0
        %10091 = vmatprep.subr.mxu0 0.0
        %10092 = vmatpush1.xpose.msra.mxu0 0.0
        %10093 = vmatprep.subr.mxu0 0.0
        %10094 = vmatpush1.xpose.msra.mxu0 0.0
        %10095 = vmatprep.subr.mxu0 0.0
        %10096 = vmatpush1.xpose.msra.mxu0 0.0
        %10097 = vmatprep.subr.mxu0 0.0
        %10098 = vmatpush1.xpose.msra.mxu0 0.0
        %10099 = vmatprep.subr.mxu0 0.0
        %10100 = vmatpush1.xpose.msra.mxu0 0.0
        %10101 = vmatprep.subr.mxu0 0.0
        %10102 = vmatpush1.xpose.msra.mxu0 0.0
        %10103 = vmatprep.subr.mxu0 0.0
        %10104 = vmatpush1.xpose.msra.mxu0 0.0
        %10105 = vmatprep.subr.mxu0 0.0
        %10106 = vmatpush1.xpose.msra.mxu0 0.0
        %10107 = vmatprep.subr.mxu0 0.0
        %10108 = vmatpush1.xpose.msra.mxu0 0.0
        %10109 = vmatprep.subr.mxu0 0.0
        %10110 = vmatpush1.xpose.msra.mxu0 0.0
        %10111 = vmatprep.subr.mxu0 0.0
        %10112 = vmatpush1.xpose.msra.mxu0 0.0
        %10113 = vmatprep.subr.mxu0 0.0
        %10114 = vmatpush1.xpose.msra.mxu0 0.0
        %10115 = vmatprep.subr.mxu0 0.0
        %10116 = vmatpush1.xpose.msra.mxu0 0.0
        %10117 = vmatprep.subr.mxu0 0.0
        %10118 = vmatpush1.xpose.msra.mxu0 0.0
        %10119 = vmatprep.subr.mxu0 0.0
        %10120 = vmatpush1.xpose.msra.mxu0 0.0
        %10121 = vmatprep.subr.mxu0 0.0
        %10122 = vmatpush1.xpose.msra.mxu0 0.0
        %10123 = vmatprep.subr.mxu0 0.0
        %10124 = vmatpush1.xpose.msra.mxu0 0.0
        %10125 = vmatprep.mubr.f32.mxu0 %v1844
        %10126 = vmatmul.mubr.f32.gmra.mrb[0].mxu0 %v1836
        %v10127 = vpop.f32.mrb[0].mxu0
        %v10128 = vadd.f32 %v10058, %v10127
        %v10129 = vpop.f32.mrb[0].mxu0
        %10130 = vdwg.mxu0
        %10131 = vmatprep.subr.mxu0 %v528
        %10132 = vmatpush1.xpose.msra.mxu0 %v527
        %10133 = vmatprep.subr.mxu0 %v784
        %10134 = vmatpush1.xpose.msra.mxu0 %v783
        %10135 = vmatprep.subr.mxu0 0.0
        %10136 = vmatpush1.xpose.msra.mxu0 0.0
        %10137 = vmatprep.subr.mxu0 0.0
        %10138 = vmatpush1.xpose.msra.mxu0 0.0
        %10139 = vmatprep.subr.mxu0 0.0
        %10140 = vmatpush1.xpose.msra.mxu0 0.0
        %10141 = vmatprep.subr.mxu0 0.0
        %10142 = vmatpush1.xpose.msra.mxu0 0.0
        %10143 = vmatprep.subr.mxu0 0.0
        %10144 = vmatpush1.xpose.msra.mxu0 0.0
        %10145 = vmatprep.subr.mxu0 0.0
        %10146 = vmatpush1.xpose.msra.mxu0 0.0
        %10147 = vmatprep.subr.mxu0 0.0
        %10148 = vmatpush1.xpose.msra.mxu0 0.0
        %10149 = vmatprep.subr.mxu0 0.0
        %10150 = vmatpush1.xpose.msra.mxu0 0.0
        %10151 = vmatprep.subr.mxu0 0.0
        %10152 = vmatpush1.xpose.msra.mxu0 0.0
        %10153 = vmatprep.subr.mxu0 0.0
        %10154 = vmatpush1.xpose.msra.mxu0 0.0
        %10155 = vmatprep.subr.mxu0 0.0
        %10156 = vmatpush1.xpose.msra.mxu0 0.0
        %10157 = vmatprep.subr.mxu0 0.0
        %10158 = vmatpush1.xpose.msra.mxu0 0.0
        %10159 = vmatprep.subr.mxu0 0.0
        %10160 = vmatpush1.xpose.msra.mxu0 0.0
        %10161 = vmatprep.subr.mxu0 0.0
        %10162 = vmatpush1.xpose.msra.mxu0 0.0
        %10163 = vmatprep.subr.mxu0 0.0
        %10164 = vmatpush1.xpose.msra.mxu0 0.0
        %10165 = vmatprep.subr.mxu0 0.0
        %10166 = vmatpush1.xpose.msra.mxu0 0.0
        %10167 = vmatprep.subr.mxu0 0.0
        %10168 = vmatpush1.xpose.msra.mxu0 0.0
        %10169 = vmatprep.subr.mxu0 0.0
        %10170 = vmatpush1.xpose.msra.mxu0 0.0
        %10171 = vmatprep.subr.mxu0 0.0
        %10172 = vmatpush1.xpose.msra.mxu0 0.0
        %10173 = vmatprep.subr.mxu0 0.0
        %10174 = vmatpush1.xpose.msra.mxu0 0.0
        %10175 = vmatprep.subr.mxu0 0.0
        %10176 = vmatpush1.xpose.msra.mxu0 0.0
        %10177 = vmatprep.subr.mxu0 0.0
        %10178 = vmatpush1.xpose.msra.mxu0 0.0
        %10179 = vmatprep.subr.mxu0 0.0
        %10180 = vmatpush1.xpose.msra.mxu0 0.0
        %10181 = vmatprep.subr.mxu0 0.0
        %10182 = vmatpush1.xpose.msra.mxu0 0.0
        %10183 = vmatprep.subr.mxu0 0.0
        %10184 = vmatpush1.xpose.msra.mxu0 0.0
        %10185 = vmatprep.subr.mxu0 0.0
        %10186 = vmatpush1.xpose.msra.mxu0 0.0
        %10187 = vmatprep.subr.mxu0 0.0
        %10188 = vmatpush1.xpose.msra.mxu0 0.0
        %10189 = vmatprep.subr.mxu0 0.0
        %10190 = vmatpush1.xpose.msra.mxu0 0.0
        %10191 = vmatprep.subr.mxu0 0.0
        %10192 = vmatpush1.xpose.msra.mxu0 0.0
        %10193 = vmatprep.subr.mxu0 0.0
        %10194 = vmatpush1.xpose.msra.mxu0 0.0
        %10195 = vmatprep.mubr.f32.mxu0 %v1845
        %10196 = vmatmul.mubr.f32.gmra.mrb[0].mxu0 %v1843
        %v10197 = vpop.f32.mrb[0].mxu0
        %v10198 = vadd.f32 %v10128, %v10197
        %v10199 = vpop.f32.mrb[0].mxu0
        %10200 = vdwg.mxu0
        %10201 = vmatprep.subr.mxu0 %v530
        %10202 = vmatpush1.xpose.msra.mxu0 %v529
        %10203 = vmatprep.subr.mxu0 %v786
        %10204 = vmatpush1.xpose.msra.mxu0 %v785
        %10205 = vmatprep.subr.mxu0 0.0
        %10206 = vmatpush1.xpose.msra.mxu0 0.0
        %10207 = vmatprep.subr.mxu0 0.0
        %10208 = vmatpush1.xpose.msra.mxu0 0.0
        %10209 = vmatprep.subr.mxu0 0.0
        %10210 = vmatpush1.xpose.msra.mxu0 0.0
        %10211 = vmatprep.subr.mxu0 0.0
        %10212 = vmatpush1.xpose.msra.mxu0 0.0
        %10213 = vmatprep.subr.mxu0 0.0
        %10214 = vmatpush1.xpose.msra.mxu0 0.0
        %10215 = vmatprep.subr.mxu0 0.0
        %10216 = vmatpush1.xpose.msra.mxu0 0.0
        %10217 = vmatprep.subr.mxu0 0.0
        %10218 = vmatpush1.xpose.msra.mxu0 0.0
        %10219 = vmatprep.subr.mxu0 0.0
        %10220 = vmatpush1.xpose.msra.mxu0 0.0
        %10221 = vmatprep.subr.mxu0 0.0
        %10222 = vmatpush1.xpose.msra.mxu0 0.0
        %10223 = vmatprep.subr.mxu0 0.0
        %10224 = vmatpush1.xpose.msra.mxu0 0.0
        %10225 = vmatprep.subr.mxu0 0.0
        %10226 = vmatpush1.xpose.msra.mxu0 0.0
        %10227 = vmatprep.subr.mxu0 0.0
        %10228 = vmatpush1.xpose.msra.mxu0 0.0
        %10229 = vmatprep.subr.mxu0 0.0
        %10230 = vmatpush1.xpose.msra.mxu0 0.0
        %10231 = vmatprep.subr.mxu0 0.0
        %10232 = vmatpush1.xpose.msra.mxu0 0.0
        %10233 = vmatprep.subr.mxu0 0.0
        %10234 = vmatpush1.xpose.msra.mxu0 0.0
        %10235 = vmatprep.subr.mxu0 0.0
        %10236 = vmatpush1.xpose.msra.mxu0 0.0
        %10237 = vmatprep.subr.mxu0 0.0
        %10238 = vmatpush1.xpose.msra.mxu0 0.0
        %10239 = vmatprep.subr.mxu0 0.0
        %10240 = vmatpush1.xpose.msra.mxu0 0.0
        %10241 = vmatprep.subr.mxu0 0.0
        %10242 = vmatpush1.xpose.msra.mxu0 0.0
        %10243 = vmatprep.subr.mxu0 0.0
        %10244 = vmatpush1.xpose.msra.mxu0 0.0
        %10245 = vmatprep.subr.mxu0 0.0
        %10246 = vmatpush1.xpose.msra.mxu0 0.0
        %10247 = vmatprep.subr.mxu0 0.0
        %10248 = vmatpush1.xpose.msra.mxu0 0.0
        %10249 = vmatprep.subr.mxu0 0.0
        %10250 = vmatpush1.xpose.msra.mxu0 0.0
        %10251 = vmatprep.subr.mxu0 0.0
        %10252 = vmatpush1.xpose.msra.mxu0 0.0
        %10253 = vmatprep.subr.mxu0 0.0
        %10254 = vmatpush1.xpose.msra.mxu0 0.0
        %10255 = vmatprep.subr.mxu0 0.0
        %10256 = vmatpush1.xpose.msra.mxu0 0.0
        %10257 = vmatprep.subr.mxu0 0.0
        %10258 = vmatpush1.xpose.msra.mxu0 0.0
        %10259 = vmatprep.subr.mxu0 0.0
        %10260 = vmatpush1.xpose.msra.mxu0 0.0
        %10261 = vmatprep.subr.mxu0 0.0
        %10262 = vmatpush1.xpose.msra.mxu0 0.0
        %10263 = vmatprep.subr.mxu0 0.0
        %10264 = vmatpush1.xpose.msra.mxu0 0.0
        %10265 = vmatprep.mubr.f32.mxu0 %v1861
        %10266 = vmatmul.mubr.f32.gmra.mrb[0].mxu0 %v1853
        %v10267 = vpop.f32.mrb[0].mxu0
        %v10268 = vadd.f32 %v10198, %v10267
        %v10269 = vpop.f32.mrb[0].mxu0
        %10270 = vdwg.mxu0
        %10271 = vmatprep.subr.mxu0 %v532
        %10272 = vmatpush1.xpose.msra.mxu0 %v531
        %10273 = vmatprep.subr.mxu0 %v788
        %10274 = vmatpush1.xpose.msra.mxu0 %v787
        %10275 = vmatprep.subr.mxu0 0.0
        %10276 = vmatpush1.xpose.msra.mxu0 0.0
        %10277 = vmatprep.subr.mxu0 0.0
        %10278 = vmatpush1.xpose.msra.mxu0 0.0
        %10279 = vmatprep.subr.mxu0 0.0
        %10280 = vmatpush1.xpose.msra.mxu0 0.0
        %10281 = vmatprep.subr.mxu0 0.0
        %10282 = vmatpush1.xpose.msra.mxu0 0.0
        %10283 = vmatprep.subr.mxu0 0.0
        %10284 = vmatpush1.xpose.msra.mxu0 0.0
        %10285 = vmatprep.subr.mxu0 0.0
        %10286 = vmatpush1.xpose.msra.mxu0 0.0
        %10287 = vmatprep.subr.mxu0 0.0
        %10288 = vmatpush1.xpose.msra.mxu0 0.0
        %10289 = vmatprep.subr.mxu0 0.0
        %10290 = vmatpush1.xpose.msra.mxu0 0.0
        %10291 = vmatprep.subr.mxu0 0.0
        %10292 = vmatpush1.xpose.msra.mxu0 0.0
        %10293 = vmatprep.subr.mxu0 0.0
        %10294 = vmatpush1.xpose.msra.mxu0 0.0
        %10295 = vmatprep.subr.mxu0 0.0
        %10296 = vmatpush1.xpose.msra.mxu0 0.0
        %10297 = vmatprep.subr.mxu0 0.0
        %10298 = vmatpush1.xpose.msra.mxu0 0.0
        %10299 = vmatprep.subr.mxu0 0.0
        %10300 = vmatpush1.xpose.msra.mxu0 0.0
        %10301 = vmatprep.subr.mxu0 0.0
        %10302 = vmatpush1.xpose.msra.mxu0 0.0
        %10303 = vmatprep.subr.mxu0 0.0
        %10304 = vmatpush1.xpose.msra.mxu0 0.0
        %10305 = vmatprep.subr.mxu0 0.0
        %10306 = vmatpush1.xpose.msra.mxu0 0.0
        %10307 = vmatprep.subr.mxu0 0.0
        %10308 = vmatpush1.xpose.msra.mxu0 0.0
        %10309 = vmatprep.subr.mxu0 0.0
        %10310 = vmatpush1.xpose.msra.mxu0 0.0
        %10311 = vmatprep.subr.mxu0 0.0
        %10312 = vmatpush1.xpose.msra.mxu0 0.0
        %10313 = vmatprep.subr.mxu0 0.0
        %10314 = vmatpush1.xpose.msra.mxu0 0.0
        %10315 = vmatprep.subr.mxu0 0.0
        %10316 = vmatpush1.xpose.msra.mxu0 0.0
        %10317 = vmatprep.subr.mxu0 0.0
        %10318 = vmatpush1.xpose.msra.mxu0 0.0
        %10319 = vmatprep.subr.mxu0 0.0
        %10320 = vmatpush1.xpose.msra.mxu0 0.0
        %10321 = vmatprep.subr.mxu0 0.0
        %10322 = vmatpush1.xpose.msra.mxu0 0.0
        %10323 = vmatprep.subr.mxu0 0.0
        %10324 = vmatpush1.xpose.msra.mxu0 0.0
        %10325 = vmatprep.subr.mxu0 0.0
        %10326 = vmatpush1.xpose.msra.mxu0 0.0
        %10327 = vmatprep.subr.mxu0 0.0
        %10328 = vmatpush1.xpose.msra.mxu0 0.0
        %10329 = vmatprep.subr.mxu0 0.0
        %10330 = vmatpush1.xpose.msra.mxu0 0.0
        %10331 = vmatprep.subr.mxu0 0.0
        %10332 = vmatpush1.xpose.msra.mxu0 0.0
        %10333 = vmatprep.subr.mxu0 0.0
        %10334 = vmatpush1.xpose.msra.mxu0 0.0
        %10335 = vmatprep.mubr.f32.mxu0 %v1862
        %10336 = vmatmul.mubr.f32.gmra.mrb[0].mxu0 %v1860
        %v10337 = vpop.f32.mrb[0].mxu0
        %v10338 = vadd.f32 %v10268, %v10337
        %v10339 = vpop.f32.mrb[0].mxu0
        %10340 = vdwg.mxu0
        %10341 = vmatprep.subr.mxu0 %v534
        %10342 = vmatpush1.xpose.msra.mxu0 %v533
        %10343 = vmatprep.subr.mxu0 %v790
        %10344 = vmatpush1.xpose.msra.mxu0 %v789
        %10345 = vmatprep.subr.mxu0 0.0
        %10346 = vmatpush1.xpose.msra.mxu0 0.0
        %10347 = vmatprep.subr.mxu0 0.0
        %10348 = vmatpush1.xpose.msra.mxu0 0.0
        %10349 = vmatprep.subr.mxu0 0.0
        %10350 = vmatpush1.xpose.msra.mxu0 0.0
        %10351 = vmatprep.subr.mxu0 0.0
        %10352 = vmatpush1.xpose.msra.mxu0 0.0
        %10353 = vmatprep.subr.mxu0 0.0
        %10354 = vmatpush1.xpose.msra.mxu0 0.0
        %10355 = vmatprep.subr.mxu0 0.0
        %10356 = vmatpush1.xpose.msra.mxu0 0.0
        %10357 = vmatprep.subr.mxu0 0.0
        %10358 = vmatpush1.xpose.msra.mxu0 0.0
        %10359 = vmatprep.subr.mxu0 0.0
        %10360 = vmatpush1.xpose.msra.mxu0 0.0
        %10361 = vmatprep.subr.mxu0 0.0
        %10362 = vmatpush1.xpose.msra.mxu0 0.0
        %10363 = vmatprep.subr.mxu0 0.0
        %10364 = vmatpush1.xpose.msra.mxu0 0.0
        %10365 = vmatprep.subr.mxu0 0.0
        %10366 = vmatpush1.xpose.msra.mxu0 0.0
        %10367 = vmatprep.subr.mxu0 0.0
        %10368 = vmatpush1.xpose.msra.mxu0 0.0
        %10369 = vmatprep.subr.mxu0 0.0
        %10370 = vmatpush1.xpose.msra.mxu0 0.0
        %10371 = vmatprep.subr.mxu0 0.0
        %10372 = vmatpush1.xpose.msra.mxu0 0.0
        %10373 = vmatprep.subr.mxu0 0.0
        %10374 = vmatpush1.xpose.msra.mxu0 0.0
        %10375 = vmatprep.subr.mxu0 0.0
        %10376 = vmatpush1.xpose.msra.mxu0 0.0
        %10377 = vmatprep.subr.mxu0 0.0
        %10378 = vmatpush1.xpose.msra.mxu0 0.0
        %10379 = vmatprep.subr.mxu0 0.0
        %10380 = vmatpush1.xpose.msra.mxu0 0.0
        %10381 = vmatprep.subr.mxu0 0.0
        %10382 = vmatpush1.xpose.msra.mxu0 0.0
        %10383 = vmatprep.subr.mxu0 0.0
        %10384 = vmatpush1.xpose.msra.mxu0 0.0
        %10385 = vmatprep.subr.mxu0 0.0
        %10386 = vmatpush1.xpose.msra.mxu0 0.0
        %10387 = vmatprep.subr.mxu0 0.0
        %10388 = vmatpush1.xpose.msra.mxu0 0.0
        %10389 = vmatprep.subr.mxu0 0.0
        %10390 = vmatpush1.xpose.msra.mxu0 0.0
        %10391 = vmatprep.subr.mxu0 0.0
        %10392 = vmatpush1.xpose.msra.mxu0 0.0
        %10393 = vmatprep.subr.mxu0 0.0
        %10394 = vmatpush1.xpose.msra.mxu0 0.0
        %10395 = vmatprep.subr.mxu0 0.0
        %10396 = vmatpush1.xpose.msra.mxu0 0.0
        %10397 = vmatprep.subr.mxu0 0.0
        %10398 = vmatpush1.xpose.msra.mxu0 0.0
        %10399 = vmatprep.subr.mxu0 0.0
        %10400 = vmatpush1.xpose.msra.mxu0 0.0
        %10401 = vmatprep.subr.mxu0 0.0
        %10402 = vmatpush1.xpose.msra.mxu0 0.0
        %10403 = vmatprep.subr.mxu0 0.0
        %10404 = vmatpush1.xpose.msra.mxu0 0.0
        %10405 = vmatprep.mubr.f32.mxu0 %v1878
        %10406 = vmatmul.mubr.f32.gmra.mrb[0].mxu0 %v1870
        %v10407 = vpop.f32.mrb[0].mxu0
        %v10408 = vadd.f32 %v10338, %v10407
        %v10409 = vpop.f32.mrb[0].mxu0
        %10410 = vdwg.mxu0
        %10411 = vmatprep.subr.mxu0 %v536
        %10412 = vmatpush1.xpose.msra.mxu0 %v535
        %10413 = vmatprep.subr.mxu0 %v792
        %10414 = vmatpush1.xpose.msra.mxu0 %v791
        %10415 = vmatprep.subr.mxu0 0.0
        %10416 = vmatpush1.xpose.msra.mxu0 0.0
        %10417 = vmatprep.subr.mxu0 0.0
        %10418 = vmatpush1.xpose.msra.mxu0 0.0
        %10419 = vmatprep.subr.mxu0 0.0
        %10420 = vmatpush1.xpose.msra.mxu0 0.0
        %10421 = vmatprep.subr.mxu0 0.0
        %10422 = vmatpush1.xpose.msra.mxu0 0.0
        %10423 = vmatprep.subr.mxu0 0.0
        %10424 = vmatpush1.xpose.msra.mxu0 0.0
        %10425 = vmatprep.subr.mxu0 0.0
        %10426 = vmatpush1.xpose.msra.mxu0 0.0
        %10427 = vmatprep.subr.mxu0 0.0
        %10428 = vmatpush1.xpose.msra.mxu0 0.0
        %10429 = vmatprep.subr.mxu0 0.0
        %10430 = vmatpush1.xpose.msra.mxu0 0.0
        %10431 = vmatprep.subr.mxu0 0.0
        %10432 = vmatpush1.xpose.msra.mxu0 0.0
        %10433 = vmatprep.subr.mxu0 0.0
        %10434 = vmatpush1.xpose.msra.mxu0 0.0
        %10435 = vmatprep.subr.mxu0 0.0
        %10436 = vmatpush1.xpose.msra.mxu0 0.0
        %10437 = vmatprep.subr.mxu0 0.0
        %10438 = vmatpush1.xpose.msra.mxu0 0.0
        %10439 = vmatprep.subr.mxu0 0.0
        %10440 = vmatpush1.xpose.msra.mxu0 0.0
        %10441 = vmatprep.subr.mxu0 0.0
        %10442 = vmatpush1.xpose.msra.mxu0 0.0
        %10443 = vmatprep.subr.mxu0 0.0
        %10444 = vmatpush1.xpose.msra.mxu0 0.0
        %10445 = vmatprep.subr.mxu0 0.0
        %10446 = vmatpush1.xpose.msra.mxu0 0.0
        %10447 = vmatprep.subr.mxu0 0.0
        %10448 = vmatpush1.xpose.msra.mxu0 0.0
        %10449 = vmatprep.subr.mxu0 0.0
        %10450 = vmatpush1.xpose.msra.mxu0 0.0
        %10451 = vmatprep.subr.mxu0 0.0
        %10452 = vmatpush1.xpose.msra.mxu0 0.0
        %10453 = vmatprep.subr.mxu0 0.0
        %10454 = vmatpush1.xpose.msra.mxu0 0.0
        %10455 = vmatprep.subr.mxu0 0.0
        %10456 = vmatpush1.xpose.msra.mxu0 0.0
        %10457 = vmatprep.subr.mxu0 0.0
        %10458 = vmatpush1.xpose.msra.mxu0 0.0
        %10459 = vmatprep.subr.mxu0 0.0
        %10460 = vmatpush1.xpose.msra.mxu0 0.0
        %10461 = vmatprep.subr.mxu0 0.0
        %10462 = vmatpush1.xpose.msra.mxu0 0.0
        %10463 = vmatprep.subr.mxu0 0.0
        %10464 = vmatpush1.xpose.msra.mxu0 0.0
        %10465 = vmatprep.subr.mxu0 0.0
        %10466 = vmatpush1.xpose.msra.mxu0 0.0
        %10467 = vmatprep.subr.mxu0 0.0
        %10468 = vmatpush1.xpose.msra.mxu0 0.0
        %10469 = vmatprep.subr.mxu0 0.0
        %10470 = vmatpush1.xpose.msra.mxu0 0.0
        %10471 = vmatprep.subr.mxu0 0.0
        %10472 = vmatpush1.xpose.msra.mxu0 0.0
        %10473 = vmatprep.subr.mxu0 0.0
        %10474 = vmatpush1.xpose.msra.mxu0 0.0
        %10475 = vmatprep.mubr.f32.mxu0 %v1879
        %10476 = vmatmul.mubr.f32.gmra.mrb[0].mxu0 %v1877
        %v10477 = vpop.f32.mrb[0].mxu0
        %v10478 = vadd.f32 %v10408, %v10477
        %v10479 = vpop.f32.mrb[0].mxu0
        %10480 = vdwg.mxu0
        %10481 = vmatprep.subr.mxu0 %v538
        %10482 = vmatpush1.xpose.msra.mxu0 %v537
        %10483 = vmatprep.subr.mxu0 %v794
        %10484 = vmatpush1.xpose.msra.mxu0 %v793
        %10485 = vmatprep.subr.mxu0 0.0
        %10486 = vmatpush1.xpose.msra.mxu0 0.0
        %10487 = vmatprep.subr.mxu0 0.0
        %10488 = vmatpush1.xpose.msra.mxu0 0.0
        %10489 = vmatprep.subr.mxu0 0.0
        %10490 = vmatpush1.xpose.msra.mxu0 0.0
        %10491 = vmatprep.subr.mxu0 0.0
        %10492 = vmatpush1.xpose.msra.mxu0 0.0
        %10493 = vmatprep.subr.mxu0 0.0
        %10494 = vmatpush1.xpose.msra.mxu0 0.0
        %10495 = vmatprep.subr.mxu0 0.0
        %10496 = vmatpush1.xpose.msra.mxu0 0.0
        %10497 = vmatprep.subr.mxu0 0.0
        %10498 = vmatpush1.xpose.msra.mxu0 0.0
        %10499 = vmatprep.subr.mxu0 0.0
        %10500 = vmatpush1.xpose.msra.mxu0 0.0
        %10501 = vmatprep.subr.mxu0 0.0
        %10502 = vmatpush1.xpose.msra.mxu0 0.0
        %10503 = vmatprep.subr.mxu0 0.0
        %10504 = vmatpush1.xpose.msra.mxu0 0.0
        %10505 = vmatprep.subr.mxu0 0.0
        %10506 = vmatpush1.xpose.msra.mxu0 0.0
        %10507 = vmatprep.subr.mxu0 0.0
        %10508 = vmatpush1.xpose.msra.mxu0 0.0
        %10509 = vmatprep.subr.mxu0 0.0
        %10510 = vmatpush1.xpose.msra.mxu0 0.0
        %10511 = vmatprep.subr.mxu0 0.0
        %10512 = vmatpush1.xpose.msra.mxu0 0.0
        %10513 = vmatprep.subr.mxu0 0.0
        %10514 = vmatpush1.xpose.msra.mxu0 0.0
        %10515 = vmatprep.subr.mxu0 0.0
        %10516 = vmatpush1.xpose.msra.mxu0 0.0
        %10517 = vmatprep.subr.mxu0 0.0
        %10518 = vmatpush1.xpose.msra.mxu0 0.0
        %10519 = vmatprep.subr.mxu0 0.0
        %10520 = vmatpush1.xpose.msra.mxu0 0.0
        %10521 = vmatprep.subr.mxu0 0.0
        %10522 = vmatpush1.xpose.msra.mxu0 0.0
        %10523 = vmatprep.subr.mxu0 0.0
        %10524 = vmatpush1.xpose.msra.mxu0 0.0
        %10525 = vmatprep.subr.mxu0 0.0
        %10526 = vmatpush1.xpose.msra.mxu0 0.0
        %10527 = vmatprep.subr.mxu0 0.0
        %10528 = vmatpush1.xpose.msra.mxu0 0.0
        %10529 = vmatprep.subr.mxu0 0.0
        %10530 = vmatpush1.xpose.msra.mxu0 0.0
        %10531 = vmatprep.subr.mxu0 0.0
        %10532 = vmatpush1.xpose.msra.mxu0 0.0
        %10533 = vmatprep.subr.mxu0 0.0
        %10534 = vmatpush1.xpose.msra.mxu0 0.0
        %10535 = vmatprep.subr.mxu0 0.0
        %10536 = vmatpush1.xpose.msra.mxu0 0.0
        %10537 = vmatprep.subr.mxu0 0.0
        %10538 = vmatpush1.xpose.msra.mxu0 0.0
        %10539 = vmatprep.subr.mxu0 0.0
        %10540 = vmatpush1.xpose.msra.mxu0 0.0
        %10541 = vmatprep.subr.mxu0 0.0
        %10542 = vmatpush1.xpose.msra.mxu0 0.0
        %10543 = vmatprep.subr.mxu0 0.0
        %10544 = vmatpush1.xpose.msra.mxu0 0.0
        %10545 = vmatprep.mubr.f32.mxu0 %v1895
        %10546 = vmatmul.mubr.f32.gmra.mrb[0].mxu0 %v1887
        %v10547 = vpop.f32.mrb[0].mxu0
        %v10548 = vadd.f32 %v10478, %v10547
        %v10549 = vpop.f32.mrb[0].mxu0
        %10550 = vdwg.mxu0
        %10551 = vmatprep.subr.mxu0 %v540
        %10552 = vmatpush1.xpose.msra.mxu0 %v539
        %10553 = vmatprep.subr.mxu0 %v796
        %10554 = vmatpush1.xpose.msra.mxu0 %v795
        %10555 = vmatprep.subr.mxu0 0.0
        %10556 = vmatpush1.xpose.msra.mxu0 0.0
        %10557 = vmatprep.subr.mxu0 0.0
        %10558 = vmatpush1.xpose.msra.mxu0 0.0
        %10559 = vmatprep.subr.mxu0 0.0
        %10560 = vmatpush1.xpose.msra.mxu0 0.0
        %10561 = vmatprep.subr.mxu0 0.0
        %10562 = vmatpush1.xpose.msra.mxu0 0.0
        %10563 = vmatprep.subr.mxu0 0.0
        %10564 = vmatpush1.xpose.msra.mxu0 0.0
        %10565 = vmatprep.subr.mxu0 0.0
        %10566 = vmatpush1.xpose.msra.mxu0 0.0
        %10567 = vmatprep.subr.mxu0 0.0
        %10568 = vmatpush1.xpose.msra.mxu0 0.0
        %10569 = vmatprep.subr.mxu0 0.0
        %10570 = vmatpush1.xpose.msra.mxu0 0.0
        %10571 = vmatprep.subr.mxu0 0.0
        %10572 = vmatpush1.xpose.msra.mxu0 0.0
        %10573 = vmatprep.subr.mxu0 0.0
        %10574 = vmatpush1.xpose.msra.mxu0 0.0
        %10575 = vmatprep.subr.mxu0 0.0
        %10576 = vmatpush1.xpose.msra.mxu0 0.0
        %10577 = vmatprep.subr.mxu0 0.0
        %10578 = vmatpush1.xpose.msra.mxu0 0.0
        %10579 = vmatprep.subr.mxu0 0.0
        %10580 = vmatpush1.xpose.msra.mxu0 0.0
        %10581 = vmatprep.subr.mxu0 0.0
        %10582 = vmatpush1.xpose.msra.mxu0 0.0
        %10583 = vmatprep.subr.mxu0 0.0
        %10584 = vmatpush1.xpose.msra.mxu0 0.0
        %10585 = vmatprep.subr.mxu0 0.0
        %10586 = vmatpush1.xpose.msra.mxu0 0.0
        %10587 = vmatprep.subr.mxu0 0.0
        %10588 = vmatpush1.xpose.msra.mxu0 0.0
        %10589 = vmatprep.subr.mxu0 0.0
        %10590 = vmatpush1.xpose.msra.mxu0 0.0
        %10591 = vmatprep.subr.mxu0 0.0
        %10592 = vmatpush1.xpose.msra.mxu0 0.0
        %10593 = vmatprep.subr.mxu0 0.0
        %10594 = vmatpush1.xpose.msra.mxu0 0.0
        %10595 = vmatprep.subr.mxu0 0.0
        %10596 = vmatpush1.xpose.msra.mxu0 0.0
        %10597 = vmatprep.subr.mxu0 0.0
        %10598 = vmatpush1.xpose.msra.mxu0 0.0
        %10599 = vmatprep.subr.mxu0 0.0
        %10600 = vmatpush1.xpose.msra.mxu0 0.0
        %10601 = vmatprep.subr.mxu0 0.0
        %10602 = vmatpush1.xpose.msra.mxu0 0.0
        %10603 = vmatprep.subr.mxu0 0.0
        %10604 = vmatpush1.xpose.msra.mxu0 0.0
        %10605 = vmatprep.subr.mxu0 0.0
        %10606 = vmatpush1.xpose.msra.mxu0 0.0
        %10607 = vmatprep.subr.mxu0 0.0
        %10608 = vmatpush1.xpose.msra.mxu0 0.0
        %10609 = vmatprep.subr.mxu0 0.0
        %10610 = vmatpush1.xpose.msra.mxu0 0.0
        %10611 = vmatprep.subr.mxu0 0.0
        %10612 = vmatpush1.xpose.msra.mxu0 0.0
        %10613 = vmatprep.subr.mxu0 0.0
        %10614 = vmatpush1.xpose.msra.mxu0 0.0
        %10615 = vmatprep.mubr.f32.mxu0 %v1896
        %10616 = vmatmul.mubr.f32.gmra.mrb[0].mxu0 %v1894
        %v10617 = vpop.f32.mrb[0].mxu0
        %v10618 = vadd.f32 %v10548, %v10617
        %v10619 = vpop.f32.mrb[0].mxu0
        %10620 = vdwg.mxu0
        %10621 = vmatprep.subr.mxu0 %v542
        %10622 = vmatpush1.xpose.msra.mxu0 %v541
        %10623 = vmatprep.subr.mxu0 %v798
        %10624 = vmatpush1.xpose.msra.mxu0 %v797
        %10625 = vmatprep.subr.mxu0 0.0
        %10626 = vmatpush1.xpose.msra.mxu0 0.0
        %10627 = vmatprep.subr.mxu0 0.0
        %10628 = vmatpush1.xpose.msra.mxu0 0.0
        %10629 = vmatprep.subr.mxu0 0.0
        %10630 = vmatpush1.xpose.msra.mxu0 0.0
        %10631 = vmatprep.subr.mxu0 0.0
        %10632 = vmatpush1.xpose.msra.mxu0 0.0
        %10633 = vmatprep.subr.mxu0 0.0
        %10634 = vmatpush1.xpose.msra.mxu0 0.0
        %10635 = vmatprep.subr.mxu0 0.0
        %10636 = vmatpush1.xpose.msra.mxu0 0.0
        %10637 = vmatprep.subr.mxu0 0.0
        %10638 = vmatpush1.xpose.msra.mxu0 0.0
        %10639 = vmatprep.subr.mxu0 0.0
        %10640 = vmatpush1.xpose.msra.mxu0 0.0
        %10641 = vmatprep.subr.mxu0 0.0
        %10642 = vmatpush1.xpose.msra.mxu0 0.0
        %10643 = vmatprep.subr.mxu0 0.0
        %10644 = vmatpush1.xpose.msra.mxu0 0.0
        %10645 = vmatprep.subr.mxu0 0.0
        %10646 = vmatpush1.xpose.msra.mxu0 0.0
        %10647 = vmatprep.subr.mxu0 0.0
        %10648 = vmatpush1.xpose.msra.mxu0 0.0
        %10649 = vmatprep.subr.mxu0 0.0
        %10650 = vmatpush1.xpose.msra.mxu0 0.0
        %10651 = vmatprep.subr.mxu0 0.0
        %10652 = vmatpush1.xpose.msra.mxu0 0.0
        %10653 = vmatprep.subr.mxu0 0.0
        %10654 = vmatpush1.xpose.msra.mxu0 0.0
        %10655 = vmatprep.subr.mxu0 0.0
        %10656 = vmatpush1.xpose.msra.mxu0 0.0
        %10657 = vmatprep.subr.mxu0 0.0
        %10658 = vmatpush1.xpose.msra.mxu0 0.0
        %10659 = vmatprep.subr.mxu0 0.0
        %10660 = vmatpush1.xpose.msra.mxu0 0.0
        %10661 = vmatprep.subr.mxu0 0.0
        %10662 = vmatpush1.xpose.msra.mxu0 0.0
        %10663 = vmatprep.subr.mxu0 0.0
        %10664 = vmatpush1.xpose.msra.mxu0 0.0
        %10665 = vmatprep.subr.mxu0 0.0
        %10666 = vmatpush1.xpose.msra.mxu0 0.0
        %10667 = vmatprep.subr.mxu0 0.0
        %10668 = vmatpush1.xpose.msra.mxu0 0.0
        %10669 = vmatprep.subr.mxu0 0.0
        %10670 = vmatpush1.xpose.msra.mxu0 0.0
        %10671 = vmatprep.subr.mxu0 0.0
        %10672 = vmatpush1.xpose.msra.mxu0 0.0
        %10673 = vmatprep.subr.mxu0 0.0
        %10674 = vmatpush1.xpose.msra.mxu0 0.0
        %10675 = vmatprep.subr.mxu0 0.0
        %10676 = vmatpush1.xpose.msra.mxu0 0.0
        %10677 = vmatprep.subr.mxu0 0.0
        %10678 = vmatpush1.xpose.msra.mxu0 0.0
        %10679 = vmatprep.subr.mxu0 0.0
        %10680 = vmatpush1.xpose.msra.mxu0 0.0
        %10681 = vmatprep.subr.mxu0 0.0
        %10682 = vmatpush1.xpose.msra.mxu0 0.0
        %10683 = vmatprep.subr.mxu0 0.0
        %10684 = vmatpush1.xpose.msra.mxu0 0.0
        %10685 = vmatprep.mubr.f32.mxu0 %v1912
        %10686 = vmatmul.mubr.f32.gmra.mrb[0].mxu0 %v1904
        %v10687 = vpop.f32.mrb[0].mxu0
        %v10688 = vadd.f32 %v10618, %v10687
        %v10689 = vpop.f32.mrb[0].mxu0
        %10690 = vdwg.mxu0
        %10691 = vmatprep.subr.mxu0 %v544
        %10692 = vmatpush1.xpose.msra.mxu0 %v543
        %10693 = vmatprep.subr.mxu0 %v800
        %10694 = vmatpush1.xpose.msra.mxu0 %v799
        %10695 = vmatprep.subr.mxu0 0.0
        %10696 = vmatpush1.xpose.msra.mxu0 0.0
        %10697 = vmatprep.subr.mxu0 0.0
        %10698 = vmatpush1.xpose.msra.mxu0 0.0
        %10699 = vmatprep.subr.mxu0 0.0
        %10700 = vmatpush1.xpose.msra.mxu0 0.0
        %10701 = vmatprep.subr.mxu0 0.0
        %10702 = vmatpush1.xpose.msra.mxu0 0.0
        %10703 = vmatprep.subr.mxu0 0.0
        %10704 = vmatpush1.xpose.msra.mxu0 0.0
        %10705 = vmatprep.subr.mxu0 0.0
        %10706 = vmatpush1.xpose.msra.mxu0 0.0
        %10707 = vmatprep.subr.mxu0 0.0
        %10708 = vmatpush1.xpose.msra.mxu0 0.0
        %10709 = vmatprep.subr.mxu0 0.0
        %10710 = vmatpush1.xpose.msra.mxu0 0.0
        %10711 = vmatprep.subr.mxu0 0.0
        %10712 = vmatpush1.xpose.msra.mxu0 0.0
        %10713 = vmatprep.subr.mxu0 0.0
        %10714 = vmatpush1.xpose.msra.mxu0 0.0
        %10715 = vmatprep.subr.mxu0 0.0
        %10716 = vmatpush1.xpose.msra.mxu0 0.0
        %10717 = vmatprep.subr.mxu0 0.0
        %10718 = vmatpush1.xpose.msra.mxu0 0.0
        %10719 = vmatprep.subr.mxu0 0.0
        %10720 = vmatpush1.xpose.msra.mxu0 0.0
        %10721 = vmatprep.subr.mxu0 0.0
        %10722 = vmatpush1.xpose.msra.mxu0 0.0
        %10723 = vmatprep.subr.mxu0 0.0
        %10724 = vmatpush1.xpose.msra.mxu0 0.0
        %10725 = vmatprep.subr.mxu0 0.0
        %10726 = vmatpush1.xpose.msra.mxu0 0.0
        %10727 = vmatprep.subr.mxu0 0.0
        %10728 = vmatpush1.xpose.msra.mxu0 0.0
        %10729 = vmatprep.subr.mxu0 0.0
        %10730 = vmatpush1.xpose.msra.mxu0 0.0
        %10731 = vmatprep.subr.mxu0 0.0
        %10732 = vmatpush1.xpose.msra.mxu0 0.0
        %10733 = vmatprep.subr.mxu0 0.0
        %10734 = vmatpush1.xpose.msra.mxu0 0.0
        %10735 = vmatprep.subr.mxu0 0.0
        %10736 = vmatpush1.xpose.msra.mxu0 0.0
        %10737 = vmatprep.subr.mxu0 0.0
        %10738 = vmatpush1.xpose.msra.mxu0 0.0
        %10739 = vmatprep.subr.mxu0 0.0
        %10740 = vmatpush1.xpose.msra.mxu0 0.0
        %10741 = vmatprep.subr.mxu0 0.0
        %10742 = vmatpush1.xpose.msra.mxu0 0.0
        %10743 = vmatprep.subr.mxu0 0.0
        %10744 = vmatpush1.xpose.msra.mxu0 0.0
        %10745 = vmatprep.subr.mxu0 0.0
        %10746 = vmatpush1.xpose.msra.mxu0 0.0
        %10747 = vmatprep.subr.mxu0 0.0
        %10748 = vmatpush1.xpose.msra.mxu0 0.0
        %10749 = vmatprep.subr.mxu0 0.0
        %10750 = vmatpush1.xpose.msra.mxu0 0.0
        %10751 = vmatprep.subr.mxu0 0.0
        %10752 = vmatpush1.xpose.msra.mxu0 0.0
        %10753 = vmatprep.subr.mxu0 0.0
        %10754 = vmatpush1.xpose.msra.mxu0 0.0
        %10755 = vmatprep.mubr.f32.mxu0 %v1913
        %10756 = vmatmul.mubr.f32.gmra.mrb[0].mxu0 %v1911
        %v10757 = vpop.f32.mrb[0].mxu0
        %v10758 = vadd.f32 %v10688, %v10757
        %v10759 = vpop.f32.mrb[0].mxu0
        %10760 = vdwg.mxu0
        %10761 = vmatprep.subr.mxu0 %v546
        %10762 = vmatpush1.xpose.msra.mxu0 %v545
        %10763 = vmatprep.subr.mxu0 %v802
        %10764 = vmatpush1.xpose.msra.mxu0 %v801
        %10765 = vmatprep.subr.mxu0 0.0
        %10766 = vmatpush1.xpose.msra.mxu0 0.0
        %10767 = vmatprep.subr.mxu0 0.0
        %10768 = vmatpush1.xpose.msra.mxu0 0.0
        %10769 = vmatprep.subr.mxu0 0.0
        %10770 = vmatpush1.xpose.msra.mxu0 0.0
        %10771 = vmatprep.subr.mxu0 0.0
        %10772 = vmatpush1.xpose.msra.mxu0 0.0
        %10773 = vmatprep.subr.mxu0 0.0
        %10774 = vmatpush1.xpose.msra.mxu0 0.0
        %10775 = vmatprep.subr.mxu0 0.0
        %10776 = vmatpush1.xpose.msra.mxu0 0.0
        %10777 = vmatprep.subr.mxu0 0.0
        %10778 = vmatpush1.xpose.msra.mxu0 0.0
        %10779 = vmatprep.subr.mxu0 0.0
        %10780 = vmatpush1.xpose.msra.mxu0 0.0
        %10781 = vmatprep.subr.mxu0 0.0
        %10782 = vmatpush1.xpose.msra.mxu0 0.0
        %10783 = vmatprep.subr.mxu0 0.0
        %10784 = vmatpush1.xpose.msra.mxu0 0.0
        %10785 = vmatprep.subr.mxu0 0.0
        %10786 = vmatpush1.xpose.msra.mxu0 0.0
        %10787 = vmatprep.subr.mxu0 0.0
        %10788 = vmatpush1.xpose.msra.mxu0 0.0
        %10789 = vmatprep.subr.mxu0 0.0
        %10790 = vmatpush1.xpose.msra.mxu0 0.0
        %10791 = vmatprep.subr.mxu0 0.0
        %10792 = vmatpush1.xpose.msra.mxu0 0.0
        %10793 = vmatprep.subr.mxu0 0.0
        %10794 = vmatpush1.xpose.msra.mxu0 0.0
        %10795 = vmatprep.subr.mxu0 0.0
        %10796 = vmatpush1.xpose.msra.mxu0 0.0
        %10797 = vmatprep.subr.mxu0 0.0
        %10798 = vmatpush1.xpose.msra.mxu0 0.0
        %10799 = vmatprep.subr.mxu0 0.0
        %10800 = vmatpush1.xpose.msra.mxu0 0.0
        %10801 = vmatprep.subr.mxu0 0.0
        %10802 = vmatpush1.xpose.msra.mxu0 0.0
        %10803 = vmatprep.subr.mxu0 0.0
        %10804 = vmatpush1.xpose.msra.mxu0 0.0
        %10805 = vmatprep.subr.mxu0 0.0
        %10806 = vmatpush1.xpose.msra.mxu0 0.0
        %10807 = vmatprep.subr.mxu0 0.0
        %10808 = vmatpush1.xpose.msra.mxu0 0.0
        %10809 = vmatprep.subr.mxu0 0.0
        %10810 = vmatpush1.xpose.msra.mxu0 0.0
        %10811 = vmatprep.subr.mxu0 0.0
        %10812 = vmatpush1.xpose.msra.mxu0 0.0
        %10813 = vmatprep.subr.mxu0 0.0
        %10814 = vmatpush1.xpose.msra.mxu0 0.0
        %10815 = vmatprep.subr.mxu0 0.0
        %10816 = vmatpush1.xpose.msra.mxu0 0.0
        %10817 = vmatprep.subr.mxu0 0.0
        %10818 = vmatpush1.xpose.msra.mxu0 0.0
        %10819 = vmatprep.subr.mxu0 0.0
        %10820 = vmatpush1.xpose.msra.mxu0 0.0
        %10821 = vmatprep.subr.mxu0 0.0
        %10822 = vmatpush1.xpose.msra.mxu0 0.0
        %10823 = vmatprep.subr.mxu0 0.0
        %10824 = vmatpush1.xpose.msra.mxu0 0.0
        %10825 = vmatprep.mubr.f32.mxu0 %v1929
        %10826 = vmatmul.mubr.f32.gmra.mrb[0].mxu0 %v1921
        %v10827 = vpop.f32.mrb[0].mxu0
        %v10828 = vadd.f32 %v10758, %v10827
        %v10829 = vpop.f32.mrb[0].mxu0
        %10830 = vdwg.mxu0
        %10831 = vmatprep.subr.mxu0 %v548
        %10832 = vmatpush1.xpose.msra.mxu0 %v547
        %10833 = vmatprep.subr.mxu0 %v804
        %10834 = vmatpush1.xpose.msra.mxu0 %v803
        %10835 = vmatprep.subr.mxu0 0.0
        %10836 = vmatpush1.xpose.msra.mxu0 0.0
        %10837 = vmatprep.subr.mxu0 0.0
        %10838 = vmatpush1.xpose.msra.mxu0 0.0
        %10839 = vmatprep.subr.mxu0 0.0
        %10840 = vmatpush1.xpose.msra.mxu0 0.0
        %10841 = vmatprep.subr.mxu0 0.0
        %10842 = vmatpush1.xpose.msra.mxu0 0.0
        %10843 = vmatprep.subr.mxu0 0.0
        %10844 = vmatpush1.xpose.msra.mxu0 0.0
        %10845 = vmatprep.subr.mxu0 0.0
        %10846 = vmatpush1.xpose.msra.mxu0 0.0
        %10847 = vmatprep.subr.mxu0 0.0
        %10848 = vmatpush1.xpose.msra.mxu0 0.0
        %10849 = vmatprep.subr.mxu0 0.0
        %10850 = vmatpush1.xpose.msra.mxu0 0.0
        %10851 = vmatprep.subr.mxu0 0.0
        %10852 = vmatpush1.xpose.msra.mxu0 0.0
        %10853 = vmatprep.subr.mxu0 0.0
        %10854 = vmatpush1.xpose.msra.mxu0 0.0
        %10855 = vmatprep.subr.mxu0 0.0
        %10856 = vmatpush1.xpose.msra.mxu0 0.0
        %10857 = vmatprep.subr.mxu0 0.0
        %10858 = vmatpush1.xpose.msra.mxu0 0.0
        %10859 = vmatprep.subr.mxu0 0.0
        %10860 = vmatpush1.xpose.msra.mxu0 0.0
        %10861 = vmatprep.subr.mxu0 0.0
        %10862 = vmatpush1.xpose.msra.mxu0 0.0
        %10863 = vmatprep.subr.mxu0 0.0
        %10864 = vmatpush1.xpose.msra.mxu0 0.0
        %10865 = vmatprep.subr.mxu0 0.0
        %10866 = vmatpush1.xpose.msra.mxu0 0.0
        %10867 = vmatprep.subr.mxu0 0.0
        %10868 = vmatpush1.xpose.msra.mxu0 0.0
        %10869 = vmatprep.subr.mxu0 0.0
        %10870 = vmatpush1.xpose.msra.mxu0 0.0
        %10871 = vmatprep.subr.mxu0 0.0
        %10872 = vmatpush1.xpose.msra.mxu0 0.0
        %10873 = vmatprep.subr.mxu0 0.0
        %10874 = vmatpush1.xpose.msra.mxu0 0.0
        %10875 = vmatprep.subr.mxu0 0.0
        %10876 = vmatpush1.xpose.msra.mxu0 0.0
        %10877 = vmatprep.subr.mxu0 0.0
        %10878 = vmatpush1.xpose.msra.mxu0 0.0
        %10879 = vmatprep.subr.mxu0 0.0
        %10880 = vmatpush1.xpose.msra.mxu0 0.0
        %10881 = vmatprep.subr.mxu0 0.0
        %10882 = vmatpush1.xpose.msra.mxu0 0.0
        %10883 = vmatprep.subr.mxu0 0.0
        %10884 = vmatpush1.xpose.msra.mxu0 0.0
        %10885 = vmatprep.subr.mxu0 0.0
        %10886 = vmatpush1.xpose.msra.mxu0 0.0
        %10887 = vmatprep.subr.mxu0 0.0
        %10888 = vmatpush1.xpose.msra.mxu0 0.0
        %10889 = vmatprep.subr.mxu0 0.0
        %10890 = vmatpush1.xpose.msra.mxu0 0.0
        %10891 = vmatprep.subr.mxu0 0.0
        %10892 = vmatpush1.xpose.msra.mxu0 0.0
        %10893 = vmatprep.subr.mxu0 0.0
        %10894 = vmatpush1.xpose.msra.mxu0 0.0
        %10895 = vmatprep.mubr.f32.mxu0 %v1930
        %10896 = vmatmul.mubr.f32.gmra.mrb[0].mxu0 %v1928
        %v10897 = vpop.f32.mrb[0].mxu0
        %v10898 = vadd.f32 %v10828, %v10897
        %v10899 = vpop.f32.mrb[0].mxu0
        %10900 = vdwg.mxu0
        %10901 = vmatprep.subr.mxu0 %v550
        %10902 = vmatpush1.xpose.msra.mxu0 %v549
        %10903 = vmatprep.subr.mxu0 %v806
        %10904 = vmatpush1.xpose.msra.mxu0 %v805
        %10905 = vmatprep.subr.mxu0 0.0
        %10906 = vmatpush1.xpose.msra.mxu0 0.0
        %10907 = vmatprep.subr.mxu0 0.0
        %10908 = vmatpush1.xpose.msra.mxu0 0.0
        %10909 = vmatprep.subr.mxu0 0.0
        %10910 = vmatpush1.xpose.msra.mxu0 0.0
        %10911 = vmatprep.subr.mxu0 0.0
        %10912 = vmatpush1.xpose.msra.mxu0 0.0
        %10913 = vmatprep.subr.mxu0 0.0
        %10914 = vmatpush1.xpose.msra.mxu0 0.0
        %10915 = vmatprep.subr.mxu0 0.0
        %10916 = vmatpush1.xpose.msra.mxu0 0.0
        %10917 = vmatprep.subr.mxu0 0.0
        %10918 = vmatpush1.xpose.msra.mxu0 0.0
        %10919 = vmatprep.subr.mxu0 0.0
        %10920 = vmatpush1.xpose.msra.mxu0 0.0
        %10921 = vmatprep.subr.mxu0 0.0
        %10922 = vmatpush1.xpose.msra.mxu0 0.0
        %10923 = vmatprep.subr.mxu0 0.0
        %10924 = vmatpush1.xpose.msra.mxu0 0.0
        %10925 = vmatprep.subr.mxu0 0.0
        %10926 = vmatpush1.xpose.msra.mxu0 0.0
        %10927 = vmatprep.subr.mxu0 0.0
        %10928 = vmatpush1.xpose.msra.mxu0 0.0
        %10929 = vmatprep.subr.mxu0 0.0
        %10930 = vmatpush1.xpose.msra.mxu0 0.0
        %10931 = vmatprep.subr.mxu0 0.0
        %10932 = vmatpush1.xpose.msra.mxu0 0.0
        %10933 = vmatprep.subr.mxu0 0.0
        %10934 = vmatpush1.xpose.msra.mxu0 0.0
        %10935 = vmatprep.subr.mxu0 0.0
        %10936 = vmatpush1.xpose.msra.mxu0 0.0
        %10937 = vmatprep.subr.mxu0 0.0
        %10938 = vmatpush1.xpose.msra.mxu0 0.0
        %10939 = vmatprep.subr.mxu0 0.0
        %10940 = vmatpush1.xpose.msra.mxu0 0.0
        %10941 = vmatprep.subr.mxu0 0.0
        %10942 = vmatpush1.xpose.msra.mxu0 0.0
        %10943 = vmatprep.subr.mxu0 0.0
        %10944 = vmatpush1.xpose.msra.mxu0 0.0
        %10945 = vmatprep.subr.mxu0 0.0
        %10946 = vmatpush1.xpose.msra.mxu0 0.0
        %10947 = vmatprep.subr.mxu0 0.0
        %10948 = vmatpush1.xpose.msra.mxu0 0.0
        %10949 = vmatprep.subr.mxu0 0.0
        %10950 = vmatpush1.xpose.msra.mxu0 0.0
        %10951 = vmatprep.subr.mxu0 0.0
        %10952 = vmatpush1.xpose.msra.mxu0 0.0
        %10953 = vmatprep.subr.mxu0 0.0
        %10954 = vmatpush1.xpose.msra.mxu0 0.0
        %10955 = vmatprep.subr.mxu0 0.0
        %10956 = vmatpush1.xpose.msra.mxu0 0.0
        %10957 = vmatprep.subr.mxu0 0.0
        %10958 = vmatpush1.xpose.msra.mxu0 0.0
        %10959 = vmatprep.subr.mxu0 0.0
        %10960 = vmatpush1.xpose.msra.mxu0 0.0
        %10961 = vmatprep.subr.mxu0 0.0
        %10962 = vmatpush1.xpose.msra.mxu0 0.0
        %10963 = vmatprep.subr.mxu0 0.0
        %10964 = vmatpush1.xpose.msra.mxu0 0.0
        %10965 = vmatprep.mubr.f32.mxu0 %v1946
        %10966 = vmatmul.mubr.f32.gmra.mrb[0].mxu0 %v1938
        %v10967 = vpop.f32.mrb[0].mxu0
        %v10968 = vadd.f32 %v10898, %v10967
        %v10969 = vpop.f32.mrb[0].mxu0
        %10970 = vdwg.mxu0
        %10971 = vmatprep.subr.mxu0 %v552
        %10972 = vmatpush1.xpose.msra.mxu0 %v551
        %10973 = vmatprep.subr.mxu0 %v808
        %10974 = vmatpush1.xpose.msra.mxu0 %v807
        %10975 = vmatprep.subr.mxu0 0.0
        %10976 = vmatpush1.xpose.msra.mxu0 0.0
        %10977 = vmatprep.subr.mxu0 0.0
        %10978 = vmatpush1.xpose.msra.mxu0 0.0
        %10979 = vmatprep.subr.mxu0 0.0
        %10980 = vmatpush1.xpose.msra.mxu0 0.0
        %10981 = vmatprep.subr.mxu0 0.0
        %10982 = vmatpush1.xpose.msra.mxu0 0.0
        %10983 = vmatprep.subr.mxu0 0.0
        %10984 = vmatpush1.xpose.msra.mxu0 0.0
        %10985 = vmatprep.subr.mxu0 0.0
        %10986 = vmatpush1.xpose.msra.mxu0 0.0
        %10987 = vmatprep.subr.mxu0 0.0
        %10988 = vmatpush1.xpose.msra.mxu0 0.0
        %10989 = vmatprep.subr.mxu0 0.0
        %10990 = vmatpush1.xpose.msra.mxu0 0.0
        %10991 = vmatprep.subr.mxu0 0.0
        %10992 = vmatpush1.xpose.msra.mxu0 0.0
        %10993 = vmatprep.subr.mxu0 0.0
        %10994 = vmatpush1.xpose.msra.mxu0 0.0
        %10995 = vmatprep.subr.mxu0 0.0
        %10996 = vmatpush1.xpose.msra.mxu0 0.0
        %10997 = vmatprep.subr.mxu0 0.0
        %10998 = vmatpush1.xpose.msra.mxu0 0.0
        %10999 = vmatprep.subr.mxu0 0.0
        %11000 = vmatpush1.xpose.msra.mxu0 0.0
        %11001 = vmatprep.subr.mxu0 0.0
        %11002 = vmatpush1.xpose.msra.mxu0 0.0
        %11003 = vmatprep.subr.mxu0 0.0
        %11004 = vmatpush1.xpose.msra.mxu0 0.0
        %11005 = vmatprep.subr.mxu0 0.0
        %11006 = vmatpush1.xpose.msra.mxu0 0.0
        %11007 = vmatprep.subr.mxu0 0.0
        %11008 = vmatpush1.xpose.msra.mxu0 0.0
        %11009 = vmatprep.subr.mxu0 0.0
        %11010 = vmatpush1.xpose.msra.mxu0 0.0
        %11011 = vmatprep.subr.mxu0 0.0
        %11012 = vmatpush1.xpose.msra.mxu0 0.0
        %11013 = vmatprep.subr.mxu0 0.0
        %11014 = vmatpush1.xpose.msra.mxu0 0.0
        %11015 = vmatprep.subr.mxu0 0.0
        %11016 = vmatpush1.xpose.msra.mxu0 0.0
        %11017 = vmatprep.subr.mxu0 0.0
        %11018 = vmatpush1.xpose.msra.mxu0 0.0
        %11019 = vmatprep.subr.mxu0 0.0
        %11020 = vmatpush1.xpose.msra.mxu0 0.0
        %11021 = vmatprep.subr.mxu0 0.0
        %11022 = vmatpush1.xpose.msra.mxu0 0.0
        %11023 = vmatprep.subr.mxu0 0.0
        %11024 = vmatpush1.xpose.msra.mxu0 0.0
        %11025 = vmatprep.subr.mxu0 0.0
        %11026 = vmatpush1.xpose.msra.mxu0 0.0
        %11027 = vmatprep.subr.mxu0 0.0
        %11028 = vmatpush1.xpose.msra.mxu0 0.0
        %11029 = vmatprep.subr.mxu0 0.0
        %11030 = vmatpush1.xpose.msra.mxu0 0.0
        %11031 = vmatprep.subr.mxu0 0.0
        %11032 = vmatpush1.xpose.msra.mxu0 0.0
        %11033 = vmatprep.subr.mxu0 0.0
        %11034 = vmatpush1.xpose.msra.mxu0 0.0
        %11035 = vmatprep.mubr.f32.mxu0 %v1947
        %11036 = vmatmul.mubr.f32.gmra.mrb[0].mxu0 %v1945
        %v11037 = vpop.f32.mrb[0].mxu0
        %v11038 = vadd.f32 %v10968, %v11037
        %v11039 = vpop.f32.mrb[0].mxu0
        %11040 = vdwg.mxu0
        %11041 = vmatprep.subr.mxu0 %v554
        %11042 = vmatpush1.xpose.msra.mxu0 %v553
        %11043 = vmatprep.subr.mxu0 %v810
        %11044 = vmatpush1.xpose.msra.mxu0 %v809
        %11045 = vmatprep.subr.mxu0 0.0
        %11046 = vmatpush1.xpose.msra.mxu0 0.0
        %11047 = vmatprep.subr.mxu0 0.0
        %11048 = vmatpush1.xpose.msra.mxu0 0.0
        %11049 = vmatprep.subr.mxu0 0.0
        %11050 = vmatpush1.xpose.msra.mxu0 0.0
        %11051 = vmatprep.subr.mxu0 0.0
        %11052 = vmatpush1.xpose.msra.mxu0 0.0
        %11053 = vmatprep.subr.mxu0 0.0
        %11054 = vmatpush1.xpose.msra.mxu0 0.0
        %11055 = vmatprep.subr.mxu0 0.0
        %11056 = vmatpush1.xpose.msra.mxu0 0.0
        %11057 = vmatprep.subr.mxu0 0.0
        %11058 = vmatpush1.xpose.msra.mxu0 0.0
        %11059 = vmatprep.subr.mxu0 0.0
        %11060 = vmatpush1.xpose.msra.mxu0 0.0
        %11061 = vmatprep.subr.mxu0 0.0
        %11062 = vmatpush1.xpose.msra.mxu0 0.0
        %11063 = vmatprep.subr.mxu0 0.0
        %11064 = vmatpush1.xpose.msra.mxu0 0.0
        %11065 = vmatprep.subr.mxu0 0.0
        %11066 = vmatpush1.xpose.msra.mxu0 0.0
        %11067 = vmatprep.subr.mxu0 0.0
        %11068 = vmatpush1.xpose.msra.mxu0 0.0
        %11069 = vmatprep.subr.mxu0 0.0
        %11070 = vmatpush1.xpose.msra.mxu0 0.0
        %11071 = vmatprep.subr.mxu0 0.0
        %11072 = vmatpush1.xpose.msra.mxu0 0.0
        %11073 = vmatprep.subr.mxu0 0.0
        %11074 = vmatpush1.xpose.msra.mxu0 0.0
        %11075 = vmatprep.subr.mxu0 0.0
        %11076 = vmatpush1.xpose.msra.mxu0 0.0
        %11077 = vmatprep.subr.mxu0 0.0
        %11078 = vmatpush1.xpose.msra.mxu0 0.0
        %11079 = vmatprep.subr.mxu0 0.0
        %11080 = vmatpush1.xpose.msra.mxu0 0.0
        %11081 = vmatprep.subr.mxu0 0.0
        %11082 = vmatpush1.xpose.msra.mxu0 0.0
        %11083 = vmatprep.subr.mxu0 0.0
        %11084 = vmatpush1.xpose.msra.mxu0 0.0
        %11085 = vmatprep.subr.mxu0 0.0
        %11086 = vmatpush1.xpose.msra.mxu0 0.0
        %11087 = vmatprep.subr.mxu0 0.0
        %11088 = vmatpush1.xpose.msra.mxu0 0.0
        %11089 = vmatprep.subr.mxu0 0.0
        %11090 = vmatpush1.xpose.msra.mxu0 0.0
        %11091 = vmatprep.subr.mxu0 0.0
        %11092 = vmatpush1.xpose.msra.mxu0 0.0
        %11093 = vmatprep.subr.mxu0 0.0
        %11094 = vmatpush1.xpose.msra.mxu0 0.0
        %11095 = vmatprep.subr.mxu0 0.0
        %11096 = vmatpush1.xpose.msra.mxu0 0.0
        %11097 = vmatprep.subr.mxu0 0.0
        %11098 = vmatpush1.xpose.msra.mxu0 0.0
        %11099 = vmatprep.subr.mxu0 0.0
        %11100 = vmatpush1.xpose.msra.mxu0 0.0
        %11101 = vmatprep.subr.mxu0 0.0
        %11102 = vmatpush1.xpose.msra.mxu0 0.0
        %11103 = vmatprep.subr.mxu0 0.0
        %11104 = vmatpush1.xpose.msra.mxu0 0.0
        %11105 = vmatprep.mubr.f32.mxu0 %v1963
        %11106 = vmatmul.mubr.f32.gmra.mrb[0].mxu0 %v1955
        %v11107 = vpop.f32.mrb[0].mxu0
        %v11108 = vadd.f32 %v11038, %v11107
        %v11109 = vpop.f32.mrb[0].mxu0
        %11110 = vdwg.mxu0
        %11111 = vmatprep.subr.mxu0 %v556
        %11112 = vmatpush1.xpose.msra.mxu0 %v555
        %11113 = vmatprep.subr.mxu0 %v812
        %11114 = vmatpush1.xpose.msra.mxu0 %v811
        %11115 = vmatprep.subr.mxu0 0.0
        %11116 = vmatpush1.xpose.msra.mxu0 0.0
        %11117 = vmatprep.subr.mxu0 0.0
        %11118 = vmatpush1.xpose.msra.mxu0 0.0
        %11119 = vmatprep.subr.mxu0 0.0
        %11120 = vmatpush1.xpose.msra.mxu0 0.0
        %11121 = vmatprep.subr.mxu0 0.0
        %11122 = vmatpush1.xpose.msra.mxu0 0.0
        %11123 = vmatprep.subr.mxu0 0.0
        %11124 = vmatpush1.xpose.msra.mxu0 0.0
        %11125 = vmatprep.subr.mxu0 0.0
        %11126 = vmatpush1.xpose.msra.mxu0 0.0
        %11127 = vmatprep.subr.mxu0 0.0
        %11128 = vmatpush1.xpose.msra.mxu0 0.0
        %11129 = vmatprep.subr.mxu0 0.0
        %11130 = vmatpush1.xpose.msra.mxu0 0.0
        %11131 = vmatprep.subr.mxu0 0.0
        %11132 = vmatpush1.xpose.msra.mxu0 0.0
        %11133 = vmatprep.subr.mxu0 0.0
        %11134 = vmatpush1.xpose.msra.mxu0 0.0
        %11135 = vmatprep.subr.mxu0 0.0
        %11136 = vmatpush1.xpose.msra.mxu0 0.0
        %11137 = vmatprep.subr.mxu0 0.0
        %11138 = vmatpush1.xpose.msra.mxu0 0.0
        %11139 = vmatprep.subr.mxu0 0.0
        %11140 = vmatpush1.xpose.msra.mxu0 0.0
        %11141 = vmatprep.subr.mxu0 0.0
        %11142 = vmatpush1.xpose.msra.mxu0 0.0
        %11143 = vmatprep.subr.mxu0 0.0
        %11144 = vmatpush1.xpose.msra.mxu0 0.0
        %11145 = vmatprep.subr.mxu0 0.0
        %11146 = vmatpush1.xpose.msra.mxu0 0.0
        %11147 = vmatprep.subr.mxu0 0.0
        %11148 = vmatpush1.xpose.msra.mxu0 0.0
        %11149 = vmatprep.subr.mxu0 0.0
        %11150 = vmatpush1.xpose.msra.mxu0 0.0
        %11151 = vmatprep.subr.mxu0 0.0
        %11152 = vmatpush1.xpose.msra.mxu0 0.0
        %11153 = vmatprep.subr.mxu0 0.0
        %11154 = vmatpush1.xpose.msra.mxu0 0.0
        %11155 = vmatprep.subr.mxu0 0.0
        %11156 = vmatpush1.xpose.msra.mxu0 0.0
        %11157 = vmatprep.subr.mxu0 0.0
        %11158 = vmatpush1.xpose.msra.mxu0 0.0
        %11159 = vmatprep.subr.mxu0 0.0
        %11160 = vmatpush1.xpose.msra.mxu0 0.0
        %11161 = vmatprep.subr.mxu0 0.0
        %11162 = vmatpush1.xpose.msra.mxu0 0.0
        %11163 = vmatprep.subr.mxu0 0.0
        %11164 = vmatpush1.xpose.msra.mxu0 0.0
        %11165 = vmatprep.subr.mxu0 0.0
        %11166 = vmatpush1.xpose.msra.mxu0 0.0
        %11167 = vmatprep.subr.mxu0 0.0
        %11168 = vmatpush1.xpose.msra.mxu0 0.0
        %11169 = vmatprep.subr.mxu0 0.0
        %11170 = vmatpush1.xpose.msra.mxu0 0.0
        %11171 = vmatprep.subr.mxu0 0.0
        %11172 = vmatpush1.xpose.msra.mxu0 0.0
        %11173 = vmatprep.subr.mxu0 0.0
        %11174 = vmatpush1.xpose.msra.mxu0 0.0
        %11175 = vmatprep.mubr.f32.mxu0 %v1964
        %11176 = vmatmul.mubr.f32.gmra.mrb[0].mxu0 %v1962
        %v11177 = vpop.f32.mrb[0].mxu0
        %v11178 = vadd.f32 %v11108, %v11177
        %v11179 = vpop.f32.mrb[0].mxu0
        %11180 = vdwg.mxu0
        %v11181 = vadd.f32 %v236, %v11178
        %vm11182 = vcmask 74752
        %11183 = vst.msk [vmem:[#allocation2] sm:$0x3] %vm11182, %v11181
        %p11184 = scmp.eq.s32.totalorder %s24, 2
        // Predicated region
        $region41: #{pallas_linear.1} parent=27 // pred_check
          %p11185 = pneg %p11184
        $region42: #{pallas_linear.1} parent=27 // pred_check_branch
          %11187 = sbr.rel (%p11185) target = $region44
        $region43: #{pallas_linear.1} parent=27 // pred_region
          %v11188 = vld [vmem:[#allocation2] sm:$0x3]
          %11189 = vst.msk [vmem:[%s229] sm:$0x3] %vm11182, %v11188
        $region44: #{pallas_linear.1} parent=27 // pred_fallthru
          _
        %p11190 = scmp.lt.s32.totalorder %s23, 1
        %s11191 = scalar_select %p11190, %s23, 1
        %s11192 = smul.addr %s11191, 2
        %s11193 = scalar_lea.vmem %s2, %s11192
        // Predicated region
        $region45: #{pallas_linear.1} parent=27 // pred_check
          %p11194 = pneg %p109
        $region46: #{pallas_linear.1} parent=27 // pred_check_branch
          %11196 = sbr.rel (%p11194) target = $region48
        $region47: #{pallas_linear.1} parent=27 // pred_region
          _
        $region48: #{pallas_linear.1} parent=27 // pred_fallthru
          _
      $region28: #{pallas_linear.1} parent=5 // pred_fallthru
        _
      %p11197 = scmp.le.s32.totalorder 2, %s14
      // Predicated region
      $region49: #{pallas_linear.1} parent=5 // pred_check
        %p11198 = pneg %p11197
      $region50: #{pallas_linear.1} parent=5 // pred_check_branch
        %11200 = sbr.rel (%p11198) target = $region52
      $region51: #{pallas_linear.1} parent=5 // pred_region
        %s11201 = ssub.s32 %s14, 2
        // Predicated region
        $region53: #{pallas_linear.1} parent=51 // pred_check
          %p11202 = pneg %p115
        $region54: #{pallas_linear.1} parent=51 // pred_check_branch
          %11204 = sbr.rel (%p11202) target = $region56
        $region55: #{pallas_linear.1} parent=51 // pred_region
          %p11205 = scmp.lt.s32.totalorder %s25, 1
          %s11206 = scalar_select %p11205, %s25, 1
          %s11207 = smul.addr %s11206, 2
          %s11208 = scalar_lea.vmem %s2, %s11207
        $region56: #{pallas_linear.1} parent=51 // pred_fallthru
          _
      $region52: #{pallas_linear.1} parent=5 // pred_fallthru
        _
    $region6: #{pallas_linear.1} parent=1 // loop_footer
      %s18 = sadd.s32 1, %s14
    $region7: #{pallas_linear.1} parent=1 // loop_footer_branch
      %13 = sbr.rel target = $region3
    $region8: #{pallas_linear.1} parent=1 // loop_exit
      _
    %11209 = vsyncpa [#allocation4], 1
    %s11210 = scalar_lea.sflag [#allocation4], 1
    %11211 = vsyncpa %s11210, 1
    %11212 = vsyncpa [#allocation6], 1
    %s11213 = scalar_lea.sflag [#allocation6], 1
    %11214 = vsyncpa %s11213, 1

</llo_original>
